<compile_context>
chip_gen: v7x
topology: tpu7x:2x2x1
jax: 0.10.0
libtpu: 0.0.40
codegen_flags: <defaults>
</compile_context>

<pallas_src>
import functools

import jax
import jax.numpy as jnp
import numpy as np
from jax.experimental import pallas as pl
from jax.experimental.pallas import tpu as pltpu


def _round_up(n, m):
    return (n + m - 1) // m * m


def _cdiv(a, b):
    return (a + b - 1) // b


def _gru_kernel(stream_ref, dt_ref, wruh_ref, wch_ref, tv_ref, out_ref, h_scr):
    """One grid step = one batch block x T timesteps of the recurrence."""
    bb, Hp = h_scr.shape
    T = stream_ref.shape[0]

    # New batch block -> reset the carried hidden state.
    @pl.when(pl.program_id(1) == 0)
    def _():
        h_scr[...] = jnp.zeros_like(h_scr)

    # Broadcast the (1, Hp) time vectors to (bb, Hp) ONCE per grid step
    # (JAX does not CSE broadcast_in_dim inside the unrolled loop).
    thw1 = jnp.broadcast_to(tv_ref[0:1, :], (bb, Hp))   # _time_history_w1
    tkw2 = jnp.broadcast_to(tv_ref[1:2, :], (bb, Hp))   # _time_kernel_w2
    tw1 = jnp.broadcast_to(tv_ref[2:3, :], (bb, Hp))    # _time_w1
    tb1 = jnp.broadcast_to(tv_ref[3:4, :], (bb, Hp))    # _time_b1
    tw12 = jnp.broadcast_to(tv_ref[4:5, :], (bb, Hp))   # _time_w12
    tb12 = jnp.broadcast_to(tv_ref[5:6, :], (bb, Hp))   # _time_b12

    mm_dtype = wruh_ref.dtype

    h = h_scr[...]                               # (bb, Hp) f32 carried state
    # Statically unrolled timestep loop (T <= t_chunk, small).
    # TODO(synk): switch to lax.fori_loop(..., unroll=8) if t_chunk is ever
    # raised far beyond 32 (code size / live-range control).
    for t in range(T):
        st = stream_ref[t].astype(jnp.float32)   # (bb, 4Hp): [r_x|u_x|c_x|A]
        dt = dt_ref[t]                           # (bb, 1) f32 time interval

        # h-side fused matmul; RHS read from the VMEM ref each step (loop
        # invariant -> cheap vld; keeps vregs free for the gate math).
        hz = jnp.dot(h.astype(mm_dtype), wruh_ref[...],
                     preferred_element_type=jnp.float32)        # (bb, 2Hp)
        r = jax.nn.sigmoid(st[:, :Hp] + hz[:, :Hp])
        u = jax.nn.sigmoid(st[:, Hp:2 * Hp] + hz[:, Hp:])
        c = jnp.tanh(st[:, 2 * Hp:3 * Hp]
                     + jnp.dot((r * h).astype(mm_dtype), wch_ref[...],
                               preferred_element_type=jnp.float32))

        # Time gate: A (= emb*tkw1 + tkb1) is streamed; dt half rebuilt here.
        tlw = jax.nn.relu(st[:, 3 * Hp:] + h * thw1)
        tls = jax.nn.relu(tw1 * dt + tb1)
        gate = jax.nn.sigmoid(tkw2 * tlw + tw12 * tls + tb12)

        h = u * h + (1.0 - u) * c * gate
        out_ref[t] = h.astype(out_ref.dtype)     # dense (bb, Hp) store

    h_scr[...] = h


@functools.partial(jax.jit,
                   static_argnames=("matmul_dtype", "activation_dtype",
                                    "t_chunk", "batch_block"))
def modified_gru_forward(x, params, *, matmul_dtype=jnp.bfloat16,
                         activation_dtype=jnp.bfloat16,
                         t_chunk=16, batch_block=128):
    """x: (B, L, input_size) with the last column the time interval.

    Returns (outputs (B, L, H) f32, last_state (B, H) f32), matching the
    PyTorch module with h=None (zero initial state).
    """
    B, L, _ = x.shape
    H = params["wrx"].shape[0]

    Hp = _round_up(H, 128)                          # lane-dense hidden dim
    # Sublane alignment: 16 for 16-bit streamed activations, else 8.
    sub = 16 if jnp.dtype(activation_dtype).itemsize == 2 else 8
    Bs = _round_up(B, sub)
    # Batch block: as large as possible, but keep >= 2 blocks when B allows so
    # v7x's two TensorCores both get work on the "parallel" batch axis.
    bb = min(_round_up(batch_block, sub),
             max(sub, _round_up(_cdiv(Bs, 2), sub)))
    Bp = _round_up(Bs, bb)
    nb = Bp // bb

    # Timesteps per grid step: choose T so Lp = nl*T has minimal padding
    # (padded timesteps would burn MXU/EUP cycles on garbage).
    nl = _cdiv(L, min(max(t_chunk, 1), L))
    T = _cdiv(L, nl)
    Lp = nl * T

    emb = jnp.pad(x[:, :, :H].astype(jnp.float32),
                  ((0, Bp - B), (0, Lp - L), (0, Hp - H)))      # (Bp, Lp, Hp)
    dt = jnp.pad(x[:, :, -1:].astype(jnp.float32),
                 ((0, Bp - B), (0, Lp - L), (0, 0)))            # (Bp, Lp, 1)

    def pad_w(w):                                  # (H, H) -> (Hp, Hp)
        return jnp.pad(w.astype(jnp.float32), ((0, Hp - H), (0, Hp - H)))

    def pad_v(v):                                  # (H,) / (1, H) -> (1, Hp)
        v = v.reshape(1, -1).astype(jnp.float32)
        return jnp.pad(v, ((0, 0), (0, Hp - H)))

    # Fused x-side weights / biases.
    wx_all = jnp.concatenate(
        [pad_w(params["wrx"]), pad_w(params["wux"]), pad_w(params["wcx"])],
        axis=1)                                                  # (Hp, 3Hp)
    b_all = jnp.concatenate(
        [pad_v(params["br"]), pad_v(params["bu"]), pad_v(params["bc"])],
        axis=1)                                                  # (1, 3Hp)

    tp = params["time_params"]     # rows: tkw1,tkb1,thw1,tw1,tb1,tkw2,tw12,tb12
    tkw1, tkb1 = pad_v(tp[0]), pad_v(tp[1])
    tv = jnp.concatenate(
        [pad_v(tp[2]), pad_v(tp[5]), pad_v(tp[3]), pad_v(tp[4]),
         pad_v(tp[6]), pad_v(tp[7]), jnp.zeros((2, Hp), jnp.float32)],
        axis=0)                                                  # (8, Hp)

    # ---- hoisted, h-independent precompute; one transpose to time-major ----
    xg = jnp.einsum("blh,hk->blk", emb, wx_all,
                    preferred_element_type=jnp.float32) + b_all  # (Bp,Lp,3Hp)
    a_pre = emb * tkw1 + tkb1                                    # (Bp,Lp,Hp)
    stream = jnp.swapaxes(jnp.concatenate([xg, a_pre], axis=-1),
                          0, 1).astype(activation_dtype)         # (Lp,Bp,4Hp)
    dt_tm = jnp.swapaxes(dt, 0, 1)                               # (Lp,Bp,1)

    # Fused h-side weights, cast once for the MXU (bf16 by default).
    w_ruh = jnp.concatenate([pad_w(params["wrh"]), pad_w(params["wuh"])],
                            axis=1).astype(matmul_dtype)         # (Hp, 2Hp)
    w_ch = pad_w(params["wch"]).astype(matmul_dtype)             # (Hp, Hp)

    outputs_tm = pl.pallas_call(
        _gru_kernel,
        out_shape=jax.ShapeDtypeStruct((Lp, Bp, Hp), jnp.float32),
        grid_spec=pltpu.PrefetchScalarGridSpec(
            num_scalar_prefetch=0,
            grid=(nb, nl),
            in_specs=[
                pl.BlockSpec((T, bb, 4 * Hp), lambda b, l: (l, b, 0)),  # stream
                pl.BlockSpec((T, bb, 1), lambda b, l: (l, b, 0)),       # dt
                pl.BlockSpec((Hp, 2 * Hp), lambda b, l: (0, 0)),        # [Wr_h|Wu_h]
                pl.BlockSpec((Hp, Hp), lambda b, l: (0, 0)),            # Wc_h
                pl.BlockSpec((8, Hp), lambda b, l: (0, 0)),             # time vecs
            ],
            out_specs=pl.BlockSpec((T, bb, Hp), lambda b, l: (l, b, 0)),
            scratch_shapes=[pltpu.VMEM((bb, Hp), jnp.float32)],
        ),
        compiler_params=pltpu.CompilerParams(
            dimension_semantics=("parallel", "arbitrary")),  # batch ∥, time serial
    )(stream, dt_tm, w_ruh, w_ch, tv)

    outputs = jnp.swapaxes(outputs_tm[:L, :B, :H], 0, 1)   # (B, L, H) f32
    last_state = outputs_tm[L - 1, :B, :H]                 # (B, H) f32
    return outputs, last_state


def init_params(hidden_size, key):
    """Parameter init mirroring the module's __init__ shapes.

    Each nn.Linear(2H, H) weight (H, 2H) is pre-transposed and split into an
    embedding half (H, H) and a state half (H, H).  Time params are ones, as
    in the PyTorch module.
    """
    H = hidden_size

    def linear(k, fan_in, fan_out):
        wk, bk = jax.random.split(k)
        bound = 1.0 / np.sqrt(fan_in)
        w = jax.random.uniform(wk, (fan_out, fan_in), jnp.float32, -bound, bound)
        b = jax.random.uniform(bk, (fan_out,), jnp.float32, -bound, bound)
        return w, b

    kr, ku, kc = jax.random.split(key, 3)
    Wr, br = linear(kr, 2 * H, H)
    Wu, bu = linear(ku, 2 * H, H)
    Wc, bc = linear(kc, 2 * H, H)

    time_params = jnp.ones((8, H), jnp.float32)

    # TODO(synk): layer1/layer2/new_r_gate/new_gate exist in __init__ but are
    # unused in forward(); they are intentionally not materialized here.
    return {
        "wrx": Wr.T[:H], "wrh": Wr.T[H:], "br": br.reshape(1, H),
        "wux": Wu.T[:H], "wuh": Wu.T[H:], "bu": bu.reshape(1, H),
        "wcx": Wc.T[:H], "wch": Wc.T[H:], "bc": bc.reshape(1, H),
        "time_params": time_params,
    }


def reference_forward(x, params):
    """Pure-JAX replica of the PyTorch forward, for correctness checking."""
    B, L, _ = x.shape
    H = params["wrx"].shape[0]
    tp = params["time_params"]
    h = jnp.zeros((B, H), jnp.float32)
    outs = []
    for l in range(L):
        inp = x[:, l, :H]
        dt = x[:, l, -1:]
        r = jax.nn.sigmoid(inp @ params["wrx"] + h @ params["wrh"] + params["br"])
        u = jax.nn.sigmoid(inp @ params["wux"] + h @ params["wuh"] + params["bu"])
        c = jnp.tanh(inp @ params["wcx"] + (r * h) @ params["wch"] + params["bc"])
        tlw = jax.nn.relu(inp * tp[0] + h * tp[2] + tp[1])
        tls = jax.nn.relu(tp[3] * dt + tp[4])
        gate = jax.nn.sigmoid(tp[5] * tlw + tp[6] * tls + tp[7])
        h = u * h + (1.0 - u) * c * gate
        outs.append(h)
    return jnp.stack(outs, axis=1), h


if __name__ == "__main__":
    B, L, H = 2, 16, 32
    input_size = H + 1        # embedding columns + trailing time-interval column

    key = jax.random.PRNGKey(0)
    kx, kp, kt = jax.random.split(key, 3)
    x = jax.random.normal(kx, (B, L, input_size), jnp.float32)
    params = init_params(H, kp)
    # Perturb the (all-ones) time params so the check is sensitive to each
    # time-parameter's distinct role.
    params["time_params"] = (params["time_params"]
                             + 0.1 * jax.random.normal(kt, (8, H), jnp.float32))

    ref_out, ref_h = reference_forward(x, params)

    # Default path: bf16 MXU weights + bf16 streamed activations, f32 state.
    outputs, h_last = modified_gru_forward(x, params)
    outputs, h_last = jax.block_until_ready((outputs, h_last))
    np.testing.assert_allclose(np.asarray(outputs), np.asarray(ref_out),
                               rtol=5e-2, atol=5e-2)
    np.testing.assert_allclose(np.asarray(h_last), np.asarray(ref_h),
                               rtol=5e-2, atol=5e-2)

    # Full-f32 path (weights + streamed activations in f32): tight tolerance.
    out_f32, h_f32 = modified_gru_forward(x, params,
                                          matmul_dtype=jnp.float32,
                                          activation_dtype=jnp.float32)
    out_f32, h_f32 = jax.block_until_ready((out_f32, h_f32))
    np.testing.assert_allclose(np.asarray(out_f32), np.asarray(ref_out),
                               rtol=1e-4, atol=1e-4)
    np.testing.assert_allclose(np.asarray(h_f32), np.asarray(ref_h),
                               rtol=1e-4, atol=1e-4)

    assert outputs.shape == (B, L, H) and h_last.shape == (B, H)
    print("KERNEL_OK")
</pallas_src>

<mosaic_0001>
module attributes {stable_mosaic.version = 11 : i64} {
  func.func @_gru_kernel(%arg0: i32, %arg1: i32, %arg2: memref<16x16x512xbf16, #tpu.memory_space<vmem>>, %arg3: memref<16x16x1xf32, #tpu.memory_space<vmem>>, %arg4: memref<128x256xbf16, #tpu.memory_space<vmem>>, %arg5: memref<128x128xbf16, #tpu.memory_space<vmem>>, %arg6: memref<8x128xf32, #tpu.memory_space<vmem>>, %arg7: memref<16x16x128xf32, #tpu.memory_space<vmem>>, %arg8: memref<16x128xf32, #tpu.memory_space<vmem>>) attributes {dimension_semantics = [#tpu.dimension_semantics<parallel>, #tpu.dimension_semantics<arbitrary>], iteration_bounds = array<i64: 1, 1>, scalar_prefetch = 0 : i64, scratch_operands = 1 : i64, tpu.core_type = #tpu.core_type<tc>, window_params = [{transform_indices = @transform_0, window_bounds = array<i64: 16, 16, 512>}, {transform_indices = @transform_1, window_bounds = array<i64: 16, 16, 1>}, {pipeline_mode = #tpu.pipeline_mode<synchronous>, transform_indices = @transform_2, window_bounds = array<i64: 128, 256>}, {pipeline_mode = #tpu.pipeline_mode<synchronous>, transform_indices = @transform_3, window_bounds = array<i64: 128, 128>}, {pipeline_mode = #tpu.pipeline_mode<synchronous>, transform_indices = @transform_4, window_bounds = array<i64: 8, 128>}, {transform_indices = @transform_5, window_bounds = array<i64: 16, 16, 128>}]} {
    %c0_i32 = arith.constant 0 : i32
    %0 = arith.cmpi eq, %arg1, %c0_i32 : i32
    %1 = arith.extui %0 : i1 to i32
    %c0_i32_0 = arith.constant 0 : i32
    %2 = arith.cmpi ne, %1, %c0_i32_0 : i32
    scf.if %2 {
      %cst_336 = arith.constant 0.000000e+00 : f32
      %967 = vector.broadcast %cst_336 : f32 to vector<16x128xf32>
      %c0_337 = arith.constant 0 : index
      %c0_338 = arith.constant 0 : index
      %968 = vector.load %arg8[%c0_337, %c0_338] : memref<16x128xf32, #tpu.memory_space<vmem>>, vector<16x128xf32>
      tpu.vector_store %arg8[%c0_337, %c0_338], %967 {strides = array<i32>} : memref<16x128xf32, #tpu.memory_space<vmem>>, vector<16x128xf32>,
    } else {
    }
    %c0 = arith.constant 0 : index
    %c0_1 = arith.constant 0 : index
    %3 = vector.load %arg6[%c0, %c0_1] : memref<8x128xf32, #tpu.memory_space<vmem>>, vector<1x128xf32>
    %4 = vector.shape_cast %3 : vector<1x128xf32> to vector<1x128xf32>
    %5 = vector.broadcast %4 : vector<1x128xf32> to vector<16x128xf32>
    %c1 = arith.constant 1 : index
    %c0_2 = arith.constant 0 : index
    %6 = vector.load %arg6[%c1, %c0_2] : memref<8x128xf32, #tpu.memory_space<vmem>>, vector<1x128xf32>
    %7 = vector.shape_cast %6 : vector<1x128xf32> to vector<1x128xf32>
    %8 = vector.broadcast %7 : vector<1x128xf32> to vector<16x128xf32>
    %c2 = arith.constant 2 : index
    %c0_3 = arith.constant 0 : index
    %9 = vector.load %arg6[%c2, %c0_3] : memref<8x128xf32, #tpu.memory_space<vmem>>, vector<1x128xf32>
    %10 = vector.shape_cast %9 : vector<1x128xf32> to vector<1x128xf32>
    %11 = vector.broadcast %10 : vector<1x128xf32> to vector<16x128xf32>
    %c3 = arith.constant 3 : index
    %c0_4 = arith.constant 0 : index
    %12 = vector.load %arg6[%c3, %c0_4] : memref<8x128xf32, #tpu.memory_space<vmem>>, vector<1x128xf32>
    %13 = vector.shape_cast %12 : vector<1x128xf32> to vector<1x128xf32>
    %14 = vector.broadcast %13 : vector<1x128xf32> to vector<16x128xf32>
    %c4 = arith.constant 4 : index
    %c0_5 = arith.constant 0 : index
    %15 = vector.load %arg6[%c4, %c0_5] : memref<8x128xf32, #tpu.memory_space<vmem>>, vector<1x128xf32>
    %16 = vector.shape_cast %15 : vector<1x128xf32> to vector<1x128xf32>
    %17 = vector.broadcast %16 : vector<1x128xf32> to vector<16x128xf32>
    %c5 = arith.constant 5 : index
    %c0_6 = arith.constant 0 : index
    %18 = vector.load %arg6[%c5, %c0_6] : memref<8x128xf32, #tpu.memory_space<vmem>>, vector<1x128xf32>
    %19 = vector.shape_cast %18 : vector<1x128xf32> to vector<1x128xf32>
    %20 = vector.broadcast %19 : vector<1x128xf32> to vector<16x128xf32>
    %c0_7 = arith.constant 0 : index
    %c0_8 = arith.constant 0 : index
    %21 = vector.load %arg8[%c0_7, %c0_8] : memref<16x128xf32, #tpu.memory_space<vmem>>, vector<16x128xf32>
    %c0_9 = arith.constant 0 : index
    %c0_10 = arith.constant 0 : index
    %c0_11 = arith.constant 0 : index
    %22 = vector.load %arg2[%c0_9, %c0_10, %c0_11] : memref<16x16x512xbf16, #tpu.memory_space<vmem>>, vector<1x16x512xbf16>
    %23 = vector.shape_cast %22 : vector<1x16x512xbf16> to vector<16x512xbf16>
    %24 = arith.extf %23 : vector<16x512xbf16> to vector<16x512xf32>
    %c0_12 = arith.constant 0 : index
    %c0_13 = arith.constant 0 : index
    %c0_14 = arith.constant 0 : index
    %25 = vector.load %arg3[%c0_12, %c0_13, %c0_14] : memref<16x16x1xf32, #tpu.memory_space<vmem>>, vector<1x16x1xf32>
    %26 = vector.shape_cast %25 : vector<1x16x1xf32> to vector<16x1xf32>
    %27 = arith.truncf %21 : vector<16x128xf32> to vector<16x128xbf16>
    %c0_15 = arith.constant 0 : index
    %c0_16 = arith.constant 0 : index
    %28 = vector.load %arg4[%c0_15, %c0_16] : memref<128x256xbf16, #tpu.memory_space<vmem>>, vector<128x256xbf16>
    %cst = arith.constant dense<0.000000e+00> : vector<16x256xf32>
    %29 = tpu.matmul %27, %28, %cst {dimension_numbers = #tpu.dot_dimension_numbers<[1], [0], [0], [1], [0, 0, 1, 1], [], []>} : vector<16x128xbf16>, vector<128x256xbf16>, vector<16x256xf32> -> vector<16x256xf32>
    %30 = vector.extract_strided_slice %24 {offsets = [0, 0], sizes = [16, 128], strides = [1, 1]} : vector<16x512xf32> to vector<16x128xf32>
    %31 = vector.extract_strided_slice %29 {offsets = [0, 0], sizes = [16, 128], strides = [1, 1]} : vector<16x256xf32> to vector<16x128xf32>
    %32 = arith.addf %30, %31 : vector<16x128xf32>
    %33 = arith.negf %32 : vector<16x128xf32>
    %34 = math.exp %33 : vector<16x128xf32>
    %cst_17 = arith.constant 1.000000e+00 : f32
    %35 = vector.broadcast %cst_17 : f32 to vector<16x128xf32>
    %36 = arith.addf %35, %34 : vector<16x128xf32>
    %37 = arith.divf %35, %36 : vector<16x128xf32>
    %38 = vector.extract_strided_slice %24 {offsets = [0, 128], sizes = [16, 128], strides = [1, 1]} : vector<16x512xf32> to vector<16x128xf32>
    %39 = vector.extract_strided_slice %29 {offsets = [0, 128], sizes = [16, 128], strides = [1, 1]} : vector<16x256xf32> to vector<16x128xf32>
    %40 = arith.addf %38, %39 : vector<16x128xf32>
    %41 = arith.negf %40 : vector<16x128xf32>
    %42 = math.exp %41 : vector<16x128xf32>
    %cst_18 = arith.constant 1.000000e+00 : f32
    %43 = vector.broadcast %cst_18 : f32 to vector<16x128xf32>
    %44 = arith.addf %43, %42 : vector<16x128xf32>
    %45 = arith.divf %43, %44 : vector<16x128xf32>
    %46 = vector.extract_strided_slice %24 {offsets = [0, 256], sizes = [16, 128], strides = [1, 1]} : vector<16x512xf32> to vector<16x128xf32>
    %47 = arith.mulf %37, %21 : vector<16x128xf32>
    %48 = arith.truncf %47 : vector<16x128xf32> to vector<16x128xbf16>
    %c0_19 = arith.constant 0 : index
    %c0_20 = arith.constant 0 : index
    %49 = vector.load %arg5[%c0_19, %c0_20] : memref<128x128xbf16, #tpu.memory_space<vmem>>, vector<128x128xbf16>
    %cst_21 = arith.constant dense<0.000000e+00> : vector<16x128xf32>
    %50 = tpu.matmul %48, %49, %cst_21 {dimension_numbers = #tpu.dot_dimension_numbers<[1], [0], [0], [1], [0, 0, 1, 1], [], []>} : vector<16x128xbf16>, vector<128x128xbf16>, vector<16x128xf32> -> vector<16x128xf32>
    %51 = arith.addf %46, %50 : vector<16x128xf32>
    %52 = math.tanh %51 : vector<16x128xf32>
    %53 = vector.extract_strided_slice %24 {offsets = [0, 384], sizes = [16, 128], strides = [1, 1]} : vector<16x512xf32> to vector<16x128xf32>
    %54 = arith.mulf %21, %5 : vector<16x128xf32>
    %55 = arith.addf %53, %54 : vector<16x128xf32>
    %cst_22 = arith.constant 0.000000e+00 : f32
    %56 = vector.broadcast %cst_22 : f32 to vector<16x128xf32>
    %57 = arith.maximumf %55, %56 : vector<16x128xf32>
    %58 = vector.broadcast %26 : vector<16x1xf32> to vector<16x128xf32>
    %59 = arith.mulf %11, %58 : vector<16x128xf32>
    %60 = arith.addf %59, %14 : vector<16x128xf32>
    %cst_23 = arith.constant 0.000000e+00 : f32
    %61 = vector.broadcast %cst_23 : f32 to vector<16x128xf32>
    %62 = arith.maximumf %60, %61 : vector<16x128xf32>
    %63 = arith.mulf %8, %57 : vector<16x128xf32>
    %64 = arith.mulf %17, %62 : vector<16x128xf32>
    %65 = arith.addf %63, %64 : vector<16x128xf32>
    %66 = arith.addf %65, %20 : vector<16x128xf32>
    %67 = arith.negf %66 : vector<16x128xf32>
    %68 = math.exp %67 : vector<16x128xf32>
    %cst_24 = arith.constant 1.000000e+00 : f32
    %69 = vector.broadcast %cst_24 : f32 to vector<16x128xf32>
    %70 = arith.addf %69, %68 : vector<16x128xf32>
    %71 = arith.divf %69, %70 : vector<16x128xf32>
    %72 = arith.mulf %45, %21 : vector<16x128xf32>
    %cst_25 = arith.constant 1.000000e+00 : f32
    %73 = vector.broadcast %cst_25 : f32 to vector<16x128xf32>
    %74 = arith.subf %73, %45 : vector<16x128xf32>
    %75 = arith.mulf %74, %52 : vector<16x128xf32>
    %76 = arith.mulf %75, %71 : vector<16x128xf32>
    %77 = arith.addf %72, %76 : vector<16x128xf32>
    %c0_26 = arith.constant 0 : index
    %c0_27 = arith.constant 0 : index
    %c0_28 = arith.constant 0 : index
    %78 = vector.load %arg7[%c0_26, %c0_27, %c0_28] : memref<16x16x128xf32, #tpu.memory_space<vmem>>, vector<1x16x128xf32>
    %79 = vector.shape_cast %78 : vector<1x16x128xf32> to vector<16x128xf32>
    %80 = vector.shape_cast %77 : vector<16x128xf32> to vector<1x16x128xf32>
    tpu.vector_store %arg7[%c0_26, %c0_27, %c0_28], %80 {strides = array<i32>} : memref<16x16x128xf32, #tpu.memory_space<vmem>>, vector<1x16x128xf32>,
    %c1_29 = arith.constant 1 : index
    %c0_30 = arith.constant 0 : index
    %c0_31 = arith.constant 0 : index
    %81 = vector.load %arg2[%c1_29, %c0_30, %c0_31] : memref<16x16x512xbf16, #tpu.memory_space<vmem>>, vector<1x16x512xbf16>
    %82 = vector.shape_cast %81 : vector<1x16x512xbf16> to vector<16x512xbf16>
    %83 = arith.extf %82 : vector<16x512xbf16> to vector<16x512xf32>
    %c1_32 = arith.constant 1 : index
    %c0_33 = arith.constant 0 : index
    %c0_34 = arith.constant 0 : index
    %84 = vector.load %arg3[%c1_32, %c0_33, %c0_34] : memref<16x16x1xf32, #tpu.memory_space<vmem>>, vector<1x16x1xf32>
    %85 = vector.shape_cast %84 : vector<1x16x1xf32> to vector<16x1xf32>
    %86 = arith.truncf %77 : vector<16x128xf32> to vector<16x128xbf16>
    %c0_35 = arith.constant 0 : index
    %c0_36 = arith.constant 0 : index
    %87 = vector.load %arg4[%c0_35, %c0_36] : memref<128x256xbf16, #tpu.memory_space<vmem>>, vector<128x256xbf16>
    %cst_37 = arith.constant dense<0.000000e+00> : vector<16x256xf32>
    %88 = tpu.matmul %86, %87, %cst_37 {dimension_numbers = #tpu.dot_dimension_numbers<[1], [0], [0], [1], [0, 0, 1, 1], [], []>} : vector<16x128xbf16>, vector<128x256xbf16>, vector<16x256xf32> -> vector<16x256xf32>
    %89 = vector.extract_strided_slice %83 {offsets = [0, 0], sizes = [16, 128], strides = [1, 1]} : vector<16x512xf32> to vector<16x128xf32>
    %90 = vector.extract_strided_slice %88 {offsets = [0, 0], sizes = [16, 128], strides = [1, 1]} : vector<16x256xf32> to vector<16x128xf32>
    %91 = arith.addf %89, %90 : vector<16x128xf32>
    %92 = arith.negf %91 : vector<16x128xf32>
    %93 = math.exp %92 : vector<16x128xf32>
    %cst_38 = arith.constant 1.000000e+00 : f32
    %94 = vector.broadcast %cst_38 : f32 to vector<16x128xf32>
    %95 = arith.addf %94, %93 : vector<16x128xf32>
    %96 = arith.divf %94, %95 : vector<16x128xf32>
    %97 = vector.extract_strided_slice %83 {offsets = [0, 128], sizes = [16, 128], strides = [1, 1]} : vector<16x512xf32> to vector<16x128xf32>
    %98 = vector.extract_strided_slice %88 {offsets = [0, 128], sizes = [16, 128], strides = [1, 1]} : vector<16x256xf32> to vector<16x128xf32>
    %99 = arith.addf %97, %98 : vector<16x128xf32>
    %100 = arith.negf %99 : vector<16x128xf32>
    %101 = math.exp %100 : vector<16x128xf32>
    %cst_39 = arith.constant 1.000000e+00 : f32
    %102 = vector.broadcast %cst_39 : f32 to vector<16x128xf32>
    %103 = arith.addf %102, %101 : vector<16x128xf32>
    %104 = arith.divf %102, %103 : vector<16x128xf32>
    %105 = vector.extract_strided_slice %83 {offsets = [0, 256], sizes = [16, 128], strides = [1, 1]} : vector<16x512xf32> to vector<16x128xf32>
    %106 = arith.mulf %96, %77 : vector<16x128xf32>
    %107 = arith.truncf %106 : vector<16x128xf32> to vector<16x128xbf16>
    %c0_40 = arith.constant 0 : index
    %c0_41 = arith.constant 0 : index
    %108 = vector.load %arg5[%c0_40, %c0_41] : memref<128x128xbf16, #tpu.memory_space<vmem>>, vector<128x128xbf16>
    %cst_42 = arith.constant dense<0.000000e+00> : vector<16x128xf32>
    %109 = tpu.matmul %107, %108, %cst_42 {dimension_numbers = #tpu.dot_dimension_numbers<[1], [0], [0], [1], [0, 0, 1, 1], [], []>} : vector<16x128xbf16>, vector<128x128xbf16>, vector<16x128xf32> -> vector<16x128xf32>
    %110 = arith.addf %105, %109 : vector<16x128xf32>
    %111 = math.tanh %110 : vector<16x128xf32>
    %112 = vector.extract_strided_slice %83 {offsets = [0, 384], sizes = [16, 128], strides = [1, 1]} : vector<16x512xf32> to vector<16x128xf32>
    %113 = arith.mulf %77, %5 : vector<16x128xf32>
    %114 = arith.addf %112, %113 : vector<16x128xf32>
    %cst_43 = arith.constant 0.000000e+00 : f32
    %115 = vector.broadcast %cst_43 : f32 to vector<16x128xf32>
    %116 = arith.maximumf %114, %115 : vector<16x128xf32>
    %117 = vector.broadcast %85 : vector<16x1xf32> to vector<16x128xf32>
    %118 = arith.mulf %11, %117 : vector<16x128xf32>
    %119 = arith.addf %118, %14 : vector<16x128xf32>
    %cst_44 = arith.constant 0.000000e+00 : f32
    %120 = vector.broadcast %cst_44 : f32 to vector<16x128xf32>
    %121 = arith.maximumf %119, %120 : vector<16x128xf32>
    %122 = arith.mulf %8, %116 : vector<16x128xf32>
    %123 = arith.mulf %17, %121 : vector<16x128xf32>
    %124 = arith.addf %122, %123 : vector<16x128xf32>
    %125 = arith.addf %124, %20 : vector<16x128xf32>
    %126 = arith.negf %125 : vector<16x128xf32>
    %127 = math.exp %126 : vector<16x128xf32>
    %cst_45 = arith.constant 1.000000e+00 : f32
    %128 = vector.broadcast %cst_45 : f32 to vector<16x128xf32>
    %129 = arith.addf %128, %127 : vector<16x128xf32>
    %130 = arith.divf %128, %129 : vector<16x128xf32>
    %131 = arith.mulf %104, %77 : vector<16x128xf32>
    %cst_46 = arith.constant 1.000000e+00 : f32
    %132 = vector.broadcast %cst_46 : f32 to vector<16x128xf32>
    %133 = arith.subf %132, %104 : vector<16x128xf32>
    %134 = arith.mulf %133, %111 : vector<16x128xf32>
    %135 = arith.mulf %134, %130 : vector<16x128xf32>
    %136 = arith.addf %131, %135 : vector<16x128xf32>
    %c1_47 = arith.constant 1 : index
    %c0_48 = arith.constant 0 : index
    %c0_49 = arith.constant 0 : index
    %137 = vector.load %arg7[%c1_47, %c0_48, %c0_49] : memref<16x16x128xf32, #tpu.memory_space<vmem>>, vector<1x16x128xf32>
    %138 = vector.shape_cast %137 : vector<1x16x128xf32> to vector<16x128xf32>
    %139 = vector.shape_cast %136 : vector<16x128xf32> to vector<1x16x128xf32>
    tpu.vector_store %arg7[%c1_47, %c0_48, %c0_49], %139 {strides = array<i32>} : memref<16x16x128xf32, #tpu.memory_space<vmem>>, vector<1x16x128xf32>,
    %c2_50 = arith.constant 2 : index
    %c0_51 = arith.constant 0 : index
    %c0_52 = arith.constant 0 : index
    %140 = vector.load %arg2[%c2_50, %c0_51, %c0_52] : memref<16x16x512xbf16, #tpu.memory_space<vmem>>, vector<1x16x512xbf16>
    %141 = vector.shape_cast %140 : vector<1x16x512xbf16> to vector<16x512xbf16>
    %142 = arith.extf %141 : vector<16x512xbf16> to vector<16x512xf32>
    %c2_53 = arith.constant 2 : index
    %c0_54 = arith.constant 0 : index
    %c0_55 = arith.constant 0 : index
    %143 = vector.load %arg3[%c2_53, %c0_54, %c0_55] : memref<16x16x1xf32, #tpu.memory_space<vmem>>, vector<1x16x1xf32>
    %144 = vector.shape_cast %143 : vector<1x16x1xf32> to vector<16x1xf32>
    %145 = arith.truncf %136 : vector<16x128xf32> to vector<16x128xbf16>
    %c0_56 = arith.constant 0 : index
    %c0_57 = arith.constant 0 : index
    %146 = vector.load %arg4[%c0_56, %c0_57] : memref<128x256xbf16, #tpu.memory_space<vmem>>, vector<128x256xbf16>
    %cst_58 = arith.constant dense<0.000000e+00> : vector<16x256xf32>
    %147 = tpu.matmul %145, %146, %cst_58 {dimension_numbers = #tpu.dot_dimension_numbers<[1], [0], [0], [1], [0, 0, 1, 1], [], []>} : vector<16x128xbf16>, vector<128x256xbf16>, vector<16x256xf32> -> vector<16x256xf32>
    %148 = vector.extract_strided_slice %142 {offsets = [0, 0], sizes = [16, 128], strides = [1, 1]} : vector<16x512xf32> to vector<16x128xf32>
    %149 = vector.extract_strided_slice %147 {offsets = [0, 0], sizes = [16, 128], strides = [1, 1]} : vector<16x256xf32> to vector<16x128xf32>
    %150 = arith.addf %148, %149 : vector<16x128xf32>
    %151 = arith.negf %150 : vector<16x128xf32>
    %152 = math.exp %151 : vector<16x128xf32>
    %cst_59 = arith.constant 1.000000e+00 : f32
    %153 = vector.broadcast %cst_59 : f32 to vector<16x128xf32>
    %154 = arith.addf %153, %152 : vector<16x128xf32>
    %155 = arith.divf %153, %154 : vector<16x128xf32>
    %156 = vector.extract_strided_slice %142 {offsets = [0, 128], sizes = [16, 128], strides = [1, 1]} : vector<16x512xf32> to vector<16x128xf32>
    %157 = vector.extract_strided_slice %147 {offsets = [0, 128], sizes = [16, 128], strides = [1, 1]} : vector<16x256xf32> to vector<16x128xf32>
    %158 = arith.addf %156, %157 : vector<16x128xf32>
    %159 = arith.negf %158 : vector<16x128xf32>
    %160 = math.exp %159 : vector<16x128xf32>
    %cst_60 = arith.constant 1.000000e+00 : f32
    %161 = vector.broadcast %cst_60 : f32 to vector<16x128xf32>
    %162 = arith.addf %161, %160 : vector<16x128xf32>
    %163 = arith.divf %161, %162 : vector<16x128xf32>
    %164 = vector.extract_strided_slice %142 {offsets = [0, 256], sizes = [16, 128], strides = [1, 1]} : vector<16x512xf32> to vector<16x128xf32>
    %165 = arith.mulf %155, %136 : vector<16x128xf32>
    %166 = arith.truncf %165 : vector<16x128xf32> to vector<16x128xbf16>
    %c0_61 = arith.constant 0 : index
    %c0_62 = arith.constant 0 : index
    %167 = vector.load %arg5[%c0_61, %c0_62] : memref<128x128xbf16, #tpu.memory_space<vmem>>, vector<128x128xbf16>
    %cst_63 = arith.constant dense<0.000000e+00> : vector<16x128xf32>
    %168 = tpu.matmul %166, %167, %cst_63 {dimension_numbers = #tpu.dot_dimension_numbers<[1], [0], [0], [1], [0, 0, 1, 1], [], []>} : vector<16x128xbf16>, vector<128x128xbf16>, vector<16x128xf32> -> vector<16x128xf32>
    %169 = arith.addf %164, %168 : vector<16x128xf32>
    %170 = math.tanh %169 : vector<16x128xf32>
    %171 = vector.extract_strided_slice %142 {offsets = [0, 384], sizes = [16, 128], strides = [1, 1]} : vector<16x512xf32> to vector<16x128xf32>
    %172 = arith.mulf %136, %5 : vector<16x128xf32>
    %173 = arith.addf %171, %172 : vector<16x128xf32>
    %cst_64 = arith.constant 0.000000e+00 : f32
    %174 = vector.broadcast %cst_64 : f32 to vector<16x128xf32>
    %175 = arith.maximumf %173, %174 : vector<16x128xf32>
    %176 = vector.broadcast %144 : vector<16x1xf32> to vector<16x128xf32>
    %177 = arith.mulf %11, %176 : vector<16x128xf32>
    %178 = arith.addf %177, %14 : vector<16x128xf32>
    %cst_65 = arith.constant 0.000000e+00 : f32
    %179 = vector.broadcast %cst_65 : f32 to vector<16x128xf32>
    %180 = arith.maximumf %178, %179 : vector<16x128xf32>
    %181 = arith.mulf %8, %175 : vector<16x128xf32>
    %182 = arith.mulf %17, %180 : vector<16x128xf32>
    %183 = arith.addf %181, %182 : vector<16x128xf32>
    %184 = arith.addf %183, %20 : vector<16x128xf32>
    %185 = arith.negf %184 : vector<16x128xf32>
    %186 = math.exp %185 : vector<16x128xf32>
    %cst_66 = arith.constant 1.000000e+00 : f32
    %187 = vector.broadcast %cst_66 : f32 to vector<16x128xf32>
    %188 = arith.addf %187, %186 : vector<16x128xf32>
    %189 = arith.divf %187, %188 : vector<16x128xf32>
    %190 = arith.mulf %163, %136 : vector<16x128xf32>
    %cst_67 = arith.constant 1.000000e+00 : f32
    %191 = vector.broadcast %cst_67 : f32 to vector<16x128xf32>
    %192 = arith.subf %191, %163 : vector<16x128xf32>
    %193 = arith.mulf %192, %170 : vector<16x128xf32>
    %194 = arith.mulf %193, %189 : vector<16x128xf32>
    %195 = arith.addf %190, %194 : vector<16x128xf32>
    %c2_68 = arith.constant 2 : index
    %c0_69 = arith.constant 0 : index
    %c0_70 = arith.constant 0 : index
    %196 = vector.load %arg7[%c2_68, %c0_69, %c0_70] : memref<16x16x128xf32, #tpu.memory_space<vmem>>, vector<1x16x128xf32>
    %197 = vector.shape_cast %196 : vector<1x16x128xf32> to vector<16x128xf32>
    %198 = vector.shape_cast %195 : vector<16x128xf32> to vector<1x16x128xf32>
    tpu.vector_store %arg7[%c2_68, %c0_69, %c0_70], %198 {strides = array<i32>} : memref<16x16x128xf32, #tpu.memory_space<vmem>>, vector<1x16x128xf32>,
    %c3_71 = arith.constant 3 : index
    %c0_72 = arith.constant 0 : index
    %c0_73 = arith.constant 0 : index
    %199 = vector.load %arg2[%c3_71, %c0_72, %c0_73] : memref<16x16x512xbf16, #tpu.memory_space<vmem>>, vector<1x16x512xbf16>
    %200 = vector.shape_cast %199 : vector<1x16x512xbf16> to vector<16x512xbf16>
    %201 = arith.extf %200 : vector<16x512xbf16> to vector<16x512xf32>
    %c3_74 = arith.constant 3 : index
    %c0_75 = arith.constant 0 : index
    %c0_76 = arith.constant 0 : index
    %202 = vector.load %arg3[%c3_74, %c0_75, %c0_76] : memref<16x16x1xf32, #tpu.memory_space<vmem>>, vector<1x16x1xf32>
    %203 = vector.shape_cast %202 : vector<1x16x1xf32> to vector<16x1xf32>
    %204 = arith.truncf %195 : vector<16x128xf32> to vector<16x128xbf16>
    %c0_77 = arith.constant 0 : index
    %c0_78 = arith.constant 0 : index
    %205 = vector.load %arg4[%c0_77, %c0_78] : memref<128x256xbf16, #tpu.memory_space<vmem>>, vector<128x256xbf16>
    %cst_79 = arith.constant dense<0.000000e+00> : vector<16x256xf32>
    %206 = tpu.matmul %204, %205, %cst_79 {dimension_numbers = #tpu.dot_dimension_numbers<[1], [0], [0], [1], [0, 0, 1, 1], [], []>} : vector<16x128xbf16>, vector<128x256xbf16>, vector<16x256xf32> -> vector<16x256xf32>
    %207 = vector.extract_strided_slice %201 {offsets = [0, 0], sizes = [16, 128], strides = [1, 1]} : vector<16x512xf32> to vector<16x128xf32>
    %208 = vector.extract_strided_slice %206 {offsets = [0, 0], sizes = [16, 128], strides = [1, 1]} : vector<16x256xf32> to vector<16x128xf32>
    %209 = arith.addf %207, %208 : vector<16x128xf32>
    %210 = arith.negf %209 : vector<16x128xf32>
    %211 = math.exp %210 : vector<16x128xf32>
    %cst_80 = arith.constant 1.000000e+00 : f32
    %212 = vector.broadcast %cst_80 : f32 to vector<16x128xf32>
    %213 = arith.addf %212, %211 : vector<16x128xf32>
    %214 = arith.divf %212, %213 : vector<16x128xf32>
    %215 = vector.extract_strided_slice %201 {offsets = [0, 128], sizes = [16, 128], strides = [1, 1]} : vector<16x512xf32> to vector<16x128xf32>
    %216 = vector.extract_strided_slice %206 {offsets = [0, 128], sizes = [16, 128], strides = [1, 1]} : vector<16x256xf32> to vector<16x128xf32>
    %217 = arith.addf %215, %216 : vector<16x128xf32>
    %218 = arith.negf %217 : vector<16x128xf32>
    %219 = math.exp %218 : vector<16x128xf32>
    %cst_81 = arith.constant 1.000000e+00 : f32
    %220 = vector.broadcast %cst_81 : f32 to vector<16x128xf32>
    %221 = arith.addf %220, %219 : vector<16x128xf32>
    %222 = arith.divf %220, %221 : vector<16x128xf32>
    %223 = vector.extract_strided_slice %201 {offsets = [0, 256], sizes = [16, 128], strides = [1, 1]} : vector<16x512xf32> to vector<16x128xf32>
    %224 = arith.mulf %214, %195 : vector<16x128xf32>
    %225 = arith.truncf %224 : vector<16x128xf32> to vector<16x128xbf16>
    %c0_82 = arith.constant 0 : index
    %c0_83 = arith.constant 0 : index
    %226 = vector.load %arg5[%c0_82, %c0_83] : memref<128x128xbf16, #tpu.memory_space<vmem>>, vector<128x128xbf16>
    %cst_84 = arith.constant dense<0.000000e+00> : vector<16x128xf32>
    %227 = tpu.matmul %225, %226, %cst_84 {dimension_numbers = #tpu.dot_dimension_numbers<[1], [0], [0], [1], [0, 0, 1, 1], [], []>} : vector<16x128xbf16>, vector<128x128xbf16>, vector<16x128xf32> -> vector<16x128xf32>
    %228 = arith.addf %223, %227 : vector<16x128xf32>
    %229 = math.tanh %228 : vector<16x128xf32>
    %230 = vector.extract_strided_slice %201 {offsets = [0, 384], sizes = [16, 128], strides = [1, 1]} : vector<16x512xf32> to vector<16x128xf32>
    %231 = arith.mulf %195, %5 : vector<16x128xf32>
    %232 = arith.addf %230, %231 : vector<16x128xf32>
    %cst_85 = arith.constant 0.000000e+00 : f32
    %233 = vector.broadcast %cst_85 : f32 to vector<16x128xf32>
    %234 = arith.maximumf %232, %233 : vector<16x128xf32>
    %235 = vector.broadcast %203 : vector<16x1xf32> to vector<16x128xf32>
    %236 = arith.mulf %11, %235 : vector<16x128xf32>
    %237 = arith.addf %236, %14 : vector<16x128xf32>
    %cst_86 = arith.constant 0.000000e+00 : f32
    %238 = vector.broadcast %cst_86 : f32 to vector<16x128xf32>
    %239 = arith.maximumf %237, %238 : vector<16x128xf32>
    %240 = arith.mulf %8, %234 : vector<16x128xf32>
    %241 = arith.mulf %17, %239 : vector<16x128xf32>
    %242 = arith.addf %240, %241 : vector<16x128xf32>
    %243 = arith.addf %242, %20 : vector<16x128xf32>
    %244 = arith.negf %243 : vector<16x128xf32>
    %245 = math.exp %244 : vector<16x128xf32>
    %cst_87 = arith.constant 1.000000e+00 : f32
    %246 = vector.broadcast %cst_87 : f32 to vector<16x128xf32>
    %247 = arith.addf %246, %245 : vector<16x128xf32>
    %248 = arith.divf %246, %247 : vector<16x128xf32>
    %249 = arith.mulf %222, %195 : vector<16x128xf32>
    %cst_88 = arith.constant 1.000000e+00 : f32
    %250 = vector.broadcast %cst_88 : f32 to vector<16x128xf32>
    %251 = arith.subf %250, %222 : vector<16x128xf32>
    %252 = arith.mulf %251, %229 : vector<16x128xf32>
    %253 = arith.mulf %252, %248 : vector<16x128xf32>
    %254 = arith.addf %249, %253 : vector<16x128xf32>
    %c3_89 = arith.constant 3 : index
    %c0_90 = arith.constant 0 : index
    %c0_91 = arith.constant 0 : index
    %255 = vector.load %arg7[%c3_89, %c0_90, %c0_91] : memref<16x16x128xf32, #tpu.memory_space<vmem>>, vector<1x16x128xf32>
    %256 = vector.shape_cast %255 : vector<1x16x128xf32> to vector<16x128xf32>
    %257 = vector.shape_cast %254 : vector<16x128xf32> to vector<1x16x128xf32>
    tpu.vector_store %arg7[%c3_89, %c0_90, %c0_91], %257 {strides = array<i32>} : memref<16x16x128xf32, #tpu.memory_space<vmem>>, vector<1x16x128xf32>,
    %c4_92 = arith.constant 4 : index
    %c0_93 = arith.constant 0 : index
    %c0_94 = arith.constant 0 : index
    %258 = vector.load %arg2[%c4_92, %c0_93, %c0_94] : memref<16x16x512xbf16, #tpu.memory_space<vmem>>, vector<1x16x512xbf16>
    %259 = vector.shape_cast %258 : vector<1x16x512xbf16> to vector<16x512xbf16>
    %260 = arith.extf %259 : vector<16x512xbf16> to vector<16x512xf32>
    %c4_95 = arith.constant 4 : index
    %c0_96 = arith.constant 0 : index
    %c0_97 = arith.constant 0 : index
    %261 = vector.load %arg3[%c4_95, %c0_96, %c0_97] : memref<16x16x1xf32, #tpu.memory_space<vmem>>, vector<1x16x1xf32>
    %262 = vector.shape_cast %261 : vector<1x16x1xf32> to vector<16x1xf32>
    %263 = arith.truncf %254 : vector<16x128xf32> to vector<16x128xbf16>
    %c0_98 = arith.constant 0 : index
    %c0_99 = arith.constant 0 : index
    %264 = vector.load %arg4[%c0_98, %c0_99] : memref<128x256xbf16, #tpu.memory_space<vmem>>, vector<128x256xbf16>
    %cst_100 = arith.constant dense<0.000000e+00> : vector<16x256xf32>
    %265 = tpu.matmul %263, %264, %cst_100 {dimension_numbers = #tpu.dot_dimension_numbers<[1], [0], [0], [1], [0, 0, 1, 1], [], []>} : vector<16x128xbf16>, vector<128x256xbf16>, vector<16x256xf32> -> vector<16x256xf32>
    %266 = vector.extract_strided_slice %260 {offsets = [0, 0], sizes = [16, 128], strides = [1, 1]} : vector<16x512xf32> to vector<16x128xf32>
    %267 = vector.extract_strided_slice %265 {offsets = [0, 0], sizes = [16, 128], strides = [1, 1]} : vector<16x256xf32> to vector<16x128xf32>
    %268 = arith.addf %266, %267 : vector<16x128xf32>
    %269 = arith.negf %268 : vector<16x128xf32>
    %270 = math.exp %269 : vector<16x128xf32>
    %cst_101 = arith.constant 1.000000e+00 : f32
    %271 = vector.broadcast %cst_101 : f32 to vector<16x128xf32>
    %272 = arith.addf %271, %270 : vector<16x128xf32>
    %273 = arith.divf %271, %272 : vector<16x128xf32>
    %274 = vector.extract_strided_slice %260 {offsets = [0, 128], sizes = [16, 128], strides = [1, 1]} : vector<16x512xf32> to vector<16x128xf32>
    %275 = vector.extract_strided_slice %265 {offsets = [0, 128], sizes = [16, 128], strides = [1, 1]} : vector<16x256xf32> to vector<16x128xf32>
    %276 = arith.addf %274, %275 : vector<16x128xf32>
    %277 = arith.negf %276 : vector<16x128xf32>
    %278 = math.exp %277 : vector<16x128xf32>
    %cst_102 = arith.constant 1.000000e+00 : f32
    %279 = vector.broadcast %cst_102 : f32 to vector<16x128xf32>
    %280 = arith.addf %279, %278 : vector<16x128xf32>
    %281 = arith.divf %279, %280 : vector<16x128xf32>
    %282 = vector.extract_strided_slice %260 {offsets = [0, 256], sizes = [16, 128], strides = [1, 1]} : vector<16x512xf32> to vector<16x128xf32>
    %283 = arith.mulf %273, %254 : vector<16x128xf32>
    %284 = arith.truncf %283 : vector<16x128xf32> to vector<16x128xbf16>
    %c0_103 = arith.constant 0 : index
    %c0_104 = arith.constant 0 : index
    %285 = vector.load %arg5[%c0_103, %c0_104] : memref<128x128xbf16, #tpu.memory_space<vmem>>, vector<128x128xbf16>
    %cst_105 = arith.constant dense<0.000000e+00> : vector<16x128xf32>
    %286 = tpu.matmul %284, %285, %cst_105 {dimension_numbers = #tpu.dot_dimension_numbers<[1], [0], [0], [1], [0, 0, 1, 1], [], []>} : vector<16x128xbf16>, vector<128x128xbf16>, vector<16x128xf32> -> vector<16x128xf32>
    %287 = arith.addf %282, %286 : vector<16x128xf32>
    %288 = math.tanh %287 : vector<16x128xf32>
    %289 = vector.extract_strided_slice %260 {offsets = [0, 384], sizes = [16, 128], strides = [1, 1]} : vector<16x512xf32> to vector<16x128xf32>
    %290 = arith.mulf %254, %5 : vector<16x128xf32>
    %291 = arith.addf %289, %290 : vector<16x128xf32>
    %cst_106 = arith.constant 0.000000e+00 : f32
    %292 = vector.broadcast %cst_106 : f32 to vector<16x128xf32>
    %293 = arith.maximumf %291, %292 : vector<16x128xf32>
    %294 = vector.broadcast %262 : vector<16x1xf32> to vector<16x128xf32>
    %295 = arith.mulf %11, %294 : vector<16x128xf32>
    %296 = arith.addf %295, %14 : vector<16x128xf32>
    %cst_107 = arith.constant 0.000000e+00 : f32
    %297 = vector.broadcast %cst_107 : f32 to vector<16x128xf32>
    %298 = arith.maximumf %296, %297 : vector<16x128xf32>
    %299 = arith.mulf %8, %293 : vector<16x128xf32>
    %300 = arith.mulf %17, %298 : vector<16x128xf32>
    %301 = arith.addf %299, %300 : vector<16x128xf32>
    %302 = arith.addf %301, %20 : vector<16x128xf32>
    %303 = arith.negf %302 : vector<16x128xf32>
    %304 = math.exp %303 : vector<16x128xf32>
    %cst_108 = arith.constant 1.000000e+00 : f32
    %305 = vector.broadcast %cst_108 : f32 to vector<16x128xf32>
    %306 = arith.addf %305, %304 : vector<16x128xf32>
    %307 = arith.divf %305, %306 : vector<16x128xf32>
    %308 = arith.mulf %281, %254 : vector<16x128xf32>
    %cst_109 = arith.constant 1.000000e+00 : f32
    %309 = vector.broadcast %cst_109 : f32 to vector<16x128xf32>
    %310 = arith.subf %309, %281 : vector<16x128xf32>
    %311 = arith.mulf %310, %288 : vector<16x128xf32>
    %312 = arith.mulf %311, %307 : vector<16x128xf32>
    %313 = arith.addf %308, %312 : vector<16x128xf32>
    %c4_110 = arith.constant 4 : index
    %c0_111 = arith.constant 0 : index
    %c0_112 = arith.constant 0 : index
    %314 = vector.load %arg7[%c4_110, %c0_111, %c0_112] : memref<16x16x128xf32, #tpu.memory_space<vmem>>, vector<1x16x128xf32>
    %315 = vector.shape_cast %314 : vector<1x16x128xf32> to vector<16x128xf32>
    %316 = vector.shape_cast %313 : vector<16x128xf32> to vector<1x16x128xf32>
    tpu.vector_store %arg7[%c4_110, %c0_111, %c0_112], %316 {strides = array<i32>} : memref<16x16x128xf32, #tpu.memory_space<vmem>>, vector<1x16x128xf32>,
    %c5_113 = arith.constant 5 : index
    %c0_114 = arith.constant 0 : index
    %c0_115 = arith.constant 0 : index
    %317 = vector.load %arg2[%c5_113, %c0_114, %c0_115] : memref<16x16x512xbf16, #tpu.memory_space<vmem>>, vector<1x16x512xbf16>
    %318 = vector.shape_cast %317 : vector<1x16x512xbf16> to vector<16x512xbf16>
    %319 = arith.extf %318 : vector<16x512xbf16> to vector<16x512xf32>
    %c5_116 = arith.constant 5 : index
    %c0_117 = arith.constant 0 : index
    %c0_118 = arith.constant 0 : index
    %320 = vector.load %arg3[%c5_116, %c0_117, %c0_118] : memref<16x16x1xf32, #tpu.memory_space<vmem>>, vector<1x16x1xf32>
    %321 = vector.shape_cast %320 : vector<1x16x1xf32> to vector<16x1xf32>
    %322 = arith.truncf %313 : vector<16x128xf32> to vector<16x128xbf16>
    %c0_119 = arith.constant 0 : index
    %c0_120 = arith.constant 0 : index
    %323 = vector.load %arg4[%c0_119, %c0_120] : memref<128x256xbf16, #tpu.memory_space<vmem>>, vector<128x256xbf16>
    %cst_121 = arith.constant dense<0.000000e+00> : vector<16x256xf32>
    %324 = tpu.matmul %322, %323, %cst_121 {dimension_numbers = #tpu.dot_dimension_numbers<[1], [0], [0], [1], [0, 0, 1, 1], [], []>} : vector<16x128xbf16>, vector<128x256xbf16>, vector<16x256xf32> -> vector<16x256xf32>
    %325 = vector.extract_strided_slice %319 {offsets = [0, 0], sizes = [16, 128], strides = [1, 1]} : vector<16x512xf32> to vector<16x128xf32>
    %326 = vector.extract_strided_slice %324 {offsets = [0, 0], sizes = [16, 128], strides = [1, 1]} : vector<16x256xf32> to vector<16x128xf32>
    %327 = arith.addf %325, %326 : vector<16x128xf32>
    %328 = arith.negf %327 : vector<16x128xf32>
    %329 = math.exp %328 : vector<16x128xf32>
    %cst_122 = arith.constant 1.000000e+00 : f32
    %330 = vector.broadcast %cst_122 : f32 to vector<16x128xf32>
    %331 = arith.addf %330, %329 : vector<16x128xf32>
    %332 = arith.divf %330, %331 : vector<16x128xf32>
    %333 = vector.extract_strided_slice %319 {offsets = [0, 128], sizes = [16, 128], strides = [1, 1]} : vector<16x512xf32> to vector<16x128xf32>
    %334 = vector.extract_strided_slice %324 {offsets = [0, 128], sizes = [16, 128], strides = [1, 1]} : vector<16x256xf32> to vector<16x128xf32>
    %335 = arith.addf %333, %334 : vector<16x128xf32>
    %336 = arith.negf %335 : vector<16x128xf32>
    %337 = math.exp %336 : vector<16x128xf32>
    %cst_123 = arith.constant 1.000000e+00 : f32
    %338 = vector.broadcast %cst_123 : f32 to vector<16x128xf32>
    %339 = arith.addf %338, %337 : vector<16x128xf32>
    %340 = arith.divf %338, %339 : vector<16x128xf32>
    %341 = vector.extract_strided_slice %319 {offsets = [0, 256], sizes = [16, 128], strides = [1, 1]} : vector<16x512xf32> to vector<16x128xf32>
    %342 = arith.mulf %332, %313 : vector<16x128xf32>
    %343 = arith.truncf %342 : vector<16x128xf32> to vector<16x128xbf16>
    %c0_124 = arith.constant 0 : index
    %c0_125 = arith.constant 0 : index
    %344 = vector.load %arg5[%c0_124, %c0_125] : memref<128x128xbf16, #tpu.memory_space<vmem>>, vector<128x128xbf16>
    %cst_126 = arith.constant dense<0.000000e+00> : vector<16x128xf32>
    %345 = tpu.matmul %343, %344, %cst_126 {dimension_numbers = #tpu.dot_dimension_numbers<[1], [0], [0], [1], [0, 0, 1, 1], [], []>} : vector<16x128xbf16>, vector<128x128xbf16>, vector<16x128xf32> -> vector<16x128xf32>
    %346 = arith.addf %341, %345 : vector<16x128xf32>
    %347 = math.tanh %346 : vector<16x128xf32>
    %348 = vector.extract_strided_slice %319 {offsets = [0, 384], sizes = [16, 128], strides = [1, 1]} : vector<16x512xf32> to vector<16x128xf32>
    %349 = arith.mulf %313, %5 : vector<16x128xf32>
    %350 = arith.addf %348, %349 : vector<16x128xf32>
    %cst_127 = arith.constant 0.000000e+00 : f32
    %351 = vector.broadcast %cst_127 : f32 to vector<16x128xf32>
    %352 = arith.maximumf %350, %351 : vector<16x128xf32>
    %353 = vector.broadcast %321 : vector<16x1xf32> to vector<16x128xf32>
    %354 = arith.mulf %11, %353 : vector<16x128xf32>
    %355 = arith.addf %354, %14 : vector<16x128xf32>
    %cst_128 = arith.constant 0.000000e+00 : f32
    %356 = vector.broadcast %cst_128 : f32 to vector<16x128xf32>
    %357 = arith.maximumf %355, %356 : vector<16x128xf32>
    %358 = arith.mulf %8, %352 : vector<16x128xf32>
    %359 = arith.mulf %17, %357 : vector<16x128xf32>
    %360 = arith.addf %358, %359 : vector<16x128xf32>
    %361 = arith.addf %360, %20 : vector<16x128xf32>
    %362 = arith.negf %361 : vector<16x128xf32>
    %363 = math.exp %362 : vector<16x128xf32>
    %cst_129 = arith.constant 1.000000e+00 : f32
    %364 = vector.broadcast %cst_129 : f32 to vector<16x128xf32>
    %365 = arith.addf %364, %363 : vector<16x128xf32>
    %366 = arith.divf %364, %365 : vector<16x128xf32>
    %367 = arith.mulf %340, %313 : vector<16x128xf32>
    %cst_130 = arith.constant 1.000000e+00 : f32
    %368 = vector.broadcast %cst_130 : f32 to vector<16x128xf32>
    %369 = arith.subf %368, %340 : vector<16x128xf32>
    %370 = arith.mulf %369, %347 : vector<16x128xf32>
    %371 = arith.mulf %370, %366 : vector<16x128xf32>
    %372 = arith.addf %367, %371 : vector<16x128xf32>
    %c5_131 = arith.constant 5 : index
    %c0_132 = arith.constant 0 : index
    %c0_133 = arith.constant 0 : index
    %373 = vector.load %arg7[%c5_131, %c0_132, %c0_133] : memref<16x16x128xf32, #tpu.memory_space<vmem>>, vector<1x16x128xf32>
    %374 = vector.shape_cast %373 : vector<1x16x128xf32> to vector<16x128xf32>
    %375 = vector.shape_cast %372 : vector<16x128xf32> to vector<1x16x128xf32>
    tpu.vector_store %arg7[%c5_131, %c0_132, %c0_133], %375 {strides = array<i32>} : memref<16x16x128xf32, #tpu.memory_space<vmem>>, vector<1x16x128xf32>,
    %c6 = arith.constant 6 : index
    %c0_134 = arith.constant 0 : index
    %c0_135 = arith.constant 0 : index
    %376 = vector.load %arg2[%c6, %c0_134, %c0_135] : memref<16x16x512xbf16, #tpu.memory_space<vmem>>, vector<1x16x512xbf16>
    %377 = vector.shape_cast %376 : vector<1x16x512xbf16> to vector<16x512xbf16>
    %378 = arith.extf %377 : vector<16x512xbf16> to vector<16x512xf32>
    %c6_136 = arith.constant 6 : index
    %c0_137 = arith.constant 0 : index
    %c0_138 = arith.constant 0 : index
    %379 = vector.load %arg3[%c6_136, %c0_137, %c0_138] : memref<16x16x1xf32, #tpu.memory_space<vmem>>, vector<1x16x1xf32>
    %380 = vector.shape_cast %379 : vector<1x16x1xf32> to vector<16x1xf32>
    %381 = arith.truncf %372 : vector<16x128xf32> to vector<16x128xbf16>
    %c0_139 = arith.constant 0 : index
    %c0_140 = arith.constant 0 : index
    %382 = vector.load %arg4[%c0_139, %c0_140] : memref<128x256xbf16, #tpu.memory_space<vmem>>, vector<128x256xbf16>
    %cst_141 = arith.constant dense<0.000000e+00> : vector<16x256xf32>
    %383 = tpu.matmul %381, %382, %cst_141 {dimension_numbers = #tpu.dot_dimension_numbers<[1], [0], [0], [1], [0, 0, 1, 1], [], []>} : vector<16x128xbf16>, vector<128x256xbf16>, vector<16x256xf32> -> vector<16x256xf32>
    %384 = vector.extract_strided_slice %378 {offsets = [0, 0], sizes = [16, 128], strides = [1, 1]} : vector<16x512xf32> to vector<16x128xf32>
    %385 = vector.extract_strided_slice %383 {offsets = [0, 0], sizes = [16, 128], strides = [1, 1]} : vector<16x256xf32> to vector<16x128xf32>
    %386 = arith.addf %384, %385 : vector<16x128xf32>
    %387 = arith.negf %386 : vector<16x128xf32>
    %388 = math.exp %387 : vector<16x128xf32>
    %cst_142 = arith.constant 1.000000e+00 : f32
    %389 = vector.broadcast %cst_142 : f32 to vector<16x128xf32>
    %390 = arith.addf %389, %388 : vector<16x128xf32>
    %391 = arith.divf %389, %390 : vector<16x128xf32>
    %392 = vector.extract_strided_slice %378 {offsets = [0, 128], sizes = [16, 128], strides = [1, 1]} : vector<16x512xf32> to vector<16x128xf32>
    %393 = vector.extract_strided_slice %383 {offsets = [0, 128], sizes = [16, 128], strides = [1, 1]} : vector<16x256xf32> to vector<16x128xf32>
    %394 = arith.addf %392, %393 : vector<16x128xf32>
    %395 = arith.negf %394 : vector<16x128xf32>
    %396 = math.exp %395 : vector<16x128xf32>
    %cst_143 = arith.constant 1.000000e+00 : f32
    %397 = vector.broadcast %cst_143 : f32 to vector<16x128xf32>
    %398 = arith.addf %397, %396 : vector<16x128xf32>
    %399 = arith.divf %397, %398 : vector<16x128xf32>
    %400 = vector.extract_strided_slice %378 {offsets = [0, 256], sizes = [16, 128], strides = [1, 1]} : vector<16x512xf32> to vector<16x128xf32>
    %401 = arith.mulf %391, %372 : vector<16x128xf32>
    %402 = arith.truncf %401 : vector<16x128xf32> to vector<16x128xbf16>
    %c0_144 = arith.constant 0 : index
    %c0_145 = arith.constant 0 : index
    %403 = vector.load %arg5[%c0_144, %c0_145] : memref<128x128xbf16, #tpu.memory_space<vmem>>, vector<128x128xbf16>
    %cst_146 = arith.constant dense<0.000000e+00> : vector<16x128xf32>
    %404 = tpu.matmul %402, %403, %cst_146 {dimension_numbers = #tpu.dot_dimension_numbers<[1], [0], [0], [1], [0, 0, 1, 1], [], []>} : vector<16x128xbf16>, vector<128x128xbf16>, vector<16x128xf32> -> vector<16x128xf32>
    %405 = arith.addf %400, %404 : vector<16x128xf32>
    %406 = math.tanh %405 : vector<16x128xf32>
    %407 = vector.extract_strided_slice %378 {offsets = [0, 384], sizes = [16, 128], strides = [1, 1]} : vector<16x512xf32> to vector<16x128xf32>
    %408 = arith.mulf %372, %5 : vector<16x128xf32>
    %409 = arith.addf %407, %408 : vector<16x128xf32>
    %cst_147 = arith.constant 0.000000e+00 : f32
    %410 = vector.broadcast %cst_147 : f32 to vector<16x128xf32>
    %411 = arith.maximumf %409, %410 : vector<16x128xf32>
    %412 = vector.broadcast %380 : vector<16x1xf32> to vector<16x128xf32>
    %413 = arith.mulf %11, %412 : vector<16x128xf32>
    %414 = arith.addf %413, %14 : vector<16x128xf32>
    %cst_148 = arith.constant 0.000000e+00 : f32
    %415 = vector.broadcast %cst_148 : f32 to vector<16x128xf32>
    %416 = arith.maximumf %414, %415 : vector<16x128xf32>
    %417 = arith.mulf %8, %411 : vector<16x128xf32>
    %418 = arith.mulf %17, %416 : vector<16x128xf32>
    %419 = arith.addf %417, %418 : vector<16x128xf32>
    %420 = arith.addf %419, %20 : vector<16x128xf32>
    %421 = arith.negf %420 : vector<16x128xf32>
    %422 = math.exp %421 : vector<16x128xf32>
    %cst_149 = arith.constant 1.000000e+00 : f32
    %423 = vector.broadcast %cst_149 : f32 to vector<16x128xf32>
    %424 = arith.addf %423, %422 : vector<16x128xf32>
    %425 = arith.divf %423, %424 : vector<16x128xf32>
    %426 = arith.mulf %399, %372 : vector<16x128xf32>
    %cst_150 = arith.constant 1.000000e+00 : f32
    %427 = vector.broadcast %cst_150 : f32 to vector<16x128xf32>
    %428 = arith.subf %427, %399 : vector<16x128xf32>
    %429 = arith.mulf %428, %406 : vector<16x128xf32>
    %430 = arith.mulf %429, %425 : vector<16x128xf32>
    %431 = arith.addf %426, %430 : vector<16x128xf32>
    %c6_151 = arith.constant 6 : index
    %c0_152 = arith.constant 0 : index
    %c0_153 = arith.constant 0 : index
    %432 = vector.load %arg7[%c6_151, %c0_152, %c0_153] : memref<16x16x128xf32, #tpu.memory_space<vmem>>, vector<1x16x128xf32>
    %433 = vector.shape_cast %432 : vector<1x16x128xf32> to vector<16x128xf32>
    %434 = vector.shape_cast %431 : vector<16x128xf32> to vector<1x16x128xf32>
    tpu.vector_store %arg7[%c6_151, %c0_152, %c0_153], %434 {strides = array<i32>} : memref<16x16x128xf32, #tpu.memory_space<vmem>>, vector<1x16x128xf32>,
    %c7 = arith.constant 7 : index
    %c0_154 = arith.constant 0 : index
    %c0_155 = arith.constant 0 : index
    %435 = vector.load %arg2[%c7, %c0_154, %c0_155] : memref<16x16x512xbf16, #tpu.memory_space<vmem>>, vector<1x16x512xbf16>
    %436 = vector.shape_cast %435 : vector<1x16x512xbf16> to vector<16x512xbf16>
    %437 = arith.extf %436 : vector<16x512xbf16> to vector<16x512xf32>
    %c7_156 = arith.constant 7 : index
    %c0_157 = arith.constant 0 : index
    %c0_158 = arith.constant 0 : index
    %438 = vector.load %arg3[%c7_156, %c0_157, %c0_158] : memref<16x16x1xf32, #tpu.memory_space<vmem>>, vector<1x16x1xf32>
    %439 = vector.shape_cast %438 : vector<1x16x1xf32> to vector<16x1xf32>
    %440 = arith.truncf %431 : vector<16x128xf32> to vector<16x128xbf16>
    %c0_159 = arith.constant 0 : index
    %c0_160 = arith.constant 0 : index
    %441 = vector.load %arg4[%c0_159, %c0_160] : memref<128x256xbf16, #tpu.memory_space<vmem>>, vector<128x256xbf16>
    %cst_161 = arith.constant dense<0.000000e+00> : vector<16x256xf32>
    %442 = tpu.matmul %440, %441, %cst_161 {dimension_numbers = #tpu.dot_dimension_numbers<[1], [0], [0], [1], [0, 0, 1, 1], [], []>} : vector<16x128xbf16>, vector<128x256xbf16>, vector<16x256xf32> -> vector<16x256xf32>
    %443 = vector.extract_strided_slice %437 {offsets = [0, 0], sizes = [16, 128], strides = [1, 1]} : vector<16x512xf32> to vector<16x128xf32>
    %444 = vector.extract_strided_slice %442 {offsets = [0, 0], sizes = [16, 128], strides = [1, 1]} : vector<16x256xf32> to vector<16x128xf32>
    %445 = arith.addf %443, %444 : vector<16x128xf32>
    %446 = arith.negf %445 : vector<16x128xf32>
    %447 = math.exp %446 : vector<16x128xf32>
    %cst_162 = arith.constant 1.000000e+00 : f32
    %448 = vector.broadcast %cst_162 : f32 to vector<16x128xf32>
    %449 = arith.addf %448, %447 : vector<16x128xf32>
    %450 = arith.divf %448, %449 : vector<16x128xf32>
    %451 = vector.extract_strided_slice %437 {offsets = [0, 128], sizes = [16, 128], strides = [1, 1]} : vector<16x512xf32> to vector<16x128xf32>
    %452 = vector.extract_strided_slice %442 {offsets = [0, 128], sizes = [16, 128], strides = [1, 1]} : vector<16x256xf32> to vector<16x128xf32>
    %453 = arith.addf %451, %452 : vector<16x128xf32>
    %454 = arith.negf %453 : vector<16x128xf32>
    %455 = math.exp %454 : vector<16x128xf32>
    %cst_163 = arith.constant 1.000000e+00 : f32
    %456 = vector.broadcast %cst_163 : f32 to vector<16x128xf32>
    %457 = arith.addf %456, %455 : vector<16x128xf32>
    %458 = arith.divf %456, %457 : vector<16x128xf32>
    %459 = vector.extract_strided_slice %437 {offsets = [0, 256], sizes = [16, 128], strides = [1, 1]} : vector<16x512xf32> to vector<16x128xf32>
    %460 = arith.mulf %450, %431 : vector<16x128xf32>
    %461 = arith.truncf %460 : vector<16x128xf32> to vector<16x128xbf16>
    %c0_164 = arith.constant 0 : index
    %c0_165 = arith.constant 0 : index
    %462 = vector.load %arg5[%c0_164, %c0_165] : memref<128x128xbf16, #tpu.memory_space<vmem>>, vector<128x128xbf16>
    %cst_166 = arith.constant dense<0.000000e+00> : vector<16x128xf32>
    %463 = tpu.matmul %461, %462, %cst_166 {dimension_numbers = #tpu.dot_dimension_numbers<[1], [0], [0], [1], [0, 0, 1, 1], [], []>} : vector<16x128xbf16>, vector<128x128xbf16>, vector<16x128xf32> -> vector<16x128xf32>
    %464 = arith.addf %459, %463 : vector<16x128xf32>
    %465 = math.tanh %464 : vector<16x128xf32>
    %466 = vector.extract_strided_slice %437 {offsets = [0, 384], sizes = [16, 128], strides = [1, 1]} : vector<16x512xf32> to vector<16x128xf32>
    %467 = arith.mulf %431, %5 : vector<16x128xf32>
    %468 = arith.addf %466, %467 : vector<16x128xf32>
    %cst_167 = arith.constant 0.000000e+00 : f32
    %469 = vector.broadcast %cst_167 : f32 to vector<16x128xf32>
    %470 = arith.maximumf %468, %469 : vector<16x128xf32>
    %471 = vector.broadcast %439 : vector<16x1xf32> to vector<16x128xf32>
    %472 = arith.mulf %11, %471 : vector<16x128xf32>
    %473 = arith.addf %472, %14 : vector<16x128xf32>
    %cst_168 = arith.constant 0.000000e+00 : f32
    %474 = vector.broadcast %cst_168 : f32 to vector<16x128xf32>
    %475 = arith.maximumf %473, %474 : vector<16x128xf32>
    %476 = arith.mulf %8, %470 : vector<16x128xf32>
    %477 = arith.mulf %17, %475 : vector<16x128xf32>
    %478 = arith.addf %476, %477 : vector<16x128xf32>
    %479 = arith.addf %478, %20 : vector<16x128xf32>
    %480 = arith.negf %479 : vector<16x128xf32>
    %481 = math.exp %480 : vector<16x128xf32>
    %cst_169 = arith.constant 1.000000e+00 : f32
    %482 = vector.broadcast %cst_169 : f32 to vector<16x128xf32>
    %483 = arith.addf %482, %481 : vector<16x128xf32>
    %484 = arith.divf %482, %483 : vector<16x128xf32>
    %485 = arith.mulf %458, %431 : vector<16x128xf32>
    %cst_170 = arith.constant 1.000000e+00 : f32
    %486 = vector.broadcast %cst_170 : f32 to vector<16x128xf32>
    %487 = arith.subf %486, %458 : vector<16x128xf32>
    %488 = arith.mulf %487, %465 : vector<16x128xf32>
    %489 = arith.mulf %488, %484 : vector<16x128xf32>
    %490 = arith.addf %485, %489 : vector<16x128xf32>
    %c7_171 = arith.constant 7 : index
    %c0_172 = arith.constant 0 : index
    %c0_173 = arith.constant 0 : index
    %491 = vector.load %arg7[%c7_171, %c0_172, %c0_173] : memref<16x16x128xf32, #tpu.memory_space<vmem>>, vector<1x16x128xf32>
    %492 = vector.shape_cast %491 : vector<1x16x128xf32> to vector<16x128xf32>
    %493 = vector.shape_cast %490 : vector<16x128xf32> to vector<1x16x128xf32>
    tpu.vector_store %arg7[%c7_171, %c0_172, %c0_173], %493 {strides = array<i32>} : memref<16x16x128xf32, #tpu.memory_space<vmem>>, vector<1x16x128xf32>,
    %c8 = arith.constant 8 : index
    %c0_174 = arith.constant 0 : index
    %c0_175 = arith.constant 0 : index
    %494 = vector.load %arg2[%c8, %c0_174, %c0_175] : memref<16x16x512xbf16, #tpu.memory_space<vmem>>, vector<1x16x512xbf16>
    %495 = vector.shape_cast %494 : vector<1x16x512xbf16> to vector<16x512xbf16>
    %496 = arith.extf %495 : vector<16x512xbf16> to vector<16x512xf32>
    %c8_176 = arith.constant 8 : index
    %c0_177 = arith.constant 0 : index
    %c0_178 = arith.constant 0 : index
    %497 = vector.load %arg3[%c8_176, %c0_177, %c0_178] : memref<16x16x1xf32, #tpu.memory_space<vmem>>, vector<1x16x1xf32>
    %498 = vector.shape_cast %497 : vector<1x16x1xf32> to vector<16x1xf32>
    %499 = arith.truncf %490 : vector<16x128xf32> to vector<16x128xbf16>
    %c0_179 = arith.constant 0 : index
    %c0_180 = arith.constant 0 : index
    %500 = vector.load %arg4[%c0_179, %c0_180] : memref<128x256xbf16, #tpu.memory_space<vmem>>, vector<128x256xbf16>
    %cst_181 = arith.constant dense<0.000000e+00> : vector<16x256xf32>
    %501 = tpu.matmul %499, %500, %cst_181 {dimension_numbers = #tpu.dot_dimension_numbers<[1], [0], [0], [1], [0, 0, 1, 1], [], []>} : vector<16x128xbf16>, vector<128x256xbf16>, vector<16x256xf32> -> vector<16x256xf32>
    %502 = vector.extract_strided_slice %496 {offsets = [0, 0], sizes = [16, 128], strides = [1, 1]} : vector<16x512xf32> to vector<16x128xf32>
    %503 = vector.extract_strided_slice %501 {offsets = [0, 0], sizes = [16, 128], strides = [1, 1]} : vector<16x256xf32> to vector<16x128xf32>
    %504 = arith.addf %502, %503 : vector<16x128xf32>
    %505 = arith.negf %504 : vector<16x128xf32>
    %506 = math.exp %505 : vector<16x128xf32>
    %cst_182 = arith.constant 1.000000e+00 : f32
    %507 = vector.broadcast %cst_182 : f32 to vector<16x128xf32>
    %508 = arith.addf %507, %506 : vector<16x128xf32>
    %509 = arith.divf %507, %508 : vector<16x128xf32>
    %510 = vector.extract_strided_slice %496 {offsets = [0, 128], sizes = [16, 128], strides = [1, 1]} : vector<16x512xf32> to vector<16x128xf32>
    %511 = vector.extract_strided_slice %501 {offsets = [0, 128], sizes = [16, 128], strides = [1, 1]} : vector<16x256xf32> to vector<16x128xf32>
    %512 = arith.addf %510, %511 : vector<16x128xf32>
    %513 = arith.negf %512 : vector<16x128xf32>
    %514 = math.exp %513 : vector<16x128xf32>
    %cst_183 = arith.constant 1.000000e+00 : f32
    %515 = vector.broadcast %cst_183 : f32 to vector<16x128xf32>
    %516 = arith.addf %515, %514 : vector<16x128xf32>
    %517 = arith.divf %515, %516 : vector<16x128xf32>
    %518 = vector.extract_strided_slice %496 {offsets = [0, 256], sizes = [16, 128], strides = [1, 1]} : vector<16x512xf32> to vector<16x128xf32>
    %519 = arith.mulf %509, %490 : vector<16x128xf32>
    %520 = arith.truncf %519 : vector<16x128xf32> to vector<16x128xbf16>
    %c0_184 = arith.constant 0 : index
    %c0_185 = arith.constant 0 : index
    %521 = vector.load %arg5[%c0_184, %c0_185] : memref<128x128xbf16, #tpu.memory_space<vmem>>, vector<128x128xbf16>
    %cst_186 = arith.constant dense<0.000000e+00> : vector<16x128xf32>
    %522 = tpu.matmul %520, %521, %cst_186 {dimension_numbers = #tpu.dot_dimension_numbers<[1], [0], [0], [1], [0, 0, 1, 1], [], []>} : vector<16x128xbf16>, vector<128x128xbf16>, vector<16x128xf32> -> vector<16x128xf32>
    %523 = arith.addf %518, %522 : vector<16x128xf32>
    %524 = math.tanh %523 : vector<16x128xf32>
    %525 = vector.extract_strided_slice %496 {offsets = [0, 384], sizes = [16, 128], strides = [1, 1]} : vector<16x512xf32> to vector<16x128xf32>
    %526 = arith.mulf %490, %5 : vector<16x128xf32>
    %527 = arith.addf %525, %526 : vector<16x128xf32>
    %cst_187 = arith.constant 0.000000e+00 : f32
    %528 = vector.broadcast %cst_187 : f32 to vector<16x128xf32>
    %529 = arith.maximumf %527, %528 : vector<16x128xf32>
    %530 = vector.broadcast %498 : vector<16x1xf32> to vector<16x128xf32>
    %531 = arith.mulf %11, %530 : vector<16x128xf32>
    %532 = arith.addf %531, %14 : vector<16x128xf32>
    %cst_188 = arith.constant 0.000000e+00 : f32
    %533 = vector.broadcast %cst_188 : f32 to vector<16x128xf32>
    %534 = arith.maximumf %532, %533 : vector<16x128xf32>
    %535 = arith.mulf %8, %529 : vector<16x128xf32>
    %536 = arith.mulf %17, %534 : vector<16x128xf32>
    %537 = arith.addf %535, %536 : vector<16x128xf32>
    %538 = arith.addf %537, %20 : vector<16x128xf32>
    %539 = arith.negf %538 : vector<16x128xf32>
    %540 = math.exp %539 : vector<16x128xf32>
    %cst_189 = arith.constant 1.000000e+00 : f32
    %541 = vector.broadcast %cst_189 : f32 to vector<16x128xf32>
    %542 = arith.addf %541, %540 : vector<16x128xf32>
    %543 = arith.divf %541, %542 : vector<16x128xf32>
    %544 = arith.mulf %517, %490 : vector<16x128xf32>
    %cst_190 = arith.constant 1.000000e+00 : f32
    %545 = vector.broadcast %cst_190 : f32 to vector<16x128xf32>
    %546 = arith.subf %545, %517 : vector<16x128xf32>
    %547 = arith.mulf %546, %524 : vector<16x128xf32>
    %548 = arith.mulf %547, %543 : vector<16x128xf32>
    %549 = arith.addf %544, %548 : vector<16x128xf32>
    %c8_191 = arith.constant 8 : index
    %c0_192 = arith.constant 0 : index
    %c0_193 = arith.constant 0 : index
    %550 = vector.load %arg7[%c8_191, %c0_192, %c0_193] : memref<16x16x128xf32, #tpu.memory_space<vmem>>, vector<1x16x128xf32>
    %551 = vector.shape_cast %550 : vector<1x16x128xf32> to vector<16x128xf32>
    %552 = vector.shape_cast %549 : vector<16x128xf32> to vector<1x16x128xf32>
    tpu.vector_store %arg7[%c8_191, %c0_192, %c0_193], %552 {strides = array<i32>} : memref<16x16x128xf32, #tpu.memory_space<vmem>>, vector<1x16x128xf32>,
    %c9 = arith.constant 9 : index
    %c0_194 = arith.constant 0 : index
    %c0_195 = arith.constant 0 : index
    %553 = vector.load %arg2[%c9, %c0_194, %c0_195] : memref<16x16x512xbf16, #tpu.memory_space<vmem>>, vector<1x16x512xbf16>
    %554 = vector.shape_cast %553 : vector<1x16x512xbf16> to vector<16x512xbf16>
    %555 = arith.extf %554 : vector<16x512xbf16> to vector<16x512xf32>
    %c9_196 = arith.constant 9 : index
    %c0_197 = arith.constant 0 : index
    %c0_198 = arith.constant 0 : index
    %556 = vector.load %arg3[%c9_196, %c0_197, %c0_198] : memref<16x16x1xf32, #tpu.memory_space<vmem>>, vector<1x16x1xf32>
    %557 = vector.shape_cast %556 : vector<1x16x1xf32> to vector<16x1xf32>
    %558 = arith.truncf %549 : vector<16x128xf32> to vector<16x128xbf16>
    %c0_199 = arith.constant 0 : index
    %c0_200 = arith.constant 0 : index
    %559 = vector.load %arg4[%c0_199, %c0_200] : memref<128x256xbf16, #tpu.memory_space<vmem>>, vector<128x256xbf16>
    %cst_201 = arith.constant dense<0.000000e+00> : vector<16x256xf32>
    %560 = tpu.matmul %558, %559, %cst_201 {dimension_numbers = #tpu.dot_dimension_numbers<[1], [0], [0], [1], [0, 0, 1, 1], [], []>} : vector<16x128xbf16>, vector<128x256xbf16>, vector<16x256xf32> -> vector<16x256xf32>
    %561 = vector.extract_strided_slice %555 {offsets = [0, 0], sizes = [16, 128], strides = [1, 1]} : vector<16x512xf32> to vector<16x128xf32>
    %562 = vector.extract_strided_slice %560 {offsets = [0, 0], sizes = [16, 128], strides = [1, 1]} : vector<16x256xf32> to vector<16x128xf32>
    %563 = arith.addf %561, %562 : vector<16x128xf32>
    %564 = arith.negf %563 : vector<16x128xf32>
    %565 = math.exp %564 : vector<16x128xf32>
    %cst_202 = arith.constant 1.000000e+00 : f32
    %566 = vector.broadcast %cst_202 : f32 to vector<16x128xf32>
    %567 = arith.addf %566, %565 : vector<16x128xf32>
    %568 = arith.divf %566, %567 : vector<16x128xf32>
    %569 = vector.extract_strided_slice %555 {offsets = [0, 128], sizes = [16, 128], strides = [1, 1]} : vector<16x512xf32> to vector<16x128xf32>
    %570 = vector.extract_strided_slice %560 {offsets = [0, 128], sizes = [16, 128], strides = [1, 1]} : vector<16x256xf32> to vector<16x128xf32>
    %571 = arith.addf %569, %570 : vector<16x128xf32>
    %572 = arith.negf %571 : vector<16x128xf32>
    %573 = math.exp %572 : vector<16x128xf32>
    %cst_203 = arith.constant 1.000000e+00 : f32
    %574 = vector.broadcast %cst_203 : f32 to vector<16x128xf32>
    %575 = arith.addf %574, %573 : vector<16x128xf32>
    %576 = arith.divf %574, %575 : vector<16x128xf32>
    %577 = vector.extract_strided_slice %555 {offsets = [0, 256], sizes = [16, 128], strides = [1, 1]} : vector<16x512xf32> to vector<16x128xf32>
    %578 = arith.mulf %568, %549 : vector<16x128xf32>
    %579 = arith.truncf %578 : vector<16x128xf32> to vector<16x128xbf16>
    %c0_204 = arith.constant 0 : index
    %c0_205 = arith.constant 0 : index
    %580 = vector.load %arg5[%c0_204, %c0_205] : memref<128x128xbf16, #tpu.memory_space<vmem>>, vector<128x128xbf16>
    %cst_206 = arith.constant dense<0.000000e+00> : vector<16x128xf32>
    %581 = tpu.matmul %579, %580, %cst_206 {dimension_numbers = #tpu.dot_dimension_numbers<[1], [0], [0], [1], [0, 0, 1, 1], [], []>} : vector<16x128xbf16>, vector<128x128xbf16>, vector<16x128xf32> -> vector<16x128xf32>
    %582 = arith.addf %577, %581 : vector<16x128xf32>
    %583 = math.tanh %582 : vector<16x128xf32>
    %584 = vector.extract_strided_slice %555 {offsets = [0, 384], sizes = [16, 128], strides = [1, 1]} : vector<16x512xf32> to vector<16x128xf32>
    %585 = arith.mulf %549, %5 : vector<16x128xf32>
    %586 = arith.addf %584, %585 : vector<16x128xf32>
    %cst_207 = arith.constant 0.000000e+00 : f32
    %587 = vector.broadcast %cst_207 : f32 to vector<16x128xf32>
    %588 = arith.maximumf %586, %587 : vector<16x128xf32>
    %589 = vector.broadcast %557 : vector<16x1xf32> to vector<16x128xf32>
    %590 = arith.mulf %11, %589 : vector<16x128xf32>
    %591 = arith.addf %590, %14 : vector<16x128xf32>
    %cst_208 = arith.constant 0.000000e+00 : f32
    %592 = vector.broadcast %cst_208 : f32 to vector<16x128xf32>
    %593 = arith.maximumf %591, %592 : vector<16x128xf32>
    %594 = arith.mulf %8, %588 : vector<16x128xf32>
    %595 = arith.mulf %17, %593 : vector<16x128xf32>
    %596 = arith.addf %594, %595 : vector<16x128xf32>
    %597 = arith.addf %596, %20 : vector<16x128xf32>
    %598 = arith.negf %597 : vector<16x128xf32>
    %599 = math.exp %598 : vector<16x128xf32>
    %cst_209 = arith.constant 1.000000e+00 : f32
    %600 = vector.broadcast %cst_209 : f32 to vector<16x128xf32>
    %601 = arith.addf %600, %599 : vector<16x128xf32>
    %602 = arith.divf %600, %601 : vector<16x128xf32>
    %603 = arith.mulf %576, %549 : vector<16x128xf32>
    %cst_210 = arith.constant 1.000000e+00 : f32
    %604 = vector.broadcast %cst_210 : f32 to vector<16x128xf32>
    %605 = arith.subf %604, %576 : vector<16x128xf32>
    %606 = arith.mulf %605, %583 : vector<16x128xf32>
    %607 = arith.mulf %606, %602 : vector<16x128xf32>
    %608 = arith.addf %603, %607 : vector<16x128xf32>
    %c9_211 = arith.constant 9 : index
    %c0_212 = arith.constant 0 : index
    %c0_213 = arith.constant 0 : index
    %609 = vector.load %arg7[%c9_211, %c0_212, %c0_213] : memref<16x16x128xf32, #tpu.memory_space<vmem>>, vector<1x16x128xf32>
    %610 = vector.shape_cast %609 : vector<1x16x128xf32> to vector<16x128xf32>
    %611 = vector.shape_cast %608 : vector<16x128xf32> to vector<1x16x128xf32>
    tpu.vector_store %arg7[%c9_211, %c0_212, %c0_213], %611 {strides = array<i32>} : memref<16x16x128xf32, #tpu.memory_space<vmem>>, vector<1x16x128xf32>,
    %c10 = arith.constant 10 : index
    %c0_214 = arith.constant 0 : index
    %c0_215 = arith.constant 0 : index
    %612 = vector.load %arg2[%c10, %c0_214, %c0_215] : memref<16x16x512xbf16, #tpu.memory_space<vmem>>, vector<1x16x512xbf16>
    %613 = vector.shape_cast %612 : vector<1x16x512xbf16> to vector<16x512xbf16>
    %614 = arith.extf %613 : vector<16x512xbf16> to vector<16x512xf32>
    %c10_216 = arith.constant 10 : index
    %c0_217 = arith.constant 0 : index
    %c0_218 = arith.constant 0 : index
    %615 = vector.load %arg3[%c10_216, %c0_217, %c0_218] : memref<16x16x1xf32, #tpu.memory_space<vmem>>, vector<1x16x1xf32>
    %616 = vector.shape_cast %615 : vector<1x16x1xf32> to vector<16x1xf32>
    %617 = arith.truncf %608 : vector<16x128xf32> to vector<16x128xbf16>
    %c0_219 = arith.constant 0 : index
    %c0_220 = arith.constant 0 : index
    %618 = vector.load %arg4[%c0_219, %c0_220] : memref<128x256xbf16, #tpu.memory_space<vmem>>, vector<128x256xbf16>
    %cst_221 = arith.constant dense<0.000000e+00> : vector<16x256xf32>
    %619 = tpu.matmul %617, %618, %cst_221 {dimension_numbers = #tpu.dot_dimension_numbers<[1], [0], [0], [1], [0, 0, 1, 1], [], []>} : vector<16x128xbf16>, vector<128x256xbf16>, vector<16x256xf32> -> vector<16x256xf32>
    %620 = vector.extract_strided_slice %614 {offsets = [0, 0], sizes = [16, 128], strides = [1, 1]} : vector<16x512xf32> to vector<16x128xf32>
    %621 = vector.extract_strided_slice %619 {offsets = [0, 0], sizes = [16, 128], strides = [1, 1]} : vector<16x256xf32> to vector<16x128xf32>
    %622 = arith.addf %620, %621 : vector<16x128xf32>
    %623 = arith.negf %622 : vector<16x128xf32>
    %624 = math.exp %623 : vector<16x128xf32>
    %cst_222 = arith.constant 1.000000e+00 : f32
    %625 = vector.broadcast %cst_222 : f32 to vector<16x128xf32>
    %626 = arith.addf %625, %624 : vector<16x128xf32>
    %627 = arith.divf %625, %626 : vector<16x128xf32>
    %628 = vector.extract_strided_slice %614 {offsets = [0, 128], sizes = [16, 128], strides = [1, 1]} : vector<16x512xf32> to vector<16x128xf32>
    %629 = vector.extract_strided_slice %619 {offsets = [0, 128], sizes = [16, 128], strides = [1, 1]} : vector<16x256xf32> to vector<16x128xf32>
    %630 = arith.addf %628, %629 : vector<16x128xf32>
    %631 = arith.negf %630 : vector<16x128xf32>
    %632 = math.exp %631 : vector<16x128xf32>
    %cst_223 = arith.constant 1.000000e+00 : f32
    %633 = vector.broadcast %cst_223 : f32 to vector<16x128xf32>
    %634 = arith.addf %633, %632 : vector<16x128xf32>
    %635 = arith.divf %633, %634 : vector<16x128xf32>
    %636 = vector.extract_strided_slice %614 {offsets = [0, 256], sizes = [16, 128], strides = [1, 1]} : vector<16x512xf32> to vector<16x128xf32>
    %637 = arith.mulf %627, %608 : vector<16x128xf32>
    %638 = arith.truncf %637 : vector<16x128xf32> to vector<16x128xbf16>
    %c0_224 = arith.constant 0 : index
    %c0_225 = arith.constant 0 : index
    %639 = vector.load %arg5[%c0_224, %c0_225] : memref<128x128xbf16, #tpu.memory_space<vmem>>, vector<128x128xbf16>
    %cst_226 = arith.constant dense<0.000000e+00> : vector<16x128xf32>
    %640 = tpu.matmul %638, %639, %cst_226 {dimension_numbers = #tpu.dot_dimension_numbers<[1], [0], [0], [1], [0, 0, 1, 1], [], []>} : vector<16x128xbf16>, vector<128x128xbf16>, vector<16x128xf32> -> vector<16x128xf32>
    %641 = arith.addf %636, %640 : vector<16x128xf32>
    %642 = math.tanh %641 : vector<16x128xf32>
    %643 = vector.extract_strided_slice %614 {offsets = [0, 384], sizes = [16, 128], strides = [1, 1]} : vector<16x512xf32> to vector<16x128xf32>
    %644 = arith.mulf %608, %5 : vector<16x128xf32>
    %645 = arith.addf %643, %644 : vector<16x128xf32>
    %cst_227 = arith.constant 0.000000e+00 : f32
    %646 = vector.broadcast %cst_227 : f32 to vector<16x128xf32>
    %647 = arith.maximumf %645, %646 : vector<16x128xf32>
    %648 = vector.broadcast %616 : vector<16x1xf32> to vector<16x128xf32>
    %649 = arith.mulf %11, %648 : vector<16x128xf32>
    %650 = arith.addf %649, %14 : vector<16x128xf32>
    %cst_228 = arith.constant 0.000000e+00 : f32
    %651 = vector.broadcast %cst_228 : f32 to vector<16x128xf32>
    %652 = arith.maximumf %650, %651 : vector<16x128xf32>
    %653 = arith.mulf %8, %647 : vector<16x128xf32>
    %654 = arith.mulf %17, %652 : vector<16x128xf32>
    %655 = arith.addf %653, %654 : vector<16x128xf32>
    %656 = arith.addf %655, %20 : vector<16x128xf32>
    %657 = arith.negf %656 : vector<16x128xf32>
    %658 = math.exp %657 : vector<16x128xf32>
    %cst_229 = arith.constant 1.000000e+00 : f32
    %659 = vector.broadcast %cst_229 : f32 to vector<16x128xf32>
    %660 = arith.addf %659, %658 : vector<16x128xf32>
    %661 = arith.divf %659, %660 : vector<16x128xf32>
    %662 = arith.mulf %635, %608 : vector<16x128xf32>
    %cst_230 = arith.constant 1.000000e+00 : f32
    %663 = vector.broadcast %cst_230 : f32 to vector<16x128xf32>
    %664 = arith.subf %663, %635 : vector<16x128xf32>
    %665 = arith.mulf %664, %642 : vector<16x128xf32>
    %666 = arith.mulf %665, %661 : vector<16x128xf32>
    %667 = arith.addf %662, %666 : vector<16x128xf32>
    %c10_231 = arith.constant 10 : index
    %c0_232 = arith.constant 0 : index
    %c0_233 = arith.constant 0 : index
    %668 = vector.load %arg7[%c10_231, %c0_232, %c0_233] : memref<16x16x128xf32, #tpu.memory_space<vmem>>, vector<1x16x128xf32>
    %669 = vector.shape_cast %668 : vector<1x16x128xf32> to vector<16x128xf32>
    %670 = vector.shape_cast %667 : vector<16x128xf32> to vector<1x16x128xf32>
    tpu.vector_store %arg7[%c10_231, %c0_232, %c0_233], %670 {strides = array<i32>} : memref<16x16x128xf32, #tpu.memory_space<vmem>>, vector<1x16x128xf32>,
    %c11 = arith.constant 11 : index
    %c0_234 = arith.constant 0 : index
    %c0_235 = arith.constant 0 : index
    %671 = vector.load %arg2[%c11, %c0_234, %c0_235] : memref<16x16x512xbf16, #tpu.memory_space<vmem>>, vector<1x16x512xbf16>
    %672 = vector.shape_cast %671 : vector<1x16x512xbf16> to vector<16x512xbf16>
    %673 = arith.extf %672 : vector<16x512xbf16> to vector<16x512xf32>
    %c11_236 = arith.constant 11 : index
    %c0_237 = arith.constant 0 : index
    %c0_238 = arith.constant 0 : index
    %674 = vector.load %arg3[%c11_236, %c0_237, %c0_238] : memref<16x16x1xf32, #tpu.memory_space<vmem>>, vector<1x16x1xf32>
    %675 = vector.shape_cast %674 : vector<1x16x1xf32> to vector<16x1xf32>
    %676 = arith.truncf %667 : vector<16x128xf32> to vector<16x128xbf16>
    %c0_239 = arith.constant 0 : index
    %c0_240 = arith.constant 0 : index
    %677 = vector.load %arg4[%c0_239, %c0_240] : memref<128x256xbf16, #tpu.memory_space<vmem>>, vector<128x256xbf16>
    %cst_241 = arith.constant dense<0.000000e+00> : vector<16x256xf32>
    %678 = tpu.matmul %676, %677, %cst_241 {dimension_numbers = #tpu.dot_dimension_numbers<[1], [0], [0], [1], [0, 0, 1, 1], [], []>} : vector<16x128xbf16>, vector<128x256xbf16>, vector<16x256xf32> -> vector<16x256xf32>
    %679 = vector.extract_strided_slice %673 {offsets = [0, 0], sizes = [16, 128], strides = [1, 1]} : vector<16x512xf32> to vector<16x128xf32>
    %680 = vector.extract_strided_slice %678 {offsets = [0, 0], sizes = [16, 128], strides = [1, 1]} : vector<16x256xf32> to vector<16x128xf32>
    %681 = arith.addf %679, %680 : vector<16x128xf32>
    %682 = arith.negf %681 : vector<16x128xf32>
    %683 = math.exp %682 : vector<16x128xf32>
    %cst_242 = arith.constant 1.000000e+00 : f32
    %684 = vector.broadcast %cst_242 : f32 to vector<16x128xf32>
    %685 = arith.addf %684, %683 : vector<16x128xf32>
    %686 = arith.divf %684, %685 : vector<16x128xf32>
    %687 = vector.extract_strided_slice %673 {offsets = [0, 128], sizes = [16, 128], strides = [1, 1]} : vector<16x512xf32> to vector<16x128xf32>
    %688 = vector.extract_strided_slice %678 {offsets = [0, 128], sizes = [16, 128], strides = [1, 1]} : vector<16x256xf32> to vector<16x128xf32>
    %689 = arith.addf %687, %688 : vector<16x128xf32>
    %690 = arith.negf %689 : vector<16x128xf32>
    %691 = math.exp %690 : vector<16x128xf32>
    %cst_243 = arith.constant 1.000000e+00 : f32
    %692 = vector.broadcast %cst_243 : f32 to vector<16x128xf32>
    %693 = arith.addf %692, %691 : vector<16x128xf32>
    %694 = arith.divf %692, %693 : vector<16x128xf32>
    %695 = vector.extract_strided_slice %673 {offsets = [0, 256], sizes = [16, 128], strides = [1, 1]} : vector<16x512xf32> to vector<16x128xf32>
    %696 = arith.mulf %686, %667 : vector<16x128xf32>
    %697 = arith.truncf %696 : vector<16x128xf32> to vector<16x128xbf16>
    %c0_244 = arith.constant 0 : index
    %c0_245 = arith.constant 0 : index
    %698 = vector.load %arg5[%c0_244, %c0_245] : memref<128x128xbf16, #tpu.memory_space<vmem>>, vector<128x128xbf16>
    %cst_246 = arith.constant dense<0.000000e+00> : vector<16x128xf32>
    %699 = tpu.matmul %697, %698, %cst_246 {dimension_numbers = #tpu.dot_dimension_numbers<[1], [0], [0], [1], [0, 0, 1, 1], [], []>} : vector<16x128xbf16>, vector<128x128xbf16>, vector<16x128xf32> -> vector<16x128xf32>
    %700 = arith.addf %695, %699 : vector<16x128xf32>
    %701 = math.tanh %700 : vector<16x128xf32>
    %702 = vector.extract_strided_slice %673 {offsets = [0, 384], sizes = [16, 128], strides = [1, 1]} : vector<16x512xf32> to vector<16x128xf32>
    %703 = arith.mulf %667, %5 : vector<16x128xf32>
    %704 = arith.addf %702, %703 : vector<16x128xf32>
    %cst_247 = arith.constant 0.000000e+00 : f32
    %705 = vector.broadcast %cst_247 : f32 to vector<16x128xf32>
    %706 = arith.maximumf %704, %705 : vector<16x128xf32>
    %707 = vector.broadcast %675 : vector<16x1xf32> to vector<16x128xf32>
    %708 = arith.mulf %11, %707 : vector<16x128xf32>
    %709 = arith.addf %708, %14 : vector<16x128xf32>
    %cst_248 = arith.constant 0.000000e+00 : f32
    %710 = vector.broadcast %cst_248 : f32 to vector<16x128xf32>
    %711 = arith.maximumf %709, %710 : vector<16x128xf32>
    %712 = arith.mulf %8, %706 : vector<16x128xf32>
    %713 = arith.mulf %17, %711 : vector<16x128xf32>
    %714 = arith.addf %712, %713 : vector<16x128xf32>
    %715 = arith.addf %714, %20 : vector<16x128xf32>
    %716 = arith.negf %715 : vector<16x128xf32>
    %717 = math.exp %716 : vector<16x128xf32>
    %cst_249 = arith.constant 1.000000e+00 : f32
    %718 = vector.broadcast %cst_249 : f32 to vector<16x128xf32>
    %719 = arith.addf %718, %717 : vector<16x128xf32>
    %720 = arith.divf %718, %719 : vector<16x128xf32>
    %721 = arith.mulf %694, %667 : vector<16x128xf32>
    %cst_250 = arith.constant 1.000000e+00 : f32
    %722 = vector.broadcast %cst_250 : f32 to vector<16x128xf32>
    %723 = arith.subf %722, %694 : vector<16x128xf32>
    %724 = arith.mulf %723, %701 : vector<16x128xf32>
    %725 = arith.mulf %724, %720 : vector<16x128xf32>
    %726 = arith.addf %721, %725 : vector<16x128xf32>
    %c11_251 = arith.constant 11 : index
    %c0_252 = arith.constant 0 : index
    %c0_253 = arith.constant 0 : index
    %727 = vector.load %arg7[%c11_251, %c0_252, %c0_253] : memref<16x16x128xf32, #tpu.memory_space<vmem>>, vector<1x16x128xf32>
    %728 = vector.shape_cast %727 : vector<1x16x128xf32> to vector<16x128xf32>
    %729 = vector.shape_cast %726 : vector<16x128xf32> to vector<1x16x128xf32>
    tpu.vector_store %arg7[%c11_251, %c0_252, %c0_253], %729 {strides = array<i32>} : memref<16x16x128xf32, #tpu.memory_space<vmem>>, vector<1x16x128xf32>,
    %c12 = arith.constant 12 : index
    %c0_254 = arith.constant 0 : index
    %c0_255 = arith.constant 0 : index
    %730 = vector.load %arg2[%c12, %c0_254, %c0_255] : memref<16x16x512xbf16, #tpu.memory_space<vmem>>, vector<1x16x512xbf16>
    %731 = vector.shape_cast %730 : vector<1x16x512xbf16> to vector<16x512xbf16>
    %732 = arith.extf %731 : vector<16x512xbf16> to vector<16x512xf32>
    %c12_256 = arith.constant 12 : index
    %c0_257 = arith.constant 0 : index
    %c0_258 = arith.constant 0 : index
    %733 = vector.load %arg3[%c12_256, %c0_257, %c0_258] : memref<16x16x1xf32, #tpu.memory_space<vmem>>, vector<1x16x1xf32>
    %734 = vector.shape_cast %733 : vector<1x16x1xf32> to vector<16x1xf32>
    %735 = arith.truncf %726 : vector<16x128xf32> to vector<16x128xbf16>
    %c0_259 = arith.constant 0 : index
    %c0_260 = arith.constant 0 : index
    %736 = vector.load %arg4[%c0_259, %c0_260] : memref<128x256xbf16, #tpu.memory_space<vmem>>, vector<128x256xbf16>
    %cst_261 = arith.constant dense<0.000000e+00> : vector<16x256xf32>
    %737 = tpu.matmul %735, %736, %cst_261 {dimension_numbers = #tpu.dot_dimension_numbers<[1], [0], [0], [1], [0, 0, 1, 1], [], []>} : vector<16x128xbf16>, vector<128x256xbf16>, vector<16x256xf32> -> vector<16x256xf32>
    %738 = vector.extract_strided_slice %732 {offsets = [0, 0], sizes = [16, 128], strides = [1, 1]} : vector<16x512xf32> to vector<16x128xf32>
    %739 = vector.extract_strided_slice %737 {offsets = [0, 0], sizes = [16, 128], strides = [1, 1]} : vector<16x256xf32> to vector<16x128xf32>
    %740 = arith.addf %738, %739 : vector<16x128xf32>
    %741 = arith.negf %740 : vector<16x128xf32>
    %742 = math.exp %741 : vector<16x128xf32>
    %cst_262 = arith.constant 1.000000e+00 : f32
    %743 = vector.broadcast %cst_262 : f32 to vector<16x128xf32>
    %744 = arith.addf %743, %742 : vector<16x128xf32>
    %745 = arith.divf %743, %744 : vector<16x128xf32>
    %746 = vector.extract_strided_slice %732 {offsets = [0, 128], sizes = [16, 128], strides = [1, 1]} : vector<16x512xf32> to vector<16x128xf32>
    %747 = vector.extract_strided_slice %737 {offsets = [0, 128], sizes = [16, 128], strides = [1, 1]} : vector<16x256xf32> to vector<16x128xf32>
    %748 = arith.addf %746, %747 : vector<16x128xf32>
    %749 = arith.negf %748 : vector<16x128xf32>
    %750 = math.exp %749 : vector<16x128xf32>
    %cst_263 = arith.constant 1.000000e+00 : f32
    %751 = vector.broadcast %cst_263 : f32 to vector<16x128xf32>
    %752 = arith.addf %751, %750 : vector<16x128xf32>
    %753 = arith.divf %751, %752 : vector<16x128xf32>
    %754 = vector.extract_strided_slice %732 {offsets = [0, 256], sizes = [16, 128], strides = [1, 1]} : vector<16x512xf32> to vector<16x128xf32>
    %755 = arith.mulf %745, %726 : vector<16x128xf32>
    %756 = arith.truncf %755 : vector<16x128xf32> to vector<16x128xbf16>
    %c0_264 = arith.constant 0 : index
    %c0_265 = arith.constant 0 : index
    %757 = vector.load %arg5[%c0_264, %c0_265] : memref<128x128xbf16, #tpu.memory_space<vmem>>, vector<128x128xbf16>
    %cst_266 = arith.constant dense<0.000000e+00> : vector<16x128xf32>
    %758 = tpu.matmul %756, %757, %cst_266 {dimension_numbers = #tpu.dot_dimension_numbers<[1], [0], [0], [1], [0, 0, 1, 1], [], []>} : vector<16x128xbf16>, vector<128x128xbf16>, vector<16x128xf32> -> vector<16x128xf32>
    %759 = arith.addf %754, %758 : vector<16x128xf32>
    %760 = math.tanh %759 : vector<16x128xf32>
    %761 = vector.extract_strided_slice %732 {offsets = [0, 384], sizes = [16, 128], strides = [1, 1]} : vector<16x512xf32> to vector<16x128xf32>
    %762 = arith.mulf %726, %5 : vector<16x128xf32>
    %763 = arith.addf %761, %762 : vector<16x128xf32>
    %cst_267 = arith.constant 0.000000e+00 : f32
    %764 = vector.broadcast %cst_267 : f32 to vector<16x128xf32>
    %765 = arith.maximumf %763, %764 : vector<16x128xf32>
    %766 = vector.broadcast %734 : vector<16x1xf32> to vector<16x128xf32>
    %767 = arith.mulf %11, %766 : vector<16x128xf32>
    %768 = arith.addf %767, %14 : vector<16x128xf32>
    %cst_268 = arith.constant 0.000000e+00 : f32
    %769 = vector.broadcast %cst_268 : f32 to vector<16x128xf32>
    %770 = arith.maximumf %768, %769 : vector<16x128xf32>
    %771 = arith.mulf %8, %765 : vector<16x128xf32>
    %772 = arith.mulf %17, %770 : vector<16x128xf32>
    %773 = arith.addf %771, %772 : vector<16x128xf32>
    %774 = arith.addf %773, %20 : vector<16x128xf32>
    %775 = arith.negf %774 : vector<16x128xf32>
    %776 = math.exp %775 : vector<16x128xf32>
    %cst_269 = arith.constant 1.000000e+00 : f32
    %777 = vector.broadcast %cst_269 : f32 to vector<16x128xf32>
    %778 = arith.addf %777, %776 : vector<16x128xf32>
    %779 = arith.divf %777, %778 : vector<16x128xf32>
    %780 = arith.mulf %753, %726 : vector<16x128xf32>
    %cst_270 = arith.constant 1.000000e+00 : f32
    %781 = vector.broadcast %cst_270 : f32 to vector<16x128xf32>
    %782 = arith.subf %781, %753 : vector<16x128xf32>
    %783 = arith.mulf %782, %760 : vector<16x128xf32>
    %784 = arith.mulf %783, %779 : vector<16x128xf32>
    %785 = arith.addf %780, %784 : vector<16x128xf32>
    %c12_271 = arith.constant 12 : index
    %c0_272 = arith.constant 0 : index
    %c0_273 = arith.constant 0 : index
    %786 = vector.load %arg7[%c12_271, %c0_272, %c0_273] : memref<16x16x128xf32, #tpu.memory_space<vmem>>, vector<1x16x128xf32>
    %787 = vector.shape_cast %786 : vector<1x16x128xf32> to vector<16x128xf32>
    %788 = vector.shape_cast %785 : vector<16x128xf32> to vector<1x16x128xf32>
    tpu.vector_store %arg7[%c12_271, %c0_272, %c0_273], %788 {strides = array<i32>} : memref<16x16x128xf32, #tpu.memory_space<vmem>>, vector<1x16x128xf32>,
    %c13 = arith.constant 13 : index
    %c0_274 = arith.constant 0 : index
    %c0_275 = arith.constant 0 : index
    %789 = vector.load %arg2[%c13, %c0_274, %c0_275] : memref<16x16x512xbf16, #tpu.memory_space<vmem>>, vector<1x16x512xbf16>
    %790 = vector.shape_cast %789 : vector<1x16x512xbf16> to vector<16x512xbf16>
    %791 = arith.extf %790 : vector<16x512xbf16> to vector<16x512xf32>
    %c13_276 = arith.constant 13 : index
    %c0_277 = arith.constant 0 : index
    %c0_278 = arith.constant 0 : index
    %792 = vector.load %arg3[%c13_276, %c0_277, %c0_278] : memref<16x16x1xf32, #tpu.memory_space<vmem>>, vector<1x16x1xf32>
    %793 = vector.shape_cast %792 : vector<1x16x1xf32> to vector<16x1xf32>
    %794 = arith.truncf %785 : vector<16x128xf32> to vector<16x128xbf16>
    %c0_279 = arith.constant 0 : index
    %c0_280 = arith.constant 0 : index
    %795 = vector.load %arg4[%c0_279, %c0_280] : memref<128x256xbf16, #tpu.memory_space<vmem>>, vector<128x256xbf16>
    %cst_281 = arith.constant dense<0.000000e+00> : vector<16x256xf32>
    %796 = tpu.matmul %794, %795, %cst_281 {dimension_numbers = #tpu.dot_dimension_numbers<[1], [0], [0], [1], [0, 0, 1, 1], [], []>} : vector<16x128xbf16>, vector<128x256xbf16>, vector<16x256xf32> -> vector<16x256xf32>
    %797 = vector.extract_strided_slice %791 {offsets = [0, 0], sizes = [16, 128], strides = [1, 1]} : vector<16x512xf32> to vector<16x128xf32>
    %798 = vector.extract_strided_slice %796 {offsets = [0, 0], sizes = [16, 128], strides = [1, 1]} : vector<16x256xf32> to vector<16x128xf32>
    %799 = arith.addf %797, %798 : vector<16x128xf32>
    %800 = arith.negf %799 : vector<16x128xf32>
    %801 = math.exp %800 : vector<16x128xf32>
    %cst_282 = arith.constant 1.000000e+00 : f32
    %802 = vector.broadcast %cst_282 : f32 to vector<16x128xf32>
    %803 = arith.addf %802, %801 : vector<16x128xf32>
    %804 = arith.divf %802, %803 : vector<16x128xf32>
    %805 = vector.extract_strided_slice %791 {offsets = [0, 128], sizes = [16, 128], strides = [1, 1]} : vector<16x512xf32> to vector<16x128xf32>
    %806 = vector.extract_strided_slice %796 {offsets = [0, 128], sizes = [16, 128], strides = [1, 1]} : vector<16x256xf32> to vector<16x128xf32>
    %807 = arith.addf %805, %806 : vector<16x128xf32>
    %808 = arith.negf %807 : vector<16x128xf32>
    %809 = math.exp %808 : vector<16x128xf32>
    %cst_283 = arith.constant 1.000000e+00 : f32
    %810 = vector.broadcast %cst_283 : f32 to vector<16x128xf32>
    %811 = arith.addf %810, %809 : vector<16x128xf32>
    %812 = arith.divf %810, %811 : vector<16x128xf32>
    %813 = vector.extract_strided_slice %791 {offsets = [0, 256], sizes = [16, 128], strides = [1, 1]} : vector<16x512xf32> to vector<16x128xf32>
    %814 = arith.mulf %804, %785 : vector<16x128xf32>
    %815 = arith.truncf %814 : vector<16x128xf32> to vector<16x128xbf16>
    %c0_284 = arith.constant 0 : index
    %c0_285 = arith.constant 0 : index
    %816 = vector.load %arg5[%c0_284, %c0_285] : memref<128x128xbf16, #tpu.memory_space<vmem>>, vector<128x128xbf16>
    %cst_286 = arith.constant dense<0.000000e+00> : vector<16x128xf32>
    %817 = tpu.matmul %815, %816, %cst_286 {dimension_numbers = #tpu.dot_dimension_numbers<[1], [0], [0], [1], [0, 0, 1, 1], [], []>} : vector<16x128xbf16>, vector<128x128xbf16>, vector<16x128xf32> -> vector<16x128xf32>
    %818 = arith.addf %813, %817 : vector<16x128xf32>
    %819 = math.tanh %818 : vector<16x128xf32>
    %820 = vector.extract_strided_slice %791 {offsets = [0, 384], sizes = [16, 128], strides = [1, 1]} : vector<16x512xf32> to vector<16x128xf32>
    %821 = arith.mulf %785, %5 : vector<16x128xf32>
    %822 = arith.addf %820, %821 : vector<16x128xf32>
    %cst_287 = arith.constant 0.000000e+00 : f32
    %823 = vector.broadcast %cst_287 : f32 to vector<16x128xf32>
    %824 = arith.maximumf %822, %823 : vector<16x128xf32>
    %825 = vector.broadcast %793 : vector<16x1xf32> to vector<16x128xf32>
    %826 = arith.mulf %11, %825 : vector<16x128xf32>
    %827 = arith.addf %826, %14 : vector<16x128xf32>
    %cst_288 = arith.constant 0.000000e+00 : f32
    %828 = vector.broadcast %cst_288 : f32 to vector<16x128xf32>
    %829 = arith.maximumf %827, %828 : vector<16x128xf32>
    %830 = arith.mulf %8, %824 : vector<16x128xf32>
    %831 = arith.mulf %17, %829 : vector<16x128xf32>
    %832 = arith.addf %830, %831 : vector<16x128xf32>
    %833 = arith.addf %832, %20 : vector<16x128xf32>
    %834 = arith.negf %833 : vector<16x128xf32>
    %835 = math.exp %834 : vector<16x128xf32>
    %cst_289 = arith.constant 1.000000e+00 : f32
    %836 = vector.broadcast %cst_289 : f32 to vector<16x128xf32>
    %837 = arith.addf %836, %835 : vector<16x128xf32>
    %838 = arith.divf %836, %837 : vector<16x128xf32>
    %839 = arith.mulf %812, %785 : vector<16x128xf32>
    %cst_290 = arith.constant 1.000000e+00 : f32
    %840 = vector.broadcast %cst_290 : f32 to vector<16x128xf32>
    %841 = arith.subf %840, %812 : vector<16x128xf32>
    %842 = arith.mulf %841, %819 : vector<16x128xf32>
    %843 = arith.mulf %842, %838 : vector<16x128xf32>
    %844 = arith.addf %839, %843 : vector<16x128xf32>
    %c13_291 = arith.constant 13 : index
    %c0_292 = arith.constant 0 : index
    %c0_293 = arith.constant 0 : index
    %845 = vector.load %arg7[%c13_291, %c0_292, %c0_293] : memref<16x16x128xf32, #tpu.memory_space<vmem>>, vector<1x16x128xf32>
    %846 = vector.shape_cast %845 : vector<1x16x128xf32> to vector<16x128xf32>
    %847 = vector.shape_cast %844 : vector<16x128xf32> to vector<1x16x128xf32>
    tpu.vector_store %arg7[%c13_291, %c0_292, %c0_293], %847 {strides = array<i32>} : memref<16x16x128xf32, #tpu.memory_space<vmem>>, vector<1x16x128xf32>,
    %c14 = arith.constant 14 : index
    %c0_294 = arith.constant 0 : index
    %c0_295 = arith.constant 0 : index
    %848 = vector.load %arg2[%c14, %c0_294, %c0_295] : memref<16x16x512xbf16, #tpu.memory_space<vmem>>, vector<1x16x512xbf16>
    %849 = vector.shape_cast %848 : vector<1x16x512xbf16> to vector<16x512xbf16>
    %850 = arith.extf %849 : vector<16x512xbf16> to vector<16x512xf32>
    %c14_296 = arith.constant 14 : index
    %c0_297 = arith.constant 0 : index
    %c0_298 = arith.constant 0 : index
    %851 = vector.load %arg3[%c14_296, %c0_297, %c0_298] : memref<16x16x1xf32, #tpu.memory_space<vmem>>, vector<1x16x1xf32>
    %852 = vector.shape_cast %851 : vector<1x16x1xf32> to vector<16x1xf32>
    %853 = arith.truncf %844 : vector<16x128xf32> to vector<16x128xbf16>
    %c0_299 = arith.constant 0 : index
    %c0_300 = arith.constant 0 : index
    %854 = vector.load %arg4[%c0_299, %c0_300] : memref<128x256xbf16, #tpu.memory_space<vmem>>, vector<128x256xbf16>
    %cst_301 = arith.constant dense<0.000000e+00> : vector<16x256xf32>
    %855 = tpu.matmul %853, %854, %cst_301 {dimension_numbers = #tpu.dot_dimension_numbers<[1], [0], [0], [1], [0, 0, 1, 1], [], []>} : vector<16x128xbf16>, vector<128x256xbf16>, vector<16x256xf32> -> vector<16x256xf32>
    %856 = vector.extract_strided_slice %850 {offsets = [0, 0], sizes = [16, 128], strides = [1, 1]} : vector<16x512xf32> to vector<16x128xf32>
    %857 = vector.extract_strided_slice %855 {offsets = [0, 0], sizes = [16, 128], strides = [1, 1]} : vector<16x256xf32> to vector<16x128xf32>
    %858 = arith.addf %856, %857 : vector<16x128xf32>
    %859 = arith.negf %858 : vector<16x128xf32>
    %860 = math.exp %859 : vector<16x128xf32>
    %cst_302 = arith.constant 1.000000e+00 : f32
    %861 = vector.broadcast %cst_302 : f32 to vector<16x128xf32>
    %862 = arith.addf %861, %860 : vector<16x128xf32>
    %863 = arith.divf %861, %862 : vector<16x128xf32>
    %864 = vector.extract_strided_slice %850 {offsets = [0, 128], sizes = [16, 128], strides = [1, 1]} : vector<16x512xf32> to vector<16x128xf32>
    %865 = vector.extract_strided_slice %855 {offsets = [0, 128], sizes = [16, 128], strides = [1, 1]} : vector<16x256xf32> to vector<16x128xf32>
    %866 = arith.addf %864, %865 : vector<16x128xf32>
    %867 = arith.negf %866 : vector<16x128xf32>
    %868 = math.exp %867 : vector<16x128xf32>
    %cst_303 = arith.constant 1.000000e+00 : f32
    %869 = vector.broadcast %cst_303 : f32 to vector<16x128xf32>
    %870 = arith.addf %869, %868 : vector<16x128xf32>
    %871 = arith.divf %869, %870 : vector<16x128xf32>
    %872 = vector.extract_strided_slice %850 {offsets = [0, 256], sizes = [16, 128], strides = [1, 1]} : vector<16x512xf32> to vector<16x128xf32>
    %873 = arith.mulf %863, %844 : vector<16x128xf32>
    %874 = arith.truncf %873 : vector<16x128xf32> to vector<16x128xbf16>
    %c0_304 = arith.constant 0 : index
    %c0_305 = arith.constant 0 : index
    %875 = vector.load %arg5[%c0_304, %c0_305] : memref<128x128xbf16, #tpu.memory_space<vmem>>, vector<128x128xbf16>
    %cst_306 = arith.constant dense<0.000000e+00> : vector<16x128xf32>
    %876 = tpu.matmul %874, %875, %cst_306 {dimension_numbers = #tpu.dot_dimension_numbers<[1], [0], [0], [1], [0, 0, 1, 1], [], []>} : vector<16x128xbf16>, vector<128x128xbf16>, vector<16x128xf32> -> vector<16x128xf32>
    %877 = arith.addf %872, %876 : vector<16x128xf32>
    %878 = math.tanh %877 : vector<16x128xf32>
    %879 = vector.extract_strided_slice %850 {offsets = [0, 384], sizes = [16, 128], strides = [1, 1]} : vector<16x512xf32> to vector<16x128xf32>
    %880 = arith.mulf %844, %5 : vector<16x128xf32>
    %881 = arith.addf %879, %880 : vector<16x128xf32>
    %cst_307 = arith.constant 0.000000e+00 : f32
    %882 = vector.broadcast %cst_307 : f32 to vector<16x128xf32>
    %883 = arith.maximumf %881, %882 : vector<16x128xf32>
    %884 = vector.broadcast %852 : vector<16x1xf32> to vector<16x128xf32>
    %885 = arith.mulf %11, %884 : vector<16x128xf32>
    %886 = arith.addf %885, %14 : vector<16x128xf32>
    %cst_308 = arith.constant 0.000000e+00 : f32
    %887 = vector.broadcast %cst_308 : f32 to vector<16x128xf32>
    %888 = arith.maximumf %886, %887 : vector<16x128xf32>
    %889 = arith.mulf %8, %883 : vector<16x128xf32>
    %890 = arith.mulf %17, %888 : vector<16x128xf32>
    %891 = arith.addf %889, %890 : vector<16x128xf32>
    %892 = arith.addf %891, %20 : vector<16x128xf32>
    %893 = arith.negf %892 : vector<16x128xf32>
    %894 = math.exp %893 : vector<16x128xf32>
    %cst_309 = arith.constant 1.000000e+00 : f32
    %895 = vector.broadcast %cst_309 : f32 to vector<16x128xf32>
    %896 = arith.addf %895, %894 : vector<16x128xf32>
    %897 = arith.divf %895, %896 : vector<16x128xf32>
    %898 = arith.mulf %871, %844 : vector<16x128xf32>
    %cst_310 = arith.constant 1.000000e+00 : f32
    %899 = vector.broadcast %cst_310 : f32 to vector<16x128xf32>
    %900 = arith.subf %899, %871 : vector<16x128xf32>
    %901 = arith.mulf %900, %878 : vector<16x128xf32>
    %902 = arith.mulf %901, %897 : vector<16x128xf32>
    %903 = arith.addf %898, %902 : vector<16x128xf32>
    %c14_311 = arith.constant 14 : index
    %c0_312 = arith.constant 0 : index
    %c0_313 = arith.constant 0 : index
    %904 = vector.load %arg7[%c14_311, %c0_312, %c0_313] : memref<16x16x128xf32, #tpu.memory_space<vmem>>, vector<1x16x128xf32>
    %905 = vector.shape_cast %904 : vector<1x16x128xf32> to vector<16x128xf32>
    %906 = vector.shape_cast %903 : vector<16x128xf32> to vector<1x16x128xf32>
    tpu.vector_store %arg7[%c14_311, %c0_312, %c0_313], %906 {strides = array<i32>} : memref<16x16x128xf32, #tpu.memory_space<vmem>>, vector<1x16x128xf32>,
    %c15 = arith.constant 15 : index
    %c0_314 = arith.constant 0 : index
    %c0_315 = arith.constant 0 : index
    %907 = vector.load %arg2[%c15, %c0_314, %c0_315] : memref<16x16x512xbf16, #tpu.memory_space<vmem>>, vector<1x16x512xbf16>
    %908 = vector.shape_cast %907 : vector<1x16x512xbf16> to vector<16x512xbf16>
    %909 = arith.extf %908 : vector<16x512xbf16> to vector<16x512xf32>
    %c15_316 = arith.constant 15 : index
    %c0_317 = arith.constant 0 : index
    %c0_318 = arith.constant 0 : index
    %910 = vector.load %arg3[%c15_316, %c0_317, %c0_318] : memref<16x16x1xf32, #tpu.memory_space<vmem>>, vector<1x16x1xf32>
    %911 = vector.shape_cast %910 : vector<1x16x1xf32> to vector<16x1xf32>
    %912 = arith.truncf %903 : vector<16x128xf32> to vector<16x128xbf16>
    %c0_319 = arith.constant 0 : index
    %c0_320 = arith.constant 0 : index
    %913 = vector.load %arg4[%c0_319, %c0_320] : memref<128x256xbf16, #tpu.memory_space<vmem>>, vector<128x256xbf16>
    %cst_321 = arith.constant dense<0.000000e+00> : vector<16x256xf32>
    %914 = tpu.matmul %912, %913, %cst_321 {dimension_numbers = #tpu.dot_dimension_numbers<[1], [0], [0], [1], [0, 0, 1, 1], [], []>} : vector<16x128xbf16>, vector<128x256xbf16>, vector<16x256xf32> -> vector<16x256xf32>
    %915 = vector.extract_strided_slice %909 {offsets = [0, 0], sizes = [16, 128], strides = [1, 1]} : vector<16x512xf32> to vector<16x128xf32>
    %916 = vector.extract_strided_slice %914 {offsets = [0, 0], sizes = [16, 128], strides = [1, 1]} : vector<16x256xf32> to vector<16x128xf32>
    %917 = arith.addf %915, %916 : vector<16x128xf32>
    %918 = arith.negf %917 : vector<16x128xf32>
    %919 = math.exp %918 : vector<16x128xf32>
    %cst_322 = arith.constant 1.000000e+00 : f32
    %920 = vector.broadcast %cst_322 : f32 to vector<16x128xf32>
    %921 = arith.addf %920, %919 : vector<16x128xf32>
    %922 = arith.divf %920, %921 : vector<16x128xf32>
    %923 = vector.extract_strided_slice %909 {offsets = [0, 128], sizes = [16, 128], strides = [1, 1]} : vector<16x512xf32> to vector<16x128xf32>
    %924 = vector.extract_strided_slice %914 {offsets = [0, 128], sizes = [16, 128], strides = [1, 1]} : vector<16x256xf32> to vector<16x128xf32>
    %925 = arith.addf %923, %924 : vector<16x128xf32>
    %926 = arith.negf %925 : vector<16x128xf32>
    %927 = math.exp %926 : vector<16x128xf32>
    %cst_323 = arith.constant 1.000000e+00 : f32
    %928 = vector.broadcast %cst_323 : f32 to vector<16x128xf32>
    %929 = arith.addf %928, %927 : vector<16x128xf32>
    %930 = arith.divf %928, %929 : vector<16x128xf32>
    %931 = vector.extract_strided_slice %909 {offsets = [0, 256], sizes = [16, 128], strides = [1, 1]} : vector<16x512xf32> to vector<16x128xf32>
    %932 = arith.mulf %922, %903 : vector<16x128xf32>
    %933 = arith.truncf %932 : vector<16x128xf32> to vector<16x128xbf16>
    %c0_324 = arith.constant 0 : index
    %c0_325 = arith.constant 0 : index
    %934 = vector.load %arg5[%c0_324, %c0_325] : memref<128x128xbf16, #tpu.memory_space<vmem>>, vector<128x128xbf16>
    %cst_326 = arith.constant dense<0.000000e+00> : vector<16x128xf32>
    %935 = tpu.matmul %933, %934, %cst_326 {dimension_numbers = #tpu.dot_dimension_numbers<[1], [0], [0], [1], [0, 0, 1, 1], [], []>} : vector<16x128xbf16>, vector<128x128xbf16>, vector<16x128xf32> -> vector<16x128xf32>
    %936 = arith.addf %931, %935 : vector<16x128xf32>
    %937 = math.tanh %936 : vector<16x128xf32>
    %938 = vector.extract_strided_slice %909 {offsets = [0, 384], sizes = [16, 128], strides = [1, 1]} : vector<16x512xf32> to vector<16x128xf32>
    %939 = arith.mulf %903, %5 : vector<16x128xf32>
    %940 = arith.addf %938, %939 : vector<16x128xf32>
    %cst_327 = arith.constant 0.000000e+00 : f32
    %941 = vector.broadcast %cst_327 : f32 to vector<16x128xf32>
    %942 = arith.maximumf %940, %941 : vector<16x128xf32>
    %943 = vector.broadcast %911 : vector<16x1xf32> to vector<16x128xf32>
    %944 = arith.mulf %11, %943 : vector<16x128xf32>
    %945 = arith.addf %944, %14 : vector<16x128xf32>
    %cst_328 = arith.constant 0.000000e+00 : f32
    %946 = vector.broadcast %cst_328 : f32 to vector<16x128xf32>
    %947 = arith.maximumf %945, %946 : vector<16x128xf32>
    %948 = arith.mulf %8, %942 : vector<16x128xf32>
    %949 = arith.mulf %17, %947 : vector<16x128xf32>
    %950 = arith.addf %948, %949 : vector<16x128xf32>
    %951 = arith.addf %950, %20 : vector<16x128xf32>
    %952 = arith.negf %951 : vector<16x128xf32>
    %953 = math.exp %952 : vector<16x128xf32>
    %cst_329 = arith.constant 1.000000e+00 : f32
    %954 = vector.broadcast %cst_329 : f32 to vector<16x128xf32>
    %955 = arith.addf %954, %953 : vector<16x128xf32>
    %956 = arith.divf %954, %955 : vector<16x128xf32>
    %957 = arith.mulf %930, %903 : vector<16x128xf32>
    %cst_330 = arith.constant 1.000000e+00 : f32
    %958 = vector.broadcast %cst_330 : f32 to vector<16x128xf32>
    %959 = arith.subf %958, %930 : vector<16x128xf32>
    %960 = arith.mulf %959, %937 : vector<16x128xf32>
    %961 = arith.mulf %960, %956 : vector<16x128xf32>
    %962 = arith.addf %957, %961 : vector<16x128xf32>
    %c15_331 = arith.constant 15 : index
    %c0_332 = arith.constant 0 : index
    %c0_333 = arith.constant 0 : index
    %963 = vector.load %arg7[%c15_331, %c0_332, %c0_333] : memref<16x16x128xf32, #tpu.memory_space<vmem>>, vector<1x16x128xf32>
    %964 = vector.shape_cast %963 : vector<1x16x128xf32> to vector<16x128xf32>
    %965 = vector.shape_cast %962 : vector<16x128xf32> to vector<1x16x128xf32>
    tpu.vector_store %arg7[%c15_331, %c0_332, %c0_333], %965 {strides = array<i32>} : memref<16x16x128xf32, #tpu.memory_space<vmem>>, vector<1x16x128xf32>,
    %c0_334 = arith.constant 0 : index
    %c0_335 = arith.constant 0 : index
    %966 = vector.load %arg8[%c0_334, %c0_335] : memref<16x128xf32, #tpu.memory_space<vmem>>, vector<16x128xf32>
    tpu.vector_store %arg8[%c0_334, %c0_335], %962 {strides = array<i32>} : memref<16x128xf32, #tpu.memory_space<vmem>>, vector<16x128xf32>,
    return
  }
  func.func @transform_0(%arg0: i32, %arg1: i32) -> (i32, i32, i32) {
    %c0_i32 = arith.constant 0 : i32
    %c0_i32_0 = arith.constant 0 : i32
    return %arg1, %arg0, %c0_i32 : i32, i32, i32
  }
  func.func @transform_1(%arg0: i32, %arg1: i32) -> (i32, i32, i32) {
    %c0_i32 = arith.constant 0 : i32
    %c0_i32_0 = arith.constant 0 : i32
    return %arg1, %arg0, %c0_i32 : i32, i32, i32
  }
  func.func @transform_2(%arg0: i32, %arg1: i32) -> (i32, i32) {
    %c0_i32 = arith.constant 0 : i32
    %c0_i32_0 = arith.constant 0 : i32
    %c0_i32_1 = arith.constant 0 : i32
    return %c0_i32, %c0_i32_0 : i32, i32
  }
  func.func @transform_3(%arg0: i32, %arg1: i32) -> (i32, i32) {
    %c0_i32 = arith.constant 0 : i32
    %c0_i32_0 = arith.constant 0 : i32
    %c0_i32_1 = arith.constant 0 : i32
    return %c0_i32, %c0_i32_0 : i32, i32
  }
  func.func @transform_4(%arg0: i32, %arg1: i32) -> (i32, i32) {
    %c0_i32 = arith.constant 0 : i32
    %c0_i32_0 = arith.constant 0 : i32
    %c0_i32_1 = arith.constant 0 : i32
    return %c0_i32, %c0_i32_0 : i32, i32
  }
  func.func @transform_5(%arg0: i32, %arg1: i32) -> (i32, i32, i32) {
    %c0_i32 = arith.constant 0 : i32
    %c0_i32_0 = arith.constant 0 : i32
    return %arg1, %arg0, %c0_i32 : i32, i32, i32
  }
}

</mosaic_0001>

<llo_original>
// kernel: modified_gru_forward.1
$region0: #{modified_gru_forward.1}
  #allocation0 [shape = 'u32[]', space=smem, size = 0x4, offset = 0x4, fixed_abs, tag = 'smem constant byte address 0x4 - core index']
  #allocation1 [shape = 'u32[144,128]{1,0:T(1,128)}', space=vmem, size = 0x12000, scoped, tag = 'internal scratch']
  #allocation2 [shape = 'f32[16,128]{1,0:T(8,128)}', space=vmem, size = 0x2000, scoped, tag = 'scratch operand']
  %s0 = inlined_call_operand.vmem [shape: bf16[16,16,512], index: 0, kind: input, shape index: {}]
  %s1 = inlined_call_operand.vmem [shape: f32[16,16,1], index: 1, kind: input, shape index: {}]
  %s2 = inlined_call_operand.vmem [shape: bf16[128,256], index: 2, kind: input, shape index: {}]
  %s3 = inlined_call_operand.vmem [shape: bf16[128,128], index: 3, kind: input, shape index: {}]
  %s4 = inlined_call_operand.vmem [shape: f32[8,128], index: 4, kind: input, shape index: {}]
  %s5 = inlined_call_operand.vmem [shape: f32[16,16,128], index: 5, kind: output, shape index: {}]
  %s6 = sld [smem:[#allocation0]]
  $region34: #{modified_gru_forward.1} parent=0
    _
  %s8 = ssub.s32 1, %s6
  %s9 = scalar_select 0, %s8, %s6
  // Predicated region
  $region2: #{modified_gru_forward.1} parent=0 // pred_check
    _
  $region3: #{modified_gru_forward.1} parent=0 // pred_check_branch
    %11 = sbr.rel (0) target = $region5
  $region4: #{modified_gru_forward.1} parent=0 // pred_region
    _
  $region5: #{modified_gru_forward.1} parent=0 // pred_fallthru
    _
  // Predicated region
  $region6: #{modified_gru_forward.1} parent=0 // pred_check
    _
  $region7: #{modified_gru_forward.1} parent=0 // pred_check_branch
    %13 = sbr.rel (0) target = $region9
  $region8: #{modified_gru_forward.1} parent=0 // pred_region
    _
  $region9: #{modified_gru_forward.1} parent=0 // pred_fallthru
    _
  // Predicated region
  $region10: #{modified_gru_forward.1} parent=0 // pred_check
    _
  $region11: #{modified_gru_forward.1} parent=0 // pred_check_branch
    %15 = sbr.rel (0) target = $region13
  $region12: #{modified_gru_forward.1} parent=0 // pred_region
    _
  $region13: #{modified_gru_forward.1} parent=0 // pred_fallthru
    _
  // Predicated region
  $region14: #{modified_gru_forward.1} parent=0 // pred_check
    _
  $region15: #{modified_gru_forward.1} parent=0 // pred_check_branch
    %17 = sbr.rel (0) target = $region17
  $region16: #{modified_gru_forward.1} parent=0 // pred_region
    _
  $region17: #{modified_gru_forward.1} parent=0 // pred_fallthru
    _
  // Predicated region
  $region18: #{modified_gru_forward.1} parent=0 // pred_check
    _
  $region19: #{modified_gru_forward.1} parent=0 // pred_check_branch
    %19 = sbr.rel (0) target = $region21
  $region20: #{modified_gru_forward.1} parent=0 // pred_region
    _
  $region21: #{modified_gru_forward.1} parent=0 // pred_fallthru
    _
  %p21 = scmp.eq.s32.totalorder 0, 0
  // Predicated region
  $region22: #{modified_gru_forward.1} parent=0 // pred_check
    %p22 = pneg %p21
  $region23: #{modified_gru_forward.1} parent=0 // pred_check_branch
    %24 = sbr.rel (%p22) target = $region25
  $region24: #{modified_gru_forward.1} parent=0 // pred_region
    %25 = vst [vmem:[#allocation2] sm:$0xff] 0.0
    %26 = vst [vmem:[#allocation2 + $0x8] sm:$0xff] 0.0
  $region25: #{modified_gru_forward.1} parent=0 // pred_fallthru
    _
  %v27 = vld [vmem:[%s4] sm:$0x1]
  %v28 = vlaneseq
  %v29 = vshrl.u32 %v28, 7
  %v30 = vsub.s32 0, %v29
  %v31 = vrot.slane %v27, %v30
  %v32 = vld [vmem:[%s4 + $0x1] sm:$0x1]
  %v33 = vlaneseq
  %v34 = vshrl.u32 %v33, 7
  %v35 = vsub.s32 0, %v34
  %v36 = vrot.slane %v32, %v35
  %v37 = vld [vmem:[%s4 + $0x2] sm:$0x1]
  %v38 = vlaneseq
  %v39 = vshrl.u32 %v38, 7
  %v40 = vsub.s32 0, %v39
  %v41 = vrot.slane %v37, %v40
  %v42 = vld [vmem:[%s4 + $0x3] sm:$0x1]
  %v43 = vlaneseq
  %v44 = vshrl.u32 %v43, 7
  %v45 = vsub.s32 0, %v44
  %v46 = vrot.slane %v42, %v45
  %v47 = vld [vmem:[%s4 + $0x4] sm:$0x1]
  %v48 = vlaneseq
  %v49 = vshrl.u32 %v48, 7
  %v50 = vsub.s32 0, %v49
  %v51 = vrot.slane %v47, %v50
  %v52 = vld [vmem:[%s4 + $0x5] sm:$0x1]
  %v53 = vlaneseq
  %v54 = vshrl.u32 %v53, 7
  %v55 = vsub.s32 0, %v54
  %v56 = vrot.slane %v52, %v55
  %v57 = vld [vmem:[#allocation2] sm:$0xff]
  %v58 = vld [vmem:[#allocation2 + $0x8] sm:$0xff]
  %v59 = vld [vmem:[%s0] sm:$0xff]
  %v60 = vld [vmem:[%s0 + $0x8] sm:$0xff]
  %v61 = vld [vmem:[%s0 + $0x10] sm:$0xff]
  %v62 = vld [vmem:[%s0 + $0x18] sm:$0xff]
  %v63 = vunpack.c.l.bf16 %v59
  %v64 = vunpack.c.h.bf16 %v59
  %v65 = vunpack.c.l.bf16 %v60
  %v66 = vunpack.c.h.bf16 %v60
  %v67 = vunpack.c.l.bf16 %v61
  %v68 = vunpack.c.h.bf16 %v61
  %v69 = vunpack.c.l.bf16 %v62
  %v70 = vunpack.c.h.bf16 %v62
  %v71 = vld [vmem:[%s1] sm:$0xff]
  %v72 = vld [vmem:[%s1 + $0x8] sm:$0xff]
  %v73 = vpack.c.bf16 %v58, %v57
  %v74 = vld [vmem:[%s2] sm:$0xff]
  %v75 = vld [vmem:[%s2 + $0x8] sm:$0xff]
  %v76 = vld [vmem:[%s2 + $0x10] sm:$0xff]
  %v77 = vld [vmem:[%s2 + $0x18] sm:$0xff]
  %v78 = vld [vmem:[%s2 + $0x20] sm:$0xff]
  %v79 = vld [vmem:[%s2 + $0x28] sm:$0xff]
  %v80 = vld [vmem:[%s2 + $0x30] sm:$0xff]
  %v81 = vld [vmem:[%s2 + $0x38] sm:$0xff]
  %v82 = vld [vmem:[%s2 + $0x40] sm:$0xff]
  %v83 = vld [vmem:[%s2 + $0x48] sm:$0xff]
  %v84 = vld [vmem:[%s2 + $0x50] sm:$0xff]
  %v85 = vld [vmem:[%s2 + $0x58] sm:$0xff]
  %v86 = vld [vmem:[%s2 + $0x60] sm:$0xff]
  %v87 = vld [vmem:[%s2 + $0x68] sm:$0xff]
  %v88 = vld [vmem:[%s2 + $0x70] sm:$0xff]
  %v89 = vld [vmem:[%s2 + $0x78] sm:$0xff]
  %v106 = vunpack.c.l.b16 %v74
  %v107 = vunpack.c.h.b16 %v74
  %v108 = vunpack.c.l.b16 %v75
  %v109 = vunpack.c.h.b16 %v75
  %v110 = vunpack.c.l.b16 %v76
  %v111 = vunpack.c.h.b16 %v76
  %v112 = vunpack.c.l.b16 %v77
  %v113 = vunpack.c.h.b16 %v77
  %v114 = vunpack.c.l.b16 %v78
  %v115 = vunpack.c.h.b16 %v78
  %v116 = vunpack.c.l.b16 %v79
  %v117 = vunpack.c.h.b16 %v79
  %v118 = vunpack.c.l.b16 %v80
  %v119 = vunpack.c.h.b16 %v80
  %v120 = vunpack.c.l.b16 %v81
  %v121 = vunpack.c.h.b16 %v81
  %v122 = vunpack.c.l.b16 %v82
  %v123 = vunpack.c.h.b16 %v82
  %v124 = vunpack.c.l.b16 %v83
  %v125 = vunpack.c.h.b16 %v83
  %v126 = vunpack.c.l.b16 %v84
  %v127 = vunpack.c.h.b16 %v84
  %v128 = vunpack.c.l.b16 %v85
  %v129 = vunpack.c.h.b16 %v85
  %v130 = vunpack.c.l.b16 %v86
  %v131 = vunpack.c.h.b16 %v86
  %v132 = vunpack.c.l.b16 %v87
  %v133 = vunpack.c.h.b16 %v87
  %v134 = vunpack.c.l.b16 %v88
  %v135 = vunpack.c.h.b16 %v88
  %v136 = vunpack.c.l.b16 %v89
  %v137 = vunpack.c.h.b16 %v89
  %v138 = vpack.c.b16 %v108, %v106
  %v139 = vpack.c.b16 %v109, %v107
  %v140 = vpack.c.b16 %v112, %v110
  %v141 = vpack.c.b16 %v113, %v111
  %v142 = vpack.c.b16 %v116, %v114
  %v143 = vpack.c.b16 %v117, %v115
  %v144 = vpack.c.b16 %v120, %v118
  %v145 = vpack.c.b16 %v121, %v119
  %v146 = vpack.c.b16 %v124, %v122
  %v147 = vpack.c.b16 %v125, %v123
  %v148 = vpack.c.b16 %v128, %v126
  %v149 = vpack.c.b16 %v129, %v127
  %v150 = vpack.c.b16 %v132, %v130
  %v151 = vpack.c.b16 %v133, %v131
  %v152 = vpack.c.b16 %v136, %v134
  %v153 = vpack.c.b16 %v137, %v135
  %170 = vmatprep.subr.bf16.mxu0 %v139
  %171 = vmatpush1.bf16.msra.mxu0 %v138
  %172 = vmatprep.subr.bf16.mxu0 %v141
  %173 = vmatpush1.bf16.msra.mxu0 %v140
  %174 = vmatprep.subr.bf16.mxu0 %v143
  %175 = vmatpush1.bf16.msra.mxu0 %v142
  %176 = vmatprep.subr.bf16.mxu0 %v145
  %177 = vmatpush1.bf16.msra.mxu0 %v144
  %178 = vmatprep.subr.bf16.mxu0 %v147
  %179 = vmatpush1.bf16.msra.mxu0 %v146
  %180 = vmatprep.subr.bf16.mxu0 %v149
  %181 = vmatpush1.bf16.msra.mxu0 %v148
  %182 = vmatprep.subr.bf16.mxu0 %v151
  %183 = vmatpush1.bf16.msra.mxu0 %v150
  %184 = vmatprep.subr.bf16.mxu0 %v153
  %185 = vmatpush1.bf16.msra.mxu0 %v152
  %186 = vmatprep.subr.bf16.mxu0 0
  %187 = vmatpush1.bf16.msra.mxu0 0
  %188 = vmatprep.subr.bf16.mxu0 0
  %189 = vmatpush1.bf16.msra.mxu0 0
  %190 = vmatprep.subr.bf16.mxu0 0
  %191 = vmatpush1.bf16.msra.mxu0 0
  %192 = vmatprep.subr.bf16.mxu0 0
  %193 = vmatpush1.bf16.msra.mxu0 0
  %194 = vmatprep.subr.bf16.mxu0 0
  %195 = vmatpush1.bf16.msra.mxu0 0
  %196 = vmatprep.subr.bf16.mxu0 0
  %197 = vmatpush1.bf16.msra.mxu0 0
  %198 = vmatprep.subr.bf16.mxu0 0
  %199 = vmatpush1.bf16.msra.mxu0 0
  %200 = vmatprep.subr.bf16.mxu0 0
  %201 = vmatpush1.bf16.msra.mxu0 0
  %202 = vmatprep.mubr.bf16.mxu0 0
  %203 = vmatmul.mubr.bf16.gmra.mrb[0].mxu0 %v73
  %v204 = vpop.f32.mrb[0].mxu0
  %v205 = vadd.f32 0.0, %v204
  %v206 = vpop.f32.mrb[0].mxu0
  %v207 = vadd.f32 0.0, %v206
  %v208 = vpop.f32.mrb[0].mxu0
  %v209 = vadd.f32 0.0, %v208
  %v210 = vpop.f32.mrb[0].mxu0
  %v211 = vadd.f32 0.0, %v210
  %212 = vdwg.mxu0
  %v213 = vadd.f32 %v63, %v205
  %v214 = vadd.f32 %v67, %v209
  %v215 = vxor.u32 %v213, 2147483648
  %v216 = vxor.u32 %v214, 2147483648
  %v217 = vmul.f32 %v215, 1.442695
  %v218 = vpow.pop %v217
  %v219 = vmul.f32 %v216, 1.442695
  %v220 = vpow.pop %v219
  %v221 = vadd.f32 %v218, 1.0
  %v222 = vadd.f32 %v220, 1.0
  %v223 = vrcp.pop %v221
  %v224 = vmul.f32 1.0, %v223
  %v225 = vrcp.pop %v222
  %v226 = vmul.f32 1.0, %v225
  %v227 = vadd.f32 %v64, %v207
  %v228 = vadd.f32 %v68, %v211
  %v229 = vxor.u32 %v227, 2147483648
  %v230 = vxor.u32 %v228, 2147483648
  %v231 = vmul.f32 %v229, 1.442695
  %v232 = vpow.pop %v231
  %v233 = vmul.f32 %v230, 1.442695
  %v234 = vpow.pop %v233
  %v235 = vadd.f32 %v232, 1.0
  %v236 = vadd.f32 %v234, 1.0
  %v237 = vrcp.pop %v235
  %v238 = vmul.f32 1.0, %v237
  %v239 = vrcp.pop %v236
  %v240 = vmul.f32 1.0, %v239
  %v241 = vmul.f32 %v224, %v57
  %v242 = vmul.f32 %v226, %v58
  %v243 = vpack.c.bf16 %v242, %v241
  %v244 = vld [vmem:[%s3] sm:$0xf]
  %v245 = vld [vmem:[%s3 + $0x4] sm:$0xf]
  %v246 = vld [vmem:[%s3 + $0x8] sm:$0xf]
  %v247 = vld [vmem:[%s3 + $0xc] sm:$0xf]
  %v248 = vld [vmem:[%s3 + $0x10] sm:$0xf]
  %v249 = vld [vmem:[%s3 + $0x14] sm:$0xf]
  %v250 = vld [vmem:[%s3 + $0x18] sm:$0xf]
  %v251 = vld [vmem:[%s3 + $0x1c] sm:$0xf]
  %v252 = vld [vmem:[%s3 + $0x20] sm:$0xf]
  %v253 = vld [vmem:[%s3 + $0x24] sm:$0xf]
  %v254 = vld [vmem:[%s3 + $0x28] sm:$0xf]
  %v255 = vld [vmem:[%s3 + $0x2c] sm:$0xf]
  %v256 = vld [vmem:[%s3 + $0x30] sm:$0xf]
  %v257 = vld [vmem:[%s3 + $0x34] sm:$0xf]
  %v258 = vld [vmem:[%s3 + $0x38] sm:$0xf]
  %v259 = vld [vmem:[%s3 + $0x3c] sm:$0xf]
  %v276 = vunpack.c.l.b16 %v244
  %v277 = vunpack.c.l.b16 %v245
  %v278 = vunpack.c.l.b16 %v246
  %v279 = vunpack.c.l.b16 %v247
  %v280 = vunpack.c.l.b16 %v248
  %v281 = vunpack.c.l.b16 %v249
  %v282 = vunpack.c.l.b16 %v250
  %v283 = vunpack.c.l.b16 %v251
  %v284 = vunpack.c.l.b16 %v252
  %v285 = vunpack.c.l.b16 %v253
  %v286 = vunpack.c.l.b16 %v254
  %v287 = vunpack.c.l.b16 %v255
  %v288 = vunpack.c.l.b16 %v256
  %v289 = vunpack.c.l.b16 %v257
  %v290 = vunpack.c.l.b16 %v258
  %v291 = vunpack.c.l.b16 %v259
  %v292 = vpack.c.b16 %v277, %v276
  %v293 = vpack.c.b16 %v279, %v278
  %v294 = vpack.c.b16 %v281, %v280
  %v295 = vpack.c.b16 %v283, %v282
  %v296 = vpack.c.b16 %v285, %v284
  %v297 = vpack.c.b16 %v287, %v286
  %v298 = vpack.c.b16 %v289, %v288
  %v299 = vpack.c.b16 %v291, %v290
  %308 = vmatprep.subr.bf16.mxu0 0
  %309 = vmatpush1.bf16.msra.mxu0 %v292
  %310 = vmatprep.subr.bf16.mxu0 0
  %311 = vmatpush1.bf16.msra.mxu0 %v293
  %312 = vmatprep.subr.bf16.mxu0 0
  %313 = vmatpush1.bf16.msra.mxu0 %v294
  %314 = vmatprep.subr.bf16.mxu0 0
  %315 = vmatpush1.bf16.msra.mxu0 %v295
  %316 = vmatprep.subr.bf16.mxu0 0
  %317 = vmatpush1.bf16.msra.mxu0 %v296
  %318 = vmatprep.subr.bf16.mxu0 0
  %319 = vmatpush1.bf16.msra.mxu0 %v297
  %320 = vmatprep.subr.bf16.mxu0 0
  %321 = vmatpush1.bf16.msra.mxu0 %v298
  %322 = vmatprep.subr.bf16.mxu0 0
  %323 = vmatpush1.bf16.msra.mxu0 %v299
  %324 = vmatprep.subr.bf16.mxu0 0
  %325 = vmatpush1.bf16.msra.mxu0 0
  %326 = vmatprep.subr.bf16.mxu0 0
  %327 = vmatpush1.bf16.msra.mxu0 0
  %328 = vmatprep.subr.bf16.mxu0 0
  %329 = vmatpush1.bf16.msra.mxu0 0
  %330 = vmatprep.subr.bf16.mxu0 0
  %331 = vmatpush1.bf16.msra.mxu0 0
  %332 = vmatprep.subr.bf16.mxu0 0
  %333 = vmatpush1.bf16.msra.mxu0 0
  %334 = vmatprep.subr.bf16.mxu0 0
  %335 = vmatpush1.bf16.msra.mxu0 0
  %336 = vmatprep.subr.bf16.mxu0 0
  %337 = vmatpush1.bf16.msra.mxu0 0
  %338 = vmatprep.subr.bf16.mxu0 0
  %339 = vmatpush1.bf16.msra.mxu0 0
  %340 = vmatprep.mubr.bf16.mxu0 0
  %341 = vmatmul.mubr.bf16.gmra.mrb[0].mxu0 %v243
  %v342 = vpop.f32.mrb[0].mxu0
  %v343 = vadd.f32 0.0, %v342
  %v344 = vpop.f32.mrb[0].mxu0
  %v345 = vpop.f32.mrb[0].mxu0
  %v346 = vadd.f32 0.0, %v345
  %v347 = vpop.f32.mrb[0].mxu0
  %348 = vdwg.mxu0
  %v349 = vadd.f32 %v65, %v343
  %v350 = vadd.f32 %v69, %v346
  %v351 = vtanh.pop %v349
  %v352 = vtanh.pop %v350
  %v353 = vmul.f32 %v57, %v31
  %v354 = vmul.f32 %v58, %v31
  %v355 = vadd.f32 %v66, %v353
  %v356 = vadd.f32 %v70, %v354
  %v357 = vmax.f32 %v355, 0.0
  %v358 = vmax.f32 %v356, 0.0
  %360 = vset.pattern.permute.xlu0 0
  %361 = vperm.xlu0 %360, %v71
  %v362 = vpop.permute.xlu0 %361
  %365 = vset.pattern.permute.xlu0 0
  %366 = vperm.xlu0 %365, %v72
  %v367 = vpop.permute.xlu0 %366
  %v369 = vmul.f32 %v41, %v362
  %v370 = vmul.f32 %v41, %v367
  %v371 = vadd.f32 %v369, %v46
  %v372 = vadd.f32 %v370, %v46
  %v373 = vmax.f32 %v371, 0.0
  %v374 = vmax.f32 %v372, 0.0
  %v375 = vmul.f32 %v36, %v357
  %v376 = vmul.f32 %v36, %v358
  %v377 = vmul.f32 %v51, %v373
  %v378 = vmul.f32 %v51, %v374
  %v379 = vadd.f32 %v375, %v377
  %v380 = vadd.f32 %v376, %v378
  %v381 = vadd.f32 %v379, %v56
  %v382 = vadd.f32 %v380, %v56
  %v383 = vxor.u32 %v381, 2147483648
  %v384 = vxor.u32 %v382, 2147483648
  %v385 = vmul.f32 %v383, 1.442695
  %v386 = vpow.pop %v385
  %v387 = vmul.f32 %v384, 1.442695
  %v388 = vpow.pop %v387
  %v389 = vadd.f32 %v386, 1.0
  %v390 = vadd.f32 %v388, 1.0
  %v391 = vrcp.pop %v389
  %v392 = vmul.f32 1.0, %v391
  %v393 = vrcp.pop %v390
  %v394 = vmul.f32 1.0, %v393
  %v395 = vmul.f32 %v238, %v57
  %v396 = vmul.f32 %v240, %v58
  %v397 = vsub.f32 1.0, %v238
  %v398 = vsub.f32 1.0, %v240
  %v399 = vmul.f32 %v397, %v351
  %v400 = vmul.f32 %v398, %v352
  %v401 = vmul.f32 %v399, %v392
  %v402 = vmul.f32 %v400, %v394
  %v403 = vadd.f32 %v395, %v401
  %v404 = vadd.f32 %v396, %v402
  %405 = vst [vmem:[%s5] sm:$0xff] %v403
  %406 = vst [vmem:[%s5 + $0x8] sm:$0xff] %v404
  %s407 = scalar_lea.vmem %s0, 32
  %v408 = vld [vmem:[%s407] sm:$0xff]
  %v409 = vld [vmem:[%s407 + $0x8] sm:$0xff]
  %v410 = vld [vmem:[%s407 + $0x10] sm:$0xff]
  %v411 = vld [vmem:[%s407 + $0x18] sm:$0xff]
  %v412 = vunpack.c.l.bf16 %v408
  %v413 = vunpack.c.h.bf16 %v408
  %v414 = vunpack.c.l.bf16 %v409
  %v415 = vunpack.c.h.bf16 %v409
  %v416 = vunpack.c.l.bf16 %v410
  %v417 = vunpack.c.h.bf16 %v410
  %v418 = vunpack.c.l.bf16 %v411
  %v419 = vunpack.c.h.bf16 %v411
  %s420 = scalar_lea.vmem %s1, 16
  %v421 = vld [vmem:[%s420] sm:$0xff]
  %v422 = vld [vmem:[%s420 + $0x8] sm:$0xff]
  %v423 = vpack.c.bf16 %v404, %v403
  %v424 = vld [vmem:[%s2] sm:$0xff]
  %v425 = vld [vmem:[%s2 + $0x8] sm:$0xff]
  %v426 = vld [vmem:[%s2 + $0x10] sm:$0xff]
  %v427 = vld [vmem:[%s2 + $0x18] sm:$0xff]
  %v428 = vld [vmem:[%s2 + $0x20] sm:$0xff]
  %v429 = vld [vmem:[%s2 + $0x28] sm:$0xff]
  %v430 = vld [vmem:[%s2 + $0x30] sm:$0xff]
  %v431 = vld [vmem:[%s2 + $0x38] sm:$0xff]
  %v432 = vld [vmem:[%s2 + $0x40] sm:$0xff]
  %v433 = vld [vmem:[%s2 + $0x48] sm:$0xff]
  %v434 = vld [vmem:[%s2 + $0x50] sm:$0xff]
  %v435 = vld [vmem:[%s2 + $0x58] sm:$0xff]
  %v436 = vld [vmem:[%s2 + $0x60] sm:$0xff]
  %v437 = vld [vmem:[%s2 + $0x68] sm:$0xff]
  %v438 = vld [vmem:[%s2 + $0x70] sm:$0xff]
  %v439 = vld [vmem:[%s2 + $0x78] sm:$0xff]
  %v456 = vunpack.c.l.b16 %v424
  %v457 = vunpack.c.h.b16 %v424
  %v458 = vunpack.c.l.b16 %v425
  %v459 = vunpack.c.h.b16 %v425
  %v460 = vunpack.c.l.b16 %v426
  %v461 = vunpack.c.h.b16 %v426
  %v462 = vunpack.c.l.b16 %v427
  %v463 = vunpack.c.h.b16 %v427
  %v464 = vunpack.c.l.b16 %v428
  %v465 = vunpack.c.h.b16 %v428
  %v466 = vunpack.c.l.b16 %v429
  %v467 = vunpack.c.h.b16 %v429
  %v468 = vunpack.c.l.b16 %v430
  %v469 = vunpack.c.h.b16 %v430
  %v470 = vunpack.c.l.b16 %v431
  %v471 = vunpack.c.h.b16 %v431
  %v472 = vunpack.c.l.b16 %v432
  %v473 = vunpack.c.h.b16 %v432
  %v474 = vunpack.c.l.b16 %v433
  %v475 = vunpack.c.h.b16 %v433
  %v476 = vunpack.c.l.b16 %v434
  %v477 = vunpack.c.h.b16 %v434
  %v478 = vunpack.c.l.b16 %v435
  %v479 = vunpack.c.h.b16 %v435
  %v480 = vunpack.c.l.b16 %v436
  %v481 = vunpack.c.h.b16 %v436
  %v482 = vunpack.c.l.b16 %v437
  %v483 = vunpack.c.h.b16 %v437
  %v484 = vunpack.c.l.b16 %v438
  %v485 = vunpack.c.h.b16 %v438
  %v486 = vunpack.c.l.b16 %v439
  %v487 = vunpack.c.h.b16 %v439
  %v488 = vpack.c.b16 %v458, %v456
  %v489 = vpack.c.b16 %v459, %v457
  %v490 = vpack.c.b16 %v462, %v460
  %v491 = vpack.c.b16 %v463, %v461
  %v492 = vpack.c.b16 %v466, %v464
  %v493 = vpack.c.b16 %v467, %v465
  %v494 = vpack.c.b16 %v470, %v468
  %v495 = vpack.c.b16 %v471, %v469
  %v496 = vpack.c.b16 %v474, %v472
  %v497 = vpack.c.b16 %v475, %v473
  %v498 = vpack.c.b16 %v478, %v476
  %v499 = vpack.c.b16 %v479, %v477
  %v500 = vpack.c.b16 %v482, %v480
  %v501 = vpack.c.b16 %v483, %v481
  %v502 = vpack.c.b16 %v486, %v484
  %v503 = vpack.c.b16 %v487, %v485
  %520 = vmatprep.subr.bf16.mxu0 %v489
  %521 = vmatpush1.bf16.msra.mxu0 %v488
  %522 = vmatprep.subr.bf16.mxu0 %v491
  %523 = vmatpush1.bf16.msra.mxu0 %v490
  %524 = vmatprep.subr.bf16.mxu0 %v493
  %525 = vmatpush1.bf16.msra.mxu0 %v492
  %526 = vmatprep.subr.bf16.mxu0 %v495
  %527 = vmatpush1.bf16.msra.mxu0 %v494
  %528 = vmatprep.subr.bf16.mxu0 %v497
  %529 = vmatpush1.bf16.msra.mxu0 %v496
  %530 = vmatprep.subr.bf16.mxu0 %v499
  %531 = vmatpush1.bf16.msra.mxu0 %v498
  %532 = vmatprep.subr.bf16.mxu0 %v501
  %533 = vmatpush1.bf16.msra.mxu0 %v500
  %534 = vmatprep.subr.bf16.mxu0 %v503
  %535 = vmatpush1.bf16.msra.mxu0 %v502
  %536 = vmatprep.subr.bf16.mxu0 0
  %537 = vmatpush1.bf16.msra.mxu0 0
  %538 = vmatprep.subr.bf16.mxu0 0
  %539 = vmatpush1.bf16.msra.mxu0 0
  %540 = vmatprep.subr.bf16.mxu0 0
  %541 = vmatpush1.bf16.msra.mxu0 0
  %542 = vmatprep.subr.bf16.mxu0 0
  %543 = vmatpush1.bf16.msra.mxu0 0
  %544 = vmatprep.subr.bf16.mxu0 0
  %545 = vmatpush1.bf16.msra.mxu0 0
  %546 = vmatprep.subr.bf16.mxu0 0
  %547 = vmatpush1.bf16.msra.mxu0 0
  %548 = vmatprep.subr.bf16.mxu0 0
  %549 = vmatpush1.bf16.msra.mxu0 0
  %550 = vmatprep.subr.bf16.mxu0 0
  %551 = vmatpush1.bf16.msra.mxu0 0
  %552 = vmatprep.mubr.bf16.mxu0 0
  %553 = vmatmul.mubr.bf16.gmra.mrb[0].mxu0 %v423
  %v554 = vpop.f32.mrb[0].mxu0
  %v555 = vadd.f32 0.0, %v554
  %v556 = vpop.f32.mrb[0].mxu0
  %v557 = vadd.f32 0.0, %v556
  %v558 = vpop.f32.mrb[0].mxu0
  %v559 = vadd.f32 0.0, %v558
  %v560 = vpop.f32.mrb[0].mxu0
  %v561 = vadd.f32 0.0, %v560
  %562 = vdwg.mxu0
  %v563 = vadd.f32 %v412, %v555
  %v564 = vadd.f32 %v416, %v559
  %v565 = vxor.u32 %v563, 2147483648
  %v566 = vxor.u32 %v564, 2147483648
  %v567 = vmul.f32 %v565, 1.442695
  %v568 = vpow.pop %v567
  %v569 = vmul.f32 %v566, 1.442695
  %v570 = vpow.pop %v569
  %v571 = vadd.f32 %v568, 1.0
  %v572 = vadd.f32 %v570, 1.0
  %v573 = vrcp.pop %v571
  %v574 = vmul.f32 1.0, %v573
  %v575 = vrcp.pop %v572
  %v576 = vmul.f32 1.0, %v575
  %v577 = vadd.f32 %v413, %v557
  %v578 = vadd.f32 %v417, %v561
  %v579 = vxor.u32 %v577, 2147483648
  %v580 = vxor.u32 %v578, 2147483648
  %v581 = vmul.f32 %v579, 1.442695
  %v582 = vpow.pop %v581
  %v583 = vmul.f32 %v580, 1.442695
  %v584 = vpow.pop %v583
  %v585 = vadd.f32 %v582, 1.0
  %v586 = vadd.f32 %v584, 1.0
  %v587 = vrcp.pop %v585
  %v588 = vmul.f32 1.0, %v587
  %v589 = vrcp.pop %v586
  %v590 = vmul.f32 1.0, %v589
  %v591 = vmul.f32 %v574, %v403
  %v592 = vmul.f32 %v576, %v404
  %v593 = vpack.c.bf16 %v592, %v591
  %v594 = vld [vmem:[%s3] sm:$0xf]
  %v595 = vld [vmem:[%s3 + $0x4] sm:$0xf]
  %v596 = vld [vmem:[%s3 + $0x8] sm:$0xf]
  %v597 = vld [vmem:[%s3 + $0xc] sm:$0xf]
  %v598 = vld [vmem:[%s3 + $0x10] sm:$0xf]
  %v599 = vld [vmem:[%s3 + $0x14] sm:$0xf]
  %v600 = vld [vmem:[%s3 + $0x18] sm:$0xf]
  %v601 = vld [vmem:[%s3 + $0x1c] sm:$0xf]
  %v602 = vld [vmem:[%s3 + $0x20] sm:$0xf]
  %v603 = vld [vmem:[%s3 + $0x24] sm:$0xf]
  %v604 = vld [vmem:[%s3 + $0x28] sm:$0xf]
  %v605 = vld [vmem:[%s3 + $0x2c] sm:$0xf]
  %v606 = vld [vmem:[%s3 + $0x30] sm:$0xf]
  %v607 = vld [vmem:[%s3 + $0x34] sm:$0xf]
  %v608 = vld [vmem:[%s3 + $0x38] sm:$0xf]
  %v609 = vld [vmem:[%s3 + $0x3c] sm:$0xf]
  %v626 = vunpack.c.l.b16 %v594
  %v627 = vunpack.c.l.b16 %v595
  %v628 = vunpack.c.l.b16 %v596
  %v629 = vunpack.c.l.b16 %v597
  %v630 = vunpack.c.l.b16 %v598
  %v631 = vunpack.c.l.b16 %v599
  %v632 = vunpack.c.l.b16 %v600
  %v633 = vunpack.c.l.b16 %v601
  %v634 = vunpack.c.l.b16 %v602
  %v635 = vunpack.c.l.b16 %v603
  %v636 = vunpack.c.l.b16 %v604
  %v637 = vunpack.c.l.b16 %v605
  %v638 = vunpack.c.l.b16 %v606
  %v639 = vunpack.c.l.b16 %v607
  %v640 = vunpack.c.l.b16 %v608
  %v641 = vunpack.c.l.b16 %v609
  %v642 = vpack.c.b16 %v627, %v626
  %v643 = vpack.c.b16 %v629, %v628
  %v644 = vpack.c.b16 %v631, %v630
  %v645 = vpack.c.b16 %v633, %v632
  %v646 = vpack.c.b16 %v635, %v634
  %v647 = vpack.c.b16 %v637, %v636
  %v648 = vpack.c.b16 %v639, %v638
  %v649 = vpack.c.b16 %v641, %v640
  %658 = vmatprep.subr.bf16.mxu0 0
  %659 = vmatpush1.bf16.msra.mxu0 %v642
  %660 = vmatprep.subr.bf16.mxu0 0
  %661 = vmatpush1.bf16.msra.mxu0 %v643
  %662 = vmatprep.subr.bf16.mxu0 0
  %663 = vmatpush1.bf16.msra.mxu0 %v644
  %664 = vmatprep.subr.bf16.mxu0 0
  %665 = vmatpush1.bf16.msra.mxu0 %v645
  %666 = vmatprep.subr.bf16.mxu0 0
  %667 = vmatpush1.bf16.msra.mxu0 %v646
  %668 = vmatprep.subr.bf16.mxu0 0
  %669 = vmatpush1.bf16.msra.mxu0 %v647
  %670 = vmatprep.subr.bf16.mxu0 0
  %671 = vmatpush1.bf16.msra.mxu0 %v648
  %672 = vmatprep.subr.bf16.mxu0 0
  %673 = vmatpush1.bf16.msra.mxu0 %v649
  %674 = vmatprep.subr.bf16.mxu0 0
  %675 = vmatpush1.bf16.msra.mxu0 0
  %676 = vmatprep.subr.bf16.mxu0 0
  %677 = vmatpush1.bf16.msra.mxu0 0
  %678 = vmatprep.subr.bf16.mxu0 0
  %679 = vmatpush1.bf16.msra.mxu0 0
  %680 = vmatprep.subr.bf16.mxu0 0
  %681 = vmatpush1.bf16.msra.mxu0 0
  %682 = vmatprep.subr.bf16.mxu0 0
  %683 = vmatpush1.bf16.msra.mxu0 0
  %684 = vmatprep.subr.bf16.mxu0 0
  %685 = vmatpush1.bf16.msra.mxu0 0
  %686 = vmatprep.subr.bf16.mxu0 0
  %687 = vmatpush1.bf16.msra.mxu0 0
  %688 = vmatprep.subr.bf16.mxu0 0
  %689 = vmatpush1.bf16.msra.mxu0 0
  %690 = vmatprep.mubr.bf16.mxu0 0
  %691 = vmatmul.mubr.bf16.gmra.mrb[0].mxu0 %v593
  %v692 = vpop.f32.mrb[0].mxu0
  %v693 = vadd.f32 0.0, %v692
  %v694 = vpop.f32.mrb[0].mxu0
  %v695 = vpop.f32.mrb[0].mxu0
  %v696 = vadd.f32 0.0, %v695
  %v697 = vpop.f32.mrb[0].mxu0
  %698 = vdwg.mxu0
  %v699 = vadd.f32 %v414, %v693
  %v700 = vadd.f32 %v418, %v696
  %v701 = vtanh.pop %v699
  %v702 = vtanh.pop %v700
  %v703 = vmul.f32 %v403, %v31
  %v704 = vmul.f32 %v404, %v31
  %v705 = vadd.f32 %v415, %v703
  %v706 = vadd.f32 %v419, %v704
  %v707 = vmax.f32 %v705, 0.0
  %v708 = vmax.f32 %v706, 0.0
  %710 = vset.pattern.permute.xlu0 0
  %711 = vperm.xlu0 %710, %v421
  %v712 = vpop.permute.xlu0 %711
  %715 = vset.pattern.permute.xlu0 0
  %716 = vperm.xlu0 %715, %v422
  %v717 = vpop.permute.xlu0 %716
  %v719 = vmul.f32 %v41, %v712
  %v720 = vmul.f32 %v41, %v717
  %v721 = vadd.f32 %v719, %v46
  %v722 = vadd.f32 %v720, %v46
  %v723 = vmax.f32 %v721, 0.0
  %v724 = vmax.f32 %v722, 0.0
  %v725 = vmul.f32 %v36, %v707
  %v726 = vmul.f32 %v36, %v708
  %v727 = vmul.f32 %v51, %v723
  %v728 = vmul.f32 %v51, %v724
  %v729 = vadd.f32 %v725, %v727
  %v730 = vadd.f32 %v726, %v728
  %v731 = vadd.f32 %v729, %v56
  %v732 = vadd.f32 %v730, %v56
  %v733 = vxor.u32 %v731, 2147483648
  %v734 = vxor.u32 %v732, 2147483648
  %v735 = vmul.f32 %v733, 1.442695
  %v736 = vpow.pop %v735
  %v737 = vmul.f32 %v734, 1.442695
  %v738 = vpow.pop %v737
  %v739 = vadd.f32 %v736, 1.0
  %v740 = vadd.f32 %v738, 1.0
  %v741 = vrcp.pop %v739
  %v742 = vmul.f32 1.0, %v741
  %v743 = vrcp.pop %v740
  %v744 = vmul.f32 1.0, %v743
  %v745 = vmul.f32 %v588, %v403
  %v746 = vmul.f32 %v590, %v404
  %v747 = vsub.f32 1.0, %v588
  %v748 = vsub.f32 1.0, %v590
  %v749 = vmul.f32 %v747, %v701
  %v750 = vmul.f32 %v748, %v702
  %v751 = vmul.f32 %v749, %v742
  %v752 = vmul.f32 %v750, %v744
  %v753 = vadd.f32 %v745, %v751
  %v754 = vadd.f32 %v746, %v752
  %s755 = scalar_lea.vmem %s5, 16
  %756 = vst [vmem:[%s755] sm:$0xff] %v753
  %757 = vst [vmem:[%s755 + $0x8] sm:$0xff] %v754
  %s758 = scalar_lea.vmem %s0, 64
  %v759 = vld [vmem:[%s758] sm:$0xff]
  %v760 = vld [vmem:[%s758 + $0x8] sm:$0xff]
  %v761 = vld [vmem:[%s758 + $0x10] sm:$0xff]
  %v762 = vld [vmem:[%s758 + $0x18] sm:$0xff]
  %v763 = vunpack.c.l.bf16 %v759
  %v764 = vunpack.c.h.bf16 %v759
  %v765 = vunpack.c.l.bf16 %v760
  %v766 = vunpack.c.h.bf16 %v760
  %v767 = vunpack.c.l.bf16 %v761
  %v768 = vunpack.c.h.bf16 %v761
  %v769 = vunpack.c.l.bf16 %v762
  %v770 = vunpack.c.h.bf16 %v762
  %s771 = scalar_lea.vmem %s1, 32
  %v772 = vld [vmem:[%s771] sm:$0xff]
  %v773 = vld [vmem:[%s771 + $0x8] sm:$0xff]
  %v774 = vpack.c.bf16 %v754, %v753
  %v775 = vld [vmem:[%s2] sm:$0xff]
  %v776 = vld [vmem:[%s2 + $0x8] sm:$0xff]
  %v777 = vld [vmem:[%s2 + $0x10] sm:$0xff]
  %v778 = vld [vmem:[%s2 + $0x18] sm:$0xff]
  %v779 = vld [vmem:[%s2 + $0x20] sm:$0xff]
  %v780 = vld [vmem:[%s2 + $0x28] sm:$0xff]
  %v781 = vld [vmem:[%s2 + $0x30] sm:$0xff]
  %v782 = vld [vmem:[%s2 + $0x38] sm:$0xff]
  %v783 = vld [vmem:[%s2 + $0x40] sm:$0xff]
  %v784 = vld [vmem:[%s2 + $0x48] sm:$0xff]
  %v785 = vld [vmem:[%s2 + $0x50] sm:$0xff]
  %v786 = vld [vmem:[%s2 + $0x58] sm:$0xff]
  %v787 = vld [vmem:[%s2 + $0x60] sm:$0xff]
  %v788 = vld [vmem:[%s2 + $0x68] sm:$0xff]
  %v789 = vld [vmem:[%s2 + $0x70] sm:$0xff]
  %v790 = vld [vmem:[%s2 + $0x78] sm:$0xff]
  %v807 = vunpack.c.l.b16 %v775
  %v808 = vunpack.c.h.b16 %v775
  %v809 = vunpack.c.l.b16 %v776
  %v810 = vunpack.c.h.b16 %v776
  %v811 = vunpack.c.l.b16 %v777
  %v812 = vunpack.c.h.b16 %v777
  %v813 = vunpack.c.l.b16 %v778
  %v814 = vunpack.c.h.b16 %v778
  %v815 = vunpack.c.l.b16 %v779
  %v816 = vunpack.c.h.b16 %v779
  %v817 = vunpack.c.l.b16 %v780
  %v818 = vunpack.c.h.b16 %v780
  %v819 = vunpack.c.l.b16 %v781
  %v820 = vunpack.c.h.b16 %v781
  %v821 = vunpack.c.l.b16 %v782
  %v822 = vunpack.c.h.b16 %v782
  %v823 = vunpack.c.l.b16 %v783
  %v824 = vunpack.c.h.b16 %v783
  %v825 = vunpack.c.l.b16 %v784
  %v826 = vunpack.c.h.b16 %v784
  %v827 = vunpack.c.l.b16 %v785
  %v828 = vunpack.c.h.b16 %v785
  %v829 = vunpack.c.l.b16 %v786
  %v830 = vunpack.c.h.b16 %v786
  %v831 = vunpack.c.l.b16 %v787
  %v832 = vunpack.c.h.b16 %v787
  %v833 = vunpack.c.l.b16 %v788
  %v834 = vunpack.c.h.b16 %v788
  %v835 = vunpack.c.l.b16 %v789
  %v836 = vunpack.c.h.b16 %v789
  %v837 = vunpack.c.l.b16 %v790
  %v838 = vunpack.c.h.b16 %v790
  %v839 = vpack.c.b16 %v809, %v807
  %v840 = vpack.c.b16 %v810, %v808
  %v841 = vpack.c.b16 %v813, %v811
  %v842 = vpack.c.b16 %v814, %v812
  %v843 = vpack.c.b16 %v817, %v815
  %v844 = vpack.c.b16 %v818, %v816
  %v845 = vpack.c.b16 %v821, %v819
  %v846 = vpack.c.b16 %v822, %v820
  %v847 = vpack.c.b16 %v825, %v823
  %v848 = vpack.c.b16 %v826, %v824
  %v849 = vpack.c.b16 %v829, %v827
  %v850 = vpack.c.b16 %v830, %v828
  %v851 = vpack.c.b16 %v833, %v831
  %v852 = vpack.c.b16 %v834, %v832
  %v853 = vpack.c.b16 %v837, %v835
  %v854 = vpack.c.b16 %v838, %v836
  %871 = vmatprep.subr.bf16.mxu0 %v840
  %872 = vmatpush1.bf16.msra.mxu0 %v839
  %873 = vmatprep.subr.bf16.mxu0 %v842
  %874 = vmatpush1.bf16.msra.mxu0 %v841
  %875 = vmatprep.subr.bf16.mxu0 %v844
  %876 = vmatpush1.bf16.msra.mxu0 %v843
  %877 = vmatprep.subr.bf16.mxu0 %v846
  %878 = vmatpush1.bf16.msra.mxu0 %v845
  %879 = vmatprep.subr.bf16.mxu0 %v848
  %880 = vmatpush1.bf16.msra.mxu0 %v847
  %881 = vmatprep.subr.bf16.mxu0 %v850
  %882 = vmatpush1.bf16.msra.mxu0 %v849
  %883 = vmatprep.subr.bf16.mxu0 %v852
  %884 = vmatpush1.bf16.msra.mxu0 %v851
  %885 = vmatprep.subr.bf16.mxu0 %v854
  %886 = vmatpush1.bf16.msra.mxu0 %v853
  %887 = vmatprep.subr.bf16.mxu0 0
  %888 = vmatpush1.bf16.msra.mxu0 0
  %889 = vmatprep.subr.bf16.mxu0 0
  %890 = vmatpush1.bf16.msra.mxu0 0
  %891 = vmatprep.subr.bf16.mxu0 0
  %892 = vmatpush1.bf16.msra.mxu0 0
  %893 = vmatprep.subr.bf16.mxu0 0
  %894 = vmatpush1.bf16.msra.mxu0 0
  %895 = vmatprep.subr.bf16.mxu0 0
  %896 = vmatpush1.bf16.msra.mxu0 0
  %897 = vmatprep.subr.bf16.mxu0 0
  %898 = vmatpush1.bf16.msra.mxu0 0
  %899 = vmatprep.subr.bf16.mxu0 0
  %900 = vmatpush1.bf16.msra.mxu0 0
  %901 = vmatprep.subr.bf16.mxu0 0
  %902 = vmatpush1.bf16.msra.mxu0 0
  %903 = vmatprep.mubr.bf16.mxu0 0
  %904 = vmatmul.mubr.bf16.gmra.mrb[0].mxu0 %v774
  %v905 = vpop.f32.mrb[0].mxu0
  %v906 = vadd.f32 0.0, %v905
  %v907 = vpop.f32.mrb[0].mxu0
  %v908 = vadd.f32 0.0, %v907
  %v909 = vpop.f32.mrb[0].mxu0
  %v910 = vadd.f32 0.0, %v909
  %v911 = vpop.f32.mrb[0].mxu0
  %v912 = vadd.f32 0.0, %v911
  %913 = vdwg.mxu0
  %v914 = vadd.f32 %v763, %v906
  %v915 = vadd.f32 %v767, %v910
  %v916 = vxor.u32 %v914, 2147483648
  %v917 = vxor.u32 %v915, 2147483648
  %v918 = vmul.f32 %v916, 1.442695
  %v919 = vpow.pop %v918
  %v920 = vmul.f32 %v917, 1.442695
  %v921 = vpow.pop %v920
  %v922 = vadd.f32 %v919, 1.0
  %v923 = vadd.f32 %v921, 1.0
  %v924 = vrcp.pop %v922
  %v925 = vmul.f32 1.0, %v924
  %v926 = vrcp.pop %v923
  %v927 = vmul.f32 1.0, %v926
  %v928 = vadd.f32 %v764, %v908
  %v929 = vadd.f32 %v768, %v912
  %v930 = vxor.u32 %v928, 2147483648
  %v931 = vxor.u32 %v929, 2147483648
  %v932 = vmul.f32 %v930, 1.442695
  %v933 = vpow.pop %v932
  %v934 = vmul.f32 %v931, 1.442695
  %v935 = vpow.pop %v934
  %v936 = vadd.f32 %v933, 1.0
  %v937 = vadd.f32 %v935, 1.0
  %v938 = vrcp.pop %v936
  %v939 = vmul.f32 1.0, %v938
  %v940 = vrcp.pop %v937
  %v941 = vmul.f32 1.0, %v940
  %v942 = vmul.f32 %v925, %v753
  %v943 = vmul.f32 %v927, %v754
  %v944 = vpack.c.bf16 %v943, %v942
  %v945 = vld [vmem:[%s3] sm:$0xf]
  %v946 = vld [vmem:[%s3 + $0x4] sm:$0xf]
  %v947 = vld [vmem:[%s3 + $0x8] sm:$0xf]
  %v948 = vld [vmem:[%s3 + $0xc] sm:$0xf]
  %v949 = vld [vmem:[%s3 + $0x10] sm:$0xf]
  %v950 = vld [vmem:[%s3 + $0x14] sm:$0xf]
  %v951 = vld [vmem:[%s3 + $0x18] sm:$0xf]
  %v952 = vld [vmem:[%s3 + $0x1c] sm:$0xf]
  %v953 = vld [vmem:[%s3 + $0x20] sm:$0xf]
  %v954 = vld [vmem:[%s3 + $0x24] sm:$0xf]
  %v955 = vld [vmem:[%s3 + $0x28] sm:$0xf]
  %v956 = vld [vmem:[%s3 + $0x2c] sm:$0xf]
  %v957 = vld [vmem:[%s3 + $0x30] sm:$0xf]
  %v958 = vld [vmem:[%s3 + $0x34] sm:$0xf]
  %v959 = vld [vmem:[%s3 + $0x38] sm:$0xf]
  %v960 = vld [vmem:[%s3 + $0x3c] sm:$0xf]
  %v977 = vunpack.c.l.b16 %v945
  %v978 = vunpack.c.l.b16 %v946
  %v979 = vunpack.c.l.b16 %v947
  %v980 = vunpack.c.l.b16 %v948
  %v981 = vunpack.c.l.b16 %v949
  %v982 = vunpack.c.l.b16 %v950
  %v983 = vunpack.c.l.b16 %v951
  %v984 = vunpack.c.l.b16 %v952
  %v985 = vunpack.c.l.b16 %v953
  %v986 = vunpack.c.l.b16 %v954
  %v987 = vunpack.c.l.b16 %v955
  %v988 = vunpack.c.l.b16 %v956
  %v989 = vunpack.c.l.b16 %v957
  %v990 = vunpack.c.l.b16 %v958
  %v991 = vunpack.c.l.b16 %v959
  %v992 = vunpack.c.l.b16 %v960
  %v993 = vpack.c.b16 %v978, %v977
  %v994 = vpack.c.b16 %v980, %v979
  %v995 = vpack.c.b16 %v982, %v981
  %v996 = vpack.c.b16 %v984, %v983
  %v997 = vpack.c.b16 %v986, %v985
  %v998 = vpack.c.b16 %v988, %v987
  %v999 = vpack.c.b16 %v990, %v989
  %v1000 = vpack.c.b16 %v992, %v991
  %1009 = vmatprep.subr.bf16.mxu0 0
  %1010 = vmatpush1.bf16.msra.mxu0 %v993
  %1011 = vmatprep.subr.bf16.mxu0 0
  %1012 = vmatpush1.bf16.msra.mxu0 %v994
  %1013 = vmatprep.subr.bf16.mxu0 0
  %1014 = vmatpush1.bf16.msra.mxu0 %v995
  %1015 = vmatprep.subr.bf16.mxu0 0
  %1016 = vmatpush1.bf16.msra.mxu0 %v996
  %1017 = vmatprep.subr.bf16.mxu0 0
  %1018 = vmatpush1.bf16.msra.mxu0 %v997
  %1019 = vmatprep.subr.bf16.mxu0 0
  %1020 = vmatpush1.bf16.msra.mxu0 %v998
  %1021 = vmatprep.subr.bf16.mxu0 0
  %1022 = vmatpush1.bf16.msra.mxu0 %v999
  %1023 = vmatprep.subr.bf16.mxu0 0
  %1024 = vmatpush1.bf16.msra.mxu0 %v1000
  %1025 = vmatprep.subr.bf16.mxu0 0
  %1026 = vmatpush1.bf16.msra.mxu0 0
  %1027 = vmatprep.subr.bf16.mxu0 0
  %1028 = vmatpush1.bf16.msra.mxu0 0
  %1029 = vmatprep.subr.bf16.mxu0 0
  %1030 = vmatpush1.bf16.msra.mxu0 0
  %1031 = vmatprep.subr.bf16.mxu0 0
  %1032 = vmatpush1.bf16.msra.mxu0 0
  %1033 = vmatprep.subr.bf16.mxu0 0
  %1034 = vmatpush1.bf16.msra.mxu0 0
  %1035 = vmatprep.subr.bf16.mxu0 0
  %1036 = vmatpush1.bf16.msra.mxu0 0
  %1037 = vmatprep.subr.bf16.mxu0 0
  %1038 = vmatpush1.bf16.msra.mxu0 0
  %1039 = vmatprep.subr.bf16.mxu0 0
  %1040 = vmatpush1.bf16.msra.mxu0 0
  %1041 = vmatprep.mubr.bf16.mxu0 0
  %1042 = vmatmul.mubr.bf16.gmra.mrb[0].mxu0 %v944
  %v1043 = vpop.f32.mrb[0].mxu0
  %v1044 = vadd.f32 0.0, %v1043
  %v1045 = vpop.f32.mrb[0].mxu0
  %v1046 = vpop.f32.mrb[0].mxu0
  %v1047 = vadd.f32 0.0, %v1046
  %v1048 = vpop.f32.mrb[0].mxu0
  %1049 = vdwg.mxu0
  %v1050 = vadd.f32 %v765, %v1044
  %v1051 = vadd.f32 %v769, %v1047
  %v1052 = vtanh.pop %v1050
  %v1053 = vtanh.pop %v1051
  %v1054 = vmul.f32 %v753, %v31
  %v1055 = vmul.f32 %v754, %v31
  %v1056 = vadd.f32 %v766, %v1054
  %v1057 = vadd.f32 %v770, %v1055
  %v1058 = vmax.f32 %v1056, 0.0
  %v1059 = vmax.f32 %v1057, 0.0
  %1061 = vset.pattern.permute.xlu0 0
  %1062 = vperm.xlu0 %1061, %v772
  %v1063 = vpop.permute.xlu0 %1062
  %1066 = vset.pattern.permute.xlu0 0
  %1067 = vperm.xlu0 %1066, %v773
  %v1068 = vpop.permute.xlu0 %1067
  %v1070 = vmul.f32 %v41, %v1063
  %v1071 = vmul.f32 %v41, %v1068
  %v1072 = vadd.f32 %v1070, %v46
  %v1073 = vadd.f32 %v1071, %v46
  %v1074 = vmax.f32 %v1072, 0.0
  %v1075 = vmax.f32 %v1073, 0.0
  %v1076 = vmul.f32 %v36, %v1058
  %v1077 = vmul.f32 %v36, %v1059
  %v1078 = vmul.f32 %v51, %v1074
  %v1079 = vmul.f32 %v51, %v1075
  %v1080 = vadd.f32 %v1076, %v1078
  %v1081 = vadd.f32 %v1077, %v1079
  %v1082 = vadd.f32 %v1080, %v56
  %v1083 = vadd.f32 %v1081, %v56
  %v1084 = vxor.u32 %v1082, 2147483648
  %v1085 = vxor.u32 %v1083, 2147483648
  %v1086 = vmul.f32 %v1084, 1.442695
  %v1087 = vpow.pop %v1086
  %v1088 = vmul.f32 %v1085, 1.442695
  %v1089 = vpow.pop %v1088
  %v1090 = vadd.f32 %v1087, 1.0
  %v1091 = vadd.f32 %v1089, 1.0
  %v1092 = vrcp.pop %v1090
  %v1093 = vmul.f32 1.0, %v1092
  %v1094 = vrcp.pop %v1091
  %v1095 = vmul.f32 1.0, %v1094
  %v1096 = vmul.f32 %v939, %v753
  %v1097 = vmul.f32 %v941, %v754
  %v1098 = vsub.f32 1.0, %v939
  %v1099 = vsub.f32 1.0, %v941
  %v1100 = vmul.f32 %v1098, %v1052
  %v1101 = vmul.f32 %v1099, %v1053
  %v1102 = vmul.f32 %v1100, %v1093
  %v1103 = vmul.f32 %v1101, %v1095
  %v1104 = vadd.f32 %v1096, %v1102
  %v1105 = vadd.f32 %v1097, %v1103
  %s1106 = scalar_lea.vmem %s5, 32
  %1107 = vst [vmem:[%s1106] sm:$0xff] %v1104
  %1108 = vst [vmem:[%s1106 + $0x8] sm:$0xff] %v1105
  %s1109 = scalar_lea.vmem %s0, 96
  %v1110 = vld [vmem:[%s1109] sm:$0xff]
  %v1111 = vld [vmem:[%s1109 + $0x8] sm:$0xff]
  %v1112 = vld [vmem:[%s1109 + $0x10] sm:$0xff]
  %v1113 = vld [vmem:[%s1109 + $0x18] sm:$0xff]
  %v1114 = vunpack.c.l.bf16 %v1110
  %v1115 = vunpack.c.h.bf16 %v1110
  %v1116 = vunpack.c.l.bf16 %v1111
  %v1117 = vunpack.c.h.bf16 %v1111
  %v1118 = vunpack.c.l.bf16 %v1112
  %v1119 = vunpack.c.h.bf16 %v1112
  %v1120 = vunpack.c.l.bf16 %v1113
  %v1121 = vunpack.c.h.bf16 %v1113
  %s1122 = scalar_lea.vmem %s1, 48
  %v1123 = vld [vmem:[%s1122] sm:$0xff]
  %v1124 = vld [vmem:[%s1122 + $0x8] sm:$0xff]
  %v1125 = vpack.c.bf16 %v1105, %v1104
  %v1126 = vld [vmem:[%s2] sm:$0xff]
  %v1127 = vld [vmem:[%s2 + $0x8] sm:$0xff]
  %v1128 = vld [vmem:[%s2 + $0x10] sm:$0xff]
  %v1129 = vld [vmem:[%s2 + $0x18] sm:$0xff]
  %v1130 = vld [vmem:[%s2 + $0x20] sm:$0xff]
  %v1131 = vld [vmem:[%s2 + $0x28] sm:$0xff]
  %v1132 = vld [vmem:[%s2 + $0x30] sm:$0xff]
  %v1133 = vld [vmem:[%s2 + $0x38] sm:$0xff]
  %v1134 = vld [vmem:[%s2 + $0x40] sm:$0xff]
  %v1135 = vld [vmem:[%s2 + $0x48] sm:$0xff]
  %v1136 = vld [vmem:[%s2 + $0x50] sm:$0xff]
  %v1137 = vld [vmem:[%s2 + $0x58] sm:$0xff]
  %v1138 = vld [vmem:[%s2 + $0x60] sm:$0xff]
  %v1139 = vld [vmem:[%s2 + $0x68] sm:$0xff]
  %v1140 = vld [vmem:[%s2 + $0x70] sm:$0xff]
  %v1141 = vld [vmem:[%s2 + $0x78] sm:$0xff]
  %v1158 = vunpack.c.l.b16 %v1126
  %v1159 = vunpack.c.h.b16 %v1126
  %v1160 = vunpack.c.l.b16 %v1127
  %v1161 = vunpack.c.h.b16 %v1127
  %v1162 = vunpack.c.l.b16 %v1128
  %v1163 = vunpack.c.h.b16 %v1128
  %v1164 = vunpack.c.l.b16 %v1129
  %v1165 = vunpack.c.h.b16 %v1129
  %v1166 = vunpack.c.l.b16 %v1130
  %v1167 = vunpack.c.h.b16 %v1130
  %v1168 = vunpack.c.l.b16 %v1131
  %v1169 = vunpack.c.h.b16 %v1131
  %v1170 = vunpack.c.l.b16 %v1132
  %v1171 = vunpack.c.h.b16 %v1132
  %v1172 = vunpack.c.l.b16 %v1133
  %v1173 = vunpack.c.h.b16 %v1133
  %v1174 = vunpack.c.l.b16 %v1134
  %v1175 = vunpack.c.h.b16 %v1134
  %v1176 = vunpack.c.l.b16 %v1135
  %v1177 = vunpack.c.h.b16 %v1135
  %v1178 = vunpack.c.l.b16 %v1136
  %v1179 = vunpack.c.h.b16 %v1136
  %v1180 = vunpack.c.l.b16 %v1137
  %v1181 = vunpack.c.h.b16 %v1137
  %v1182 = vunpack.c.l.b16 %v1138
  %v1183 = vunpack.c.h.b16 %v1138
  %v1184 = vunpack.c.l.b16 %v1139
  %v1185 = vunpack.c.h.b16 %v1139
  %v1186 = vunpack.c.l.b16 %v1140
  %v1187 = vunpack.c.h.b16 %v1140
  %v1188 = vunpack.c.l.b16 %v1141
  %v1189 = vunpack.c.h.b16 %v1141
  %v1190 = vpack.c.b16 %v1160, %v1158
  %v1191 = vpack.c.b16 %v1161, %v1159
  %v1192 = vpack.c.b16 %v1164, %v1162
  %v1193 = vpack.c.b16 %v1165, %v1163
  %v1194 = vpack.c.b16 %v1168, %v1166
  %v1195 = vpack.c.b16 %v1169, %v1167
  %v1196 = vpack.c.b16 %v1172, %v1170
  %v1197 = vpack.c.b16 %v1173, %v1171
  %v1198 = vpack.c.b16 %v1176, %v1174
  %v1199 = vpack.c.b16 %v1177, %v1175
  %v1200 = vpack.c.b16 %v1180, %v1178
  %v1201 = vpack.c.b16 %v1181, %v1179
  %v1202 = vpack.c.b16 %v1184, %v1182
  %v1203 = vpack.c.b16 %v1185, %v1183
  %v1204 = vpack.c.b16 %v1188, %v1186
  %v1205 = vpack.c.b16 %v1189, %v1187
  %1222 = vmatprep.subr.bf16.mxu0 %v1191
  %1223 = vmatpush1.bf16.msra.mxu0 %v1190
  %1224 = vmatprep.subr.bf16.mxu0 %v1193
  %1225 = vmatpush1.bf16.msra.mxu0 %v1192
  %1226 = vmatprep.subr.bf16.mxu0 %v1195
  %1227 = vmatpush1.bf16.msra.mxu0 %v1194
  %1228 = vmatprep.subr.bf16.mxu0 %v1197
  %1229 = vmatpush1.bf16.msra.mxu0 %v1196
  %1230 = vmatprep.subr.bf16.mxu0 %v1199
  %1231 = vmatpush1.bf16.msra.mxu0 %v1198
  %1232 = vmatprep.subr.bf16.mxu0 %v1201
  %1233 = vmatpush1.bf16.msra.mxu0 %v1200
  %1234 = vmatprep.subr.bf16.mxu0 %v1203
  %1235 = vmatpush1.bf16.msra.mxu0 %v1202
  %1236 = vmatprep.subr.bf16.mxu0 %v1205
  %1237 = vmatpush1.bf16.msra.mxu0 %v1204
  %1238 = vmatprep.subr.bf16.mxu0 0
  %1239 = vmatpush1.bf16.msra.mxu0 0
  %1240 = vmatprep.subr.bf16.mxu0 0
  %1241 = vmatpush1.bf16.msra.mxu0 0
  %1242 = vmatprep.subr.bf16.mxu0 0
  %1243 = vmatpush1.bf16.msra.mxu0 0
  %1244 = vmatprep.subr.bf16.mxu0 0
  %1245 = vmatpush1.bf16.msra.mxu0 0
  %1246 = vmatprep.subr.bf16.mxu0 0
  %1247 = vmatpush1.bf16.msra.mxu0 0
  %1248 = vmatprep.subr.bf16.mxu0 0
  %1249 = vmatpush1.bf16.msra.mxu0 0
  %1250 = vmatprep.subr.bf16.mxu0 0
  %1251 = vmatpush1.bf16.msra.mxu0 0
  %1252 = vmatprep.subr.bf16.mxu0 0
  %1253 = vmatpush1.bf16.msra.mxu0 0
  %1254 = vmatprep.mubr.bf16.mxu0 0
  %1255 = vmatmul.mubr.bf16.gmra.mrb[0].mxu0 %v1125
  %v1256 = vpop.f32.mrb[0].mxu0
  %v1257 = vadd.f32 0.0, %v1256
  %v1258 = vpop.f32.mrb[0].mxu0
  %v1259 = vadd.f32 0.0, %v1258
  %v1260 = vpop.f32.mrb[0].mxu0
  %v1261 = vadd.f32 0.0, %v1260
  %v1262 = vpop.f32.mrb[0].mxu0
  %v1263 = vadd.f32 0.0, %v1262
  %1264 = vdwg.mxu0
  %v1265 = vadd.f32 %v1114, %v1257
  %v1266 = vadd.f32 %v1118, %v1261
  %v1267 = vxor.u32 %v1265, 2147483648
  %v1268 = vxor.u32 %v1266, 2147483648
  %v1269 = vmul.f32 %v1267, 1.442695
  %v1270 = vpow.pop %v1269
  %v1271 = vmul.f32 %v1268, 1.442695
  %v1272 = vpow.pop %v1271
  %v1273 = vadd.f32 %v1270, 1.0
  %v1274 = vadd.f32 %v1272, 1.0
  %v1275 = vrcp.pop %v1273
  %v1276 = vmul.f32 1.0, %v1275
  %v1277 = vrcp.pop %v1274
  %v1278 = vmul.f32 1.0, %v1277
  %v1279 = vadd.f32 %v1115, %v1259
  %v1280 = vadd.f32 %v1119, %v1263
  %v1281 = vxor.u32 %v1279, 2147483648
  %v1282 = vxor.u32 %v1280, 2147483648
  %v1283 = vmul.f32 %v1281, 1.442695
  %v1284 = vpow.pop %v1283
  %v1285 = vmul.f32 %v1282, 1.442695
  %v1286 = vpow.pop %v1285
  %v1287 = vadd.f32 %v1284, 1.0
  %v1288 = vadd.f32 %v1286, 1.0
  %v1289 = vrcp.pop %v1287
  %v1290 = vmul.f32 1.0, %v1289
  %v1291 = vrcp.pop %v1288
  %v1292 = vmul.f32 1.0, %v1291
  %v1293 = vmul.f32 %v1276, %v1104
  %v1294 = vmul.f32 %v1278, %v1105
  %v1295 = vpack.c.bf16 %v1294, %v1293
  %v1296 = vld [vmem:[%s3] sm:$0xf]
  %v1297 = vld [vmem:[%s3 + $0x4] sm:$0xf]
  %v1298 = vld [vmem:[%s3 + $0x8] sm:$0xf]
  %v1299 = vld [vmem:[%s3 + $0xc] sm:$0xf]
  %v1300 = vld [vmem:[%s3 + $0x10] sm:$0xf]
  %v1301 = vld [vmem:[%s3 + $0x14] sm:$0xf]
  %v1302 = vld [vmem:[%s3 + $0x18] sm:$0xf]
  %v1303 = vld [vmem:[%s3 + $0x1c] sm:$0xf]
  %v1304 = vld [vmem:[%s3 + $0x20] sm:$0xf]
  %v1305 = vld [vmem:[%s3 + $0x24] sm:$0xf]
  %v1306 = vld [vmem:[%s3 + $0x28] sm:$0xf]
  %v1307 = vld [vmem:[%s3 + $0x2c] sm:$0xf]
  %v1308 = vld [vmem:[%s3 + $0x30] sm:$0xf]
  %v1309 = vld [vmem:[%s3 + $0x34] sm:$0xf]
  %v1310 = vld [vmem:[%s3 + $0x38] sm:$0xf]
  %v1311 = vld [vmem:[%s3 + $0x3c] sm:$0xf]
  %v1328 = vunpack.c.l.b16 %v1296
  %v1329 = vunpack.c.l.b16 %v1297
  %v1330 = vunpack.c.l.b16 %v1298
  %v1331 = vunpack.c.l.b16 %v1299
  %v1332 = vunpack.c.l.b16 %v1300
  %v1333 = vunpack.c.l.b16 %v1301
  %v1334 = vunpack.c.l.b16 %v1302
  %v1335 = vunpack.c.l.b16 %v1303
  %v1336 = vunpack.c.l.b16 %v1304
  %v1337 = vunpack.c.l.b16 %v1305
  %v1338 = vunpack.c.l.b16 %v1306
  %v1339 = vunpack.c.l.b16 %v1307
  %v1340 = vunpack.c.l.b16 %v1308
  %v1341 = vunpack.c.l.b16 %v1309
  %v1342 = vunpack.c.l.b16 %v1310
  %v1343 = vunpack.c.l.b16 %v1311
  %v1344 = vpack.c.b16 %v1329, %v1328
  %v1345 = vpack.c.b16 %v1331, %v1330
  %v1346 = vpack.c.b16 %v1333, %v1332
  %v1347 = vpack.c.b16 %v1335, %v1334
  %v1348 = vpack.c.b16 %v1337, %v1336
  %v1349 = vpack.c.b16 %v1339, %v1338
  %v1350 = vpack.c.b16 %v1341, %v1340
  %v1351 = vpack.c.b16 %v1343, %v1342
  %1360 = vmatprep.subr.bf16.mxu0 0
  %1361 = vmatpush1.bf16.msra.mxu0 %v1344
  %1362 = vmatprep.subr.bf16.mxu0 0
  %1363 = vmatpush1.bf16.msra.mxu0 %v1345
  %1364 = vmatprep.subr.bf16.mxu0 0
  %1365 = vmatpush1.bf16.msra.mxu0 %v1346
  %1366 = vmatprep.subr.bf16.mxu0 0
  %1367 = vmatpush1.bf16.msra.mxu0 %v1347
  %1368 = vmatprep.subr.bf16.mxu0 0
  %1369 = vmatpush1.bf16.msra.mxu0 %v1348
  %1370 = vmatprep.subr.bf16.mxu0 0
  %1371 = vmatpush1.bf16.msra.mxu0 %v1349
  %1372 = vmatprep.subr.bf16.mxu0 0
  %1373 = vmatpush1.bf16.msra.mxu0 %v1350
  %1374 = vmatprep.subr.bf16.mxu0 0
  %1375 = vmatpush1.bf16.msra.mxu0 %v1351
  %1376 = vmatprep.subr.bf16.mxu0 0
  %1377 = vmatpush1.bf16.msra.mxu0 0
  %1378 = vmatprep.subr.bf16.mxu0 0
  %1379 = vmatpush1.bf16.msra.mxu0 0
  %1380 = vmatprep.subr.bf16.mxu0 0
  %1381 = vmatpush1.bf16.msra.mxu0 0
  %1382 = vmatprep.subr.bf16.mxu0 0
  %1383 = vmatpush1.bf16.msra.mxu0 0
  %1384 = vmatprep.subr.bf16.mxu0 0
  %1385 = vmatpush1.bf16.msra.mxu0 0
  %1386 = vmatprep.subr.bf16.mxu0 0
  %1387 = vmatpush1.bf16.msra.mxu0 0
  %1388 = vmatprep.subr.bf16.mxu0 0
  %1389 = vmatpush1.bf16.msra.mxu0 0
  %1390 = vmatprep.subr.bf16.mxu0 0
  %1391 = vmatpush1.bf16.msra.mxu0 0
  %1392 = vmatprep.mubr.bf16.mxu0 0
  %1393 = vmatmul.mubr.bf16.gmra.mrb[0].mxu0 %v1295
  %v1394 = vpop.f32.mrb[0].mxu0
  %v1395 = vadd.f32 0.0, %v1394
  %v1396 = vpop.f32.mrb[0].mxu0
  %v1397 = vpop.f32.mrb[0].mxu0
  %v1398 = vadd.f32 0.0, %v1397
  %v1399 = vpop.f32.mrb[0].mxu0
  %1400 = vdwg.mxu0
  %v1401 = vadd.f32 %v1116, %v1395
  %v1402 = vadd.f32 %v1120, %v1398
  %v1403 = vtanh.pop %v1401
  %v1404 = vtanh.pop %v1402
  %v1405 = vmul.f32 %v1104, %v31
  %v1406 = vmul.f32 %v1105, %v31
  %v1407 = vadd.f32 %v1117, %v1405
  %v1408 = vadd.f32 %v1121, %v1406
  %v1409 = vmax.f32 %v1407, 0.0
  %v1410 = vmax.f32 %v1408, 0.0
  %1412 = vset.pattern.permute.xlu0 0
  %1413 = vperm.xlu0 %1412, %v1123
  %v1414 = vpop.permute.xlu0 %1413
  %1417 = vset.pattern.permute.xlu0 0
  %1418 = vperm.xlu0 %1417, %v1124
  %v1419 = vpop.permute.xlu0 %1418
  %v1421 = vmul.f32 %v41, %v1414
  %v1422 = vmul.f32 %v41, %v1419
  %v1423 = vadd.f32 %v1421, %v46
  %v1424 = vadd.f32 %v1422, %v46
  %v1425 = vmax.f32 %v1423, 0.0
  %v1426 = vmax.f32 %v1424, 0.0
  %v1427 = vmul.f32 %v36, %v1409
  %v1428 = vmul.f32 %v36, %v1410
  %v1429 = vmul.f32 %v51, %v1425
  %v1430 = vmul.f32 %v51, %v1426
  %v1431 = vadd.f32 %v1427, %v1429
  %v1432 = vadd.f32 %v1428, %v1430
  %v1433 = vadd.f32 %v1431, %v56
  %v1434 = vadd.f32 %v1432, %v56
  %v1435 = vxor.u32 %v1433, 2147483648
  %v1436 = vxor.u32 %v1434, 2147483648
  %v1437 = vmul.f32 %v1435, 1.442695
  %v1438 = vpow.pop %v1437
  %v1439 = vmul.f32 %v1436, 1.442695
  %v1440 = vpow.pop %v1439
  %v1441 = vadd.f32 %v1438, 1.0
  %v1442 = vadd.f32 %v1440, 1.0
  %v1443 = vrcp.pop %v1441
  %v1444 = vmul.f32 1.0, %v1443
  %v1445 = vrcp.pop %v1442
  %v1446 = vmul.f32 1.0, %v1445
  %v1447 = vmul.f32 %v1290, %v1104
  %v1448 = vmul.f32 %v1292, %v1105
  %v1449 = vsub.f32 1.0, %v1290
  %v1450 = vsub.f32 1.0, %v1292
  %v1451 = vmul.f32 %v1449, %v1403
  %v1452 = vmul.f32 %v1450, %v1404
  %v1453 = vmul.f32 %v1451, %v1444
  %v1454 = vmul.f32 %v1452, %v1446
  %v1455 = vadd.f32 %v1447, %v1453
  %v1456 = vadd.f32 %v1448, %v1454
  %s1457 = scalar_lea.vmem %s5, 48
  %1458 = vst [vmem:[%s1457] sm:$0xff] %v1455
  %1459 = vst [vmem:[%s1457 + $0x8] sm:$0xff] %v1456
  %s1460 = scalar_lea.vmem %s0, 128
  %v1461 = vld [vmem:[%s1460] sm:$0xff]
  %v1462 = vld [vmem:[%s1460 + $0x8] sm:$0xff]
  %v1463 = vld [vmem:[%s1460 + $0x10] sm:$0xff]
  %v1464 = vld [vmem:[%s1460 + $0x18] sm:$0xff]
  %v1465 = vunpack.c.l.bf16 %v1461
  %v1466 = vunpack.c.h.bf16 %v1461
  %v1467 = vunpack.c.l.bf16 %v1462
  %v1468 = vunpack.c.h.bf16 %v1462
  %v1469 = vunpack.c.l.bf16 %v1463
  %v1470 = vunpack.c.h.bf16 %v1463
  %v1471 = vunpack.c.l.bf16 %v1464
  %v1472 = vunpack.c.h.bf16 %v1464
  %s1473 = scalar_lea.vmem %s1, 64
  %v1474 = vld [vmem:[%s1473] sm:$0xff]
  %v1475 = vld [vmem:[%s1473 + $0x8] sm:$0xff]
  %v1476 = vpack.c.bf16 %v1456, %v1455
  %v1477 = vld [vmem:[%s2] sm:$0xff]
  %v1478 = vld [vmem:[%s2 + $0x8] sm:$0xff]
  %v1479 = vld [vmem:[%s2 + $0x10] sm:$0xff]
  %v1480 = vld [vmem:[%s2 + $0x18] sm:$0xff]
  %v1481 = vld [vmem:[%s2 + $0x20] sm:$0xff]
  %v1482 = vld [vmem:[%s2 + $0x28] sm:$0xff]
  %v1483 = vld [vmem:[%s2 + $0x30] sm:$0xff]
  %v1484 = vld [vmem:[%s2 + $0x38] sm:$0xff]
  %v1485 = vld [vmem:[%s2 + $0x40] sm:$0xff]
  %v1486 = vld [vmem:[%s2 + $0x48] sm:$0xff]
  %v1487 = vld [vmem:[%s2 + $0x50] sm:$0xff]
  %v1488 = vld [vmem:[%s2 + $0x58] sm:$0xff]
  %v1489 = vld [vmem:[%s2 + $0x60] sm:$0xff]
  %v1490 = vld [vmem:[%s2 + $0x68] sm:$0xff]
  %v1491 = vld [vmem:[%s2 + $0x70] sm:$0xff]
  %v1492 = vld [vmem:[%s2 + $0x78] sm:$0xff]
  %v1509 = vunpack.c.l.b16 %v1477
  %v1510 = vunpack.c.h.b16 %v1477
  %v1511 = vunpack.c.l.b16 %v1478
  %v1512 = vunpack.c.h.b16 %v1478
  %v1513 = vunpack.c.l.b16 %v1479
  %v1514 = vunpack.c.h.b16 %v1479
  %v1515 = vunpack.c.l.b16 %v1480
  %v1516 = vunpack.c.h.b16 %v1480
  %v1517 = vunpack.c.l.b16 %v1481
  %v1518 = vunpack.c.h.b16 %v1481
  %v1519 = vunpack.c.l.b16 %v1482
  %v1520 = vunpack.c.h.b16 %v1482
  %v1521 = vunpack.c.l.b16 %v1483
  %v1522 = vunpack.c.h.b16 %v1483
  %v1523 = vunpack.c.l.b16 %v1484
  %v1524 = vunpack.c.h.b16 %v1484
  %v1525 = vunpack.c.l.b16 %v1485
  %v1526 = vunpack.c.h.b16 %v1485
  %v1527 = vunpack.c.l.b16 %v1486
  %v1528 = vunpack.c.h.b16 %v1486
  %v1529 = vunpack.c.l.b16 %v1487
  %v1530 = vunpack.c.h.b16 %v1487
  %v1531 = vunpack.c.l.b16 %v1488
  %v1532 = vunpack.c.h.b16 %v1488
  %v1533 = vunpack.c.l.b16 %v1489
  %v1534 = vunpack.c.h.b16 %v1489
  %v1535 = vunpack.c.l.b16 %v1490
  %v1536 = vunpack.c.h.b16 %v1490
  %v1537 = vunpack.c.l.b16 %v1491
  %v1538 = vunpack.c.h.b16 %v1491
  %v1539 = vunpack.c.l.b16 %v1492
  %v1540 = vunpack.c.h.b16 %v1492
  %v1541 = vpack.c.b16 %v1511, %v1509
  %v1542 = vpack.c.b16 %v1512, %v1510
  %v1543 = vpack.c.b16 %v1515, %v1513
  %v1544 = vpack.c.b16 %v1516, %v1514
  %v1545 = vpack.c.b16 %v1519, %v1517
  %v1546 = vpack.c.b16 %v1520, %v1518
  %v1547 = vpack.c.b16 %v1523, %v1521
  %v1548 = vpack.c.b16 %v1524, %v1522
  %v1549 = vpack.c.b16 %v1527, %v1525
  %v1550 = vpack.c.b16 %v1528, %v1526
  %v1551 = vpack.c.b16 %v1531, %v1529
  %v1552 = vpack.c.b16 %v1532, %v1530
  %v1553 = vpack.c.b16 %v1535, %v1533
  %v1554 = vpack.c.b16 %v1536, %v1534
  %v1555 = vpack.c.b16 %v1539, %v1537
  %v1556 = vpack.c.b16 %v1540, %v1538
  %1573 = vmatprep.subr.bf16.mxu0 %v1542
  %1574 = vmatpush1.bf16.msra.mxu0 %v1541
  %1575 = vmatprep.subr.bf16.mxu0 %v1544
  %1576 = vmatpush1.bf16.msra.mxu0 %v1543
  %1577 = vmatprep.subr.bf16.mxu0 %v1546
  %1578 = vmatpush1.bf16.msra.mxu0 %v1545
  %1579 = vmatprep.subr.bf16.mxu0 %v1548
  %1580 = vmatpush1.bf16.msra.mxu0 %v1547
  %1581 = vmatprep.subr.bf16.mxu0 %v1550
  %1582 = vmatpush1.bf16.msra.mxu0 %v1549
  %1583 = vmatprep.subr.bf16.mxu0 %v1552
  %1584 = vmatpush1.bf16.msra.mxu0 %v1551
  %1585 = vmatprep.subr.bf16.mxu0 %v1554
  %1586 = vmatpush1.bf16.msra.mxu0 %v1553
  %1587 = vmatprep.subr.bf16.mxu0 %v1556
  %1588 = vmatpush1.bf16.msra.mxu0 %v1555
  %1589 = vmatprep.subr.bf16.mxu0 0
  %1590 = vmatpush1.bf16.msra.mxu0 0
  %1591 = vmatprep.subr.bf16.mxu0 0
  %1592 = vmatpush1.bf16.msra.mxu0 0
  %1593 = vmatprep.subr.bf16.mxu0 0
  %1594 = vmatpush1.bf16.msra.mxu0 0
  %1595 = vmatprep.subr.bf16.mxu0 0
  %1596 = vmatpush1.bf16.msra.mxu0 0
  %1597 = vmatprep.subr.bf16.mxu0 0
  %1598 = vmatpush1.bf16.msra.mxu0 0
  %1599 = vmatprep.subr.bf16.mxu0 0
  %1600 = vmatpush1.bf16.msra.mxu0 0
  %1601 = vmatprep.subr.bf16.mxu0 0
  %1602 = vmatpush1.bf16.msra.mxu0 0
  %1603 = vmatprep.subr.bf16.mxu0 0
  %1604 = vmatpush1.bf16.msra.mxu0 0
  %1605 = vmatprep.mubr.bf16.mxu0 0
  %1606 = vmatmul.mubr.bf16.gmra.mrb[0].mxu0 %v1476
  %v1607 = vpop.f32.mrb[0].mxu0
  %v1608 = vadd.f32 0.0, %v1607
  %v1609 = vpop.f32.mrb[0].mxu0
  %v1610 = vadd.f32 0.0, %v1609
  %v1611 = vpop.f32.mrb[0].mxu0
  %v1612 = vadd.f32 0.0, %v1611
  %v1613 = vpop.f32.mrb[0].mxu0
  %v1614 = vadd.f32 0.0, %v1613
  %1615 = vdwg.mxu0
  %v1616 = vadd.f32 %v1465, %v1608
  %v1617 = vadd.f32 %v1469, %v1612
  %v1618 = vxor.u32 %v1616, 2147483648
  %v1619 = vxor.u32 %v1617, 2147483648
  %v1620 = vmul.f32 %v1618, 1.442695
  %v1621 = vpow.pop %v1620
  %v1622 = vmul.f32 %v1619, 1.442695
  %v1623 = vpow.pop %v1622
  %v1624 = vadd.f32 %v1621, 1.0
  %v1625 = vadd.f32 %v1623, 1.0
  %v1626 = vrcp.pop %v1624
  %v1627 = vmul.f32 1.0, %v1626
  %v1628 = vrcp.pop %v1625
  %v1629 = vmul.f32 1.0, %v1628
  %v1630 = vadd.f32 %v1466, %v1610
  %v1631 = vadd.f32 %v1470, %v1614
  %v1632 = vxor.u32 %v1630, 2147483648
  %v1633 = vxor.u32 %v1631, 2147483648
  %v1634 = vmul.f32 %v1632, 1.442695
  %v1635 = vpow.pop %v1634
  %v1636 = vmul.f32 %v1633, 1.442695
  %v1637 = vpow.pop %v1636
  %v1638 = vadd.f32 %v1635, 1.0
  %v1639 = vadd.f32 %v1637, 1.0
  %v1640 = vrcp.pop %v1638
  %v1641 = vmul.f32 1.0, %v1640
  %v1642 = vrcp.pop %v1639
  %v1643 = vmul.f32 1.0, %v1642
  %v1644 = vmul.f32 %v1627, %v1455
  %v1645 = vmul.f32 %v1629, %v1456
  %v1646 = vpack.c.bf16 %v1645, %v1644
  %v1647 = vld [vmem:[%s3] sm:$0xf]
  %v1648 = vld [vmem:[%s3 + $0x4] sm:$0xf]
  %v1649 = vld [vmem:[%s3 + $0x8] sm:$0xf]
  %v1650 = vld [vmem:[%s3 + $0xc] sm:$0xf]
  %v1651 = vld [vmem:[%s3 + $0x10] sm:$0xf]
  %v1652 = vld [vmem:[%s3 + $0x14] sm:$0xf]
  %v1653 = vld [vmem:[%s3 + $0x18] sm:$0xf]
  %v1654 = vld [vmem:[%s3 + $0x1c] sm:$0xf]
  %v1655 = vld [vmem:[%s3 + $0x20] sm:$0xf]
  %v1656 = vld [vmem:[%s3 + $0x24] sm:$0xf]
  %v1657 = vld [vmem:[%s3 + $0x28] sm:$0xf]
  %v1658 = vld [vmem:[%s3 + $0x2c] sm:$0xf]
  %v1659 = vld [vmem:[%s3 + $0x30] sm:$0xf]
  %v1660 = vld [vmem:[%s3 + $0x34] sm:$0xf]
  %v1661 = vld [vmem:[%s3 + $0x38] sm:$0xf]
  %v1662 = vld [vmem:[%s3 + $0x3c] sm:$0xf]
  %v1679 = vunpack.c.l.b16 %v1647
  %v1680 = vunpack.c.l.b16 %v1648
  %v1681 = vunpack.c.l.b16 %v1649
  %v1682 = vunpack.c.l.b16 %v1650
  %v1683 = vunpack.c.l.b16 %v1651
  %v1684 = vunpack.c.l.b16 %v1652
  %v1685 = vunpack.c.l.b16 %v1653
  %v1686 = vunpack.c.l.b16 %v1654
  %v1687 = vunpack.c.l.b16 %v1655
  %v1688 = vunpack.c.l.b16 %v1656
  %v1689 = vunpack.c.l.b16 %v1657
  %v1690 = vunpack.c.l.b16 %v1658
  %v1691 = vunpack.c.l.b16 %v1659
  %v1692 = vunpack.c.l.b16 %v1660
  %v1693 = vunpack.c.l.b16 %v1661
  %v1694 = vunpack.c.l.b16 %v1662
  %v1695 = vpack.c.b16 %v1680, %v1679
  %v1696 = vpack.c.b16 %v1682, %v1681
  %v1697 = vpack.c.b16 %v1684, %v1683
  %v1698 = vpack.c.b16 %v1686, %v1685
  %v1699 = vpack.c.b16 %v1688, %v1687
  %v1700 = vpack.c.b16 %v1690, %v1689
  %v1701 = vpack.c.b16 %v1692, %v1691
  %v1702 = vpack.c.b16 %v1694, %v1693
  %1711 = vmatprep.subr.bf16.mxu0 0
  %1712 = vmatpush1.bf16.msra.mxu0 %v1695
  %1713 = vmatprep.subr.bf16.mxu0 0
  %1714 = vmatpush1.bf16.msra.mxu0 %v1696
  %1715 = vmatprep.subr.bf16.mxu0 0
  %1716 = vmatpush1.bf16.msra.mxu0 %v1697
  %1717 = vmatprep.subr.bf16.mxu0 0
  %1718 = vmatpush1.bf16.msra.mxu0 %v1698
  %1719 = vmatprep.subr.bf16.mxu0 0
  %1720 = vmatpush1.bf16.msra.mxu0 %v1699
  %1721 = vmatprep.subr.bf16.mxu0 0
  %1722 = vmatpush1.bf16.msra.mxu0 %v1700
  %1723 = vmatprep.subr.bf16.mxu0 0
  %1724 = vmatpush1.bf16.msra.mxu0 %v1701
  %1725 = vmatprep.subr.bf16.mxu0 0
  %1726 = vmatpush1.bf16.msra.mxu0 %v1702
  %1727 = vmatprep.subr.bf16.mxu0 0
  %1728 = vmatpush1.bf16.msra.mxu0 0
  %1729 = vmatprep.subr.bf16.mxu0 0
  %1730 = vmatpush1.bf16.msra.mxu0 0
  %1731 = vmatprep.subr.bf16.mxu0 0
  %1732 = vmatpush1.bf16.msra.mxu0 0
  %1733 = vmatprep.subr.bf16.mxu0 0
  %1734 = vmatpush1.bf16.msra.mxu0 0
  %1735 = vmatprep.subr.bf16.mxu0 0
  %1736 = vmatpush1.bf16.msra.mxu0 0
  %1737 = vmatprep.subr.bf16.mxu0 0
  %1738 = vmatpush1.bf16.msra.mxu0 0
  %1739 = vmatprep.subr.bf16.mxu0 0
  %1740 = vmatpush1.bf16.msra.mxu0 0
  %1741 = vmatprep.subr.bf16.mxu0 0
  %1742 = vmatpush1.bf16.msra.mxu0 0
  %1743 = vmatprep.mubr.bf16.mxu0 0
  %1744 = vmatmul.mubr.bf16.gmra.mrb[0].mxu0 %v1646
  %v1745 = vpop.f32.mrb[0].mxu0
  %v1746 = vadd.f32 0.0, %v1745
  %v1747 = vpop.f32.mrb[0].mxu0
  %v1748 = vpop.f32.mrb[0].mxu0
  %v1749 = vadd.f32 0.0, %v1748
  %v1750 = vpop.f32.mrb[0].mxu0
  %1751 = vdwg.mxu0
  %v1752 = vadd.f32 %v1467, %v1746
  %v1753 = vadd.f32 %v1471, %v1749
  %v1754 = vtanh.pop %v1752
  %v1755 = vtanh.pop %v1753
  %v1756 = vmul.f32 %v1455, %v31
  %v1757 = vmul.f32 %v1456, %v31
  %v1758 = vadd.f32 %v1468, %v1756
  %v1759 = vadd.f32 %v1472, %v1757
  %v1760 = vmax.f32 %v1758, 0.0
  %v1761 = vmax.f32 %v1759, 0.0
  %1763 = vset.pattern.permute.xlu0 0
  %1764 = vperm.xlu0 %1763, %v1474
  %v1765 = vpop.permute.xlu0 %1764
  %1768 = vset.pattern.permute.xlu0 0
  %1769 = vperm.xlu0 %1768, %v1475
  %v1770 = vpop.permute.xlu0 %1769
  %v1772 = vmul.f32 %v41, %v1765
  %v1773 = vmul.f32 %v41, %v1770
  %v1774 = vadd.f32 %v1772, %v46
  %v1775 = vadd.f32 %v1773, %v46
  %v1776 = vmax.f32 %v1774, 0.0
  %v1777 = vmax.f32 %v1775, 0.0
  %v1778 = vmul.f32 %v36, %v1760
  %v1779 = vmul.f32 %v36, %v1761
  %v1780 = vmul.f32 %v51, %v1776
  %v1781 = vmul.f32 %v51, %v1777
  %v1782 = vadd.f32 %v1778, %v1780
  %v1783 = vadd.f32 %v1779, %v1781
  %v1784 = vadd.f32 %v1782, %v56
  %v1785 = vadd.f32 %v1783, %v56
  %v1786 = vxor.u32 %v1784, 2147483648
  %v1787 = vxor.u32 %v1785, 2147483648
  %v1788 = vmul.f32 %v1786, 1.442695
  %v1789 = vpow.pop %v1788
  %v1790 = vmul.f32 %v1787, 1.442695
  %v1791 = vpow.pop %v1790
  %v1792 = vadd.f32 %v1789, 1.0
  %v1793 = vadd.f32 %v1791, 1.0
  %v1794 = vrcp.pop %v1792
  %v1795 = vmul.f32 1.0, %v1794
  %v1796 = vrcp.pop %v1793
  %v1797 = vmul.f32 1.0, %v1796
  %v1798 = vmul.f32 %v1641, %v1455
  %v1799 = vmul.f32 %v1643, %v1456
  %v1800 = vsub.f32 1.0, %v1641
  %v1801 = vsub.f32 1.0, %v1643
  %v1802 = vmul.f32 %v1800, %v1754
  %v1803 = vmul.f32 %v1801, %v1755
  %v1804 = vmul.f32 %v1802, %v1795
  %v1805 = vmul.f32 %v1803, %v1797
  %v1806 = vadd.f32 %v1798, %v1804
  %v1807 = vadd.f32 %v1799, %v1805
  %s1808 = scalar_lea.vmem %s5, 64
  %1809 = vst [vmem:[%s1808] sm:$0xff] %v1806
  %1810 = vst [vmem:[%s1808 + $0x8] sm:$0xff] %v1807
  %s1811 = scalar_lea.vmem %s0, 160
  %v1812 = vld [vmem:[%s1811] sm:$0xff]
  %v1813 = vld [vmem:[%s1811 + $0x8] sm:$0xff]
  %v1814 = vld [vmem:[%s1811 + $0x10] sm:$0xff]
  %v1815 = vld [vmem:[%s1811 + $0x18] sm:$0xff]
  %v1816 = vunpack.c.l.bf16 %v1812
  %v1817 = vunpack.c.h.bf16 %v1812
  %v1818 = vunpack.c.l.bf16 %v1813
  %v1819 = vunpack.c.h.bf16 %v1813
  %v1820 = vunpack.c.l.bf16 %v1814
  %v1821 = vunpack.c.h.bf16 %v1814
  %v1822 = vunpack.c.l.bf16 %v1815
  %v1823 = vunpack.c.h.bf16 %v1815
  %s1824 = scalar_lea.vmem %s1, 80
  %v1825 = vld [vmem:[%s1824] sm:$0xff]
  %v1826 = vld [vmem:[%s1824 + $0x8] sm:$0xff]
  %v1827 = vpack.c.bf16 %v1807, %v1806
  %v1828 = vld [vmem:[%s2] sm:$0xff]
  %v1829 = vld [vmem:[%s2 + $0x8] sm:$0xff]
  %v1830 = vld [vmem:[%s2 + $0x10] sm:$0xff]
  %v1831 = vld [vmem:[%s2 + $0x18] sm:$0xff]
  %v1832 = vld [vmem:[%s2 + $0x20] sm:$0xff]
  %v1833 = vld [vmem:[%s2 + $0x28] sm:$0xff]
  %v1834 = vld [vmem:[%s2 + $0x30] sm:$0xff]
  %v1835 = vld [vmem:[%s2 + $0x38] sm:$0xff]
  %v1836 = vld [vmem:[%s2 + $0x40] sm:$0xff]
  %v1837 = vld [vmem:[%s2 + $0x48] sm:$0xff]
  %v1838 = vld [vmem:[%s2 + $0x50] sm:$0xff]
  %v1839 = vld [vmem:[%s2 + $0x58] sm:$0xff]
  %v1840 = vld [vmem:[%s2 + $0x60] sm:$0xff]
  %v1841 = vld [vmem:[%s2 + $0x68] sm:$0xff]
  %v1842 = vld [vmem:[%s2 + $0x70] sm:$0xff]
  %v1843 = vld [vmem:[%s2 + $0x78] sm:$0xff]
  %v1860 = vunpack.c.l.b16 %v1828
  %v1861 = vunpack.c.h.b16 %v1828
  %v1862 = vunpack.c.l.b16 %v1829
  %v1863 = vunpack.c.h.b16 %v1829
  %v1864 = vunpack.c.l.b16 %v1830
  %v1865 = vunpack.c.h.b16 %v1830
  %v1866 = vunpack.c.l.b16 %v1831
  %v1867 = vunpack.c.h.b16 %v1831
  %v1868 = vunpack.c.l.b16 %v1832
  %v1869 = vunpack.c.h.b16 %v1832
  %v1870 = vunpack.c.l.b16 %v1833
  %v1871 = vunpack.c.h.b16 %v1833
  %v1872 = vunpack.c.l.b16 %v1834
  %v1873 = vunpack.c.h.b16 %v1834
  %v1874 = vunpack.c.l.b16 %v1835
  %v1875 = vunpack.c.h.b16 %v1835
  %v1876 = vunpack.c.l.b16 %v1836
  %v1877 = vunpack.c.h.b16 %v1836
  %v1878 = vunpack.c.l.b16 %v1837
  %v1879 = vunpack.c.h.b16 %v1837
  %v1880 = vunpack.c.l.b16 %v1838
  %v1881 = vunpack.c.h.b16 %v1838
  %v1882 = vunpack.c.l.b16 %v1839
  %v1883 = vunpack.c.h.b16 %v1839
  %v1884 = vunpack.c.l.b16 %v1840
  %v1885 = vunpack.c.h.b16 %v1840
  %v1886 = vunpack.c.l.b16 %v1841
  %v1887 = vunpack.c.h.b16 %v1841
  %v1888 = vunpack.c.l.b16 %v1842
  %v1889 = vunpack.c.h.b16 %v1842
  %v1890 = vunpack.c.l.b16 %v1843
  %v1891 = vunpack.c.h.b16 %v1843
  %v1892 = vpack.c.b16 %v1862, %v1860
  %v1893 = vpack.c.b16 %v1863, %v1861
  %v1894 = vpack.c.b16 %v1866, %v1864
  %v1895 = vpack.c.b16 %v1867, %v1865
  %v1896 = vpack.c.b16 %v1870, %v1868
  %v1897 = vpack.c.b16 %v1871, %v1869
  %v1898 = vpack.c.b16 %v1874, %v1872
  %v1899 = vpack.c.b16 %v1875, %v1873
  %v1900 = vpack.c.b16 %v1878, %v1876
  %v1901 = vpack.c.b16 %v1879, %v1877
  %v1902 = vpack.c.b16 %v1882, %v1880
  %v1903 = vpack.c.b16 %v1883, %v1881
  %v1904 = vpack.c.b16 %v1886, %v1884
  %v1905 = vpack.c.b16 %v1887, %v1885
  %v1906 = vpack.c.b16 %v1890, %v1888
  %v1907 = vpack.c.b16 %v1891, %v1889
  %1924 = vmatprep.subr.bf16.mxu0 %v1893
  %1925 = vmatpush1.bf16.msra.mxu0 %v1892
  %1926 = vmatprep.subr.bf16.mxu0 %v1895
  %1927 = vmatpush1.bf16.msra.mxu0 %v1894
  %1928 = vmatprep.subr.bf16.mxu0 %v1897
  %1929 = vmatpush1.bf16.msra.mxu0 %v1896
  %1930 = vmatprep.subr.bf16.mxu0 %v1899
  %1931 = vmatpush1.bf16.msra.mxu0 %v1898
  %1932 = vmatprep.subr.bf16.mxu0 %v1901
  %1933 = vmatpush1.bf16.msra.mxu0 %v1900
  %1934 = vmatprep.subr.bf16.mxu0 %v1903
  %1935 = vmatpush1.bf16.msra.mxu0 %v1902
  %1936 = vmatprep.subr.bf16.mxu0 %v1905
  %1937 = vmatpush1.bf16.msra.mxu0 %v1904
  %1938 = vmatprep.subr.bf16.mxu0 %v1907
  %1939 = vmatpush1.bf16.msra.mxu0 %v1906
  %1940 = vmatprep.subr.bf16.mxu0 0
  %1941 = vmatpush1.bf16.msra.mxu0 0
  %1942 = vmatprep.subr.bf16.mxu0 0
  %1943 = vmatpush1.bf16.msra.mxu0 0
  %1944 = vmatprep.subr.bf16.mxu0 0
  %1945 = vmatpush1.bf16.msra.mxu0 0
  %1946 = vmatprep.subr.bf16.mxu0 0
  %1947 = vmatpush1.bf16.msra.mxu0 0
  %1948 = vmatprep.subr.bf16.mxu0 0
  %1949 = vmatpush1.bf16.msra.mxu0 0
  %1950 = vmatprep.subr.bf16.mxu0 0
  %1951 = vmatpush1.bf16.msra.mxu0 0
  %1952 = vmatprep.subr.bf16.mxu0 0
  %1953 = vmatpush1.bf16.msra.mxu0 0
  %1954 = vmatprep.subr.bf16.mxu0 0
  %1955 = vmatpush1.bf16.msra.mxu0 0
  %1956 = vmatprep.mubr.bf16.mxu0 0
  %1957 = vmatmul.mubr.bf16.gmra.mrb[0].mxu0 %v1827
  %v1958 = vpop.f32.mrb[0].mxu0
  %v1959 = vadd.f32 0.0, %v1958
  %v1960 = vpop.f32.mrb[0].mxu0
  %v1961 = vadd.f32 0.0, %v1960
  %v1962 = vpop.f32.mrb[0].mxu0
  %v1963 = vadd.f32 0.0, %v1962
  %v1964 = vpop.f32.mrb[0].mxu0
  %v1965 = vadd.f32 0.0, %v1964
  %1966 = vdwg.mxu0
  %v1967 = vadd.f32 %v1816, %v1959
  %v1968 = vadd.f32 %v1820, %v1963
  %v1969 = vxor.u32 %v1967, 2147483648
  %v1970 = vxor.u32 %v1968, 2147483648
  %v1971 = vmul.f32 %v1969, 1.442695
  %v1972 = vpow.pop %v1971
  %v1973 = vmul.f32 %v1970, 1.442695
  %v1974 = vpow.pop %v1973
  %v1975 = vadd.f32 %v1972, 1.0
  %v1976 = vadd.f32 %v1974, 1.0
  %v1977 = vrcp.pop %v1975
  %v1978 = vmul.f32 1.0, %v1977
  %v1979 = vrcp.pop %v1976
  %v1980 = vmul.f32 1.0, %v1979
  %v1981 = vadd.f32 %v1817, %v1961
  %v1982 = vadd.f32 %v1821, %v1965
  %v1983 = vxor.u32 %v1981, 2147483648
  %v1984 = vxor.u32 %v1982, 2147483648
  %v1985 = vmul.f32 %v1983, 1.442695
  %v1986 = vpow.pop %v1985
  %v1987 = vmul.f32 %v1984, 1.442695
  %v1988 = vpow.pop %v1987
  %v1989 = vadd.f32 %v1986, 1.0
  %v1990 = vadd.f32 %v1988, 1.0
  %v1991 = vrcp.pop %v1989
  %v1992 = vmul.f32 1.0, %v1991
  %v1993 = vrcp.pop %v1990
  %v1994 = vmul.f32 1.0, %v1993
  %v1995 = vmul.f32 %v1978, %v1806
  %v1996 = vmul.f32 %v1980, %v1807
  %v1997 = vpack.c.bf16 %v1996, %v1995
  %v1998 = vld [vmem:[%s3] sm:$0xf]
  %v1999 = vld [vmem:[%s3 + $0x4] sm:$0xf]
  %v2000 = vld [vmem:[%s3 + $0x8] sm:$0xf]
  %v2001 = vld [vmem:[%s3 + $0xc] sm:$0xf]
  %v2002 = vld [vmem:[%s3 + $0x10] sm:$0xf]
  %v2003 = vld [vmem:[%s3 + $0x14] sm:$0xf]
  %v2004 = vld [vmem:[%s3 + $0x18] sm:$0xf]
  %v2005 = vld [vmem:[%s3 + $0x1c] sm:$0xf]
  %v2006 = vld [vmem:[%s3 + $0x20] sm:$0xf]
  %v2007 = vld [vmem:[%s3 + $0x24] sm:$0xf]
  %v2008 = vld [vmem:[%s3 + $0x28] sm:$0xf]
  %v2009 = vld [vmem:[%s3 + $0x2c] sm:$0xf]
  %v2010 = vld [vmem:[%s3 + $0x30] sm:$0xf]
  %v2011 = vld [vmem:[%s3 + $0x34] sm:$0xf]
  %v2012 = vld [vmem:[%s3 + $0x38] sm:$0xf]
  %v2013 = vld [vmem:[%s3 + $0x3c] sm:$0xf]
  %v2030 = vunpack.c.l.b16 %v1998
  %v2031 = vunpack.c.l.b16 %v1999
  %v2032 = vunpack.c.l.b16 %v2000
  %v2033 = vunpack.c.l.b16 %v2001
  %v2034 = vunpack.c.l.b16 %v2002
  %v2035 = vunpack.c.l.b16 %v2003
  %v2036 = vunpack.c.l.b16 %v2004
  %v2037 = vunpack.c.l.b16 %v2005
  %v2038 = vunpack.c.l.b16 %v2006
  %v2039 = vunpack.c.l.b16 %v2007
  %v2040 = vunpack.c.l.b16 %v2008
  %v2041 = vunpack.c.l.b16 %v2009
  %v2042 = vunpack.c.l.b16 %v2010
  %v2043 = vunpack.c.l.b16 %v2011
  %v2044 = vunpack.c.l.b16 %v2012
  %v2045 = vunpack.c.l.b16 %v2013
  %v2046 = vpack.c.b16 %v2031, %v2030
  %v2047 = vpack.c.b16 %v2033, %v2032
  %v2048 = vpack.c.b16 %v2035, %v2034
  %v2049 = vpack.c.b16 %v2037, %v2036
  %v2050 = vpack.c.b16 %v2039, %v2038
  %v2051 = vpack.c.b16 %v2041, %v2040
  %v2052 = vpack.c.b16 %v2043, %v2042
  %v2053 = vpack.c.b16 %v2045, %v2044
  %2062 = vmatprep.subr.bf16.mxu0 0
  %2063 = vmatpush1.bf16.msra.mxu0 %v2046
  %2064 = vmatprep.subr.bf16.mxu0 0
  %2065 = vmatpush1.bf16.msra.mxu0 %v2047
  %2066 = vmatprep.subr.bf16.mxu0 0
  %2067 = vmatpush1.bf16.msra.mxu0 %v2048
  %2068 = vmatprep.subr.bf16.mxu0 0
  %2069 = vmatpush1.bf16.msra.mxu0 %v2049
  %2070 = vmatprep.subr.bf16.mxu0 0
  %2071 = vmatpush1.bf16.msra.mxu0 %v2050
  %2072 = vmatprep.subr.bf16.mxu0 0
  %2073 = vmatpush1.bf16.msra.mxu0 %v2051
  %2074 = vmatprep.subr.bf16.mxu0 0
  %2075 = vmatpush1.bf16.msra.mxu0 %v2052
  %2076 = vmatprep.subr.bf16.mxu0 0
  %2077 = vmatpush1.bf16.msra.mxu0 %v2053
  %2078 = vmatprep.subr.bf16.mxu0 0
  %2079 = vmatpush1.bf16.msra.mxu0 0
  %2080 = vmatprep.subr.bf16.mxu0 0
  %2081 = vmatpush1.bf16.msra.mxu0 0
  %2082 = vmatprep.subr.bf16.mxu0 0
  %2083 = vmatpush1.bf16.msra.mxu0 0
  %2084 = vmatprep.subr.bf16.mxu0 0
  %2085 = vmatpush1.bf16.msra.mxu0 0
  %2086 = vmatprep.subr.bf16.mxu0 0
  %2087 = vmatpush1.bf16.msra.mxu0 0
  %2088 = vmatprep.subr.bf16.mxu0 0
  %2089 = vmatpush1.bf16.msra.mxu0 0
  %2090 = vmatprep.subr.bf16.mxu0 0
  %2091 = vmatpush1.bf16.msra.mxu0 0
  %2092 = vmatprep.subr.bf16.mxu0 0
  %2093 = vmatpush1.bf16.msra.mxu0 0
  %2094 = vmatprep.mubr.bf16.mxu0 0
  %2095 = vmatmul.mubr.bf16.gmra.mrb[0].mxu0 %v1997
  %v2096 = vpop.f32.mrb[0].mxu0
  %v2097 = vadd.f32 0.0, %v2096
  %v2098 = vpop.f32.mrb[0].mxu0
  %v2099 = vpop.f32.mrb[0].mxu0
  %v2100 = vadd.f32 0.0, %v2099
  %v2101 = vpop.f32.mrb[0].mxu0
  %2102 = vdwg.mxu0
  %v2103 = vadd.f32 %v1818, %v2097
  %v2104 = vadd.f32 %v1822, %v2100
  %v2105 = vtanh.pop %v2103
  %v2106 = vtanh.pop %v2104
  %v2107 = vmul.f32 %v1806, %v31
  %v2108 = vmul.f32 %v1807, %v31
  %v2109 = vadd.f32 %v1819, %v2107
  %v2110 = vadd.f32 %v1823, %v2108
  %v2111 = vmax.f32 %v2109, 0.0
  %v2112 = vmax.f32 %v2110, 0.0
  %2114 = vset.pattern.permute.xlu0 0
  %2115 = vperm.xlu0 %2114, %v1825
  %v2116 = vpop.permute.xlu0 %2115
  %2119 = vset.pattern.permute.xlu0 0
  %2120 = vperm.xlu0 %2119, %v1826
  %v2121 = vpop.permute.xlu0 %2120
  %v2123 = vmul.f32 %v41, %v2116
  %v2124 = vmul.f32 %v41, %v2121
  %v2125 = vadd.f32 %v2123, %v46
  %v2126 = vadd.f32 %v2124, %v46
  %v2127 = vmax.f32 %v2125, 0.0
  %v2128 = vmax.f32 %v2126, 0.0
  %v2129 = vmul.f32 %v36, %v2111
  %v2130 = vmul.f32 %v36, %v2112
  %v2131 = vmul.f32 %v51, %v2127
  %v2132 = vmul.f32 %v51, %v2128
  %v2133 = vadd.f32 %v2129, %v2131
  %v2134 = vadd.f32 %v2130, %v2132
  %v2135 = vadd.f32 %v2133, %v56
  %v2136 = vadd.f32 %v2134, %v56
  %v2137 = vxor.u32 %v2135, 2147483648
  %v2138 = vxor.u32 %v2136, 2147483648
  %v2139 = vmul.f32 %v2137, 1.442695
  %v2140 = vpow.pop %v2139
  %v2141 = vmul.f32 %v2138, 1.442695
  %v2142 = vpow.pop %v2141
  %v2143 = vadd.f32 %v2140, 1.0
  %v2144 = vadd.f32 %v2142, 1.0
  %v2145 = vrcp.pop %v2143
  %v2146 = vmul.f32 1.0, %v2145
  %v2147 = vrcp.pop %v2144
  %v2148 = vmul.f32 1.0, %v2147
  %v2149 = vmul.f32 %v1992, %v1806
  %v2150 = vmul.f32 %v1994, %v1807
  %v2151 = vsub.f32 1.0, %v1992
  %v2152 = vsub.f32 1.0, %v1994
  %v2153 = vmul.f32 %v2151, %v2105
  %v2154 = vmul.f32 %v2152, %v2106
  %v2155 = vmul.f32 %v2153, %v2146
  %v2156 = vmul.f32 %v2154, %v2148
  %v2157 = vadd.f32 %v2149, %v2155
  %v2158 = vadd.f32 %v2150, %v2156
  %s2159 = scalar_lea.vmem %s5, 80
  %2160 = vst [vmem:[%s2159] sm:$0xff] %v2157
  %2161 = vst [vmem:[%s2159 + $0x8] sm:$0xff] %v2158
  %s2162 = scalar_lea.vmem %s0, 192
  %v2163 = vld [vmem:[%s2162] sm:$0xff]
  %v2164 = vld [vmem:[%s2162 + $0x8] sm:$0xff]
  %v2165 = vld [vmem:[%s2162 + $0x10] sm:$0xff]
  %v2166 = vld [vmem:[%s2162 + $0x18] sm:$0xff]
  %v2167 = vunpack.c.l.bf16 %v2163
  %v2168 = vunpack.c.h.bf16 %v2163
  %v2169 = vunpack.c.l.bf16 %v2164
  %v2170 = vunpack.c.h.bf16 %v2164
  %v2171 = vunpack.c.l.bf16 %v2165
  %v2172 = vunpack.c.h.bf16 %v2165
  %v2173 = vunpack.c.l.bf16 %v2166
  %v2174 = vunpack.c.h.bf16 %v2166
  %s2175 = scalar_lea.vmem %s1, 96
  %v2176 = vld [vmem:[%s2175] sm:$0xff]
  %v2177 = vld [vmem:[%s2175 + $0x8] sm:$0xff]
  %v2178 = vpack.c.bf16 %v2158, %v2157
  %v2179 = vld [vmem:[%s2] sm:$0xff]
  %v2180 = vld [vmem:[%s2 + $0x8] sm:$0xff]
  %v2181 = vld [vmem:[%s2 + $0x10] sm:$0xff]
  %v2182 = vld [vmem:[%s2 + $0x18] sm:$0xff]
  %v2183 = vld [vmem:[%s2 + $0x20] sm:$0xff]
  %v2184 = vld [vmem:[%s2 + $0x28] sm:$0xff]
  %v2185 = vld [vmem:[%s2 + $0x30] sm:$0xff]
  %v2186 = vld [vmem:[%s2 + $0x38] sm:$0xff]
  %v2187 = vld [vmem:[%s2 + $0x40] sm:$0xff]
  %v2188 = vld [vmem:[%s2 + $0x48] sm:$0xff]
  %v2189 = vld [vmem:[%s2 + $0x50] sm:$0xff]
  %v2190 = vld [vmem:[%s2 + $0x58] sm:$0xff]
  %v2191 = vld [vmem:[%s2 + $0x60] sm:$0xff]
  %v2192 = vld [vmem:[%s2 + $0x68] sm:$0xff]
  %v2193 = vld [vmem:[%s2 + $0x70] sm:$0xff]
  %v2194 = vld [vmem:[%s2 + $0x78] sm:$0xff]
  %v2211 = vunpack.c.l.b16 %v2179
  %v2212 = vunpack.c.h.b16 %v2179
  %v2213 = vunpack.c.l.b16 %v2180
  %v2214 = vunpack.c.h.b16 %v2180
  %v2215 = vunpack.c.l.b16 %v2181
  %v2216 = vunpack.c.h.b16 %v2181
  %v2217 = vunpack.c.l.b16 %v2182
  %v2218 = vunpack.c.h.b16 %v2182
  %v2219 = vunpack.c.l.b16 %v2183
  %v2220 = vunpack.c.h.b16 %v2183
  %v2221 = vunpack.c.l.b16 %v2184
  %v2222 = vunpack.c.h.b16 %v2184
  %v2223 = vunpack.c.l.b16 %v2185
  %v2224 = vunpack.c.h.b16 %v2185
  %v2225 = vunpack.c.l.b16 %v2186
  %v2226 = vunpack.c.h.b16 %v2186
  %v2227 = vunpack.c.l.b16 %v2187
  %v2228 = vunpack.c.h.b16 %v2187
  %v2229 = vunpack.c.l.b16 %v2188
  %v2230 = vunpack.c.h.b16 %v2188
  %v2231 = vunpack.c.l.b16 %v2189
  %v2232 = vunpack.c.h.b16 %v2189
  %v2233 = vunpack.c.l.b16 %v2190
  %v2234 = vunpack.c.h.b16 %v2190
  %v2235 = vunpack.c.l.b16 %v2191
  %v2236 = vunpack.c.h.b16 %v2191
  %v2237 = vunpack.c.l.b16 %v2192
  %v2238 = vunpack.c.h.b16 %v2192
  %v2239 = vunpack.c.l.b16 %v2193
  %v2240 = vunpack.c.h.b16 %v2193
  %v2241 = vunpack.c.l.b16 %v2194
  %v2242 = vunpack.c.h.b16 %v2194
  %v2243 = vpack.c.b16 %v2213, %v2211
  %v2244 = vpack.c.b16 %v2214, %v2212
  %v2245 = vpack.c.b16 %v2217, %v2215
  %v2246 = vpack.c.b16 %v2218, %v2216
  %v2247 = vpack.c.b16 %v2221, %v2219
  %v2248 = vpack.c.b16 %v2222, %v2220
  %v2249 = vpack.c.b16 %v2225, %v2223
  %v2250 = vpack.c.b16 %v2226, %v2224
  %v2251 = vpack.c.b16 %v2229, %v2227
  %v2252 = vpack.c.b16 %v2230, %v2228
  %v2253 = vpack.c.b16 %v2233, %v2231
  %v2254 = vpack.c.b16 %v2234, %v2232
  %v2255 = vpack.c.b16 %v2237, %v2235
  %v2256 = vpack.c.b16 %v2238, %v2236
  %v2257 = vpack.c.b16 %v2241, %v2239
  %v2258 = vpack.c.b16 %v2242, %v2240
  %2275 = vmatprep.subr.bf16.mxu0 %v2244
  %2276 = vmatpush1.bf16.msra.mxu0 %v2243
  %2277 = vmatprep.subr.bf16.mxu0 %v2246
  %2278 = vmatpush1.bf16.msra.mxu0 %v2245
  %2279 = vmatprep.subr.bf16.mxu0 %v2248
  %2280 = vmatpush1.bf16.msra.mxu0 %v2247
  %2281 = vmatprep.subr.bf16.mxu0 %v2250
  %2282 = vmatpush1.bf16.msra.mxu0 %v2249
  %2283 = vmatprep.subr.bf16.mxu0 %v2252
  %2284 = vmatpush1.bf16.msra.mxu0 %v2251
  %2285 = vmatprep.subr.bf16.mxu0 %v2254
  %2286 = vmatpush1.bf16.msra.mxu0 %v2253
  %2287 = vmatprep.subr.bf16.mxu0 %v2256
  %2288 = vmatpush1.bf16.msra.mxu0 %v2255
  %2289 = vmatprep.subr.bf16.mxu0 %v2258
  %2290 = vmatpush1.bf16.msra.mxu0 %v2257
  %2291 = vmatprep.subr.bf16.mxu0 0
  %2292 = vmatpush1.bf16.msra.mxu0 0
  %2293 = vmatprep.subr.bf16.mxu0 0
  %2294 = vmatpush1.bf16.msra.mxu0 0
  %2295 = vmatprep.subr.bf16.mxu0 0
  %2296 = vmatpush1.bf16.msra.mxu0 0
  %2297 = vmatprep.subr.bf16.mxu0 0
  %2298 = vmatpush1.bf16.msra.mxu0 0
  %2299 = vmatprep.subr.bf16.mxu0 0
  %2300 = vmatpush1.bf16.msra.mxu0 0
  %2301 = vmatprep.subr.bf16.mxu0 0
  %2302 = vmatpush1.bf16.msra.mxu0 0
  %2303 = vmatprep.subr.bf16.mxu0 0
  %2304 = vmatpush1.bf16.msra.mxu0 0
  %2305 = vmatprep.subr.bf16.mxu0 0
  %2306 = vmatpush1.bf16.msra.mxu0 0
  %2307 = vmatprep.mubr.bf16.mxu0 0
  %2308 = vmatmul.mubr.bf16.gmra.mrb[0].mxu0 %v2178
  %v2309 = vpop.f32.mrb[0].mxu0
  %v2310 = vadd.f32 0.0, %v2309
  %v2311 = vpop.f32.mrb[0].mxu0
  %v2312 = vadd.f32 0.0, %v2311
  %v2313 = vpop.f32.mrb[0].mxu0
  %v2314 = vadd.f32 0.0, %v2313
  %v2315 = vpop.f32.mrb[0].mxu0
  %v2316 = vadd.f32 0.0, %v2315
  %2317 = vdwg.mxu0
  %v2318 = vadd.f32 %v2167, %v2310
  %v2319 = vadd.f32 %v2171, %v2314
  %v2320 = vxor.u32 %v2318, 2147483648
  %v2321 = vxor.u32 %v2319, 2147483648
  %v2322 = vmul.f32 %v2320, 1.442695
  %v2323 = vpow.pop %v2322
  %v2324 = vmul.f32 %v2321, 1.442695
  %v2325 = vpow.pop %v2324
  %v2326 = vadd.f32 %v2323, 1.0
  %v2327 = vadd.f32 %v2325, 1.0
  %v2328 = vrcp.pop %v2326
  %v2329 = vmul.f32 1.0, %v2328
  %v2330 = vrcp.pop %v2327
  %v2331 = vmul.f32 1.0, %v2330
  %v2332 = vadd.f32 %v2168, %v2312
  %v2333 = vadd.f32 %v2172, %v2316
  %v2334 = vxor.u32 %v2332, 2147483648
  %v2335 = vxor.u32 %v2333, 2147483648
  %v2336 = vmul.f32 %v2334, 1.442695
  %v2337 = vpow.pop %v2336
  %v2338 = vmul.f32 %v2335, 1.442695
  %v2339 = vpow.pop %v2338
  %v2340 = vadd.f32 %v2337, 1.0
  %v2341 = vadd.f32 %v2339, 1.0
  %v2342 = vrcp.pop %v2340
  %v2343 = vmul.f32 1.0, %v2342
  %v2344 = vrcp.pop %v2341
  %v2345 = vmul.f32 1.0, %v2344
  %v2346 = vmul.f32 %v2329, %v2157
  %v2347 = vmul.f32 %v2331, %v2158
  %v2348 = vpack.c.bf16 %v2347, %v2346
  %v2349 = vld [vmem:[%s3] sm:$0xf]
  %v2350 = vld [vmem:[%s3 + $0x4] sm:$0xf]
  %v2351 = vld [vmem:[%s3 + $0x8] sm:$0xf]
  %v2352 = vld [vmem:[%s3 + $0xc] sm:$0xf]
  %v2353 = vld [vmem:[%s3 + $0x10] sm:$0xf]
  %v2354 = vld [vmem:[%s3 + $0x14] sm:$0xf]
  %v2355 = vld [vmem:[%s3 + $0x18] sm:$0xf]
  %v2356 = vld [vmem:[%s3 + $0x1c] sm:$0xf]
  %v2357 = vld [vmem:[%s3 + $0x20] sm:$0xf]
  %v2358 = vld [vmem:[%s3 + $0x24] sm:$0xf]
  %v2359 = vld [vmem:[%s3 + $0x28] sm:$0xf]
  %v2360 = vld [vmem:[%s3 + $0x2c] sm:$0xf]
  %v2361 = vld [vmem:[%s3 + $0x30] sm:$0xf]
  %v2362 = vld [vmem:[%s3 + $0x34] sm:$0xf]
  %v2363 = vld [vmem:[%s3 + $0x38] sm:$0xf]
  %v2364 = vld [vmem:[%s3 + $0x3c] sm:$0xf]
  %v2381 = vunpack.c.l.b16 %v2349
  %v2382 = vunpack.c.l.b16 %v2350
  %v2383 = vunpack.c.l.b16 %v2351
  %v2384 = vunpack.c.l.b16 %v2352
  %v2385 = vunpack.c.l.b16 %v2353
  %v2386 = vunpack.c.l.b16 %v2354
  %v2387 = vunpack.c.l.b16 %v2355
  %v2388 = vunpack.c.l.b16 %v2356
  %v2389 = vunpack.c.l.b16 %v2357
  %v2390 = vunpack.c.l.b16 %v2358
  %v2391 = vunpack.c.l.b16 %v2359
  %v2392 = vunpack.c.l.b16 %v2360
  %v2393 = vunpack.c.l.b16 %v2361
  %v2394 = vunpack.c.l.b16 %v2362
  %v2395 = vunpack.c.l.b16 %v2363
  %v2396 = vunpack.c.l.b16 %v2364
  %v2397 = vpack.c.b16 %v2382, %v2381
  %v2398 = vpack.c.b16 %v2384, %v2383
  %v2399 = vpack.c.b16 %v2386, %v2385
  %v2400 = vpack.c.b16 %v2388, %v2387
  %v2401 = vpack.c.b16 %v2390, %v2389
  %v2402 = vpack.c.b16 %v2392, %v2391
  %v2403 = vpack.c.b16 %v2394, %v2393
  %v2404 = vpack.c.b16 %v2396, %v2395
  %2413 = vmatprep.subr.bf16.mxu0 0
  %2414 = vmatpush1.bf16.msra.mxu0 %v2397
  %2415 = vmatprep.subr.bf16.mxu0 0
  %2416 = vmatpush1.bf16.msra.mxu0 %v2398
  %2417 = vmatprep.subr.bf16.mxu0 0
  %2418 = vmatpush1.bf16.msra.mxu0 %v2399
  %2419 = vmatprep.subr.bf16.mxu0 0
  %2420 = vmatpush1.bf16.msra.mxu0 %v2400
  %2421 = vmatprep.subr.bf16.mxu0 0
  %2422 = vmatpush1.bf16.msra.mxu0 %v2401
  %2423 = vmatprep.subr.bf16.mxu0 0
  %2424 = vmatpush1.bf16.msra.mxu0 %v2402
  %2425 = vmatprep.subr.bf16.mxu0 0
  %2426 = vmatpush1.bf16.msra.mxu0 %v2403
  %2427 = vmatprep.subr.bf16.mxu0 0
  %2428 = vmatpush1.bf16.msra.mxu0 %v2404
  %2429 = vmatprep.subr.bf16.mxu0 0
  %2430 = vmatpush1.bf16.msra.mxu0 0
  %2431 = vmatprep.subr.bf16.mxu0 0
  %2432 = vmatpush1.bf16.msra.mxu0 0
  %2433 = vmatprep.subr.bf16.mxu0 0
  %2434 = vmatpush1.bf16.msra.mxu0 0
  %2435 = vmatprep.subr.bf16.mxu0 0
  %2436 = vmatpush1.bf16.msra.mxu0 0
  %2437 = vmatprep.subr.bf16.mxu0 0
  %2438 = vmatpush1.bf16.msra.mxu0 0
  %2439 = vmatprep.subr.bf16.mxu0 0
  %2440 = vmatpush1.bf16.msra.mxu0 0
  %2441 = vmatprep.subr.bf16.mxu0 0
  %2442 = vmatpush1.bf16.msra.mxu0 0
  %2443 = vmatprep.subr.bf16.mxu0 0
  %2444 = vmatpush1.bf16.msra.mxu0 0
  %2445 = vmatprep.mubr.bf16.mxu0 0
  %2446 = vmatmul.mubr.bf16.gmra.mrb[0].mxu0 %v2348
  %v2447 = vpop.f32.mrb[0].mxu0
  %v2448 = vadd.f32 0.0, %v2447
  %v2449 = vpop.f32.mrb[0].mxu0
  %v2450 = vpop.f32.mrb[0].mxu0
  %v2451 = vadd.f32 0.0, %v2450
  %v2452 = vpop.f32.mrb[0].mxu0
  %2453 = vdwg.mxu0
  %v2454 = vadd.f32 %v2169, %v2448
  %v2455 = vadd.f32 %v2173, %v2451
  %v2456 = vtanh.pop %v2454
  %v2457 = vtanh.pop %v2455
  %v2458 = vmul.f32 %v2157, %v31
  %v2459 = vmul.f32 %v2158, %v31
  %v2460 = vadd.f32 %v2170, %v2458
  %v2461 = vadd.f32 %v2174, %v2459
  %v2462 = vmax.f32 %v2460, 0.0
  %v2463 = vmax.f32 %v2461, 0.0
  %2465 = vset.pattern.permute.xlu0 0
  %2466 = vperm.xlu0 %2465, %v2176
  %v2467 = vpop.permute.xlu0 %2466
  %2470 = vset.pattern.permute.xlu0 0
  %2471 = vperm.xlu0 %2470, %v2177
  %v2472 = vpop.permute.xlu0 %2471
  %v2474 = vmul.f32 %v41, %v2467
  %v2475 = vmul.f32 %v41, %v2472
  %v2476 = vadd.f32 %v2474, %v46
  %v2477 = vadd.f32 %v2475, %v46
  %v2478 = vmax.f32 %v2476, 0.0
  %v2479 = vmax.f32 %v2477, 0.0
  %v2480 = vmul.f32 %v36, %v2462
  %v2481 = vmul.f32 %v36, %v2463
  %v2482 = vmul.f32 %v51, %v2478
  %v2483 = vmul.f32 %v51, %v2479
  %v2484 = vadd.f32 %v2480, %v2482
  %v2485 = vadd.f32 %v2481, %v2483
  %v2486 = vadd.f32 %v2484, %v56
  %v2487 = vadd.f32 %v2485, %v56
  %v2488 = vxor.u32 %v2486, 2147483648
  %v2489 = vxor.u32 %v2487, 2147483648
  %v2490 = vmul.f32 %v2488, 1.442695
  %v2491 = vpow.pop %v2490
  %v2492 = vmul.f32 %v2489, 1.442695
  %v2493 = vpow.pop %v2492
  %v2494 = vadd.f32 %v2491, 1.0
  %v2495 = vadd.f32 %v2493, 1.0
  %v2496 = vrcp.pop %v2494
  %v2497 = vmul.f32 1.0, %v2496
  %v2498 = vrcp.pop %v2495
  %v2499 = vmul.f32 1.0, %v2498
  %v2500 = vmul.f32 %v2343, %v2157
  %v2501 = vmul.f32 %v2345, %v2158
  %v2502 = vsub.f32 1.0, %v2343
  %v2503 = vsub.f32 1.0, %v2345
  %v2504 = vmul.f32 %v2502, %v2456
  %v2505 = vmul.f32 %v2503, %v2457
  %v2506 = vmul.f32 %v2504, %v2497
  %v2507 = vmul.f32 %v2505, %v2499
  %v2508 = vadd.f32 %v2500, %v2506
  %v2509 = vadd.f32 %v2501, %v2507
  %s2510 = scalar_lea.vmem %s5, 96
  %2511 = vst [vmem:[%s2510] sm:$0xff] %v2508
  %2512 = vst [vmem:[%s2510 + $0x8] sm:$0xff] %v2509
  %s2513 = scalar_lea.vmem %s0, 224
  %v2514 = vld [vmem:[%s2513] sm:$0xff]
  %v2515 = vld [vmem:[%s2513 + $0x8] sm:$0xff]
  %v2516 = vld [vmem:[%s2513 + $0x10] sm:$0xff]
  %v2517 = vld [vmem:[%s2513 + $0x18] sm:$0xff]
  %v2518 = vunpack.c.l.bf16 %v2514
  %v2519 = vunpack.c.h.bf16 %v2514
  %v2520 = vunpack.c.l.bf16 %v2515
  %v2521 = vunpack.c.h.bf16 %v2515
  %v2522 = vunpack.c.l.bf16 %v2516
  %v2523 = vunpack.c.h.bf16 %v2516
  %v2524 = vunpack.c.l.bf16 %v2517
  %v2525 = vunpack.c.h.bf16 %v2517
  %s2526 = scalar_lea.vmem %s1, 112
  %v2527 = vld [vmem:[%s2526] sm:$0xff]
  %v2528 = vld [vmem:[%s2526 + $0x8] sm:$0xff]
  %v2529 = vpack.c.bf16 %v2509, %v2508
  %v2530 = vld [vmem:[%s2] sm:$0xff]
  %v2531 = vld [vmem:[%s2 + $0x8] sm:$0xff]
  %v2532 = vld [vmem:[%s2 + $0x10] sm:$0xff]
  %v2533 = vld [vmem:[%s2 + $0x18] sm:$0xff]
  %v2534 = vld [vmem:[%s2 + $0x20] sm:$0xff]
  %v2535 = vld [vmem:[%s2 + $0x28] sm:$0xff]
  %v2536 = vld [vmem:[%s2 + $0x30] sm:$0xff]
  %v2537 = vld [vmem:[%s2 + $0x38] sm:$0xff]
  %v2538 = vld [vmem:[%s2 + $0x40] sm:$0xff]
  %v2539 = vld [vmem:[%s2 + $0x48] sm:$0xff]
  %v2540 = vld [vmem:[%s2 + $0x50] sm:$0xff]
  %v2541 = vld [vmem:[%s2 + $0x58] sm:$0xff]
  %v2542 = vld [vmem:[%s2 + $0x60] sm:$0xff]
  %v2543 = vld [vmem:[%s2 + $0x68] sm:$0xff]
  %v2544 = vld [vmem:[%s2 + $0x70] sm:$0xff]
  %v2545 = vld [vmem:[%s2 + $0x78] sm:$0xff]
  %v2562 = vunpack.c.l.b16 %v2530
  %v2563 = vunpack.c.h.b16 %v2530
  %v2564 = vunpack.c.l.b16 %v2531
  %v2565 = vunpack.c.h.b16 %v2531
  %v2566 = vunpack.c.l.b16 %v2532
  %v2567 = vunpack.c.h.b16 %v2532
  %v2568 = vunpack.c.l.b16 %v2533
  %v2569 = vunpack.c.h.b16 %v2533
  %v2570 = vunpack.c.l.b16 %v2534
  %v2571 = vunpack.c.h.b16 %v2534
  %v2572 = vunpack.c.l.b16 %v2535
  %v2573 = vunpack.c.h.b16 %v2535
  %v2574 = vunpack.c.l.b16 %v2536
  %v2575 = vunpack.c.h.b16 %v2536
  %v2576 = vunpack.c.l.b16 %v2537
  %v2577 = vunpack.c.h.b16 %v2537
  %v2578 = vunpack.c.l.b16 %v2538
  %v2579 = vunpack.c.h.b16 %v2538
  %v2580 = vunpack.c.l.b16 %v2539
  %v2581 = vunpack.c.h.b16 %v2539
  %v2582 = vunpack.c.l.b16 %v2540
  %v2583 = vunpack.c.h.b16 %v2540
  %v2584 = vunpack.c.l.b16 %v2541
  %v2585 = vunpack.c.h.b16 %v2541
  %v2586 = vunpack.c.l.b16 %v2542
  %v2587 = vunpack.c.h.b16 %v2542
  %v2588 = vunpack.c.l.b16 %v2543
  %v2589 = vunpack.c.h.b16 %v2543
  %v2590 = vunpack.c.l.b16 %v2544
  %v2591 = vunpack.c.h.b16 %v2544
  %v2592 = vunpack.c.l.b16 %v2545
  %v2593 = vunpack.c.h.b16 %v2545
  %v2594 = vpack.c.b16 %v2564, %v2562
  %v2595 = vpack.c.b16 %v2565, %v2563
  %v2596 = vpack.c.b16 %v2568, %v2566
  %v2597 = vpack.c.b16 %v2569, %v2567
  %v2598 = vpack.c.b16 %v2572, %v2570
  %v2599 = vpack.c.b16 %v2573, %v2571
  %v2600 = vpack.c.b16 %v2576, %v2574
  %v2601 = vpack.c.b16 %v2577, %v2575
  %v2602 = vpack.c.b16 %v2580, %v2578
  %v2603 = vpack.c.b16 %v2581, %v2579
  %v2604 = vpack.c.b16 %v2584, %v2582
  %v2605 = vpack.c.b16 %v2585, %v2583
  %v2606 = vpack.c.b16 %v2588, %v2586
  %v2607 = vpack.c.b16 %v2589, %v2587
  %v2608 = vpack.c.b16 %v2592, %v2590
  %v2609 = vpack.c.b16 %v2593, %v2591
  %2626 = vmatprep.subr.bf16.mxu0 %v2595
  %2627 = vmatpush1.bf16.msra.mxu0 %v2594
  %2628 = vmatprep.subr.bf16.mxu0 %v2597
  %2629 = vmatpush1.bf16.msra.mxu0 %v2596
  %2630 = vmatprep.subr.bf16.mxu0 %v2599
  %2631 = vmatpush1.bf16.msra.mxu0 %v2598
  %2632 = vmatprep.subr.bf16.mxu0 %v2601
  %2633 = vmatpush1.bf16.msra.mxu0 %v2600
  %2634 = vmatprep.subr.bf16.mxu0 %v2603
  %2635 = vmatpush1.bf16.msra.mxu0 %v2602
  %2636 = vmatprep.subr.bf16.mxu0 %v2605
  %2637 = vmatpush1.bf16.msra.mxu0 %v2604
  %2638 = vmatprep.subr.bf16.mxu0 %v2607
  %2639 = vmatpush1.bf16.msra.mxu0 %v2606
  %2640 = vmatprep.subr.bf16.mxu0 %v2609
  %2641 = vmatpush1.bf16.msra.mxu0 %v2608
  %2642 = vmatprep.subr.bf16.mxu0 0
  %2643 = vmatpush1.bf16.msra.mxu0 0
  %2644 = vmatprep.subr.bf16.mxu0 0
  %2645 = vmatpush1.bf16.msra.mxu0 0
  %2646 = vmatprep.subr.bf16.mxu0 0
  %2647 = vmatpush1.bf16.msra.mxu0 0
  %2648 = vmatprep.subr.bf16.mxu0 0
  %2649 = vmatpush1.bf16.msra.mxu0 0
  %2650 = vmatprep.subr.bf16.mxu0 0
  %2651 = vmatpush1.bf16.msra.mxu0 0
  %2652 = vmatprep.subr.bf16.mxu0 0
  %2653 = vmatpush1.bf16.msra.mxu0 0
  %2654 = vmatprep.subr.bf16.mxu0 0
  %2655 = vmatpush1.bf16.msra.mxu0 0
  %2656 = vmatprep.subr.bf16.mxu0 0
  %2657 = vmatpush1.bf16.msra.mxu0 0
  %2658 = vmatprep.mubr.bf16.mxu0 0
  %2659 = vmatmul.mubr.bf16.gmra.mrb[0].mxu0 %v2529
  %v2660 = vpop.f32.mrb[0].mxu0
  %v2661 = vadd.f32 0.0, %v2660
  %v2662 = vpop.f32.mrb[0].mxu0
  %v2663 = vadd.f32 0.0, %v2662
  %v2664 = vpop.f32.mrb[0].mxu0
  %v2665 = vadd.f32 0.0, %v2664
  %v2666 = vpop.f32.mrb[0].mxu0
  %v2667 = vadd.f32 0.0, %v2666
  %2668 = vdwg.mxu0
  %v2669 = vadd.f32 %v2518, %v2661
  %v2670 = vadd.f32 %v2522, %v2665
  %v2671 = vxor.u32 %v2669, 2147483648
  %v2672 = vxor.u32 %v2670, 2147483648
  %v2673 = vmul.f32 %v2671, 1.442695
  %v2674 = vpow.pop %v2673
  %v2675 = vmul.f32 %v2672, 1.442695
  %v2676 = vpow.pop %v2675
  %v2677 = vadd.f32 %v2674, 1.0
  %v2678 = vadd.f32 %v2676, 1.0
  %v2679 = vrcp.pop %v2677
  %v2680 = vmul.f32 1.0, %v2679
  %v2681 = vrcp.pop %v2678
  %v2682 = vmul.f32 1.0, %v2681
  %v2683 = vadd.f32 %v2519, %v2663
  %v2684 = vadd.f32 %v2523, %v2667
  %v2685 = vxor.u32 %v2683, 2147483648
  %v2686 = vxor.u32 %v2684, 2147483648
  %v2687 = vmul.f32 %v2685, 1.442695
  %v2688 = vpow.pop %v2687
  %v2689 = vmul.f32 %v2686, 1.442695
  %v2690 = vpow.pop %v2689
  %v2691 = vadd.f32 %v2688, 1.0
  %v2692 = vadd.f32 %v2690, 1.0
  %v2693 = vrcp.pop %v2691
  %v2694 = vmul.f32 1.0, %v2693
  %v2695 = vrcp.pop %v2692
  %v2696 = vmul.f32 1.0, %v2695
  %v2697 = vmul.f32 %v2680, %v2508
  %v2698 = vmul.f32 %v2682, %v2509
  %v2699 = vpack.c.bf16 %v2698, %v2697
  %v2700 = vld [vmem:[%s3] sm:$0xf]
  %v2701 = vld [vmem:[%s3 + $0x4] sm:$0xf]
  %v2702 = vld [vmem:[%s3 + $0x8] sm:$0xf]
  %v2703 = vld [vmem:[%s3 + $0xc] sm:$0xf]
  %v2704 = vld [vmem:[%s3 + $0x10] sm:$0xf]
  %v2705 = vld [vmem:[%s3 + $0x14] sm:$0xf]
  %v2706 = vld [vmem:[%s3 + $0x18] sm:$0xf]
  %v2707 = vld [vmem:[%s3 + $0x1c] sm:$0xf]
  %v2708 = vld [vmem:[%s3 + $0x20] sm:$0xf]
  %v2709 = vld [vmem:[%s3 + $0x24] sm:$0xf]
  %v2710 = vld [vmem:[%s3 + $0x28] sm:$0xf]
  %v2711 = vld [vmem:[%s3 + $0x2c] sm:$0xf]
  %v2712 = vld [vmem:[%s3 + $0x30] sm:$0xf]
  %v2713 = vld [vmem:[%s3 + $0x34] sm:$0xf]
  %v2714 = vld [vmem:[%s3 + $0x38] sm:$0xf]
  %v2715 = vld [vmem:[%s3 + $0x3c] sm:$0xf]
  %v2732 = vunpack.c.l.b16 %v2700
  %v2733 = vunpack.c.l.b16 %v2701
  %v2734 = vunpack.c.l.b16 %v2702
  %v2735 = vunpack.c.l.b16 %v2703
  %v2736 = vunpack.c.l.b16 %v2704
  %v2737 = vunpack.c.l.b16 %v2705
  %v2738 = vunpack.c.l.b16 %v2706
  %v2739 = vunpack.c.l.b16 %v2707
  %v2740 = vunpack.c.l.b16 %v2708
  %v2741 = vunpack.c.l.b16 %v2709
  %v2742 = vunpack.c.l.b16 %v2710
  %v2743 = vunpack.c.l.b16 %v2711
  %v2744 = vunpack.c.l.b16 %v2712
  %v2745 = vunpack.c.l.b16 %v2713
  %v2746 = vunpack.c.l.b16 %v2714
  %v2747 = vunpack.c.l.b16 %v2715
  %v2748 = vpack.c.b16 %v2733, %v2732
  %v2749 = vpack.c.b16 %v2735, %v2734
  %v2750 = vpack.c.b16 %v2737, %v2736
  %v2751 = vpack.c.b16 %v2739, %v2738
  %v2752 = vpack.c.b16 %v2741, %v2740
  %v2753 = vpack.c.b16 %v2743, %v2742
  %v2754 = vpack.c.b16 %v2745, %v2744
  %v2755 = vpack.c.b16 %v2747, %v2746
  %2764 = vmatprep.subr.bf16.mxu0 0
  %2765 = vmatpush1.bf16.msra.mxu0 %v2748
  %2766 = vmatprep.subr.bf16.mxu0 0
  %2767 = vmatpush1.bf16.msra.mxu0 %v2749
  %2768 = vmatprep.subr.bf16.mxu0 0
  %2769 = vmatpush1.bf16.msra.mxu0 %v2750
  %2770 = vmatprep.subr.bf16.mxu0 0
  %2771 = vmatpush1.bf16.msra.mxu0 %v2751
  %2772 = vmatprep.subr.bf16.mxu0 0
  %2773 = vmatpush1.bf16.msra.mxu0 %v2752
  %2774 = vmatprep.subr.bf16.mxu0 0
  %2775 = vmatpush1.bf16.msra.mxu0 %v2753
  %2776 = vmatprep.subr.bf16.mxu0 0
  %2777 = vmatpush1.bf16.msra.mxu0 %v2754
  %2778 = vmatprep.subr.bf16.mxu0 0
  %2779 = vmatpush1.bf16.msra.mxu0 %v2755
  %2780 = vmatprep.subr.bf16.mxu0 0
  %2781 = vmatpush1.bf16.msra.mxu0 0
  %2782 = vmatprep.subr.bf16.mxu0 0
  %2783 = vmatpush1.bf16.msra.mxu0 0
  %2784 = vmatprep.subr.bf16.mxu0 0
  %2785 = vmatpush1.bf16.msra.mxu0 0
  %2786 = vmatprep.subr.bf16.mxu0 0
  %2787 = vmatpush1.bf16.msra.mxu0 0
  %2788 = vmatprep.subr.bf16.mxu0 0
  %2789 = vmatpush1.bf16.msra.mxu0 0
  %2790 = vmatprep.subr.bf16.mxu0 0
  %2791 = vmatpush1.bf16.msra.mxu0 0
  %2792 = vmatprep.subr.bf16.mxu0 0
  %2793 = vmatpush1.bf16.msra.mxu0 0
  %2794 = vmatprep.subr.bf16.mxu0 0
  %2795 = vmatpush1.bf16.msra.mxu0 0
  %2796 = vmatprep.mubr.bf16.mxu0 0
  %2797 = vmatmul.mubr.bf16.gmra.mrb[0].mxu0 %v2699
  %v2798 = vpop.f32.mrb[0].mxu0
  %v2799 = vadd.f32 0.0, %v2798
  %v2800 = vpop.f32.mrb[0].mxu0
  %v2801 = vpop.f32.mrb[0].mxu0
  %v2802 = vadd.f32 0.0, %v2801
  %v2803 = vpop.f32.mrb[0].mxu0
  %2804 = vdwg.mxu0
  %v2805 = vadd.f32 %v2520, %v2799
  %v2806 = vadd.f32 %v2524, %v2802
  %v2807 = vtanh.pop %v2805
  %v2808 = vtanh.pop %v2806
  %v2809 = vmul.f32 %v2508, %v31
  %v2810 = vmul.f32 %v2509, %v31
  %v2811 = vadd.f32 %v2521, %v2809
  %v2812 = vadd.f32 %v2525, %v2810
  %v2813 = vmax.f32 %v2811, 0.0
  %v2814 = vmax.f32 %v2812, 0.0
  %2816 = vset.pattern.permute.xlu0 0
  %2817 = vperm.xlu0 %2816, %v2527
  %v2818 = vpop.permute.xlu0 %2817
  %2821 = vset.pattern.permute.xlu0 0
  %2822 = vperm.xlu0 %2821, %v2528
  %v2823 = vpop.permute.xlu0 %2822
  %v2825 = vmul.f32 %v41, %v2818
  %v2826 = vmul.f32 %v41, %v2823
  %v2827 = vadd.f32 %v2825, %v46
  %v2828 = vadd.f32 %v2826, %v46
  %v2829 = vmax.f32 %v2827, 0.0
  %v2830 = vmax.f32 %v2828, 0.0
  %v2831 = vmul.f32 %v36, %v2813
  %v2832 = vmul.f32 %v36, %v2814
  %v2833 = vmul.f32 %v51, %v2829
  %v2834 = vmul.f32 %v51, %v2830
  %v2835 = vadd.f32 %v2831, %v2833
  %v2836 = vadd.f32 %v2832, %v2834
  %v2837 = vadd.f32 %v2835, %v56
  %v2838 = vadd.f32 %v2836, %v56
  %v2839 = vxor.u32 %v2837, 2147483648
  %v2840 = vxor.u32 %v2838, 2147483648
  %v2841 = vmul.f32 %v2839, 1.442695
  %v2842 = vpow.pop %v2841
  %v2843 = vmul.f32 %v2840, 1.442695
  %v2844 = vpow.pop %v2843
  %v2845 = vadd.f32 %v2842, 1.0
  %v2846 = vadd.f32 %v2844, 1.0
  %v2847 = vrcp.pop %v2845
  %v2848 = vmul.f32 1.0, %v2847
  %v2849 = vrcp.pop %v2846
  %v2850 = vmul.f32 1.0, %v2849
  %v2851 = vmul.f32 %v2694, %v2508
  %v2852 = vmul.f32 %v2696, %v2509
  %v2853 = vsub.f32 1.0, %v2694
  %v2854 = vsub.f32 1.0, %v2696
  %v2855 = vmul.f32 %v2853, %v2807
  %v2856 = vmul.f32 %v2854, %v2808
  %v2857 = vmul.f32 %v2855, %v2848
  %v2858 = vmul.f32 %v2856, %v2850
  %v2859 = vadd.f32 %v2851, %v2857
  %v2860 = vadd.f32 %v2852, %v2858
  %s2861 = scalar_lea.vmem %s5, 112
  %2862 = vst [vmem:[%s2861] sm:$0xff] %v2859
  %2863 = vst [vmem:[%s2861 + $0x8] sm:$0xff] %v2860
  %s2864 = scalar_lea.vmem %s0, 256
  %v2865 = vld [vmem:[%s2864] sm:$0xff]
  %v2866 = vld [vmem:[%s2864 + $0x8] sm:$0xff]
  %v2867 = vld [vmem:[%s2864 + $0x10] sm:$0xff]
  %v2868 = vld [vmem:[%s2864 + $0x18] sm:$0xff]
  %v2869 = vunpack.c.l.bf16 %v2865
  %v2870 = vunpack.c.h.bf16 %v2865
  %v2871 = vunpack.c.l.bf16 %v2866
  %v2872 = vunpack.c.h.bf16 %v2866
  %v2873 = vunpack.c.l.bf16 %v2867
  %v2874 = vunpack.c.h.bf16 %v2867
  %v2875 = vunpack.c.l.bf16 %v2868
  %v2876 = vunpack.c.h.bf16 %v2868
  %s2877 = scalar_lea.vmem %s1, 128
  %v2878 = vld [vmem:[%s2877] sm:$0xff]
  %v2879 = vld [vmem:[%s2877 + $0x8] sm:$0xff]
  %v2880 = vpack.c.bf16 %v2860, %v2859
  %v2881 = vld [vmem:[%s2] sm:$0xff]
  %v2882 = vld [vmem:[%s2 + $0x8] sm:$0xff]
  %v2883 = vld [vmem:[%s2 + $0x10] sm:$0xff]
  %v2884 = vld [vmem:[%s2 + $0x18] sm:$0xff]
  %v2885 = vld [vmem:[%s2 + $0x20] sm:$0xff]
  %v2886 = vld [vmem:[%s2 + $0x28] sm:$0xff]
  %v2887 = vld [vmem:[%s2 + $0x30] sm:$0xff]
  %v2888 = vld [vmem:[%s2 + $0x38] sm:$0xff]
  %v2889 = vld [vmem:[%s2 + $0x40] sm:$0xff]
  %v2890 = vld [vmem:[%s2 + $0x48] sm:$0xff]
  %v2891 = vld [vmem:[%s2 + $0x50] sm:$0xff]
  %v2892 = vld [vmem:[%s2 + $0x58] sm:$0xff]
  %v2893 = vld [vmem:[%s2 + $0x60] sm:$0xff]
  %v2894 = vld [vmem:[%s2 + $0x68] sm:$0xff]
  %v2895 = vld [vmem:[%s2 + $0x70] sm:$0xff]
  %v2896 = vld [vmem:[%s2 + $0x78] sm:$0xff]
  %v2913 = vunpack.c.l.b16 %v2881
  %v2914 = vunpack.c.h.b16 %v2881
  %v2915 = vunpack.c.l.b16 %v2882
  %v2916 = vunpack.c.h.b16 %v2882
  %v2917 = vunpack.c.l.b16 %v2883
  %v2918 = vunpack.c.h.b16 %v2883
  %v2919 = vunpack.c.l.b16 %v2884
  %v2920 = vunpack.c.h.b16 %v2884
  %v2921 = vunpack.c.l.b16 %v2885
  %v2922 = vunpack.c.h.b16 %v2885
  %v2923 = vunpack.c.l.b16 %v2886
  %v2924 = vunpack.c.h.b16 %v2886
  %v2925 = vunpack.c.l.b16 %v2887
  %v2926 = vunpack.c.h.b16 %v2887
  %v2927 = vunpack.c.l.b16 %v2888
  %v2928 = vunpack.c.h.b16 %v2888
  %v2929 = vunpack.c.l.b16 %v2889
  %v2930 = vunpack.c.h.b16 %v2889
  %v2931 = vunpack.c.l.b16 %v2890
  %v2932 = vunpack.c.h.b16 %v2890
  %v2933 = vunpack.c.l.b16 %v2891
  %v2934 = vunpack.c.h.b16 %v2891
  %v2935 = vunpack.c.l.b16 %v2892
  %v2936 = vunpack.c.h.b16 %v2892
  %v2937 = vunpack.c.l.b16 %v2893
  %v2938 = vunpack.c.h.b16 %v2893
  %v2939 = vunpack.c.l.b16 %v2894
  %v2940 = vunpack.c.h.b16 %v2894
  %v2941 = vunpack.c.l.b16 %v2895
  %v2942 = vunpack.c.h.b16 %v2895
  %v2943 = vunpack.c.l.b16 %v2896
  %v2944 = vunpack.c.h.b16 %v2896
  %v2945 = vpack.c.b16 %v2915, %v2913
  %v2946 = vpack.c.b16 %v2916, %v2914
  %v2947 = vpack.c.b16 %v2919, %v2917
  %v2948 = vpack.c.b16 %v2920, %v2918
  %v2949 = vpack.c.b16 %v2923, %v2921
  %v2950 = vpack.c.b16 %v2924, %v2922
  %v2951 = vpack.c.b16 %v2927, %v2925
  %v2952 = vpack.c.b16 %v2928, %v2926
  %v2953 = vpack.c.b16 %v2931, %v2929
  %v2954 = vpack.c.b16 %v2932, %v2930
  %v2955 = vpack.c.b16 %v2935, %v2933
  %v2956 = vpack.c.b16 %v2936, %v2934
  %v2957 = vpack.c.b16 %v2939, %v2937
  %v2958 = vpack.c.b16 %v2940, %v2938
  %v2959 = vpack.c.b16 %v2943, %v2941
  %v2960 = vpack.c.b16 %v2944, %v2942
  %2977 = vmatprep.subr.bf16.mxu0 %v2946
  %2978 = vmatpush1.bf16.msra.mxu0 %v2945
  %2979 = vmatprep.subr.bf16.mxu0 %v2948
  %2980 = vmatpush1.bf16.msra.mxu0 %v2947
  %2981 = vmatprep.subr.bf16.mxu0 %v2950
  %2982 = vmatpush1.bf16.msra.mxu0 %v2949
  %2983 = vmatprep.subr.bf16.mxu0 %v2952
  %2984 = vmatpush1.bf16.msra.mxu0 %v2951
  %2985 = vmatprep.subr.bf16.mxu0 %v2954
  %2986 = vmatpush1.bf16.msra.mxu0 %v2953
  %2987 = vmatprep.subr.bf16.mxu0 %v2956
  %2988 = vmatpush1.bf16.msra.mxu0 %v2955
  %2989 = vmatprep.subr.bf16.mxu0 %v2958
  %2990 = vmatpush1.bf16.msra.mxu0 %v2957
  %2991 = vmatprep.subr.bf16.mxu0 %v2960
  %2992 = vmatpush1.bf16.msra.mxu0 %v2959
  %2993 = vmatprep.subr.bf16.mxu0 0
  %2994 = vmatpush1.bf16.msra.mxu0 0
  %2995 = vmatprep.subr.bf16.mxu0 0
  %2996 = vmatpush1.bf16.msra.mxu0 0
  %2997 = vmatprep.subr.bf16.mxu0 0
  %2998 = vmatpush1.bf16.msra.mxu0 0
  %2999 = vmatprep.subr.bf16.mxu0 0
  %3000 = vmatpush1.bf16.msra.mxu0 0
  %3001 = vmatprep.subr.bf16.mxu0 0
  %3002 = vmatpush1.bf16.msra.mxu0 0
  %3003 = vmatprep.subr.bf16.mxu0 0
  %3004 = vmatpush1.bf16.msra.mxu0 0
  %3005 = vmatprep.subr.bf16.mxu0 0
  %3006 = vmatpush1.bf16.msra.mxu0 0
  %3007 = vmatprep.subr.bf16.mxu0 0
  %3008 = vmatpush1.bf16.msra.mxu0 0
  %3009 = vmatprep.mubr.bf16.mxu0 0
  %3010 = vmatmul.mubr.bf16.gmra.mrb[0].mxu0 %v2880
  %v3011 = vpop.f32.mrb[0].mxu0
  %v3012 = vadd.f32 0.0, %v3011
  %v3013 = vpop.f32.mrb[0].mxu0
  %v3014 = vadd.f32 0.0, %v3013
  %v3015 = vpop.f32.mrb[0].mxu0
  %v3016 = vadd.f32 0.0, %v3015
  %v3017 = vpop.f32.mrb[0].mxu0
  %v3018 = vadd.f32 0.0, %v3017
  %3019 = vdwg.mxu0
  %v3020 = vadd.f32 %v2869, %v3012
  %v3021 = vadd.f32 %v2873, %v3016
  %v3022 = vxor.u32 %v3020, 2147483648
  %v3023 = vxor.u32 %v3021, 2147483648
  %v3024 = vmul.f32 %v3022, 1.442695
  %v3025 = vpow.pop %v3024
  %v3026 = vmul.f32 %v3023, 1.442695
  %v3027 = vpow.pop %v3026
  %v3028 = vadd.f32 %v3025, 1.0
  %v3029 = vadd.f32 %v3027, 1.0
  %v3030 = vrcp.pop %v3028
  %v3031 = vmul.f32 1.0, %v3030
  %v3032 = vrcp.pop %v3029
  %v3033 = vmul.f32 1.0, %v3032
  %v3034 = vadd.f32 %v2870, %v3014
  %v3035 = vadd.f32 %v2874, %v3018
  %v3036 = vxor.u32 %v3034, 2147483648
  %v3037 = vxor.u32 %v3035, 2147483648
  %v3038 = vmul.f32 %v3036, 1.442695
  %v3039 = vpow.pop %v3038
  %v3040 = vmul.f32 %v3037, 1.442695
  %v3041 = vpow.pop %v3040
  %v3042 = vadd.f32 %v3039, 1.0
  %v3043 = vadd.f32 %v3041, 1.0
  %v3044 = vrcp.pop %v3042
  %v3045 = vmul.f32 1.0, %v3044
  %v3046 = vrcp.pop %v3043
  %v3047 = vmul.f32 1.0, %v3046
  %v3048 = vmul.f32 %v3031, %v2859
  %v3049 = vmul.f32 %v3033, %v2860
  %v3050 = vpack.c.bf16 %v3049, %v3048
  %v3051 = vld [vmem:[%s3] sm:$0xf]
  %v3052 = vld [vmem:[%s3 + $0x4] sm:$0xf]
  %v3053 = vld [vmem:[%s3 + $0x8] sm:$0xf]
  %v3054 = vld [vmem:[%s3 + $0xc] sm:$0xf]
  %v3055 = vld [vmem:[%s3 + $0x10] sm:$0xf]
  %v3056 = vld [vmem:[%s3 + $0x14] sm:$0xf]
  %v3057 = vld [vmem:[%s3 + $0x18] sm:$0xf]
  %v3058 = vld [vmem:[%s3 + $0x1c] sm:$0xf]
  %v3059 = vld [vmem:[%s3 + $0x20] sm:$0xf]
  %v3060 = vld [vmem:[%s3 + $0x24] sm:$0xf]
  %v3061 = vld [vmem:[%s3 + $0x28] sm:$0xf]
  %v3062 = vld [vmem:[%s3 + $0x2c] sm:$0xf]
  %v3063 = vld [vmem:[%s3 + $0x30] sm:$0xf]
  %v3064 = vld [vmem:[%s3 + $0x34] sm:$0xf]
  %v3065 = vld [vmem:[%s3 + $0x38] sm:$0xf]
  %v3066 = vld [vmem:[%s3 + $0x3c] sm:$0xf]
  %v3083 = vunpack.c.l.b16 %v3051
  %v3084 = vunpack.c.l.b16 %v3052
  %v3085 = vunpack.c.l.b16 %v3053
  %v3086 = vunpack.c.l.b16 %v3054
  %v3087 = vunpack.c.l.b16 %v3055
  %v3088 = vunpack.c.l.b16 %v3056
  %v3089 = vunpack.c.l.b16 %v3057
  %v3090 = vunpack.c.l.b16 %v3058
  %v3091 = vunpack.c.l.b16 %v3059
  %v3092 = vunpack.c.l.b16 %v3060
  %v3093 = vunpack.c.l.b16 %v3061
  %v3094 = vunpack.c.l.b16 %v3062
  %v3095 = vunpack.c.l.b16 %v3063
  %v3096 = vunpack.c.l.b16 %v3064
  %v3097 = vunpack.c.l.b16 %v3065
  %v3098 = vunpack.c.l.b16 %v3066
  %v3099 = vpack.c.b16 %v3084, %v3083
  %v3100 = vpack.c.b16 %v3086, %v3085
  %v3101 = vpack.c.b16 %v3088, %v3087
  %v3102 = vpack.c.b16 %v3090, %v3089
  %v3103 = vpack.c.b16 %v3092, %v3091
  %v3104 = vpack.c.b16 %v3094, %v3093
  %v3105 = vpack.c.b16 %v3096, %v3095
  %v3106 = vpack.c.b16 %v3098, %v3097
  %3115 = vmatprep.subr.bf16.mxu0 0
  %3116 = vmatpush1.bf16.msra.mxu0 %v3099
  %3117 = vmatprep.subr.bf16.mxu0 0
  %3118 = vmatpush1.bf16.msra.mxu0 %v3100
  %3119 = vmatprep.subr.bf16.mxu0 0
  %3120 = vmatpush1.bf16.msra.mxu0 %v3101
  %3121 = vmatprep.subr.bf16.mxu0 0
  %3122 = vmatpush1.bf16.msra.mxu0 %v3102
  %3123 = vmatprep.subr.bf16.mxu0 0
  %3124 = vmatpush1.bf16.msra.mxu0 %v3103
  %3125 = vmatprep.subr.bf16.mxu0 0
  %3126 = vmatpush1.bf16.msra.mxu0 %v3104
  %3127 = vmatprep.subr.bf16.mxu0 0
  %3128 = vmatpush1.bf16.msra.mxu0 %v3105
  %3129 = vmatprep.subr.bf16.mxu0 0
  %3130 = vmatpush1.bf16.msra.mxu0 %v3106
  %3131 = vmatprep.subr.bf16.mxu0 0
  %3132 = vmatpush1.bf16.msra.mxu0 0
  %3133 = vmatprep.subr.bf16.mxu0 0
  %3134 = vmatpush1.bf16.msra.mxu0 0
  %3135 = vmatprep.subr.bf16.mxu0 0
  %3136 = vmatpush1.bf16.msra.mxu0 0
  %3137 = vmatprep.subr.bf16.mxu0 0
  %3138 = vmatpush1.bf16.msra.mxu0 0
  %3139 = vmatprep.subr.bf16.mxu0 0
  %3140 = vmatpush1.bf16.msra.mxu0 0
  %3141 = vmatprep.subr.bf16.mxu0 0
  %3142 = vmatpush1.bf16.msra.mxu0 0
  %3143 = vmatprep.subr.bf16.mxu0 0
  %3144 = vmatpush1.bf16.msra.mxu0 0
  %3145 = vmatprep.subr.bf16.mxu0 0
  %3146 = vmatpush1.bf16.msra.mxu0 0
  %3147 = vmatprep.mubr.bf16.mxu0 0
  %3148 = vmatmul.mubr.bf16.gmra.mrb[0].mxu0 %v3050
  %v3149 = vpop.f32.mrb[0].mxu0
  %v3150 = vadd.f32 0.0, %v3149
  %v3151 = vpop.f32.mrb[0].mxu0
  %v3152 = vpop.f32.mrb[0].mxu0
  %v3153 = vadd.f32 0.0, %v3152
  %v3154 = vpop.f32.mrb[0].mxu0
  %3155 = vdwg.mxu0
  %v3156 = vadd.f32 %v2871, %v3150
  %v3157 = vadd.f32 %v2875, %v3153
  %v3158 = vtanh.pop %v3156
  %v3159 = vtanh.pop %v3157
  %v3160 = vmul.f32 %v2859, %v31
  %v3161 = vmul.f32 %v2860, %v31
  %v3162 = vadd.f32 %v2872, %v3160
  %v3163 = vadd.f32 %v2876, %v3161
  %v3164 = vmax.f32 %v3162, 0.0
  %v3165 = vmax.f32 %v3163, 0.0
  %3167 = vset.pattern.permute.xlu0 0
  %3168 = vperm.xlu0 %3167, %v2878
  %v3169 = vpop.permute.xlu0 %3168
  %3172 = vset.pattern.permute.xlu0 0
  %3173 = vperm.xlu0 %3172, %v2879
  %v3174 = vpop.permute.xlu0 %3173
  %v3176 = vmul.f32 %v41, %v3169
  %v3177 = vmul.f32 %v41, %v3174
  %v3178 = vadd.f32 %v3176, %v46
  %v3179 = vadd.f32 %v3177, %v46
  %v3180 = vmax.f32 %v3178, 0.0
  %v3181 = vmax.f32 %v3179, 0.0
  %v3182 = vmul.f32 %v36, %v3164
  %v3183 = vmul.f32 %v36, %v3165
  %v3184 = vmul.f32 %v51, %v3180
  %v3185 = vmul.f32 %v51, %v3181
  %v3186 = vadd.f32 %v3182, %v3184
  %v3187 = vadd.f32 %v3183, %v3185
  %v3188 = vadd.f32 %v3186, %v56
  %v3189 = vadd.f32 %v3187, %v56
  %v3190 = vxor.u32 %v3188, 2147483648
  %v3191 = vxor.u32 %v3189, 2147483648
  %v3192 = vmul.f32 %v3190, 1.442695
  %v3193 = vpow.pop %v3192
  %v3194 = vmul.f32 %v3191, 1.442695
  %v3195 = vpow.pop %v3194
  %v3196 = vadd.f32 %v3193, 1.0
  %v3197 = vadd.f32 %v3195, 1.0
  %v3198 = vrcp.pop %v3196
  %v3199 = vmul.f32 1.0, %v3198
  %v3200 = vrcp.pop %v3197
  %v3201 = vmul.f32 1.0, %v3200
  %v3202 = vmul.f32 %v3045, %v2859
  %v3203 = vmul.f32 %v3047, %v2860
  %v3204 = vsub.f32 1.0, %v3045
  %v3205 = vsub.f32 1.0, %v3047
  %v3206 = vmul.f32 %v3204, %v3158
  %v3207 = vmul.f32 %v3205, %v3159
  %v3208 = vmul.f32 %v3206, %v3199
  %v3209 = vmul.f32 %v3207, %v3201
  %v3210 = vadd.f32 %v3202, %v3208
  %v3211 = vadd.f32 %v3203, %v3209
  %s3212 = scalar_lea.vmem %s5, 128
  %3213 = vst [vmem:[%s3212] sm:$0xff] %v3210
  %3214 = vst [vmem:[%s3212 + $0x8] sm:$0xff] %v3211
  %s3215 = scalar_lea.vmem %s0, 288
  %v3216 = vld [vmem:[%s3215] sm:$0xff]
  %v3217 = vld [vmem:[%s3215 + $0x8] sm:$0xff]
  %v3218 = vld [vmem:[%s3215 + $0x10] sm:$0xff]
  %v3219 = vld [vmem:[%s3215 + $0x18] sm:$0xff]
  %v3220 = vunpack.c.l.bf16 %v3216
  %v3221 = vunpack.c.h.bf16 %v3216
  %v3222 = vunpack.c.l.bf16 %v3217
  %v3223 = vunpack.c.h.bf16 %v3217
  %v3224 = vunpack.c.l.bf16 %v3218
  %v3225 = vunpack.c.h.bf16 %v3218
  %v3226 = vunpack.c.l.bf16 %v3219
  %v3227 = vunpack.c.h.bf16 %v3219
  %s3228 = scalar_lea.vmem %s1, 144
  %v3229 = vld [vmem:[%s3228] sm:$0xff]
  %v3230 = vld [vmem:[%s3228 + $0x8] sm:$0xff]
  %v3231 = vpack.c.bf16 %v3211, %v3210
  %v3232 = vld [vmem:[%s2] sm:$0xff]
  %v3233 = vld [vmem:[%s2 + $0x8] sm:$0xff]
  %v3234 = vld [vmem:[%s2 + $0x10] sm:$0xff]
  %v3235 = vld [vmem:[%s2 + $0x18] sm:$0xff]
  %v3236 = vld [vmem:[%s2 + $0x20] sm:$0xff]
  %v3237 = vld [vmem:[%s2 + $0x28] sm:$0xff]
  %v3238 = vld [vmem:[%s2 + $0x30] sm:$0xff]
  %v3239 = vld [vmem:[%s2 + $0x38] sm:$0xff]
  %v3240 = vld [vmem:[%s2 + $0x40] sm:$0xff]
  %v3241 = vld [vmem:[%s2 + $0x48] sm:$0xff]
  %v3242 = vld [vmem:[%s2 + $0x50] sm:$0xff]
  %v3243 = vld [vmem:[%s2 + $0x58] sm:$0xff]
  %v3244 = vld [vmem:[%s2 + $0x60] sm:$0xff]
  %v3245 = vld [vmem:[%s2 + $0x68] sm:$0xff]
  %v3246 = vld [vmem:[%s2 + $0x70] sm:$0xff]
  %v3247 = vld [vmem:[%s2 + $0x78] sm:$0xff]
  %v3264 = vunpack.c.l.b16 %v3232
  %v3265 = vunpack.c.h.b16 %v3232
  %v3266 = vunpack.c.l.b16 %v3233
  %v3267 = vunpack.c.h.b16 %v3233
  %v3268 = vunpack.c.l.b16 %v3234
  %v3269 = vunpack.c.h.b16 %v3234
  %v3270 = vunpack.c.l.b16 %v3235
  %v3271 = vunpack.c.h.b16 %v3235
  %v3272 = vunpack.c.l.b16 %v3236
  %v3273 = vunpack.c.h.b16 %v3236
  %v3274 = vunpack.c.l.b16 %v3237
  %v3275 = vunpack.c.h.b16 %v3237
  %v3276 = vunpack.c.l.b16 %v3238
  %v3277 = vunpack.c.h.b16 %v3238
  %v3278 = vunpack.c.l.b16 %v3239
  %v3279 = vunpack.c.h.b16 %v3239
  %v3280 = vunpack.c.l.b16 %v3240
  %v3281 = vunpack.c.h.b16 %v3240
  %v3282 = vunpack.c.l.b16 %v3241
  %v3283 = vunpack.c.h.b16 %v3241
  %v3284 = vunpack.c.l.b16 %v3242
  %v3285 = vunpack.c.h.b16 %v3242
  %v3286 = vunpack.c.l.b16 %v3243
  %v3287 = vunpack.c.h.b16 %v3243
  %v3288 = vunpack.c.l.b16 %v3244
  %v3289 = vunpack.c.h.b16 %v3244
  %v3290 = vunpack.c.l.b16 %v3245
  %v3291 = vunpack.c.h.b16 %v3245
  %v3292 = vunpack.c.l.b16 %v3246
  %v3293 = vunpack.c.h.b16 %v3246
  %v3294 = vunpack.c.l.b16 %v3247
  %v3295 = vunpack.c.h.b16 %v3247
  %v3296 = vpack.c.b16 %v3266, %v3264
  %v3297 = vpack.c.b16 %v3267, %v3265
  %v3298 = vpack.c.b16 %v3270, %v3268
  %v3299 = vpack.c.b16 %v3271, %v3269
  %v3300 = vpack.c.b16 %v3274, %v3272
  %v3301 = vpack.c.b16 %v3275, %v3273
  %v3302 = vpack.c.b16 %v3278, %v3276
  %v3303 = vpack.c.b16 %v3279, %v3277
  %v3304 = vpack.c.b16 %v3282, %v3280
  %v3305 = vpack.c.b16 %v3283, %v3281
  %v3306 = vpack.c.b16 %v3286, %v3284
  %v3307 = vpack.c.b16 %v3287, %v3285
  %v3308 = vpack.c.b16 %v3290, %v3288
  %v3309 = vpack.c.b16 %v3291, %v3289
  %v3310 = vpack.c.b16 %v3294, %v3292
  %v3311 = vpack.c.b16 %v3295, %v3293
  %3328 = vmatprep.subr.bf16.mxu0 %v3297
  %3329 = vmatpush1.bf16.msra.mxu0 %v3296
  %3330 = vmatprep.subr.bf16.mxu0 %v3299
  %3331 = vmatpush1.bf16.msra.mxu0 %v3298
  %3332 = vmatprep.subr.bf16.mxu0 %v3301
  %3333 = vmatpush1.bf16.msra.mxu0 %v3300
  %3334 = vmatprep.subr.bf16.mxu0 %v3303
  %3335 = vmatpush1.bf16.msra.mxu0 %v3302
  %3336 = vmatprep.subr.bf16.mxu0 %v3305
  %3337 = vmatpush1.bf16.msra.mxu0 %v3304
  %3338 = vmatprep.subr.bf16.mxu0 %v3307
  %3339 = vmatpush1.bf16.msra.mxu0 %v3306
  %3340 = vmatprep.subr.bf16.mxu0 %v3309
  %3341 = vmatpush1.bf16.msra.mxu0 %v3308
  %3342 = vmatprep.subr.bf16.mxu0 %v3311
  %3343 = vmatpush1.bf16.msra.mxu0 %v3310
  %3344 = vmatprep.subr.bf16.mxu0 0
  %3345 = vmatpush1.bf16.msra.mxu0 0
  %3346 = vmatprep.subr.bf16.mxu0 0
  %3347 = vmatpush1.bf16.msra.mxu0 0
  %3348 = vmatprep.subr.bf16.mxu0 0
  %3349 = vmatpush1.bf16.msra.mxu0 0
  %3350 = vmatprep.subr.bf16.mxu0 0
  %3351 = vmatpush1.bf16.msra.mxu0 0
  %3352 = vmatprep.subr.bf16.mxu0 0
  %3353 = vmatpush1.bf16.msra.mxu0 0
  %3354 = vmatprep.subr.bf16.mxu0 0
  %3355 = vmatpush1.bf16.msra.mxu0 0
  %3356 = vmatprep.subr.bf16.mxu0 0
  %3357 = vmatpush1.bf16.msra.mxu0 0
  %3358 = vmatprep.subr.bf16.mxu0 0
  %3359 = vmatpush1.bf16.msra.mxu0 0
  %3360 = vmatprep.mubr.bf16.mxu0 0
  %3361 = vmatmul.mubr.bf16.gmra.mrb[0].mxu0 %v3231
  %v3362 = vpop.f32.mrb[0].mxu0
  %v3363 = vadd.f32 0.0, %v3362
  %v3364 = vpop.f32.mrb[0].mxu0
  %v3365 = vadd.f32 0.0, %v3364
  %v3366 = vpop.f32.mrb[0].mxu0
  %v3367 = vadd.f32 0.0, %v3366
  %v3368 = vpop.f32.mrb[0].mxu0
  %v3369 = vadd.f32 0.0, %v3368
  %3370 = vdwg.mxu0
  %v3371 = vadd.f32 %v3220, %v3363
  %v3372 = vadd.f32 %v3224, %v3367
  %v3373 = vxor.u32 %v3371, 2147483648
  %v3374 = vxor.u32 %v3372, 2147483648
  %v3375 = vmul.f32 %v3373, 1.442695
  %v3376 = vpow.pop %v3375
  %v3377 = vmul.f32 %v3374, 1.442695
  %v3378 = vpow.pop %v3377
  %v3379 = vadd.f32 %v3376, 1.0
  %v3380 = vadd.f32 %v3378, 1.0
  %v3381 = vrcp.pop %v3379
  %v3382 = vmul.f32 1.0, %v3381
  %v3383 = vrcp.pop %v3380
  %v3384 = vmul.f32 1.0, %v3383
  %v3385 = vadd.f32 %v3221, %v3365
  %v3386 = vadd.f32 %v3225, %v3369
  %v3387 = vxor.u32 %v3385, 2147483648
  %v3388 = vxor.u32 %v3386, 2147483648
  %v3389 = vmul.f32 %v3387, 1.442695
  %v3390 = vpow.pop %v3389
  %v3391 = vmul.f32 %v3388, 1.442695
  %v3392 = vpow.pop %v3391
  %v3393 = vadd.f32 %v3390, 1.0
  %v3394 = vadd.f32 %v3392, 1.0
  %v3395 = vrcp.pop %v3393
  %v3396 = vmul.f32 1.0, %v3395
  %v3397 = vrcp.pop %v3394
  %v3398 = vmul.f32 1.0, %v3397
  %v3399 = vmul.f32 %v3382, %v3210
  %v3400 = vmul.f32 %v3384, %v3211
  %v3401 = vpack.c.bf16 %v3400, %v3399
  %v3402 = vld [vmem:[%s3] sm:$0xf]
  %v3403 = vld [vmem:[%s3 + $0x4] sm:$0xf]
  %v3404 = vld [vmem:[%s3 + $0x8] sm:$0xf]
  %v3405 = vld [vmem:[%s3 + $0xc] sm:$0xf]
  %v3406 = vld [vmem:[%s3 + $0x10] sm:$0xf]
  %v3407 = vld [vmem:[%s3 + $0x14] sm:$0xf]
  %v3408 = vld [vmem:[%s3 + $0x18] sm:$0xf]
  %v3409 = vld [vmem:[%s3 + $0x1c] sm:$0xf]
  %v3410 = vld [vmem:[%s3 + $0x20] sm:$0xf]
  %v3411 = vld [vmem:[%s3 + $0x24] sm:$0xf]
  %v3412 = vld [vmem:[%s3 + $0x28] sm:$0xf]
  %v3413 = vld [vmem:[%s3 + $0x2c] sm:$0xf]
  %v3414 = vld [vmem:[%s3 + $0x30] sm:$0xf]
  %v3415 = vld [vmem:[%s3 + $0x34] sm:$0xf]
  %v3416 = vld [vmem:[%s3 + $0x38] sm:$0xf]
  %v3417 = vld [vmem:[%s3 + $0x3c] sm:$0xf]
  %v3434 = vunpack.c.l.b16 %v3402
  %v3435 = vunpack.c.l.b16 %v3403
  %v3436 = vunpack.c.l.b16 %v3404
  %v3437 = vunpack.c.l.b16 %v3405
  %v3438 = vunpack.c.l.b16 %v3406
  %v3439 = vunpack.c.l.b16 %v3407
  %v3440 = vunpack.c.l.b16 %v3408
  %v3441 = vunpack.c.l.b16 %v3409
  %v3442 = vunpack.c.l.b16 %v3410
  %v3443 = vunpack.c.l.b16 %v3411
  %v3444 = vunpack.c.l.b16 %v3412
  %v3445 = vunpack.c.l.b16 %v3413
  %v3446 = vunpack.c.l.b16 %v3414
  %v3447 = vunpack.c.l.b16 %v3415
  %v3448 = vunpack.c.l.b16 %v3416
  %v3449 = vunpack.c.l.b16 %v3417
  %v3450 = vpack.c.b16 %v3435, %v3434
  %v3451 = vpack.c.b16 %v3437, %v3436
  %v3452 = vpack.c.b16 %v3439, %v3438
  %v3453 = vpack.c.b16 %v3441, %v3440
  %v3454 = vpack.c.b16 %v3443, %v3442
  %v3455 = vpack.c.b16 %v3445, %v3444
  %v3456 = vpack.c.b16 %v3447, %v3446
  %v3457 = vpack.c.b16 %v3449, %v3448
  %3466 = vmatprep.subr.bf16.mxu0 0
  %3467 = vmatpush1.bf16.msra.mxu0 %v3450
  %3468 = vmatprep.subr.bf16.mxu0 0
  %3469 = vmatpush1.bf16.msra.mxu0 %v3451
  %3470 = vmatprep.subr.bf16.mxu0 0
  %3471 = vmatpush1.bf16.msra.mxu0 %v3452
  %3472 = vmatprep.subr.bf16.mxu0 0
  %3473 = vmatpush1.bf16.msra.mxu0 %v3453
  %3474 = vmatprep.subr.bf16.mxu0 0
  %3475 = vmatpush1.bf16.msra.mxu0 %v3454
  %3476 = vmatprep.subr.bf16.mxu0 0
  %3477 = vmatpush1.bf16.msra.mxu0 %v3455
  %3478 = vmatprep.subr.bf16.mxu0 0
  %3479 = vmatpush1.bf16.msra.mxu0 %v3456
  %3480 = vmatprep.subr.bf16.mxu0 0
  %3481 = vmatpush1.bf16.msra.mxu0 %v3457
  %3482 = vmatprep.subr.bf16.mxu0 0
  %3483 = vmatpush1.bf16.msra.mxu0 0
  %3484 = vmatprep.subr.bf16.mxu0 0
  %3485 = vmatpush1.bf16.msra.mxu0 0
  %3486 = vmatprep.subr.bf16.mxu0 0
  %3487 = vmatpush1.bf16.msra.mxu0 0
  %3488 = vmatprep.subr.bf16.mxu0 0
  %3489 = vmatpush1.bf16.msra.mxu0 0
  %3490 = vmatprep.subr.bf16.mxu0 0
  %3491 = vmatpush1.bf16.msra.mxu0 0
  %3492 = vmatprep.subr.bf16.mxu0 0
  %3493 = vmatpush1.bf16.msra.mxu0 0
  %3494 = vmatprep.subr.bf16.mxu0 0
  %3495 = vmatpush1.bf16.msra.mxu0 0
  %3496 = vmatprep.subr.bf16.mxu0 0
  %3497 = vmatpush1.bf16.msra.mxu0 0
  %3498 = vmatprep.mubr.bf16.mxu0 0
  %3499 = vmatmul.mubr.bf16.gmra.mrb[0].mxu0 %v3401
  %v3500 = vpop.f32.mrb[0].mxu0
  %v3501 = vadd.f32 0.0, %v3500
  %v3502 = vpop.f32.mrb[0].mxu0
  %v3503 = vpop.f32.mrb[0].mxu0
  %v3504 = vadd.f32 0.0, %v3503
  %v3505 = vpop.f32.mrb[0].mxu0
  %3506 = vdwg.mxu0
  %v3507 = vadd.f32 %v3222, %v3501
  %v3508 = vadd.f32 %v3226, %v3504
  %v3509 = vtanh.pop %v3507
  %v3510 = vtanh.pop %v3508
  %v3511 = vmul.f32 %v3210, %v31
  %v3512 = vmul.f32 %v3211, %v31
  %v3513 = vadd.f32 %v3223, %v3511
  %v3514 = vadd.f32 %v3227, %v3512
  %v3515 = vmax.f32 %v3513, 0.0
  %v3516 = vmax.f32 %v3514, 0.0
  %3518 = vset.pattern.permute.xlu0 0
  %3519 = vperm.xlu0 %3518, %v3229
  %v3520 = vpop.permute.xlu0 %3519
  %3523 = vset.pattern.permute.xlu0 0
  %3524 = vperm.xlu0 %3523, %v3230
  %v3525 = vpop.permute.xlu0 %3524
  %v3527 = vmul.f32 %v41, %v3520
  %v3528 = vmul.f32 %v41, %v3525
  %v3529 = vadd.f32 %v3527, %v46
  %v3530 = vadd.f32 %v3528, %v46
  %v3531 = vmax.f32 %v3529, 0.0
  %v3532 = vmax.f32 %v3530, 0.0
  %v3533 = vmul.f32 %v36, %v3515
  %v3534 = vmul.f32 %v36, %v3516
  %v3535 = vmul.f32 %v51, %v3531
  %v3536 = vmul.f32 %v51, %v3532
  %v3537 = vadd.f32 %v3533, %v3535
  %v3538 = vadd.f32 %v3534, %v3536
  %v3539 = vadd.f32 %v3537, %v56
  %v3540 = vadd.f32 %v3538, %v56
  %v3541 = vxor.u32 %v3539, 2147483648
  %v3542 = vxor.u32 %v3540, 2147483648
  %v3543 = vmul.f32 %v3541, 1.442695
  %v3544 = vpow.pop %v3543
  %v3545 = vmul.f32 %v3542, 1.442695
  %v3546 = vpow.pop %v3545
  %v3547 = vadd.f32 %v3544, 1.0
  %v3548 = vadd.f32 %v3546, 1.0
  %v3549 = vrcp.pop %v3547
  %v3550 = vmul.f32 1.0, %v3549
  %v3551 = vrcp.pop %v3548
  %v3552 = vmul.f32 1.0, %v3551
  %v3553 = vmul.f32 %v3396, %v3210
  %v3554 = vmul.f32 %v3398, %v3211
  %v3555 = vsub.f32 1.0, %v3396
  %v3556 = vsub.f32 1.0, %v3398
  %v3557 = vmul.f32 %v3555, %v3509
  %v3558 = vmul.f32 %v3556, %v3510
  %v3559 = vmul.f32 %v3557, %v3550
  %v3560 = vmul.f32 %v3558, %v3552
  %v3561 = vadd.f32 %v3553, %v3559
  %v3562 = vadd.f32 %v3554, %v3560
  %s3563 = scalar_lea.vmem %s5, 144
  %3564 = vst [vmem:[%s3563] sm:$0xff] %v3561
  %3565 = vst [vmem:[%s3563 + $0x8] sm:$0xff] %v3562
  %s3566 = scalar_lea.vmem %s0, 320
  %v3567 = vld [vmem:[%s3566] sm:$0xff]
  %v3568 = vld [vmem:[%s3566 + $0x8] sm:$0xff]
  %v3569 = vld [vmem:[%s3566 + $0x10] sm:$0xff]
  %v3570 = vld [vmem:[%s3566 + $0x18] sm:$0xff]
  %v3571 = vunpack.c.l.bf16 %v3567
  %v3572 = vunpack.c.h.bf16 %v3567
  %v3573 = vunpack.c.l.bf16 %v3568
  %v3574 = vunpack.c.h.bf16 %v3568
  %v3575 = vunpack.c.l.bf16 %v3569
  %v3576 = vunpack.c.h.bf16 %v3569
  %v3577 = vunpack.c.l.bf16 %v3570
  %v3578 = vunpack.c.h.bf16 %v3570
  %s3579 = scalar_lea.vmem %s1, 160
  %v3580 = vld [vmem:[%s3579] sm:$0xff]
  %v3581 = vld [vmem:[%s3579 + $0x8] sm:$0xff]
  %v3582 = vpack.c.bf16 %v3562, %v3561
  %v3583 = vld [vmem:[%s2] sm:$0xff]
  %v3584 = vld [vmem:[%s2 + $0x8] sm:$0xff]
  %v3585 = vld [vmem:[%s2 + $0x10] sm:$0xff]
  %v3586 = vld [vmem:[%s2 + $0x18] sm:$0xff]
  %v3587 = vld [vmem:[%s2 + $0x20] sm:$0xff]
  %v3588 = vld [vmem:[%s2 + $0x28] sm:$0xff]
  %v3589 = vld [vmem:[%s2 + $0x30] sm:$0xff]
  %v3590 = vld [vmem:[%s2 + $0x38] sm:$0xff]
  %v3591 = vld [vmem:[%s2 + $0x40] sm:$0xff]
  %v3592 = vld [vmem:[%s2 + $0x48] sm:$0xff]
  %v3593 = vld [vmem:[%s2 + $0x50] sm:$0xff]
  %v3594 = vld [vmem:[%s2 + $0x58] sm:$0xff]
  %v3595 = vld [vmem:[%s2 + $0x60] sm:$0xff]
  %v3596 = vld [vmem:[%s2 + $0x68] sm:$0xff]
  %v3597 = vld [vmem:[%s2 + $0x70] sm:$0xff]
  %v3598 = vld [vmem:[%s2 + $0x78] sm:$0xff]
  %v3615 = vunpack.c.l.b16 %v3583
  %v3616 = vunpack.c.h.b16 %v3583
  %v3617 = vunpack.c.l.b16 %v3584
  %v3618 = vunpack.c.h.b16 %v3584
  %v3619 = vunpack.c.l.b16 %v3585
  %v3620 = vunpack.c.h.b16 %v3585
  %v3621 = vunpack.c.l.b16 %v3586
  %v3622 = vunpack.c.h.b16 %v3586
  %v3623 = vunpack.c.l.b16 %v3587
  %v3624 = vunpack.c.h.b16 %v3587
  %v3625 = vunpack.c.l.b16 %v3588
  %v3626 = vunpack.c.h.b16 %v3588
  %v3627 = vunpack.c.l.b16 %v3589
  %v3628 = vunpack.c.h.b16 %v3589
  %v3629 = vunpack.c.l.b16 %v3590
  %v3630 = vunpack.c.h.b16 %v3590
  %v3631 = vunpack.c.l.b16 %v3591
  %v3632 = vunpack.c.h.b16 %v3591
  %v3633 = vunpack.c.l.b16 %v3592
  %v3634 = vunpack.c.h.b16 %v3592
  %v3635 = vunpack.c.l.b16 %v3593
  %v3636 = vunpack.c.h.b16 %v3593
  %v3637 = vunpack.c.l.b16 %v3594
  %v3638 = vunpack.c.h.b16 %v3594
  %v3639 = vunpack.c.l.b16 %v3595
  %v3640 = vunpack.c.h.b16 %v3595
  %v3641 = vunpack.c.l.b16 %v3596
  %v3642 = vunpack.c.h.b16 %v3596
  %v3643 = vunpack.c.l.b16 %v3597
  %v3644 = vunpack.c.h.b16 %v3597
  %v3645 = vunpack.c.l.b16 %v3598
  %v3646 = vunpack.c.h.b16 %v3598
  %v3647 = vpack.c.b16 %v3617, %v3615
  %v3648 = vpack.c.b16 %v3618, %v3616
  %v3649 = vpack.c.b16 %v3621, %v3619
  %v3650 = vpack.c.b16 %v3622, %v3620
  %v3651 = vpack.c.b16 %v3625, %v3623
  %v3652 = vpack.c.b16 %v3626, %v3624
  %v3653 = vpack.c.b16 %v3629, %v3627
  %v3654 = vpack.c.b16 %v3630, %v3628
  %v3655 = vpack.c.b16 %v3633, %v3631
  %v3656 = vpack.c.b16 %v3634, %v3632
  %v3657 = vpack.c.b16 %v3637, %v3635
  %v3658 = vpack.c.b16 %v3638, %v3636
  %v3659 = vpack.c.b16 %v3641, %v3639
  %v3660 = vpack.c.b16 %v3642, %v3640
  %v3661 = vpack.c.b16 %v3645, %v3643
  %v3662 = vpack.c.b16 %v3646, %v3644
  %3679 = vmatprep.subr.bf16.mxu0 %v3648
  %3680 = vmatpush1.bf16.msra.mxu0 %v3647
  %3681 = vmatprep.subr.bf16.mxu0 %v3650
  %3682 = vmatpush1.bf16.msra.mxu0 %v3649
  %3683 = vmatprep.subr.bf16.mxu0 %v3652
  %3684 = vmatpush1.bf16.msra.mxu0 %v3651
  %3685 = vmatprep.subr.bf16.mxu0 %v3654
  %3686 = vmatpush1.bf16.msra.mxu0 %v3653
  %3687 = vmatprep.subr.bf16.mxu0 %v3656
  %3688 = vmatpush1.bf16.msra.mxu0 %v3655
  %3689 = vmatprep.subr.bf16.mxu0 %v3658
  %3690 = vmatpush1.bf16.msra.mxu0 %v3657
  %3691 = vmatprep.subr.bf16.mxu0 %v3660
  %3692 = vmatpush1.bf16.msra.mxu0 %v3659
  %3693 = vmatprep.subr.bf16.mxu0 %v3662
  %3694 = vmatpush1.bf16.msra.mxu0 %v3661
  %3695 = vmatprep.subr.bf16.mxu0 0
  %3696 = vmatpush1.bf16.msra.mxu0 0
  %3697 = vmatprep.subr.bf16.mxu0 0
  %3698 = vmatpush1.bf16.msra.mxu0 0
  %3699 = vmatprep.subr.bf16.mxu0 0
  %3700 = vmatpush1.bf16.msra.mxu0 0
  %3701 = vmatprep.subr.bf16.mxu0 0
  %3702 = vmatpush1.bf16.msra.mxu0 0
  %3703 = vmatprep.subr.bf16.mxu0 0
  %3704 = vmatpush1.bf16.msra.mxu0 0
  %3705 = vmatprep.subr.bf16.mxu0 0
  %3706 = vmatpush1.bf16.msra.mxu0 0
  %3707 = vmatprep.subr.bf16.mxu0 0
  %3708 = vmatpush1.bf16.msra.mxu0 0
  %3709 = vmatprep.subr.bf16.mxu0 0
  %3710 = vmatpush1.bf16.msra.mxu0 0
  %3711 = vmatprep.mubr.bf16.mxu0 0
  %3712 = vmatmul.mubr.bf16.gmra.mrb[0].mxu0 %v3582
  %v3713 = vpop.f32.mrb[0].mxu0
  %v3714 = vadd.f32 0.0, %v3713
  %v3715 = vpop.f32.mrb[0].mxu0
  %v3716 = vadd.f32 0.0, %v3715
  %v3717 = vpop.f32.mrb[0].mxu0
  %v3718 = vadd.f32 0.0, %v3717
  %v3719 = vpop.f32.mrb[0].mxu0
  %v3720 = vadd.f32 0.0, %v3719
  %3721 = vdwg.mxu0
  %v3722 = vadd.f32 %v3571, %v3714
  %v3723 = vadd.f32 %v3575, %v3718
  %v3724 = vxor.u32 %v3722, 2147483648
  %v3725 = vxor.u32 %v3723, 2147483648
  %v3726 = vmul.f32 %v3724, 1.442695
  %v3727 = vpow.pop %v3726
  %v3728 = vmul.f32 %v3725, 1.442695
  %v3729 = vpow.pop %v3728
  %v3730 = vadd.f32 %v3727, 1.0
  %v3731 = vadd.f32 %v3729, 1.0
  %v3732 = vrcp.pop %v3730
  %v3733 = vmul.f32 1.0, %v3732
  %v3734 = vrcp.pop %v3731
  %v3735 = vmul.f32 1.0, %v3734
  %v3736 = vadd.f32 %v3572, %v3716
  %v3737 = vadd.f32 %v3576, %v3720
  %v3738 = vxor.u32 %v3736, 2147483648
  %v3739 = vxor.u32 %v3737, 2147483648
  %v3740 = vmul.f32 %v3738, 1.442695
  %v3741 = vpow.pop %v3740
  %v3742 = vmul.f32 %v3739, 1.442695
  %v3743 = vpow.pop %v3742
  %v3744 = vadd.f32 %v3741, 1.0
  %v3745 = vadd.f32 %v3743, 1.0
  %v3746 = vrcp.pop %v3744
  %v3747 = vmul.f32 1.0, %v3746
  %v3748 = vrcp.pop %v3745
  %v3749 = vmul.f32 1.0, %v3748
  %v3750 = vmul.f32 %v3733, %v3561
  %v3751 = vmul.f32 %v3735, %v3562
  %v3752 = vpack.c.bf16 %v3751, %v3750
  %v3753 = vld [vmem:[%s3] sm:$0xf]
  %v3754 = vld [vmem:[%s3 + $0x4] sm:$0xf]
  %v3755 = vld [vmem:[%s3 + $0x8] sm:$0xf]
  %v3756 = vld [vmem:[%s3 + $0xc] sm:$0xf]
  %v3757 = vld [vmem:[%s3 + $0x10] sm:$0xf]
  %v3758 = vld [vmem:[%s3 + $0x14] sm:$0xf]
  %v3759 = vld [vmem:[%s3 + $0x18] sm:$0xf]
  %v3760 = vld [vmem:[%s3 + $0x1c] sm:$0xf]
  %v3761 = vld [vmem:[%s3 + $0x20] sm:$0xf]
  %v3762 = vld [vmem:[%s3 + $0x24] sm:$0xf]
  %v3763 = vld [vmem:[%s3 + $0x28] sm:$0xf]
  %v3764 = vld [vmem:[%s3 + $0x2c] sm:$0xf]
  %v3765 = vld [vmem:[%s3 + $0x30] sm:$0xf]
  %v3766 = vld [vmem:[%s3 + $0x34] sm:$0xf]
  %v3767 = vld [vmem:[%s3 + $0x38] sm:$0xf]
  %v3768 = vld [vmem:[%s3 + $0x3c] sm:$0xf]
  %v3785 = vunpack.c.l.b16 %v3753
  %v3786 = vunpack.c.l.b16 %v3754
  %v3787 = vunpack.c.l.b16 %v3755
  %v3788 = vunpack.c.l.b16 %v3756
  %v3789 = vunpack.c.l.b16 %v3757
  %v3790 = vunpack.c.l.b16 %v3758
  %v3791 = vunpack.c.l.b16 %v3759
  %v3792 = vunpack.c.l.b16 %v3760
  %v3793 = vunpack.c.l.b16 %v3761
  %v3794 = vunpack.c.l.b16 %v3762
  %v3795 = vunpack.c.l.b16 %v3763
  %v3796 = vunpack.c.l.b16 %v3764
  %v3797 = vunpack.c.l.b16 %v3765
  %v3798 = vunpack.c.l.b16 %v3766
  %v3799 = vunpack.c.l.b16 %v3767
  %v3800 = vunpack.c.l.b16 %v3768
  %v3801 = vpack.c.b16 %v3786, %v3785
  %v3802 = vpack.c.b16 %v3788, %v3787
  %v3803 = vpack.c.b16 %v3790, %v3789
  %v3804 = vpack.c.b16 %v3792, %v3791
  %v3805 = vpack.c.b16 %v3794, %v3793
  %v3806 = vpack.c.b16 %v3796, %v3795
  %v3807 = vpack.c.b16 %v3798, %v3797
  %v3808 = vpack.c.b16 %v3800, %v3799
  %3817 = vmatprep.subr.bf16.mxu0 0
  %3818 = vmatpush1.bf16.msra.mxu0 %v3801
  %3819 = vmatprep.subr.bf16.mxu0 0
  %3820 = vmatpush1.bf16.msra.mxu0 %v3802
  %3821 = vmatprep.subr.bf16.mxu0 0
  %3822 = vmatpush1.bf16.msra.mxu0 %v3803
  %3823 = vmatprep.subr.bf16.mxu0 0
  %3824 = vmatpush1.bf16.msra.mxu0 %v3804
  %3825 = vmatprep.subr.bf16.mxu0 0
  %3826 = vmatpush1.bf16.msra.mxu0 %v3805
  %3827 = vmatprep.subr.bf16.mxu0 0
  %3828 = vmatpush1.bf16.msra.mxu0 %v3806
  %3829 = vmatprep.subr.bf16.mxu0 0
  %3830 = vmatpush1.bf16.msra.mxu0 %v3807
  %3831 = vmatprep.subr.bf16.mxu0 0
  %3832 = vmatpush1.bf16.msra.mxu0 %v3808
  %3833 = vmatprep.subr.bf16.mxu0 0
  %3834 = vmatpush1.bf16.msra.mxu0 0
  %3835 = vmatprep.subr.bf16.mxu0 0
  %3836 = vmatpush1.bf16.msra.mxu0 0
  %3837 = vmatprep.subr.bf16.mxu0 0
  %3838 = vmatpush1.bf16.msra.mxu0 0
  %3839 = vmatprep.subr.bf16.mxu0 0
  %3840 = vmatpush1.bf16.msra.mxu0 0
  %3841 = vmatprep.subr.bf16.mxu0 0
  %3842 = vmatpush1.bf16.msra.mxu0 0
  %3843 = vmatprep.subr.bf16.mxu0 0
  %3844 = vmatpush1.bf16.msra.mxu0 0
  %3845 = vmatprep.subr.bf16.mxu0 0
  %3846 = vmatpush1.bf16.msra.mxu0 0
  %3847 = vmatprep.subr.bf16.mxu0 0
  %3848 = vmatpush1.bf16.msra.mxu0 0
  %3849 = vmatprep.mubr.bf16.mxu0 0
  %3850 = vmatmul.mubr.bf16.gmra.mrb[0].mxu0 %v3752
  %v3851 = vpop.f32.mrb[0].mxu0
  %v3852 = vadd.f32 0.0, %v3851
  %v3853 = vpop.f32.mrb[0].mxu0
  %v3854 = vpop.f32.mrb[0].mxu0
  %v3855 = vadd.f32 0.0, %v3854
  %v3856 = vpop.f32.mrb[0].mxu0
  %3857 = vdwg.mxu0
  %v3858 = vadd.f32 %v3573, %v3852
  %v3859 = vadd.f32 %v3577, %v3855
  %v3860 = vtanh.pop %v3858
  %v3861 = vtanh.pop %v3859
  %v3862 = vmul.f32 %v3561, %v31
  %v3863 = vmul.f32 %v3562, %v31
  %v3864 = vadd.f32 %v3574, %v3862
  %v3865 = vadd.f32 %v3578, %v3863
  %v3866 = vmax.f32 %v3864, 0.0
  %v3867 = vmax.f32 %v3865, 0.0
  %3869 = vset.pattern.permute.xlu0 0
  %3870 = vperm.xlu0 %3869, %v3580
  %v3871 = vpop.permute.xlu0 %3870
  %3874 = vset.pattern.permute.xlu0 0
  %3875 = vperm.xlu0 %3874, %v3581
  %v3876 = vpop.permute.xlu0 %3875
  %v3878 = vmul.f32 %v41, %v3871
  %v3879 = vmul.f32 %v41, %v3876
  %v3880 = vadd.f32 %v3878, %v46
  %v3881 = vadd.f32 %v3879, %v46
  %v3882 = vmax.f32 %v3880, 0.0
  %v3883 = vmax.f32 %v3881, 0.0
  %v3884 = vmul.f32 %v36, %v3866
  %v3885 = vmul.f32 %v36, %v3867
  %v3886 = vmul.f32 %v51, %v3882
  %v3887 = vmul.f32 %v51, %v3883
  %v3888 = vadd.f32 %v3884, %v3886
  %v3889 = vadd.f32 %v3885, %v3887
  %v3890 = vadd.f32 %v3888, %v56
  %v3891 = vadd.f32 %v3889, %v56
  %v3892 = vxor.u32 %v3890, 2147483648
  %v3893 = vxor.u32 %v3891, 2147483648
  %v3894 = vmul.f32 %v3892, 1.442695
  %v3895 = vpow.pop %v3894
  %v3896 = vmul.f32 %v3893, 1.442695
  %v3897 = vpow.pop %v3896
  %v3898 = vadd.f32 %v3895, 1.0
  %v3899 = vadd.f32 %v3897, 1.0
  %v3900 = vrcp.pop %v3898
  %v3901 = vmul.f32 1.0, %v3900
  %v3902 = vrcp.pop %v3899
  %v3903 = vmul.f32 1.0, %v3902
  %v3904 = vmul.f32 %v3747, %v3561
  %v3905 = vmul.f32 %v3749, %v3562
  %v3906 = vsub.f32 1.0, %v3747
  %v3907 = vsub.f32 1.0, %v3749
  %v3908 = vmul.f32 %v3906, %v3860
  %v3909 = vmul.f32 %v3907, %v3861
  %v3910 = vmul.f32 %v3908, %v3901
  %v3911 = vmul.f32 %v3909, %v3903
  %v3912 = vadd.f32 %v3904, %v3910
  %v3913 = vadd.f32 %v3905, %v3911
  %s3914 = scalar_lea.vmem %s5, 160
  %3915 = vst [vmem:[%s3914] sm:$0xff] %v3912
  %3916 = vst [vmem:[%s3914 + $0x8] sm:$0xff] %v3913
  %s3917 = scalar_lea.vmem %s0, 352
  %v3918 = vld [vmem:[%s3917] sm:$0xff]
  %v3919 = vld [vmem:[%s3917 + $0x8] sm:$0xff]
  %v3920 = vld [vmem:[%s3917 + $0x10] sm:$0xff]
  %v3921 = vld [vmem:[%s3917 + $0x18] sm:$0xff]
  %v3922 = vunpack.c.l.bf16 %v3918
  %v3923 = vunpack.c.h.bf16 %v3918
  %v3924 = vunpack.c.l.bf16 %v3919
  %v3925 = vunpack.c.h.bf16 %v3919
  %v3926 = vunpack.c.l.bf16 %v3920
  %v3927 = vunpack.c.h.bf16 %v3920
  %v3928 = vunpack.c.l.bf16 %v3921
  %v3929 = vunpack.c.h.bf16 %v3921
  %s3930 = scalar_lea.vmem %s1, 176
  %v3931 = vld [vmem:[%s3930] sm:$0xff]
  %v3932 = vld [vmem:[%s3930 + $0x8] sm:$0xff]
  %v3933 = vpack.c.bf16 %v3913, %v3912
  %v3934 = vld [vmem:[%s2] sm:$0xff]
  %v3935 = vld [vmem:[%s2 + $0x8] sm:$0xff]
  %v3936 = vld [vmem:[%s2 + $0x10] sm:$0xff]
  %v3937 = vld [vmem:[%s2 + $0x18] sm:$0xff]
  %v3938 = vld [vmem:[%s2 + $0x20] sm:$0xff]
  %v3939 = vld [vmem:[%s2 + $0x28] sm:$0xff]
  %v3940 = vld [vmem:[%s2 + $0x30] sm:$0xff]
  %v3941 = vld [vmem:[%s2 + $0x38] sm:$0xff]
  %v3942 = vld [vmem:[%s2 + $0x40] sm:$0xff]
  %v3943 = vld [vmem:[%s2 + $0x48] sm:$0xff]
  %v3944 = vld [vmem:[%s2 + $0x50] sm:$0xff]
  %v3945 = vld [vmem:[%s2 + $0x58] sm:$0xff]
  %v3946 = vld [vmem:[%s2 + $0x60] sm:$0xff]
  %v3947 = vld [vmem:[%s2 + $0x68] sm:$0xff]
  %v3948 = vld [vmem:[%s2 + $0x70] sm:$0xff]
  %v3949 = vld [vmem:[%s2 + $0x78] sm:$0xff]
  %v3966 = vunpack.c.l.b16 %v3934
  %v3967 = vunpack.c.h.b16 %v3934
  %v3968 = vunpack.c.l.b16 %v3935
  %v3969 = vunpack.c.h.b16 %v3935
  %v3970 = vunpack.c.l.b16 %v3936
  %v3971 = vunpack.c.h.b16 %v3936
  %v3972 = vunpack.c.l.b16 %v3937
  %v3973 = vunpack.c.h.b16 %v3937
  %v3974 = vunpack.c.l.b16 %v3938
  %v3975 = vunpack.c.h.b16 %v3938
  %v3976 = vunpack.c.l.b16 %v3939
  %v3977 = vunpack.c.h.b16 %v3939
  %v3978 = vunpack.c.l.b16 %v3940
  %v3979 = vunpack.c.h.b16 %v3940
  %v3980 = vunpack.c.l.b16 %v3941
  %v3981 = vunpack.c.h.b16 %v3941
  %v3982 = vunpack.c.l.b16 %v3942
  %v3983 = vunpack.c.h.b16 %v3942
  %v3984 = vunpack.c.l.b16 %v3943
  %v3985 = vunpack.c.h.b16 %v3943
  %v3986 = vunpack.c.l.b16 %v3944
  %v3987 = vunpack.c.h.b16 %v3944
  %v3988 = vunpack.c.l.b16 %v3945
  %v3989 = vunpack.c.h.b16 %v3945
  %v3990 = vunpack.c.l.b16 %v3946
  %v3991 = vunpack.c.h.b16 %v3946
  %v3992 = vunpack.c.l.b16 %v3947
  %v3993 = vunpack.c.h.b16 %v3947
  %v3994 = vunpack.c.l.b16 %v3948
  %v3995 = vunpack.c.h.b16 %v3948
  %v3996 = vunpack.c.l.b16 %v3949
  %v3997 = vunpack.c.h.b16 %v3949
  %v3998 = vpack.c.b16 %v3968, %v3966
  %v3999 = vpack.c.b16 %v3969, %v3967
  %v4000 = vpack.c.b16 %v3972, %v3970
  %v4001 = vpack.c.b16 %v3973, %v3971
  %v4002 = vpack.c.b16 %v3976, %v3974
  %v4003 = vpack.c.b16 %v3977, %v3975
  %v4004 = vpack.c.b16 %v3980, %v3978
  %v4005 = vpack.c.b16 %v3981, %v3979
  %v4006 = vpack.c.b16 %v3984, %v3982
  %v4007 = vpack.c.b16 %v3985, %v3983
  %v4008 = vpack.c.b16 %v3988, %v3986
  %v4009 = vpack.c.b16 %v3989, %v3987
  %v4010 = vpack.c.b16 %v3992, %v3990
  %v4011 = vpack.c.b16 %v3993, %v3991
  %v4012 = vpack.c.b16 %v3996, %v3994
  %v4013 = vpack.c.b16 %v3997, %v3995
  %4030 = vmatprep.subr.bf16.mxu0 %v3999
  %4031 = vmatpush1.bf16.msra.mxu0 %v3998
  %4032 = vmatprep.subr.bf16.mxu0 %v4001
  %4033 = vmatpush1.bf16.msra.mxu0 %v4000
  %4034 = vmatprep.subr.bf16.mxu0 %v4003
  %4035 = vmatpush1.bf16.msra.mxu0 %v4002
  %4036 = vmatprep.subr.bf16.mxu0 %v4005
  %4037 = vmatpush1.bf16.msra.mxu0 %v4004
  %4038 = vmatprep.subr.bf16.mxu0 %v4007
  %4039 = vmatpush1.bf16.msra.mxu0 %v4006
  %4040 = vmatprep.subr.bf16.mxu0 %v4009
  %4041 = vmatpush1.bf16.msra.mxu0 %v4008
  %4042 = vmatprep.subr.bf16.mxu0 %v4011
  %4043 = vmatpush1.bf16.msra.mxu0 %v4010
  %4044 = vmatprep.subr.bf16.mxu0 %v4013
  %4045 = vmatpush1.bf16.msra.mxu0 %v4012
  %4046 = vmatprep.subr.bf16.mxu0 0
  %4047 = vmatpush1.bf16.msra.mxu0 0
  %4048 = vmatprep.subr.bf16.mxu0 0
  %4049 = vmatpush1.bf16.msra.mxu0 0
  %4050 = vmatprep.subr.bf16.mxu0 0
  %4051 = vmatpush1.bf16.msra.mxu0 0
  %4052 = vmatprep.subr.bf16.mxu0 0
  %4053 = vmatpush1.bf16.msra.mxu0 0
  %4054 = vmatprep.subr.bf16.mxu0 0
  %4055 = vmatpush1.bf16.msra.mxu0 0
  %4056 = vmatprep.subr.bf16.mxu0 0
  %4057 = vmatpush1.bf16.msra.mxu0 0
  %4058 = vmatprep.subr.bf16.mxu0 0
  %4059 = vmatpush1.bf16.msra.mxu0 0
  %4060 = vmatprep.subr.bf16.mxu0 0
  %4061 = vmatpush1.bf16.msra.mxu0 0
  %4062 = vmatprep.mubr.bf16.mxu0 0
  %4063 = vmatmul.mubr.bf16.gmra.mrb[0].mxu0 %v3933
  %v4064 = vpop.f32.mrb[0].mxu0
  %v4065 = vadd.f32 0.0, %v4064
  %v4066 = vpop.f32.mrb[0].mxu0
  %v4067 = vadd.f32 0.0, %v4066
  %v4068 = vpop.f32.mrb[0].mxu0
  %v4069 = vadd.f32 0.0, %v4068
  %v4070 = vpop.f32.mrb[0].mxu0
  %v4071 = vadd.f32 0.0, %v4070
  %4072 = vdwg.mxu0
  %v4073 = vadd.f32 %v3922, %v4065
  %v4074 = vadd.f32 %v3926, %v4069
  %v4075 = vxor.u32 %v4073, 2147483648
  %v4076 = vxor.u32 %v4074, 2147483648
  %v4077 = vmul.f32 %v4075, 1.442695
  %v4078 = vpow.pop %v4077
  %v4079 = vmul.f32 %v4076, 1.442695
  %v4080 = vpow.pop %v4079
  %v4081 = vadd.f32 %v4078, 1.0
  %v4082 = vadd.f32 %v4080, 1.0
  %v4083 = vrcp.pop %v4081
  %v4084 = vmul.f32 1.0, %v4083
  %v4085 = vrcp.pop %v4082
  %v4086 = vmul.f32 1.0, %v4085
  %v4087 = vadd.f32 %v3923, %v4067
  %v4088 = vadd.f32 %v3927, %v4071
  %v4089 = vxor.u32 %v4087, 2147483648
  %v4090 = vxor.u32 %v4088, 2147483648
  %v4091 = vmul.f32 %v4089, 1.442695
  %v4092 = vpow.pop %v4091
  %v4093 = vmul.f32 %v4090, 1.442695
  %v4094 = vpow.pop %v4093
  %v4095 = vadd.f32 %v4092, 1.0
  %v4096 = vadd.f32 %v4094, 1.0
  %v4097 = vrcp.pop %v4095
  %v4098 = vmul.f32 1.0, %v4097
  %v4099 = vrcp.pop %v4096
  %v4100 = vmul.f32 1.0, %v4099
  %v4101 = vmul.f32 %v4084, %v3912
  %v4102 = vmul.f32 %v4086, %v3913
  %v4103 = vpack.c.bf16 %v4102, %v4101
  %v4104 = vld [vmem:[%s3] sm:$0xf]
  %v4105 = vld [vmem:[%s3 + $0x4] sm:$0xf]
  %v4106 = vld [vmem:[%s3 + $0x8] sm:$0xf]
  %v4107 = vld [vmem:[%s3 + $0xc] sm:$0xf]
  %v4108 = vld [vmem:[%s3 + $0x10] sm:$0xf]
  %v4109 = vld [vmem:[%s3 + $0x14] sm:$0xf]
  %v4110 = vld [vmem:[%s3 + $0x18] sm:$0xf]
  %v4111 = vld [vmem:[%s3 + $0x1c] sm:$0xf]
  %v4112 = vld [vmem:[%s3 + $0x20] sm:$0xf]
  %v4113 = vld [vmem:[%s3 + $0x24] sm:$0xf]
  %v4114 = vld [vmem:[%s3 + $0x28] sm:$0xf]
  %v4115 = vld [vmem:[%s3 + $0x2c] sm:$0xf]
  %v4116 = vld [vmem:[%s3 + $0x30] sm:$0xf]
  %v4117 = vld [vmem:[%s3 + $0x34] sm:$0xf]
  %v4118 = vld [vmem:[%s3 + $0x38] sm:$0xf]
  %v4119 = vld [vmem:[%s3 + $0x3c] sm:$0xf]
  %v4136 = vunpack.c.l.b16 %v4104
  %v4137 = vunpack.c.l.b16 %v4105
  %v4138 = vunpack.c.l.b16 %v4106
  %v4139 = vunpack.c.l.b16 %v4107
  %v4140 = vunpack.c.l.b16 %v4108
  %v4141 = vunpack.c.l.b16 %v4109
  %v4142 = vunpack.c.l.b16 %v4110
  %v4143 = vunpack.c.l.b16 %v4111
  %v4144 = vunpack.c.l.b16 %v4112
  %v4145 = vunpack.c.l.b16 %v4113
  %v4146 = vunpack.c.l.b16 %v4114
  %v4147 = vunpack.c.l.b16 %v4115
  %v4148 = vunpack.c.l.b16 %v4116
  %v4149 = vunpack.c.l.b16 %v4117
  %v4150 = vunpack.c.l.b16 %v4118
  %v4151 = vunpack.c.l.b16 %v4119
  %v4152 = vpack.c.b16 %v4137, %v4136
  %v4153 = vpack.c.b16 %v4139, %v4138
  %v4154 = vpack.c.b16 %v4141, %v4140
  %v4155 = vpack.c.b16 %v4143, %v4142
  %v4156 = vpack.c.b16 %v4145, %v4144
  %v4157 = vpack.c.b16 %v4147, %v4146
  %v4158 = vpack.c.b16 %v4149, %v4148
  %v4159 = vpack.c.b16 %v4151, %v4150
  %4168 = vmatprep.subr.bf16.mxu0 0
  %4169 = vmatpush1.bf16.msra.mxu0 %v4152
  %4170 = vmatprep.subr.bf16.mxu0 0
  %4171 = vmatpush1.bf16.msra.mxu0 %v4153
  %4172 = vmatprep.subr.bf16.mxu0 0
  %4173 = vmatpush1.bf16.msra.mxu0 %v4154
  %4174 = vmatprep.subr.bf16.mxu0 0
  %4175 = vmatpush1.bf16.msra.mxu0 %v4155
  %4176 = vmatprep.subr.bf16.mxu0 0
  %4177 = vmatpush1.bf16.msra.mxu0 %v4156
  %4178 = vmatprep.subr.bf16.mxu0 0
  %4179 = vmatpush1.bf16.msra.mxu0 %v4157
  %4180 = vmatprep.subr.bf16.mxu0 0
  %4181 = vmatpush1.bf16.msra.mxu0 %v4158
  %4182 = vmatprep.subr.bf16.mxu0 0
  %4183 = vmatpush1.bf16.msra.mxu0 %v4159
  %4184 = vmatprep.subr.bf16.mxu0 0
  %4185 = vmatpush1.bf16.msra.mxu0 0
  %4186 = vmatprep.subr.bf16.mxu0 0
  %4187 = vmatpush1.bf16.msra.mxu0 0
  %4188 = vmatprep.subr.bf16.mxu0 0
  %4189 = vmatpush1.bf16.msra.mxu0 0
  %4190 = vmatprep.subr.bf16.mxu0 0
  %4191 = vmatpush1.bf16.msra.mxu0 0
  %4192 = vmatprep.subr.bf16.mxu0 0
  %4193 = vmatpush1.bf16.msra.mxu0 0
  %4194 = vmatprep.subr.bf16.mxu0 0
  %4195 = vmatpush1.bf16.msra.mxu0 0
  %4196 = vmatprep.subr.bf16.mxu0 0
  %4197 = vmatpush1.bf16.msra.mxu0 0
  %4198 = vmatprep.subr.bf16.mxu0 0
  %4199 = vmatpush1.bf16.msra.mxu0 0
  %4200 = vmatprep.mubr.bf16.mxu0 0
  %4201 = vmatmul.mubr.bf16.gmra.mrb[0].mxu0 %v4103
  %v4202 = vpop.f32.mrb[0].mxu0
  %v4203 = vadd.f32 0.0, %v4202
  %v4204 = vpop.f32.mrb[0].mxu0
  %v4205 = vpop.f32.mrb[0].mxu0
  %v4206 = vadd.f32 0.0, %v4205
  %v4207 = vpop.f32.mrb[0].mxu0
  %4208 = vdwg.mxu0
  %v4209 = vadd.f32 %v3924, %v4203
  %v4210 = vadd.f32 %v3928, %v4206
  %v4211 = vtanh.pop %v4209
  %v4212 = vtanh.pop %v4210
  %v4213 = vmul.f32 %v3912, %v31
  %v4214 = vmul.f32 %v3913, %v31
  %v4215 = vadd.f32 %v3925, %v4213
  %v4216 = vadd.f32 %v3929, %v4214
  %v4217 = vmax.f32 %v4215, 0.0
  %v4218 = vmax.f32 %v4216, 0.0
  %4220 = vset.pattern.permute.xlu0 0
  %4221 = vperm.xlu0 %4220, %v3931
  %v4222 = vpop.permute.xlu0 %4221
  %4225 = vset.pattern.permute.xlu0 0
  %4226 = vperm.xlu0 %4225, %v3932
  %v4227 = vpop.permute.xlu0 %4226
  %v4229 = vmul.f32 %v41, %v4222
  %v4230 = vmul.f32 %v41, %v4227
  %v4231 = vadd.f32 %v4229, %v46
  %v4232 = vadd.f32 %v4230, %v46
  %v4233 = vmax.f32 %v4231, 0.0
  %v4234 = vmax.f32 %v4232, 0.0
  %v4235 = vmul.f32 %v36, %v4217
  %v4236 = vmul.f32 %v36, %v4218
  %v4237 = vmul.f32 %v51, %v4233
  %v4238 = vmul.f32 %v51, %v4234
  %v4239 = vadd.f32 %v4235, %v4237
  %v4240 = vadd.f32 %v4236, %v4238
  %v4241 = vadd.f32 %v4239, %v56
  %v4242 = vadd.f32 %v4240, %v56
  %v4243 = vxor.u32 %v4241, 2147483648
  %v4244 = vxor.u32 %v4242, 2147483648
  %v4245 = vmul.f32 %v4243, 1.442695
  %v4246 = vpow.pop %v4245
  %v4247 = vmul.f32 %v4244, 1.442695
  %v4248 = vpow.pop %v4247
  %v4249 = vadd.f32 %v4246, 1.0
  %v4250 = vadd.f32 %v4248, 1.0
  %v4251 = vrcp.pop %v4249
  %v4252 = vmul.f32 1.0, %v4251
  %v4253 = vrcp.pop %v4250
  %v4254 = vmul.f32 1.0, %v4253
  %v4255 = vmul.f32 %v4098, %v3912
  %v4256 = vmul.f32 %v4100, %v3913
  %v4257 = vsub.f32 1.0, %v4098
  %v4258 = vsub.f32 1.0, %v4100
  %v4259 = vmul.f32 %v4257, %v4211
  %v4260 = vmul.f32 %v4258, %v4212
  %v4261 = vmul.f32 %v4259, %v4252
  %v4262 = vmul.f32 %v4260, %v4254
  %v4263 = vadd.f32 %v4255, %v4261
  %v4264 = vadd.f32 %v4256, %v4262
  %s4265 = scalar_lea.vmem %s5, 176
  %4266 = vst [vmem:[%s4265] sm:$0xff] %v4263
  %4267 = vst [vmem:[%s4265 + $0x8] sm:$0xff] %v4264
  %s4268 = scalar_lea.vmem %s0, 384
  %v4269 = vld [vmem:[%s4268] sm:$0xff]
  %v4270 = vld [vmem:[%s4268 + $0x8] sm:$0xff]
  %v4271 = vld [vmem:[%s4268 + $0x10] sm:$0xff]
  %v4272 = vld [vmem:[%s4268 + $0x18] sm:$0xff]
  %v4273 = vunpack.c.l.bf16 %v4269
  %v4274 = vunpack.c.h.bf16 %v4269
  %v4275 = vunpack.c.l.bf16 %v4270
  %v4276 = vunpack.c.h.bf16 %v4270
  %v4277 = vunpack.c.l.bf16 %v4271
  %v4278 = vunpack.c.h.bf16 %v4271
  %v4279 = vunpack.c.l.bf16 %v4272
  %v4280 = vunpack.c.h.bf16 %v4272
  %s4281 = scalar_lea.vmem %s1, 192
  %v4282 = vld [vmem:[%s4281] sm:$0xff]
  %v4283 = vld [vmem:[%s4281 + $0x8] sm:$0xff]
  %v4284 = vpack.c.bf16 %v4264, %v4263
  %v4285 = vld [vmem:[%s2] sm:$0xff]
  %v4286 = vld [vmem:[%s2 + $0x8] sm:$0xff]
  %v4287 = vld [vmem:[%s2 + $0x10] sm:$0xff]
  %v4288 = vld [vmem:[%s2 + $0x18] sm:$0xff]
  %v4289 = vld [vmem:[%s2 + $0x20] sm:$0xff]
  %v4290 = vld [vmem:[%s2 + $0x28] sm:$0xff]
  %v4291 = vld [vmem:[%s2 + $0x30] sm:$0xff]
  %v4292 = vld [vmem:[%s2 + $0x38] sm:$0xff]
  %v4293 = vld [vmem:[%s2 + $0x40] sm:$0xff]
  %v4294 = vld [vmem:[%s2 + $0x48] sm:$0xff]
  %v4295 = vld [vmem:[%s2 + $0x50] sm:$0xff]
  %v4296 = vld [vmem:[%s2 + $0x58] sm:$0xff]
  %v4297 = vld [vmem:[%s2 + $0x60] sm:$0xff]
  %v4298 = vld [vmem:[%s2 + $0x68] sm:$0xff]
  %v4299 = vld [vmem:[%s2 + $0x70] sm:$0xff]
  %v4300 = vld [vmem:[%s2 + $0x78] sm:$0xff]
  %v4317 = vunpack.c.l.b16 %v4285
  %v4318 = vunpack.c.h.b16 %v4285
  %v4319 = vunpack.c.l.b16 %v4286
  %v4320 = vunpack.c.h.b16 %v4286
  %v4321 = vunpack.c.l.b16 %v4287
  %v4322 = vunpack.c.h.b16 %v4287
  %v4323 = vunpack.c.l.b16 %v4288
  %v4324 = vunpack.c.h.b16 %v4288
  %v4325 = vunpack.c.l.b16 %v4289
  %v4326 = vunpack.c.h.b16 %v4289
  %v4327 = vunpack.c.l.b16 %v4290
  %v4328 = vunpack.c.h.b16 %v4290
  %v4329 = vunpack.c.l.b16 %v4291
  %v4330 = vunpack.c.h.b16 %v4291
  %v4331 = vunpack.c.l.b16 %v4292
  %v4332 = vunpack.c.h.b16 %v4292
  %v4333 = vunpack.c.l.b16 %v4293
  %v4334 = vunpack.c.h.b16 %v4293
  %v4335 = vunpack.c.l.b16 %v4294
  %v4336 = vunpack.c.h.b16 %v4294
  %v4337 = vunpack.c.l.b16 %v4295
  %v4338 = vunpack.c.h.b16 %v4295
  %v4339 = vunpack.c.l.b16 %v4296
  %v4340 = vunpack.c.h.b16 %v4296
  %v4341 = vunpack.c.l.b16 %v4297
  %v4342 = vunpack.c.h.b16 %v4297
  %v4343 = vunpack.c.l.b16 %v4298
  %v4344 = vunpack.c.h.b16 %v4298
  %v4345 = vunpack.c.l.b16 %v4299
  %v4346 = vunpack.c.h.b16 %v4299
  %v4347 = vunpack.c.l.b16 %v4300
  %v4348 = vunpack.c.h.b16 %v4300
  %v4349 = vpack.c.b16 %v4319, %v4317
  %v4350 = vpack.c.b16 %v4320, %v4318
  %v4351 = vpack.c.b16 %v4323, %v4321
  %v4352 = vpack.c.b16 %v4324, %v4322
  %v4353 = vpack.c.b16 %v4327, %v4325
  %v4354 = vpack.c.b16 %v4328, %v4326
  %v4355 = vpack.c.b16 %v4331, %v4329
  %v4356 = vpack.c.b16 %v4332, %v4330
  %v4357 = vpack.c.b16 %v4335, %v4333
  %v4358 = vpack.c.b16 %v4336, %v4334
  %v4359 = vpack.c.b16 %v4339, %v4337
  %v4360 = vpack.c.b16 %v4340, %v4338
  %v4361 = vpack.c.b16 %v4343, %v4341
  %v4362 = vpack.c.b16 %v4344, %v4342
  %v4363 = vpack.c.b16 %v4347, %v4345
  %v4364 = vpack.c.b16 %v4348, %v4346
  %4381 = vmatprep.subr.bf16.mxu0 %v4350
  %4382 = vmatpush1.bf16.msra.mxu0 %v4349
  %4383 = vmatprep.subr.bf16.mxu0 %v4352
  %4384 = vmatpush1.bf16.msra.mxu0 %v4351
  %4385 = vmatprep.subr.bf16.mxu0 %v4354
  %4386 = vmatpush1.bf16.msra.mxu0 %v4353
  %4387 = vmatprep.subr.bf16.mxu0 %v4356
  %4388 = vmatpush1.bf16.msra.mxu0 %v4355
  %4389 = vmatprep.subr.bf16.mxu0 %v4358
  %4390 = vmatpush1.bf16.msra.mxu0 %v4357
  %4391 = vmatprep.subr.bf16.mxu0 %v4360
  %4392 = vmatpush1.bf16.msra.mxu0 %v4359
  %4393 = vmatprep.subr.bf16.mxu0 %v4362
  %4394 = vmatpush1.bf16.msra.mxu0 %v4361
  %4395 = vmatprep.subr.bf16.mxu0 %v4364
  %4396 = vmatpush1.bf16.msra.mxu0 %v4363
  %4397 = vmatprep.subr.bf16.mxu0 0
  %4398 = vmatpush1.bf16.msra.mxu0 0
  %4399 = vmatprep.subr.bf16.mxu0 0
  %4400 = vmatpush1.bf16.msra.mxu0 0
  %4401 = vmatprep.subr.bf16.mxu0 0
  %4402 = vmatpush1.bf16.msra.mxu0 0
  %4403 = vmatprep.subr.bf16.mxu0 0
  %4404 = vmatpush1.bf16.msra.mxu0 0
  %4405 = vmatprep.subr.bf16.mxu0 0
  %4406 = vmatpush1.bf16.msra.mxu0 0
  %4407 = vmatprep.subr.bf16.mxu0 0
  %4408 = vmatpush1.bf16.msra.mxu0 0
  %4409 = vmatprep.subr.bf16.mxu0 0
  %4410 = vmatpush1.bf16.msra.mxu0 0
  %4411 = vmatprep.subr.bf16.mxu0 0
  %4412 = vmatpush1.bf16.msra.mxu0 0
  %4413 = vmatprep.mubr.bf16.mxu0 0
  %4414 = vmatmul.mubr.bf16.gmra.mrb[0].mxu0 %v4284
  %v4415 = vpop.f32.mrb[0].mxu0
  %v4416 = vadd.f32 0.0, %v4415
  %v4417 = vpop.f32.mrb[0].mxu0
  %v4418 = vadd.f32 0.0, %v4417
  %v4419 = vpop.f32.mrb[0].mxu0
  %v4420 = vadd.f32 0.0, %v4419
  %v4421 = vpop.f32.mrb[0].mxu0
  %v4422 = vadd.f32 0.0, %v4421
  %4423 = vdwg.mxu0
  %v4424 = vadd.f32 %v4273, %v4416
  %v4425 = vadd.f32 %v4277, %v4420
  %v4426 = vxor.u32 %v4424, 2147483648
  %v4427 = vxor.u32 %v4425, 2147483648
  %v4428 = vmul.f32 %v4426, 1.442695
  %v4429 = vpow.pop %v4428
  %v4430 = vmul.f32 %v4427, 1.442695
  %v4431 = vpow.pop %v4430
  %v4432 = vadd.f32 %v4429, 1.0
  %v4433 = vadd.f32 %v4431, 1.0
  %v4434 = vrcp.pop %v4432
  %v4435 = vmul.f32 1.0, %v4434
  %v4436 = vrcp.pop %v4433
  %v4437 = vmul.f32 1.0, %v4436
  %v4438 = vadd.f32 %v4274, %v4418
  %v4439 = vadd.f32 %v4278, %v4422
  %v4440 = vxor.u32 %v4438, 2147483648
  %v4441 = vxor.u32 %v4439, 2147483648
  %v4442 = vmul.f32 %v4440, 1.442695
  %v4443 = vpow.pop %v4442
  %v4444 = vmul.f32 %v4441, 1.442695
  %v4445 = vpow.pop %v4444
  %v4446 = vadd.f32 %v4443, 1.0
  %v4447 = vadd.f32 %v4445, 1.0
  %v4448 = vrcp.pop %v4446
  %v4449 = vmul.f32 1.0, %v4448
  %v4450 = vrcp.pop %v4447
  %v4451 = vmul.f32 1.0, %v4450
  %v4452 = vmul.f32 %v4435, %v4263
  %v4453 = vmul.f32 %v4437, %v4264
  %v4454 = vpack.c.bf16 %v4453, %v4452
  %v4455 = vld [vmem:[%s3] sm:$0xf]
  %v4456 = vld [vmem:[%s3 + $0x4] sm:$0xf]
  %v4457 = vld [vmem:[%s3 + $0x8] sm:$0xf]
  %v4458 = vld [vmem:[%s3 + $0xc] sm:$0xf]
  %v4459 = vld [vmem:[%s3 + $0x10] sm:$0xf]
  %v4460 = vld [vmem:[%s3 + $0x14] sm:$0xf]
  %v4461 = vld [vmem:[%s3 + $0x18] sm:$0xf]
  %v4462 = vld [vmem:[%s3 + $0x1c] sm:$0xf]
  %v4463 = vld [vmem:[%s3 + $0x20] sm:$0xf]
  %v4464 = vld [vmem:[%s3 + $0x24] sm:$0xf]
  %v4465 = vld [vmem:[%s3 + $0x28] sm:$0xf]
  %v4466 = vld [vmem:[%s3 + $0x2c] sm:$0xf]
  %v4467 = vld [vmem:[%s3 + $0x30] sm:$0xf]
  %v4468 = vld [vmem:[%s3 + $0x34] sm:$0xf]
  %v4469 = vld [vmem:[%s3 + $0x38] sm:$0xf]
  %v4470 = vld [vmem:[%s3 + $0x3c] sm:$0xf]
  %v4487 = vunpack.c.l.b16 %v4455
  %v4488 = vunpack.c.l.b16 %v4456
  %v4489 = vunpack.c.l.b16 %v4457
  %v4490 = vunpack.c.l.b16 %v4458
  %v4491 = vunpack.c.l.b16 %v4459
  %v4492 = vunpack.c.l.b16 %v4460
  %v4493 = vunpack.c.l.b16 %v4461
  %v4494 = vunpack.c.l.b16 %v4462
  %v4495 = vunpack.c.l.b16 %v4463
  %v4496 = vunpack.c.l.b16 %v4464
  %v4497 = vunpack.c.l.b16 %v4465
  %v4498 = vunpack.c.l.b16 %v4466
  %v4499 = vunpack.c.l.b16 %v4467
  %v4500 = vunpack.c.l.b16 %v4468
  %v4501 = vunpack.c.l.b16 %v4469
  %v4502 = vunpack.c.l.b16 %v4470
  %v4503 = vpack.c.b16 %v4488, %v4487
  %v4504 = vpack.c.b16 %v4490, %v4489
  %v4505 = vpack.c.b16 %v4492, %v4491
  %v4506 = vpack.c.b16 %v4494, %v4493
  %v4507 = vpack.c.b16 %v4496, %v4495
  %v4508 = vpack.c.b16 %v4498, %v4497
  %v4509 = vpack.c.b16 %v4500, %v4499
  %v4510 = vpack.c.b16 %v4502, %v4501
  %4519 = vmatprep.subr.bf16.mxu0 0
  %4520 = vmatpush1.bf16.msra.mxu0 %v4503
  %4521 = vmatprep.subr.bf16.mxu0 0
  %4522 = vmatpush1.bf16.msra.mxu0 %v4504
  %4523 = vmatprep.subr.bf16.mxu0 0
  %4524 = vmatpush1.bf16.msra.mxu0 %v4505
  %4525 = vmatprep.subr.bf16.mxu0 0
  %4526 = vmatpush1.bf16.msra.mxu0 %v4506
  %4527 = vmatprep.subr.bf16.mxu0 0
  %4528 = vmatpush1.bf16.msra.mxu0 %v4507
  %4529 = vmatprep.subr.bf16.mxu0 0
  %4530 = vmatpush1.bf16.msra.mxu0 %v4508
  %4531 = vmatprep.subr.bf16.mxu0 0
  %4532 = vmatpush1.bf16.msra.mxu0 %v4509
  %4533 = vmatprep.subr.bf16.mxu0 0
  %4534 = vmatpush1.bf16.msra.mxu0 %v4510
  %4535 = vmatprep.subr.bf16.mxu0 0
  %4536 = vmatpush1.bf16.msra.mxu0 0
  %4537 = vmatprep.subr.bf16.mxu0 0
  %4538 = vmatpush1.bf16.msra.mxu0 0
  %4539 = vmatprep.subr.bf16.mxu0 0
  %4540 = vmatpush1.bf16.msra.mxu0 0
  %4541 = vmatprep.subr.bf16.mxu0 0
  %4542 = vmatpush1.bf16.msra.mxu0 0
  %4543 = vmatprep.subr.bf16.mxu0 0
  %4544 = vmatpush1.bf16.msra.mxu0 0
  %4545 = vmatprep.subr.bf16.mxu0 0
  %4546 = vmatpush1.bf16.msra.mxu0 0
  %4547 = vmatprep.subr.bf16.mxu0 0
  %4548 = vmatpush1.bf16.msra.mxu0 0
  %4549 = vmatprep.subr.bf16.mxu0 0
  %4550 = vmatpush1.bf16.msra.mxu0 0
  %4551 = vmatprep.mubr.bf16.mxu0 0
  %4552 = vmatmul.mubr.bf16.gmra.mrb[0].mxu0 %v4454
  %v4553 = vpop.f32.mrb[0].mxu0
  %v4554 = vadd.f32 0.0, %v4553
  %v4555 = vpop.f32.mrb[0].mxu0
  %v4556 = vpop.f32.mrb[0].mxu0
  %v4557 = vadd.f32 0.0, %v4556
  %v4558 = vpop.f32.mrb[0].mxu0
  %4559 = vdwg.mxu0
  %v4560 = vadd.f32 %v4275, %v4554
  %v4561 = vadd.f32 %v4279, %v4557
  %v4562 = vtanh.pop %v4560
  %v4563 = vtanh.pop %v4561
  %v4564 = vmul.f32 %v4263, %v31
  %v4565 = vmul.f32 %v4264, %v31
  %v4566 = vadd.f32 %v4276, %v4564
  %v4567 = vadd.f32 %v4280, %v4565
  %v4568 = vmax.f32 %v4566, 0.0
  %v4569 = vmax.f32 %v4567, 0.0
  %4571 = vset.pattern.permute.xlu0 0
  %4572 = vperm.xlu0 %4571, %v4282
  %v4573 = vpop.permute.xlu0 %4572
  %4576 = vset.pattern.permute.xlu0 0
  %4577 = vperm.xlu0 %4576, %v4283
  %v4578 = vpop.permute.xlu0 %4577
  %v4580 = vmul.f32 %v41, %v4573
  %v4581 = vmul.f32 %v41, %v4578
  %v4582 = vadd.f32 %v4580, %v46
  %v4583 = vadd.f32 %v4581, %v46
  %v4584 = vmax.f32 %v4582, 0.0
  %v4585 = vmax.f32 %v4583, 0.0
  %v4586 = vmul.f32 %v36, %v4568
  %v4587 = vmul.f32 %v36, %v4569
  %v4588 = vmul.f32 %v51, %v4584
  %v4589 = vmul.f32 %v51, %v4585
  %v4590 = vadd.f32 %v4586, %v4588
  %v4591 = vadd.f32 %v4587, %v4589
  %v4592 = vadd.f32 %v4590, %v56
  %v4593 = vadd.f32 %v4591, %v56
  %v4594 = vxor.u32 %v4592, 2147483648
  %v4595 = vxor.u32 %v4593, 2147483648
  %v4596 = vmul.f32 %v4594, 1.442695
  %v4597 = vpow.pop %v4596
  %v4598 = vmul.f32 %v4595, 1.442695
  %v4599 = vpow.pop %v4598
  %v4600 = vadd.f32 %v4597, 1.0
  %v4601 = vadd.f32 %v4599, 1.0
  %v4602 = vrcp.pop %v4600
  %v4603 = vmul.f32 1.0, %v4602
  %v4604 = vrcp.pop %v4601
  %v4605 = vmul.f32 1.0, %v4604
  %v4606 = vmul.f32 %v4449, %v4263
  %v4607 = vmul.f32 %v4451, %v4264
  %v4608 = vsub.f32 1.0, %v4449
  %v4609 = vsub.f32 1.0, %v4451
  %v4610 = vmul.f32 %v4608, %v4562
  %v4611 = vmul.f32 %v4609, %v4563
  %v4612 = vmul.f32 %v4610, %v4603
  %v4613 = vmul.f32 %v4611, %v4605
  %v4614 = vadd.f32 %v4606, %v4612
  %v4615 = vadd.f32 %v4607, %v4613
  %s4616 = scalar_lea.vmem %s5, 192
  %4617 = vst [vmem:[%s4616] sm:$0xff] %v4614
  %4618 = vst [vmem:[%s4616 + $0x8] sm:$0xff] %v4615
  %s4619 = scalar_lea.vmem %s0, 416
  %v4620 = vld [vmem:[%s4619] sm:$0xff]
  %v4621 = vld [vmem:[%s4619 + $0x8] sm:$0xff]
  %v4622 = vld [vmem:[%s4619 + $0x10] sm:$0xff]
  %v4623 = vld [vmem:[%s4619 + $0x18] sm:$0xff]
  %v4624 = vunpack.c.l.bf16 %v4620
  %v4625 = vunpack.c.h.bf16 %v4620
  %v4626 = vunpack.c.l.bf16 %v4621
  %v4627 = vunpack.c.h.bf16 %v4621
  %v4628 = vunpack.c.l.bf16 %v4622
  %v4629 = vunpack.c.h.bf16 %v4622
  %v4630 = vunpack.c.l.bf16 %v4623
  %v4631 = vunpack.c.h.bf16 %v4623
  %s4632 = scalar_lea.vmem %s1, 208
  %v4633 = vld [vmem:[%s4632] sm:$0xff]
  %v4634 = vld [vmem:[%s4632 + $0x8] sm:$0xff]
  %v4635 = vpack.c.bf16 %v4615, %v4614
  %v4636 = vld [vmem:[%s2] sm:$0xff]
  %v4637 = vld [vmem:[%s2 + $0x8] sm:$0xff]
  %v4638 = vld [vmem:[%s2 + $0x10] sm:$0xff]
  %v4639 = vld [vmem:[%s2 + $0x18] sm:$0xff]
  %v4640 = vld [vmem:[%s2 + $0x20] sm:$0xff]
  %v4641 = vld [vmem:[%s2 + $0x28] sm:$0xff]
  %v4642 = vld [vmem:[%s2 + $0x30] sm:$0xff]
  %v4643 = vld [vmem:[%s2 + $0x38] sm:$0xff]
  %v4644 = vld [vmem:[%s2 + $0x40] sm:$0xff]
  %v4645 = vld [vmem:[%s2 + $0x48] sm:$0xff]
  %v4646 = vld [vmem:[%s2 + $0x50] sm:$0xff]
  %v4647 = vld [vmem:[%s2 + $0x58] sm:$0xff]
  %v4648 = vld [vmem:[%s2 + $0x60] sm:$0xff]
  %v4649 = vld [vmem:[%s2 + $0x68] sm:$0xff]
  %v4650 = vld [vmem:[%s2 + $0x70] sm:$0xff]
  %v4651 = vld [vmem:[%s2 + $0x78] sm:$0xff]
  %v4668 = vunpack.c.l.b16 %v4636
  %v4669 = vunpack.c.h.b16 %v4636
  %v4670 = vunpack.c.l.b16 %v4637
  %v4671 = vunpack.c.h.b16 %v4637
  %v4672 = vunpack.c.l.b16 %v4638
  %v4673 = vunpack.c.h.b16 %v4638
  %v4674 = vunpack.c.l.b16 %v4639
  %v4675 = vunpack.c.h.b16 %v4639
  %v4676 = vunpack.c.l.b16 %v4640
  %v4677 = vunpack.c.h.b16 %v4640
  %v4678 = vunpack.c.l.b16 %v4641
  %v4679 = vunpack.c.h.b16 %v4641
  %v4680 = vunpack.c.l.b16 %v4642
  %v4681 = vunpack.c.h.b16 %v4642
  %v4682 = vunpack.c.l.b16 %v4643
  %v4683 = vunpack.c.h.b16 %v4643
  %v4684 = vunpack.c.l.b16 %v4644
  %v4685 = vunpack.c.h.b16 %v4644
  %v4686 = vunpack.c.l.b16 %v4645
  %v4687 = vunpack.c.h.b16 %v4645
  %v4688 = vunpack.c.l.b16 %v4646
  %v4689 = vunpack.c.h.b16 %v4646
  %v4690 = vunpack.c.l.b16 %v4647
  %v4691 = vunpack.c.h.b16 %v4647
  %v4692 = vunpack.c.l.b16 %v4648
  %v4693 = vunpack.c.h.b16 %v4648
  %v4694 = vunpack.c.l.b16 %v4649
  %v4695 = vunpack.c.h.b16 %v4649
  %v4696 = vunpack.c.l.b16 %v4650
  %v4697 = vunpack.c.h.b16 %v4650
  %v4698 = vunpack.c.l.b16 %v4651
  %v4699 = vunpack.c.h.b16 %v4651
  %v4700 = vpack.c.b16 %v4670, %v4668
  %v4701 = vpack.c.b16 %v4671, %v4669
  %v4702 = vpack.c.b16 %v4674, %v4672
  %v4703 = vpack.c.b16 %v4675, %v4673
  %v4704 = vpack.c.b16 %v4678, %v4676
  %v4705 = vpack.c.b16 %v4679, %v4677
  %v4706 = vpack.c.b16 %v4682, %v4680
  %v4707 = vpack.c.b16 %v4683, %v4681
  %v4708 = vpack.c.b16 %v4686, %v4684
  %v4709 = vpack.c.b16 %v4687, %v4685
  %v4710 = vpack.c.b16 %v4690, %v4688
  %v4711 = vpack.c.b16 %v4691, %v4689
  %v4712 = vpack.c.b16 %v4694, %v4692
  %v4713 = vpack.c.b16 %v4695, %v4693
  %v4714 = vpack.c.b16 %v4698, %v4696
  %v4715 = vpack.c.b16 %v4699, %v4697
  %4732 = vmatprep.subr.bf16.mxu0 %v4701
  %4733 = vmatpush1.bf16.msra.mxu0 %v4700
  %4734 = vmatprep.subr.bf16.mxu0 %v4703
  %4735 = vmatpush1.bf16.msra.mxu0 %v4702
  %4736 = vmatprep.subr.bf16.mxu0 %v4705
  %4737 = vmatpush1.bf16.msra.mxu0 %v4704
  %4738 = vmatprep.subr.bf16.mxu0 %v4707
  %4739 = vmatpush1.bf16.msra.mxu0 %v4706
  %4740 = vmatprep.subr.bf16.mxu0 %v4709
  %4741 = vmatpush1.bf16.msra.mxu0 %v4708
  %4742 = vmatprep.subr.bf16.mxu0 %v4711
  %4743 = vmatpush1.bf16.msra.mxu0 %v4710
  %4744 = vmatprep.subr.bf16.mxu0 %v4713
  %4745 = vmatpush1.bf16.msra.mxu0 %v4712
  %4746 = vmatprep.subr.bf16.mxu0 %v4715
  %4747 = vmatpush1.bf16.msra.mxu0 %v4714
  %4748 = vmatprep.subr.bf16.mxu0 0
  %4749 = vmatpush1.bf16.msra.mxu0 0
  %4750 = vmatprep.subr.bf16.mxu0 0
  %4751 = vmatpush1.bf16.msra.mxu0 0
  %4752 = vmatprep.subr.bf16.mxu0 0
  %4753 = vmatpush1.bf16.msra.mxu0 0
  %4754 = vmatprep.subr.bf16.mxu0 0
  %4755 = vmatpush1.bf16.msra.mxu0 0
  %4756 = vmatprep.subr.bf16.mxu0 0
  %4757 = vmatpush1.bf16.msra.mxu0 0
  %4758 = vmatprep.subr.bf16.mxu0 0
  %4759 = vmatpush1.bf16.msra.mxu0 0
  %4760 = vmatprep.subr.bf16.mxu0 0
  %4761 = vmatpush1.bf16.msra.mxu0 0
  %4762 = vmatprep.subr.bf16.mxu0 0
  %4763 = vmatpush1.bf16.msra.mxu0 0
  %4764 = vmatprep.mubr.bf16.mxu0 0
  %4765 = vmatmul.mubr.bf16.gmra.mrb[0].mxu0 %v4635
  %v4766 = vpop.f32.mrb[0].mxu0
  %v4767 = vadd.f32 0.0, %v4766
  %v4768 = vpop.f32.mrb[0].mxu0
  %v4769 = vadd.f32 0.0, %v4768
  %v4770 = vpop.f32.mrb[0].mxu0
  %v4771 = vadd.f32 0.0, %v4770
  %v4772 = vpop.f32.mrb[0].mxu0
  %v4773 = vadd.f32 0.0, %v4772
  %4774 = vdwg.mxu0
  %v4775 = vadd.f32 %v4624, %v4767
  %v4776 = vadd.f32 %v4628, %v4771
  %v4777 = vxor.u32 %v4775, 2147483648
  %v4778 = vxor.u32 %v4776, 2147483648
  %v4779 = vmul.f32 %v4777, 1.442695
  %v4780 = vpow.pop %v4779
  %v4781 = vmul.f32 %v4778, 1.442695
  %v4782 = vpow.pop %v4781
  %v4783 = vadd.f32 %v4780, 1.0
  %v4784 = vadd.f32 %v4782, 1.0
  %v4785 = vrcp.pop %v4783
  %v4786 = vmul.f32 1.0, %v4785
  %v4787 = vrcp.pop %v4784
  %v4788 = vmul.f32 1.0, %v4787
  %v4789 = vadd.f32 %v4625, %v4769
  %v4790 = vadd.f32 %v4629, %v4773
  %v4791 = vxor.u32 %v4789, 2147483648
  %v4792 = vxor.u32 %v4790, 2147483648
  %v4793 = vmul.f32 %v4791, 1.442695
  %v4794 = vpow.pop %v4793
  %v4795 = vmul.f32 %v4792, 1.442695
  %v4796 = vpow.pop %v4795
  %v4797 = vadd.f32 %v4794, 1.0
  %v4798 = vadd.f32 %v4796, 1.0
  %v4799 = vrcp.pop %v4797
  %v4800 = vmul.f32 1.0, %v4799
  %v4801 = vrcp.pop %v4798
  %v4802 = vmul.f32 1.0, %v4801
  %v4803 = vmul.f32 %v4786, %v4614
  %v4804 = vmul.f32 %v4788, %v4615
  %v4805 = vpack.c.bf16 %v4804, %v4803
  %v4806 = vld [vmem:[%s3] sm:$0xf]
  %v4807 = vld [vmem:[%s3 + $0x4] sm:$0xf]
  %v4808 = vld [vmem:[%s3 + $0x8] sm:$0xf]
  %v4809 = vld [vmem:[%s3 + $0xc] sm:$0xf]
  %v4810 = vld [vmem:[%s3 + $0x10] sm:$0xf]
  %v4811 = vld [vmem:[%s3 + $0x14] sm:$0xf]
  %v4812 = vld [vmem:[%s3 + $0x18] sm:$0xf]
  %v4813 = vld [vmem:[%s3 + $0x1c] sm:$0xf]
  %v4814 = vld [vmem:[%s3 + $0x20] sm:$0xf]
  %v4815 = vld [vmem:[%s3 + $0x24] sm:$0xf]
  %v4816 = vld [vmem:[%s3 + $0x28] sm:$0xf]
  %v4817 = vld [vmem:[%s3 + $0x2c] sm:$0xf]
  %v4818 = vld [vmem:[%s3 + $0x30] sm:$0xf]
  %v4819 = vld [vmem:[%s3 + $0x34] sm:$0xf]
  %v4820 = vld [vmem:[%s3 + $0x38] sm:$0xf]
  %v4821 = vld [vmem:[%s3 + $0x3c] sm:$0xf]
  %v4838 = vunpack.c.l.b16 %v4806
  %v4839 = vunpack.c.l.b16 %v4807
  %v4840 = vunpack.c.l.b16 %v4808
  %v4841 = vunpack.c.l.b16 %v4809
  %v4842 = vunpack.c.l.b16 %v4810
  %v4843 = vunpack.c.l.b16 %v4811
  %v4844 = vunpack.c.l.b16 %v4812
  %v4845 = vunpack.c.l.b16 %v4813
  %v4846 = vunpack.c.l.b16 %v4814
  %v4847 = vunpack.c.l.b16 %v4815
  %v4848 = vunpack.c.l.b16 %v4816
  %v4849 = vunpack.c.l.b16 %v4817
  %v4850 = vunpack.c.l.b16 %v4818
  %v4851 = vunpack.c.l.b16 %v4819
  %v4852 = vunpack.c.l.b16 %v4820
  %v4853 = vunpack.c.l.b16 %v4821
  %v4854 = vpack.c.b16 %v4839, %v4838
  %v4855 = vpack.c.b16 %v4841, %v4840
  %v4856 = vpack.c.b16 %v4843, %v4842
  %v4857 = vpack.c.b16 %v4845, %v4844
  %v4858 = vpack.c.b16 %v4847, %v4846
  %v4859 = vpack.c.b16 %v4849, %v4848
  %v4860 = vpack.c.b16 %v4851, %v4850
  %v4861 = vpack.c.b16 %v4853, %v4852
  %4870 = vmatprep.subr.bf16.mxu0 0
  %4871 = vmatpush1.bf16.msra.mxu0 %v4854
  %4872 = vmatprep.subr.bf16.mxu0 0
  %4873 = vmatpush1.bf16.msra.mxu0 %v4855
  %4874 = vmatprep.subr.bf16.mxu0 0
  %4875 = vmatpush1.bf16.msra.mxu0 %v4856
  %4876 = vmatprep.subr.bf16.mxu0 0
  %4877 = vmatpush1.bf16.msra.mxu0 %v4857
  %4878 = vmatprep.subr.bf16.mxu0 0
  %4879 = vmatpush1.bf16.msra.mxu0 %v4858
  %4880 = vmatprep.subr.bf16.mxu0 0
  %4881 = vmatpush1.bf16.msra.mxu0 %v4859
  %4882 = vmatprep.subr.bf16.mxu0 0
  %4883 = vmatpush1.bf16.msra.mxu0 %v4860
  %4884 = vmatprep.subr.bf16.mxu0 0
  %4885 = vmatpush1.bf16.msra.mxu0 %v4861
  %4886 = vmatprep.subr.bf16.mxu0 0
  %4887 = vmatpush1.bf16.msra.mxu0 0
  %4888 = vmatprep.subr.bf16.mxu0 0
  %4889 = vmatpush1.bf16.msra.mxu0 0
  %4890 = vmatprep.subr.bf16.mxu0 0
  %4891 = vmatpush1.bf16.msra.mxu0 0
  %4892 = vmatprep.subr.bf16.mxu0 0
  %4893 = vmatpush1.bf16.msra.mxu0 0
  %4894 = vmatprep.subr.bf16.mxu0 0
  %4895 = vmatpush1.bf16.msra.mxu0 0
  %4896 = vmatprep.subr.bf16.mxu0 0
  %4897 = vmatpush1.bf16.msra.mxu0 0
  %4898 = vmatprep.subr.bf16.mxu0 0
  %4899 = vmatpush1.bf16.msra.mxu0 0
  %4900 = vmatprep.subr.bf16.mxu0 0
  %4901 = vmatpush1.bf16.msra.mxu0 0
  %4902 = vmatprep.mubr.bf16.mxu0 0
  %4903 = vmatmul.mubr.bf16.gmra.mrb[0].mxu0 %v4805
  %v4904 = vpop.f32.mrb[0].mxu0
  %v4905 = vadd.f32 0.0, %v4904
  %v4906 = vpop.f32.mrb[0].mxu0
  %v4907 = vpop.f32.mrb[0].mxu0
  %v4908 = vadd.f32 0.0, %v4907
  %v4909 = vpop.f32.mrb[0].mxu0
  %4910 = vdwg.mxu0
  %v4911 = vadd.f32 %v4626, %v4905
  %v4912 = vadd.f32 %v4630, %v4908
  %v4913 = vtanh.pop %v4911
  %v4914 = vtanh.pop %v4912
  %v4915 = vmul.f32 %v4614, %v31
  %v4916 = vmul.f32 %v4615, %v31
  %v4917 = vadd.f32 %v4627, %v4915
  %v4918 = vadd.f32 %v4631, %v4916
  %v4919 = vmax.f32 %v4917, 0.0
  %v4920 = vmax.f32 %v4918, 0.0
  %4922 = vset.pattern.permute.xlu0 0
  %4923 = vperm.xlu0 %4922, %v4633
  %v4924 = vpop.permute.xlu0 %4923
  %4927 = vset.pattern.permute.xlu0 0
  %4928 = vperm.xlu0 %4927, %v4634
  %v4929 = vpop.permute.xlu0 %4928
  %v4931 = vmul.f32 %v41, %v4924
  %v4932 = vmul.f32 %v41, %v4929
  %v4933 = vadd.f32 %v4931, %v46
  %v4934 = vadd.f32 %v4932, %v46
  %v4935 = vmax.f32 %v4933, 0.0
  %v4936 = vmax.f32 %v4934, 0.0
  %v4937 = vmul.f32 %v36, %v4919
  %v4938 = vmul.f32 %v36, %v4920
  %v4939 = vmul.f32 %v51, %v4935
  %v4940 = vmul.f32 %v51, %v4936
  %v4941 = vadd.f32 %v4937, %v4939
  %v4942 = vadd.f32 %v4938, %v4940
  %v4943 = vadd.f32 %v4941, %v56
  %v4944 = vadd.f32 %v4942, %v56
  %v4945 = vxor.u32 %v4943, 2147483648
  %v4946 = vxor.u32 %v4944, 2147483648
  %v4947 = vmul.f32 %v4945, 1.442695
  %v4948 = vpow.pop %v4947
  %v4949 = vmul.f32 %v4946, 1.442695
  %v4950 = vpow.pop %v4949
  %v4951 = vadd.f32 %v4948, 1.0
  %v4952 = vadd.f32 %v4950, 1.0
  %v4953 = vrcp.pop %v4951
  %v4954 = vmul.f32 1.0, %v4953
  %v4955 = vrcp.pop %v4952
  %v4956 = vmul.f32 1.0, %v4955
  %v4957 = vmul.f32 %v4800, %v4614
  %v4958 = vmul.f32 %v4802, %v4615
  %v4959 = vsub.f32 1.0, %v4800
  %v4960 = vsub.f32 1.0, %v4802
  %v4961 = vmul.f32 %v4959, %v4913
  %v4962 = vmul.f32 %v4960, %v4914
  %v4963 = vmul.f32 %v4961, %v4954
  %v4964 = vmul.f32 %v4962, %v4956
  %v4965 = vadd.f32 %v4957, %v4963
  %v4966 = vadd.f32 %v4958, %v4964
  %s4967 = scalar_lea.vmem %s5, 208
  %4968 = vst [vmem:[%s4967] sm:$0xff] %v4965
  %4969 = vst [vmem:[%s4967 + $0x8] sm:$0xff] %v4966
  %s4970 = scalar_lea.vmem %s0, 448
  %v4971 = vld [vmem:[%s4970] sm:$0xff]
  %v4972 = vld [vmem:[%s4970 + $0x8] sm:$0xff]
  %v4973 = vld [vmem:[%s4970 + $0x10] sm:$0xff]
  %v4974 = vld [vmem:[%s4970 + $0x18] sm:$0xff]
  %v4975 = vunpack.c.l.bf16 %v4971
  %v4976 = vunpack.c.h.bf16 %v4971
  %v4977 = vunpack.c.l.bf16 %v4972
  %v4978 = vunpack.c.h.bf16 %v4972
  %v4979 = vunpack.c.l.bf16 %v4973
  %v4980 = vunpack.c.h.bf16 %v4973
  %v4981 = vunpack.c.l.bf16 %v4974
  %v4982 = vunpack.c.h.bf16 %v4974
  %s4983 = scalar_lea.vmem %s1, 224
  %v4984 = vld [vmem:[%s4983] sm:$0xff]
  %v4985 = vld [vmem:[%s4983 + $0x8] sm:$0xff]
  %v4986 = vpack.c.bf16 %v4966, %v4965
  %v4987 = vld [vmem:[%s2] sm:$0xff]
  %v4988 = vld [vmem:[%s2 + $0x8] sm:$0xff]
  %v4989 = vld [vmem:[%s2 + $0x10] sm:$0xff]
  %v4990 = vld [vmem:[%s2 + $0x18] sm:$0xff]
  %v4991 = vld [vmem:[%s2 + $0x20] sm:$0xff]
  %v4992 = vld [vmem:[%s2 + $0x28] sm:$0xff]
  %v4993 = vld [vmem:[%s2 + $0x30] sm:$0xff]
  %v4994 = vld [vmem:[%s2 + $0x38] sm:$0xff]
  %v4995 = vld [vmem:[%s2 + $0x40] sm:$0xff]
  %v4996 = vld [vmem:[%s2 + $0x48] sm:$0xff]
  %v4997 = vld [vmem:[%s2 + $0x50] sm:$0xff]
  %v4998 = vld [vmem:[%s2 + $0x58] sm:$0xff]
  %v4999 = vld [vmem:[%s2 + $0x60] sm:$0xff]
  %v5000 = vld [vmem:[%s2 + $0x68] sm:$0xff]
  %v5001 = vld [vmem:[%s2 + $0x70] sm:$0xff]
  %v5002 = vld [vmem:[%s2 + $0x78] sm:$0xff]
  %v5019 = vunpack.c.l.b16 %v4987
  %v5020 = vunpack.c.h.b16 %v4987
  %v5021 = vunpack.c.l.b16 %v4988
  %v5022 = vunpack.c.h.b16 %v4988
  %v5023 = vunpack.c.l.b16 %v4989
  %v5024 = vunpack.c.h.b16 %v4989
  %v5025 = vunpack.c.l.b16 %v4990
  %v5026 = vunpack.c.h.b16 %v4990
  %v5027 = vunpack.c.l.b16 %v4991
  %v5028 = vunpack.c.h.b16 %v4991
  %v5029 = vunpack.c.l.b16 %v4992
  %v5030 = vunpack.c.h.b16 %v4992
  %v5031 = vunpack.c.l.b16 %v4993
  %v5032 = vunpack.c.h.b16 %v4993
  %v5033 = vunpack.c.l.b16 %v4994
  %v5034 = vunpack.c.h.b16 %v4994
  %v5035 = vunpack.c.l.b16 %v4995
  %v5036 = vunpack.c.h.b16 %v4995
  %v5037 = vunpack.c.l.b16 %v4996
  %v5038 = vunpack.c.h.b16 %v4996
  %v5039 = vunpack.c.l.b16 %v4997
  %v5040 = vunpack.c.h.b16 %v4997
  %v5041 = vunpack.c.l.b16 %v4998
  %v5042 = vunpack.c.h.b16 %v4998
  %v5043 = vunpack.c.l.b16 %v4999
  %v5044 = vunpack.c.h.b16 %v4999
  %v5045 = vunpack.c.l.b16 %v5000
  %v5046 = vunpack.c.h.b16 %v5000
  %v5047 = vunpack.c.l.b16 %v5001
  %v5048 = vunpack.c.h.b16 %v5001
  %v5049 = vunpack.c.l.b16 %v5002
  %v5050 = vunpack.c.h.b16 %v5002
  %v5051 = vpack.c.b16 %v5021, %v5019
  %v5052 = vpack.c.b16 %v5022, %v5020
  %v5053 = vpack.c.b16 %v5025, %v5023
  %v5054 = vpack.c.b16 %v5026, %v5024
  %v5055 = vpack.c.b16 %v5029, %v5027
  %v5056 = vpack.c.b16 %v5030, %v5028
  %v5057 = vpack.c.b16 %v5033, %v5031
  %v5058 = vpack.c.b16 %v5034, %v5032
  %v5059 = vpack.c.b16 %v5037, %v5035
  %v5060 = vpack.c.b16 %v5038, %v5036
  %v5061 = vpack.c.b16 %v5041, %v5039
  %v5062 = vpack.c.b16 %v5042, %v5040
  %v5063 = vpack.c.b16 %v5045, %v5043
  %v5064 = vpack.c.b16 %v5046, %v5044
  %v5065 = vpack.c.b16 %v5049, %v5047
  %v5066 = vpack.c.b16 %v5050, %v5048
  %5083 = vmatprep.subr.bf16.mxu0 %v5052
  %5084 = vmatpush1.bf16.msra.mxu0 %v5051
  %5085 = vmatprep.subr.bf16.mxu0 %v5054
  %5086 = vmatpush1.bf16.msra.mxu0 %v5053
  %5087 = vmatprep.subr.bf16.mxu0 %v5056
  %5088 = vmatpush1.bf16.msra.mxu0 %v5055
  %5089 = vmatprep.subr.bf16.mxu0 %v5058
  %5090 = vmatpush1.bf16.msra.mxu0 %v5057
  %5091 = vmatprep.subr.bf16.mxu0 %v5060
  %5092 = vmatpush1.bf16.msra.mxu0 %v5059
  %5093 = vmatprep.subr.bf16.mxu0 %v5062
  %5094 = vmatpush1.bf16.msra.mxu0 %v5061
  %5095 = vmatprep.subr.bf16.mxu0 %v5064
  %5096 = vmatpush1.bf16.msra.mxu0 %v5063
  %5097 = vmatprep.subr.bf16.mxu0 %v5066
  %5098 = vmatpush1.bf16.msra.mxu0 %v5065
  %5099 = vmatprep.subr.bf16.mxu0 0
  %5100 = vmatpush1.bf16.msra.mxu0 0
  %5101 = vmatprep.subr.bf16.mxu0 0
  %5102 = vmatpush1.bf16.msra.mxu0 0
  %5103 = vmatprep.subr.bf16.mxu0 0
  %5104 = vmatpush1.bf16.msra.mxu0 0
  %5105 = vmatprep.subr.bf16.mxu0 0
  %5106 = vmatpush1.bf16.msra.mxu0 0
  %5107 = vmatprep.subr.bf16.mxu0 0
  %5108 = vmatpush1.bf16.msra.mxu0 0
  %5109 = vmatprep.subr.bf16.mxu0 0
  %5110 = vmatpush1.bf16.msra.mxu0 0
  %5111 = vmatprep.subr.bf16.mxu0 0
  %5112 = vmatpush1.bf16.msra.mxu0 0
  %5113 = vmatprep.subr.bf16.mxu0 0
  %5114 = vmatpush1.bf16.msra.mxu0 0
  %5115 = vmatprep.mubr.bf16.mxu0 0
  %5116 = vmatmul.mubr.bf16.gmra.mrb[0].mxu0 %v4986
  %v5117 = vpop.f32.mrb[0].mxu0
  %v5118 = vadd.f32 0.0, %v5117
  %v5119 = vpop.f32.mrb[0].mxu0
  %v5120 = vadd.f32 0.0, %v5119
  %v5121 = vpop.f32.mrb[0].mxu0
  %v5122 = vadd.f32 0.0, %v5121
  %v5123 = vpop.f32.mrb[0].mxu0
  %v5124 = vadd.f32 0.0, %v5123
  %5125 = vdwg.mxu0
  %v5126 = vadd.f32 %v4975, %v5118
  %v5127 = vadd.f32 %v4979, %v5122
  %v5128 = vxor.u32 %v5126, 2147483648
  %v5129 = vxor.u32 %v5127, 2147483648
  %v5130 = vmul.f32 %v5128, 1.442695
  %v5131 = vpow.pop %v5130
  %v5132 = vmul.f32 %v5129, 1.442695
  %v5133 = vpow.pop %v5132
  %v5134 = vadd.f32 %v5131, 1.0
  %v5135 = vadd.f32 %v5133, 1.0
  %v5136 = vrcp.pop %v5134
  %v5137 = vmul.f32 1.0, %v5136
  %v5138 = vrcp.pop %v5135
  %v5139 = vmul.f32 1.0, %v5138
  %v5140 = vadd.f32 %v4976, %v5120
  %v5141 = vadd.f32 %v4980, %v5124
  %v5142 = vxor.u32 %v5140, 2147483648
  %v5143 = vxor.u32 %v5141, 2147483648
  %v5144 = vmul.f32 %v5142, 1.442695
  %v5145 = vpow.pop %v5144
  %v5146 = vmul.f32 %v5143, 1.442695
  %v5147 = vpow.pop %v5146
  %v5148 = vadd.f32 %v5145, 1.0
  %v5149 = vadd.f32 %v5147, 1.0
  %v5150 = vrcp.pop %v5148
  %v5151 = vmul.f32 1.0, %v5150
  %v5152 = vrcp.pop %v5149
  %v5153 = vmul.f32 1.0, %v5152
  %v5154 = vmul.f32 %v5137, %v4965
  %v5155 = vmul.f32 %v5139, %v4966
  %v5156 = vpack.c.bf16 %v5155, %v5154
  %v5157 = vld [vmem:[%s3] sm:$0xf]
  %v5158 = vld [vmem:[%s3 + $0x4] sm:$0xf]
  %v5159 = vld [vmem:[%s3 + $0x8] sm:$0xf]
  %v5160 = vld [vmem:[%s3 + $0xc] sm:$0xf]
  %v5161 = vld [vmem:[%s3 + $0x10] sm:$0xf]
  %v5162 = vld [vmem:[%s3 + $0x14] sm:$0xf]
  %v5163 = vld [vmem:[%s3 + $0x18] sm:$0xf]
  %v5164 = vld [vmem:[%s3 + $0x1c] sm:$0xf]
  %v5165 = vld [vmem:[%s3 + $0x20] sm:$0xf]
  %v5166 = vld [vmem:[%s3 + $0x24] sm:$0xf]
  %v5167 = vld [vmem:[%s3 + $0x28] sm:$0xf]
  %v5168 = vld [vmem:[%s3 + $0x2c] sm:$0xf]
  %v5169 = vld [vmem:[%s3 + $0x30] sm:$0xf]
  %v5170 = vld [vmem:[%s3 + $0x34] sm:$0xf]
  %v5171 = vld [vmem:[%s3 + $0x38] sm:$0xf]
  %v5172 = vld [vmem:[%s3 + $0x3c] sm:$0xf]
  %v5189 = vunpack.c.l.b16 %v5157
  %v5190 = vunpack.c.l.b16 %v5158
  %v5191 = vunpack.c.l.b16 %v5159
  %v5192 = vunpack.c.l.b16 %v5160
  %v5193 = vunpack.c.l.b16 %v5161
  %v5194 = vunpack.c.l.b16 %v5162
  %v5195 = vunpack.c.l.b16 %v5163
  %v5196 = vunpack.c.l.b16 %v5164
  %v5197 = vunpack.c.l.b16 %v5165
  %v5198 = vunpack.c.l.b16 %v5166
  %v5199 = vunpack.c.l.b16 %v5167
  %v5200 = vunpack.c.l.b16 %v5168
  %v5201 = vunpack.c.l.b16 %v5169
  %v5202 = vunpack.c.l.b16 %v5170
  %v5203 = vunpack.c.l.b16 %v5171
  %v5204 = vunpack.c.l.b16 %v5172
  %v5205 = vpack.c.b16 %v5190, %v5189
  %v5206 = vpack.c.b16 %v5192, %v5191
  %v5207 = vpack.c.b16 %v5194, %v5193
  %v5208 = vpack.c.b16 %v5196, %v5195
  %v5209 = vpack.c.b16 %v5198, %v5197
  %v5210 = vpack.c.b16 %v5200, %v5199
  %v5211 = vpack.c.b16 %v5202, %v5201
  %v5212 = vpack.c.b16 %v5204, %v5203
  %5221 = vmatprep.subr.bf16.mxu0 0
  %5222 = vmatpush1.bf16.msra.mxu0 %v5205
  %5223 = vmatprep.subr.bf16.mxu0 0
  %5224 = vmatpush1.bf16.msra.mxu0 %v5206
  %5225 = vmatprep.subr.bf16.mxu0 0
  %5226 = vmatpush1.bf16.msra.mxu0 %v5207
  %5227 = vmatprep.subr.bf16.mxu0 0
  %5228 = vmatpush1.bf16.msra.mxu0 %v5208
  %5229 = vmatprep.subr.bf16.mxu0 0
  %5230 = vmatpush1.bf16.msra.mxu0 %v5209
  %5231 = vmatprep.subr.bf16.mxu0 0
  %5232 = vmatpush1.bf16.msra.mxu0 %v5210
  %5233 = vmatprep.subr.bf16.mxu0 0
  %5234 = vmatpush1.bf16.msra.mxu0 %v5211
  %5235 = vmatprep.subr.bf16.mxu0 0
  %5236 = vmatpush1.bf16.msra.mxu0 %v5212
  %5237 = vmatprep.subr.bf16.mxu0 0
  %5238 = vmatpush1.bf16.msra.mxu0 0
  %5239 = vmatprep.subr.bf16.mxu0 0
  %5240 = vmatpush1.bf16.msra.mxu0 0
  %5241 = vmatprep.subr.bf16.mxu0 0
  %5242 = vmatpush1.bf16.msra.mxu0 0
  %5243 = vmatprep.subr.bf16.mxu0 0
  %5244 = vmatpush1.bf16.msra.mxu0 0
  %5245 = vmatprep.subr.bf16.mxu0 0
  %5246 = vmatpush1.bf16.msra.mxu0 0
  %5247 = vmatprep.subr.bf16.mxu0 0
  %5248 = vmatpush1.bf16.msra.mxu0 0
  %5249 = vmatprep.subr.bf16.mxu0 0
  %5250 = vmatpush1.bf16.msra.mxu0 0
  %5251 = vmatprep.subr.bf16.mxu0 0
  %5252 = vmatpush1.bf16.msra.mxu0 0
  %5253 = vmatprep.mubr.bf16.mxu0 0
  %5254 = vmatmul.mubr.bf16.gmra.mrb[0].mxu0 %v5156
  %v5255 = vpop.f32.mrb[0].mxu0
  %v5256 = vadd.f32 0.0, %v5255
  %v5257 = vpop.f32.mrb[0].mxu0
  %v5258 = vpop.f32.mrb[0].mxu0
  %v5259 = vadd.f32 0.0, %v5258
  %v5260 = vpop.f32.mrb[0].mxu0
  %5261 = vdwg.mxu0
  %v5262 = vadd.f32 %v4977, %v5256
  %v5263 = vadd.f32 %v4981, %v5259
  %v5264 = vtanh.pop %v5262
  %v5265 = vtanh.pop %v5263
  %v5266 = vmul.f32 %v4965, %v31
  %v5267 = vmul.f32 %v4966, %v31
  %v5268 = vadd.f32 %v4978, %v5266
  %v5269 = vadd.f32 %v4982, %v5267
  %v5270 = vmax.f32 %v5268, 0.0
  %v5271 = vmax.f32 %v5269, 0.0
  %5273 = vset.pattern.permute.xlu0 0
  %5274 = vperm.xlu0 %5273, %v4984
  %v5275 = vpop.permute.xlu0 %5274
  %5278 = vset.pattern.permute.xlu0 0
  %5279 = vperm.xlu0 %5278, %v4985
  %v5280 = vpop.permute.xlu0 %5279
  %v5282 = vmul.f32 %v41, %v5275
  %v5283 = vmul.f32 %v41, %v5280
  %v5284 = vadd.f32 %v5282, %v46
  %v5285 = vadd.f32 %v5283, %v46
  %v5286 = vmax.f32 %v5284, 0.0
  %v5287 = vmax.f32 %v5285, 0.0
  %v5288 = vmul.f32 %v36, %v5270
  %v5289 = vmul.f32 %v36, %v5271
  %v5290 = vmul.f32 %v51, %v5286
  %v5291 = vmul.f32 %v51, %v5287
  %v5292 = vadd.f32 %v5288, %v5290
  %v5293 = vadd.f32 %v5289, %v5291
  %v5294 = vadd.f32 %v5292, %v56
  %v5295 = vadd.f32 %v5293, %v56
  %v5296 = vxor.u32 %v5294, 2147483648
  %v5297 = vxor.u32 %v5295, 2147483648
  %v5298 = vmul.f32 %v5296, 1.442695
  %v5299 = vpow.pop %v5298
  %v5300 = vmul.f32 %v5297, 1.442695
  %v5301 = vpow.pop %v5300
  %v5302 = vadd.f32 %v5299, 1.0
  %v5303 = vadd.f32 %v5301, 1.0
  %v5304 = vrcp.pop %v5302
  %v5305 = vmul.f32 1.0, %v5304
  %v5306 = vrcp.pop %v5303
  %v5307 = vmul.f32 1.0, %v5306
  %v5308 = vmul.f32 %v5151, %v4965
  %v5309 = vmul.f32 %v5153, %v4966
  %v5310 = vsub.f32 1.0, %v5151
  %v5311 = vsub.f32 1.0, %v5153
  %v5312 = vmul.f32 %v5310, %v5264
  %v5313 = vmul.f32 %v5311, %v5265
  %v5314 = vmul.f32 %v5312, %v5305
  %v5315 = vmul.f32 %v5313, %v5307
  %v5316 = vadd.f32 %v5308, %v5314
  %v5317 = vadd.f32 %v5309, %v5315
  %s5318 = scalar_lea.vmem %s5, 224
  %5319 = vst [vmem:[%s5318] sm:$0xff] %v5316
  %5320 = vst [vmem:[%s5318 + $0x8] sm:$0xff] %v5317
  %s5321 = scalar_lea.vmem %s0, 480
  %v5322 = vld [vmem:[%s5321] sm:$0xff]
  %v5323 = vld [vmem:[%s5321 + $0x8] sm:$0xff]
  %v5324 = vld [vmem:[%s5321 + $0x10] sm:$0xff]
  %v5325 = vld [vmem:[%s5321 + $0x18] sm:$0xff]
  %v5326 = vunpack.c.l.bf16 %v5322
  %v5327 = vunpack.c.h.bf16 %v5322
  %v5328 = vunpack.c.l.bf16 %v5323
  %v5329 = vunpack.c.h.bf16 %v5323
  %v5330 = vunpack.c.l.bf16 %v5324
  %v5331 = vunpack.c.h.bf16 %v5324
  %v5332 = vunpack.c.l.bf16 %v5325
  %v5333 = vunpack.c.h.bf16 %v5325
  %s5334 = scalar_lea.vmem %s1, 240
  %v5335 = vld [vmem:[%s5334] sm:$0xff]
  %v5336 = vld [vmem:[%s5334 + $0x8] sm:$0xff]
  %v5337 = vpack.c.bf16 %v5317, %v5316
  %v5338 = vld [vmem:[%s2] sm:$0xff]
  %v5339 = vld [vmem:[%s2 + $0x8] sm:$0xff]
  %v5340 = vld [vmem:[%s2 + $0x10] sm:$0xff]
  %v5341 = vld [vmem:[%s2 + $0x18] sm:$0xff]
  %v5342 = vld [vmem:[%s2 + $0x20] sm:$0xff]
  %v5343 = vld [vmem:[%s2 + $0x28] sm:$0xff]
  %v5344 = vld [vmem:[%s2 + $0x30] sm:$0xff]
  %v5345 = vld [vmem:[%s2 + $0x38] sm:$0xff]
  %v5346 = vld [vmem:[%s2 + $0x40] sm:$0xff]
  %v5347 = vld [vmem:[%s2 + $0x48] sm:$0xff]
  %v5348 = vld [vmem:[%s2 + $0x50] sm:$0xff]
  %v5349 = vld [vmem:[%s2 + $0x58] sm:$0xff]
  %v5350 = vld [vmem:[%s2 + $0x60] sm:$0xff]
  %v5351 = vld [vmem:[%s2 + $0x68] sm:$0xff]
  %v5352 = vld [vmem:[%s2 + $0x70] sm:$0xff]
  %v5353 = vld [vmem:[%s2 + $0x78] sm:$0xff]
  %v5370 = vunpack.c.l.b16 %v5338
  %v5371 = vunpack.c.h.b16 %v5338
  %v5372 = vunpack.c.l.b16 %v5339
  %v5373 = vunpack.c.h.b16 %v5339
  %v5374 = vunpack.c.l.b16 %v5340
  %v5375 = vunpack.c.h.b16 %v5340
  %v5376 = vunpack.c.l.b16 %v5341
  %v5377 = vunpack.c.h.b16 %v5341
  %v5378 = vunpack.c.l.b16 %v5342
  %v5379 = vunpack.c.h.b16 %v5342
  %v5380 = vunpack.c.l.b16 %v5343
  %v5381 = vunpack.c.h.b16 %v5343
  %v5382 = vunpack.c.l.b16 %v5344
  %v5383 = vunpack.c.h.b16 %v5344
  %v5384 = vunpack.c.l.b16 %v5345
  %v5385 = vunpack.c.h.b16 %v5345
  %v5386 = vunpack.c.l.b16 %v5346
  %v5387 = vunpack.c.h.b16 %v5346
  %v5388 = vunpack.c.l.b16 %v5347
  %v5389 = vunpack.c.h.b16 %v5347
  %v5390 = vunpack.c.l.b16 %v5348
  %v5391 = vunpack.c.h.b16 %v5348
  %v5392 = vunpack.c.l.b16 %v5349
  %v5393 = vunpack.c.h.b16 %v5349
  %v5394 = vunpack.c.l.b16 %v5350
  %v5395 = vunpack.c.h.b16 %v5350
  %v5396 = vunpack.c.l.b16 %v5351
  %v5397 = vunpack.c.h.b16 %v5351
  %v5398 = vunpack.c.l.b16 %v5352
  %v5399 = vunpack.c.h.b16 %v5352
  %v5400 = vunpack.c.l.b16 %v5353
  %v5401 = vunpack.c.h.b16 %v5353
  %v5402 = vpack.c.b16 %v5372, %v5370
  %v5403 = vpack.c.b16 %v5373, %v5371
  %v5404 = vpack.c.b16 %v5376, %v5374
  %v5405 = vpack.c.b16 %v5377, %v5375
  %v5406 = vpack.c.b16 %v5380, %v5378
  %v5407 = vpack.c.b16 %v5381, %v5379
  %v5408 = vpack.c.b16 %v5384, %v5382
  %v5409 = vpack.c.b16 %v5385, %v5383
  %v5410 = vpack.c.b16 %v5388, %v5386
  %v5411 = vpack.c.b16 %v5389, %v5387
  %v5412 = vpack.c.b16 %v5392, %v5390
  %v5413 = vpack.c.b16 %v5393, %v5391
  %v5414 = vpack.c.b16 %v5396, %v5394
  %v5415 = vpack.c.b16 %v5397, %v5395
  %v5416 = vpack.c.b16 %v5400, %v5398
  %v5417 = vpack.c.b16 %v5401, %v5399
  %5434 = vmatprep.subr.bf16.mxu0 %v5403
  %5435 = vmatpush1.bf16.msra.mxu0 %v5402
  %5436 = vmatprep.subr.bf16.mxu0 %v5405
  %5437 = vmatpush1.bf16.msra.mxu0 %v5404
  %5438 = vmatprep.subr.bf16.mxu0 %v5407
  %5439 = vmatpush1.bf16.msra.mxu0 %v5406
  %5440 = vmatprep.subr.bf16.mxu0 %v5409
  %5441 = vmatpush1.bf16.msra.mxu0 %v5408
  %5442 = vmatprep.subr.bf16.mxu0 %v5411
  %5443 = vmatpush1.bf16.msra.mxu0 %v5410
  %5444 = vmatprep.subr.bf16.mxu0 %v5413
  %5445 = vmatpush1.bf16.msra.mxu0 %v5412
  %5446 = vmatprep.subr.bf16.mxu0 %v5415
  %5447 = vmatpush1.bf16.msra.mxu0 %v5414
  %5448 = vmatprep.subr.bf16.mxu0 %v5417
  %5449 = vmatpush1.bf16.msra.mxu0 %v5416
  %5450 = vmatprep.subr.bf16.mxu0 0
  %5451 = vmatpush1.bf16.msra.mxu0 0
  %5452 = vmatprep.subr.bf16.mxu0 0
  %5453 = vmatpush1.bf16.msra.mxu0 0
  %5454 = vmatprep.subr.bf16.mxu0 0
  %5455 = vmatpush1.bf16.msra.mxu0 0
  %5456 = vmatprep.subr.bf16.mxu0 0
  %5457 = vmatpush1.bf16.msra.mxu0 0
  %5458 = vmatprep.subr.bf16.mxu0 0
  %5459 = vmatpush1.bf16.msra.mxu0 0
  %5460 = vmatprep.subr.bf16.mxu0 0
  %5461 = vmatpush1.bf16.msra.mxu0 0
  %5462 = vmatprep.subr.bf16.mxu0 0
  %5463 = vmatpush1.bf16.msra.mxu0 0
  %5464 = vmatprep.subr.bf16.mxu0 0
  %5465 = vmatpush1.bf16.msra.mxu0 0
  %5466 = vmatprep.mubr.bf16.mxu0 0
  %5467 = vmatmul.mubr.bf16.gmra.mrb[0].mxu0 %v5337
  %v5468 = vpop.f32.mrb[0].mxu0
  %v5469 = vadd.f32 0.0, %v5468
  %v5470 = vpop.f32.mrb[0].mxu0
  %v5471 = vadd.f32 0.0, %v5470
  %v5472 = vpop.f32.mrb[0].mxu0
  %v5473 = vadd.f32 0.0, %v5472
  %v5474 = vpop.f32.mrb[0].mxu0
  %v5475 = vadd.f32 0.0, %v5474
  %5476 = vdwg.mxu0
  %v5477 = vadd.f32 %v5326, %v5469
  %v5478 = vadd.f32 %v5330, %v5473
  %v5479 = vxor.u32 %v5477, 2147483648
  %v5480 = vxor.u32 %v5478, 2147483648
  %v5481 = vmul.f32 %v5479, 1.442695
  %v5482 = vpow.pop %v5481
  %v5483 = vmul.f32 %v5480, 1.442695
  %v5484 = vpow.pop %v5483
  %v5485 = vadd.f32 %v5482, 1.0
  %v5486 = vadd.f32 %v5484, 1.0
  %v5487 = vrcp.pop %v5485
  %v5488 = vmul.f32 1.0, %v5487
  %v5489 = vrcp.pop %v5486
  %v5490 = vmul.f32 1.0, %v5489
  %v5491 = vadd.f32 %v5327, %v5471
  %v5492 = vadd.f32 %v5331, %v5475
  %v5493 = vxor.u32 %v5491, 2147483648
  %v5494 = vxor.u32 %v5492, 2147483648
  %v5495 = vmul.f32 %v5493, 1.442695
  %v5496 = vpow.pop %v5495
  %v5497 = vmul.f32 %v5494, 1.442695
  %v5498 = vpow.pop %v5497
  %v5499 = vadd.f32 %v5496, 1.0
  %v5500 = vadd.f32 %v5498, 1.0
  %v5501 = vrcp.pop %v5499
  %v5502 = vmul.f32 1.0, %v5501
  %v5503 = vrcp.pop %v5500
  %v5504 = vmul.f32 1.0, %v5503
  %v5505 = vmul.f32 %v5488, %v5316
  %v5506 = vmul.f32 %v5490, %v5317
  %v5507 = vpack.c.bf16 %v5506, %v5505
  %v5508 = vld [vmem:[%s3] sm:$0xf]
  %v5509 = vld [vmem:[%s3 + $0x4] sm:$0xf]
  %v5510 = vld [vmem:[%s3 + $0x8] sm:$0xf]
  %v5511 = vld [vmem:[%s3 + $0xc] sm:$0xf]
  %v5512 = vld [vmem:[%s3 + $0x10] sm:$0xf]
  %v5513 = vld [vmem:[%s3 + $0x14] sm:$0xf]
  %v5514 = vld [vmem:[%s3 + $0x18] sm:$0xf]
  %v5515 = vld [vmem:[%s3 + $0x1c] sm:$0xf]
  %v5516 = vld [vmem:[%s3 + $0x20] sm:$0xf]
  %v5517 = vld [vmem:[%s3 + $0x24] sm:$0xf]
  %v5518 = vld [vmem:[%s3 + $0x28] sm:$0xf]
  %v5519 = vld [vmem:[%s3 + $0x2c] sm:$0xf]
  %v5520 = vld [vmem:[%s3 + $0x30] sm:$0xf]
  %v5521 = vld [vmem:[%s3 + $0x34] sm:$0xf]
  %v5522 = vld [vmem:[%s3 + $0x38] sm:$0xf]
  %v5523 = vld [vmem:[%s3 + $0x3c] sm:$0xf]
  %v5540 = vunpack.c.l.b16 %v5508
  %v5541 = vunpack.c.l.b16 %v5509
  %v5542 = vunpack.c.l.b16 %v5510
  %v5543 = vunpack.c.l.b16 %v5511
  %v5544 = vunpack.c.l.b16 %v5512
  %v5545 = vunpack.c.l.b16 %v5513
  %v5546 = vunpack.c.l.b16 %v5514
  %v5547 = vunpack.c.l.b16 %v5515
  %v5548 = vunpack.c.l.b16 %v5516
  %v5549 = vunpack.c.l.b16 %v5517
  %v5550 = vunpack.c.l.b16 %v5518
  %v5551 = vunpack.c.l.b16 %v5519
  %v5552 = vunpack.c.l.b16 %v5520
  %v5553 = vunpack.c.l.b16 %v5521
  %v5554 = vunpack.c.l.b16 %v5522
  %v5555 = vunpack.c.l.b16 %v5523
  %v5556 = vpack.c.b16 %v5541, %v5540
  %v5557 = vpack.c.b16 %v5543, %v5542
  %v5558 = vpack.c.b16 %v5545, %v5544
  %v5559 = vpack.c.b16 %v5547, %v5546
  %v5560 = vpack.c.b16 %v5549, %v5548
  %v5561 = vpack.c.b16 %v5551, %v5550
  %v5562 = vpack.c.b16 %v5553, %v5552
  %v5563 = vpack.c.b16 %v5555, %v5554
  %5572 = vmatprep.subr.bf16.mxu0 0
  %5573 = vmatpush1.bf16.msra.mxu0 %v5556
  %5574 = vmatprep.subr.bf16.mxu0 0
  %5575 = vmatpush1.bf16.msra.mxu0 %v5557
  %5576 = vmatprep.subr.bf16.mxu0 0
  %5577 = vmatpush1.bf16.msra.mxu0 %v5558
  %5578 = vmatprep.subr.bf16.mxu0 0
  %5579 = vmatpush1.bf16.msra.mxu0 %v5559
  %5580 = vmatprep.subr.bf16.mxu0 0
  %5581 = vmatpush1.bf16.msra.mxu0 %v5560
  %5582 = vmatprep.subr.bf16.mxu0 0
  %5583 = vmatpush1.bf16.msra.mxu0 %v5561
  %5584 = vmatprep.subr.bf16.mxu0 0
  %5585 = vmatpush1.bf16.msra.mxu0 %v5562
  %5586 = vmatprep.subr.bf16.mxu0 0
  %5587 = vmatpush1.bf16.msra.mxu0 %v5563
  %5588 = vmatprep.subr.bf16.mxu0 0
  %5589 = vmatpush1.bf16.msra.mxu0 0
  %5590 = vmatprep.subr.bf16.mxu0 0
  %5591 = vmatpush1.bf16.msra.mxu0 0
  %5592 = vmatprep.subr.bf16.mxu0 0
  %5593 = vmatpush1.bf16.msra.mxu0 0
  %5594 = vmatprep.subr.bf16.mxu0 0
  %5595 = vmatpush1.bf16.msra.mxu0 0
  %5596 = vmatprep.subr.bf16.mxu0 0
  %5597 = vmatpush1.bf16.msra.mxu0 0
  %5598 = vmatprep.subr.bf16.mxu0 0
  %5599 = vmatpush1.bf16.msra.mxu0 0
  %5600 = vmatprep.subr.bf16.mxu0 0
  %5601 = vmatpush1.bf16.msra.mxu0 0
  %5602 = vmatprep.subr.bf16.mxu0 0
  %5603 = vmatpush1.bf16.msra.mxu0 0
  %5604 = vmatprep.mubr.bf16.mxu0 0
  %5605 = vmatmul.mubr.bf16.gmra.mrb[0].mxu0 %v5507
  %v5606 = vpop.f32.mrb[0].mxu0
  %v5607 = vadd.f32 0.0, %v5606
  %v5608 = vpop.f32.mrb[0].mxu0
  %v5609 = vpop.f32.mrb[0].mxu0
  %v5610 = vadd.f32 0.0, %v5609
  %v5611 = vpop.f32.mrb[0].mxu0
  %5612 = vdwg.mxu0
  %v5613 = vadd.f32 %v5328, %v5607
  %v5614 = vadd.f32 %v5332, %v5610
  %v5615 = vtanh.pop %v5613
  %v5616 = vtanh.pop %v5614
  %v5617 = vmul.f32 %v5316, %v31
  %v5618 = vmul.f32 %v5317, %v31
  %v5619 = vadd.f32 %v5329, %v5617
  %v5620 = vadd.f32 %v5333, %v5618
  %v5621 = vmax.f32 %v5619, 0.0
  %v5622 = vmax.f32 %v5620, 0.0
  %5624 = vset.pattern.permute.xlu0 0
  %5625 = vperm.xlu0 %5624, %v5335
  %v5626 = vpop.permute.xlu0 %5625
  %5629 = vset.pattern.permute.xlu0 0
  %5630 = vperm.xlu0 %5629, %v5336
  %v5631 = vpop.permute.xlu0 %5630
  %v5633 = vmul.f32 %v41, %v5626
  %v5634 = vmul.f32 %v41, %v5631
  %v5635 = vadd.f32 %v5633, %v46
  %v5636 = vadd.f32 %v5634, %v46
  %v5637 = vmax.f32 %v5635, 0.0
  %v5638 = vmax.f32 %v5636, 0.0
  %v5639 = vmul.f32 %v36, %v5621
  %v5640 = vmul.f32 %v36, %v5622
  %v5641 = vmul.f32 %v51, %v5637
  %v5642 = vmul.f32 %v51, %v5638
  %v5643 = vadd.f32 %v5639, %v5641
  %v5644 = vadd.f32 %v5640, %v5642
  %v5645 = vadd.f32 %v5643, %v56
  %v5646 = vadd.f32 %v5644, %v56
  %v5647 = vxor.u32 %v5645, 2147483648
  %v5648 = vxor.u32 %v5646, 2147483648
  %v5649 = vmul.f32 %v5647, 1.442695
  %v5650 = vpow.pop %v5649
  %v5651 = vmul.f32 %v5648, 1.442695
  %v5652 = vpow.pop %v5651
  %v5653 = vadd.f32 %v5650, 1.0
  %v5654 = vadd.f32 %v5652, 1.0
  %v5655 = vrcp.pop %v5653
  %v5656 = vmul.f32 1.0, %v5655
  %v5657 = vrcp.pop %v5654
  %v5658 = vmul.f32 1.0, %v5657
  %v5659 = vmul.f32 %v5502, %v5316
  %v5660 = vmul.f32 %v5504, %v5317
  %v5661 = vsub.f32 1.0, %v5502
  %v5662 = vsub.f32 1.0, %v5504
  %v5663 = vmul.f32 %v5661, %v5615
  %v5664 = vmul.f32 %v5662, %v5616
  %v5665 = vmul.f32 %v5663, %v5656
  %v5666 = vmul.f32 %v5664, %v5658
  %v5667 = vadd.f32 %v5659, %v5665
  %v5668 = vadd.f32 %v5660, %v5666
  %s5669 = scalar_lea.vmem %s5, 240
  %5670 = vst [vmem:[%s5669] sm:$0xff] %v5667
  %5671 = vst [vmem:[%s5669 + $0x8] sm:$0xff] %v5668
  %5672 = vst [vmem:[#allocation2] sm:$0xff] %v5667
  %5673 = vst [vmem:[#allocation2 + $0x8] sm:$0xff] %v5668
  // Predicated region
  $region26: #{modified_gru_forward.1} parent=0 // pred_check
    _
  $region27: #{modified_gru_forward.1} parent=0 // pred_check_branch
    %5675 = sbr.rel (0) target = $region29
  $region28: #{modified_gru_forward.1} parent=0 // pred_region
    _
  $region29: #{modified_gru_forward.1} parent=0 // pred_fallthru
    _
  // Predicated region
  $region30: #{modified_gru_forward.1} parent=0 // pred_check
    _
  $region31: #{modified_gru_forward.1} parent=0 // pred_check_branch
    %5677 = sbr.rel (0) target = $region33
  $region32: #{modified_gru_forward.1} parent=0 // pred_region
    _
  $region33: #{modified_gru_forward.1} parent=0 // pred_fallthru
    _

</llo_original>
